<compile_context>
chip_gen: v5e
topology: v5e:2x2
jax: 0.10.0
libtpu: 0.0.40
codegen_flags: <defaults>
</compile_context>

<pallas_src>
import jax
import jax.numpy as jnp
import numpy as np
from jax.experimental import pallas as pl
from jax.experimental.pallas import tpu as pltpu

_EPS = 1e-5  # nn.BatchNorm2d default eps


# ----------------------------------------------------------------------------
# In-kernel helpers
# ----------------------------------------------------------------------------
def _elu(y):
    # ELU(alpha=1).  Negative branch uses exp(min(y, 0)) - 1 (guaranteed Mosaic
    # lowering); absolute deviation from expm1 is < 1.2e-7.
    return jnp.where(y > 0, y, jnp.exp(jnp.minimum(y, 0.0)) - 1.0)


def _conv3x3_acc(pad_ref, w_ref, H, W):
    """3x3 'same' conv as 9 accumulating MXU matmuls.

    pad_ref : (B, H+2, W+2, Cin) bf16 zero-padded activations (VMEM)
    w_ref   : (9, Cin, Cout) bf16 weights, tap t = dh*3 + dw
    returns : (B*H*W, Cout) f32 accumulator

    Each tap's window slice+reshape is a strided VMEM relayout, but all stores
    are full-width slabs (no lane-misaligned column writes) and the reduction
    runs on the MXU into an f32 accumulator with M = B*H*W.
    # TODO(synk): for production C>=128, replace the window copies with
    # pltpu.roll-shifted views + boundary masks to move the tap shifts onto
    # the (idle) XLU slots.
    """
    B = pad_ref.shape[0]
    C = pad_ref.shape[3]
    acc = None
    for t in range(9):
        dh, dw = divmod(t, 3)
        win = pad_ref[:, dh:dh + H, dw:dw + W, :].reshape(B * H * W, C)
        part = jnp.dot(win, w_ref[t], preferred_element_type=jnp.float32)
        acc = part if acc is None else acc + part
    return acc


def _store_stats(stats_ref, acc):
    # Per-step BN partial statistics taken from the f32 accumulator (bf16 is
    # only used for the stored activation, never for the statistics).
    # TODO(synk): for very large N*H*W switch to shifted sums-of-squares to
    # avoid E[y^2]-E[y]^2 cancellation, and/or compute the sums as
    # ones(1, M) @ acc on the MXU if the XLU ever becomes the bottleneck.
    stats_ref[0, 0:1, :] = jnp.sum(acc, axis=0, keepdims=True)
    stats_ref[0, 1:2, :] = jnp.sum(acc * acc, axis=0, keepdims=True)


# ----------------------------------------------------------------------------
# Kernels
# ----------------------------------------------------------------------------
def _conv1_kernel(xpad_ref, w_ref, y_ref, stats_ref):
    # xpad_ref : (B, H+2, W+2, Cin) bf16 zero-padded input images
    # w_ref    : (9, Cin, Cout) bf16
    # y_ref    : (B, H, W, Cout) bf16 pre-BN conv1 output
    # stats_ref: (1, 2, Cout) f32 per-step [sum, sum_sq]
    B, Hp, Wp, _ = xpad_ref.shape
    H, W = Hp - 2, Wp - 2
    acc = _conv3x3_acc(xpad_ref, w_ref, H, W)
    _store_stats(stats_ref, acc)
    y_ref[...] = acc.reshape(y_ref.shape).astype(jnp.bfloat16)


def _bn_elu_conv2_kernel(y1_ref, scale_ref, shift_ref, w_ref,
                         y_ref, stats_ref, hpad_ref):
    # Fuses: BN1 (precomputed per-channel affine) + ELU + zero-pad + conv2.
    # y1_ref    : (B, H, W, C) bf16 pre-BN conv1 output
    # scale/shift: (1, C) f32 folded BN1 params
    # w_ref     : (9, C, Cout) bf16
    # y_ref     : (B, H*W, Cout) bf16 pre-BN conv2 output
    # stats_ref : (1, 2, Cout) f32 per-step [sum, sum_sq]
    # hpad_ref  : (B, H+2, W+2, C) bf16 VMEM scratch (padded intermediate;
    #             never round-trips through HBM)
    B, H, W, C = y1_ref.shape
    sc = scale_ref[...].reshape(1, 1, 1, C)
    sh = shift_ref[...].reshape(1, 1, 1, C)
    h = _elu(sc * y1_ref[...] + sh)                        # f32 (B, H, W, C)
    # Zero only the 1-pixel border -- every step, so the scratch is valid on
    # whichever TensorCore runs this step under "parallel" semantics.
    zrow = jnp.zeros((B, 1, W + 2, C), jnp.bfloat16)
    zcol = jnp.zeros((B, H + 2, 1, C), jnp.bfloat16)
    hpad_ref[:, 0:1, :, :] = zrow
    hpad_ref[:, H + 1:H + 2, :, :] = zrow
    hpad_ref[:, :, 0:1, :] = zcol
    hpad_ref[:, :, W + 1:W + 2, :] = zcol
    hpad_ref[:, 1:H + 1, 1:W + 1, :] = h.astype(jnp.bfloat16)
    acc = _conv3x3_acc(hpad_ref, w_ref, H, W)
    _store_stats(stats_ref, acc)
    y_ref[...] = acc.reshape(y_ref.shape).astype(jnp.bfloat16)


def _bn_add_elu_kernel(y2_ref, res_ref, scale_ref, shift_ref, out_ref):
    # BN2 affine + residual add + ELU on (B, H*W, C) tiles.
    # y2 is bf16; the affine/add/ELU run in f32 (scale/shift/residual are f32).
    y = scale_ref[...] * y2_ref[...] + shift_ref[...] + res_ref[...]
    out_ref[...] = _elu(y)


# ----------------------------------------------------------------------------
# pallas_call wrappers
# ----------------------------------------------------------------------------
def _vmem_budget_bytes():
    """Generation-aware VMEM budget: ~3/4 of physical VMEM, capped at 100 MiB
    (~96 MiB on v5e/v6e with 128 MiB VMEM, ~48 MiB on v7x with 64 MiB)."""
    cap = 128 * 1024 * 1024
    try:
        info = pltpu.get_tpu_info()
        for attr in ("vmem_capacity_bytes", "vmem_size_bytes", "vmem_bytes"):
            v = getattr(info, attr, None)
            if v:
                cap = int(v)
                break
    except Exception:
        pass
    return int(min(cap * 3 // 4, 100 * 1024 * 1024))


def _choose_batch_block(N, H, W, C, Cout, vmem_budget):
    """Images per grid step: as many as fit in ~half the VMEM budget (rough
    per-image working set incl. double-buffered bf16 blocks, padded scratch
    and the f32 accumulator), while keeping >= min(4, N) grid steps so both
    v7x TensorCores get work under dimension_semantics=('parallel',)."""
    Hp, Wp = H + 2, W + 2
    per_img = (2 * Hp * Wp * C * 2               # pipelined bf16 input blocks
               + 2 * H * W * Cout * 2            # pipelined bf16 output blocks
               + Hp * Wp * C * 2                 # padded bf16 VMEM scratch
               + 4 * H * W * max(C, Cout) * 4)   # f32 accumulator + tap temps
    cap = max(1, (vmem_budget // 2) // per_img)
    min_steps = min(4, N)
    best = 1
    for b in range(1, N + 1):
        if N % b or b > cap or (N // b) < min_steps:
            continue
        best = max(best, b)
    return best


def _tpu_params():
    return pltpu.CompilerParams(
        dimension_semantics=("parallel",),        # batch axis -> both TCs on v7x
        vmem_limit_bytes=_vmem_budget_bytes())


def _conv1(xpad, w_mat, B):
    N, Hp, Wp, Cin = xpad.shape
    H, W = Hp - 2, Wp - 2
    Cout = w_mat.shape[-1]
    G = N // B
    return pl.pallas_call(
        _conv1_kernel,
        grid=(G,),
        in_specs=[
            pl.BlockSpec((B, Hp, Wp, Cin), lambda n: (n, 0, 0, 0)),
            pl.BlockSpec((9, Cin, Cout), lambda n: (0, 0, 0)),
        ],
        out_specs=[
            pl.BlockSpec((B, H, W, Cout), lambda n: (n, 0, 0, 0)),
            pl.BlockSpec((1, 2, Cout), lambda n: (n, 0, 0)),
        ],
        out_shape=[
            jax.ShapeDtypeStruct((N, H, W, Cout), jnp.bfloat16),
            jax.ShapeDtypeStruct((G, 2, Cout), jnp.float32),
        ],
        compiler_params=_tpu_params(),
    )(xpad, w_mat)


def _conv2(y1, scale, shift, w_mat, B):
    N, H, W, C = y1.shape
    Cout = w_mat.shape[-1]
    G = N // B
    return pl.pallas_call(
        _bn_elu_conv2_kernel,
        grid=(G,),
        in_specs=[
            pl.BlockSpec((B, H, W, C), lambda n: (n, 0, 0, 0)),
            pl.BlockSpec((1, C), lambda n: (0, 0)),
            pl.BlockSpec((1, C), lambda n: (0, 0)),
            pl.BlockSpec((9, C, Cout), lambda n: (0, 0, 0)),
        ],
        out_specs=[
            pl.BlockSpec((B, H * W, Cout), lambda n: (n, 0, 0)),
            pl.BlockSpec((1, 2, Cout), lambda n: (n, 0, 0)),
        ],
        out_shape=[
            jax.ShapeDtypeStruct((N, H * W, Cout), jnp.bfloat16),
            jax.ShapeDtypeStruct((G, 2, Cout), jnp.float32),
        ],
        scratch_shapes=[pltpu.VMEM((B, H + 2, W + 2, C), jnp.bfloat16)],
        compiler_params=_tpu_params(),
    )(y1, scale, shift, w_mat)


def _bn_add_elu(y2, res, scale, shift, B):
    N, HW, C = y2.shape
    G = N // B
    return pl.pallas_call(
        _bn_add_elu_kernel,
        grid=(G,),
        in_specs=[
            pl.BlockSpec((B, HW, C), lambda n: (n, 0, 0)),
            pl.BlockSpec((B, HW, C), lambda n: (n, 0, 0)),
            pl.BlockSpec((1, C), lambda n: (0, 0)),
            pl.BlockSpec((1, C), lambda n: (0, 0)),
        ],
        out_specs=pl.BlockSpec((B, HW, C), lambda n: (n, 0, 0)),
        out_shape=jax.ShapeDtypeStruct((N, HW, C), jnp.float32),
        compiler_params=_tpu_params(),
    )(y2, res, scale, shift)


def _bn_scale_shift(stats, gamma, beta, count):
    """Fold training-mode BatchNorm (biased variance over the FULL N*H*W
    population, eps=1e-5) into a per-channel affine y*scale + shift."""
    s = jnp.sum(stats[:, 0, :], axis=0)
    ss = jnp.sum(stats[:, 1, :], axis=0)
    mean = s / count
    var = jnp.maximum(ss / count - mean * mean, 0.0)
    scale = gamma.reshape(1, -1) * jax.lax.rsqrt(var + _EPS)
    shift = beta.reshape(1, -1) - mean.reshape(1, -1) * scale
    return scale.astype(jnp.float32), shift.astype(jnp.float32)


@jax.jit
def resnet_basic_block(x_nchw, params):
    """Forward pass of ResnetBasicBlock.  x_nchw: (N, C, H, W) PyTorch layout.
    params = (w1, g1, b1, w2, g2, b2); conv weights HWIO (3, 3, Cin, Cout),
    BN gamma/beta shaped (1, C)."""
    w1, g1, b1, w2, g2, b2 = params
    N, C, H, W = x_nchw.shape
    if not (w1.shape == (3, 3, C, C) and w2.shape == (3, 3, C, C)):
        # The residual add in forward() silently requires in_planes == out_planes.
        raise ValueError("ResnetBasicBlock residual requires in_planes == out_planes "
                         f"(got x channels {C}, w1 {w1.shape}, w2 {w2.shape})")
    # TODO(synk): BatchNorm2d running-mean/var buffer updates (stateful training
    # bookkeeping) are not modeled; they do not affect the forward value.

    x = jnp.transpose(x_nchw, (0, 2, 3, 1)).astype(jnp.float32)        # NHWC f32 residual
    # Activations are cast to bf16 ONCE here; all cross-kernel activation
    # traffic (xpad, y1, y2) is bf16, accumulation/statistics stay f32.
    xpad = jnp.pad(x.astype(jnp.bfloat16), ((0, 0), (1, 1), (1, 1), (0, 0)))
    w1m = w1.astype(jnp.bfloat16).reshape(9, C, C)      # tap t = dh*3+dw -> (Cin, Cout)
    w2m = w2.astype(jnp.bfloat16).reshape(9, C, C)
    count = N * H * W
    B = _choose_batch_block(N, H, W, C, C, _vmem_budget_bytes())

    # conv1 (+ per-step BN partial stats from the f32 accumulator)
    y1, s1 = _conv1(xpad, w1m, B)                                      # (N,H,W,C) bf16
    scale1, shift1 = _bn_scale_shift(s1, g1, b1, count)
    # bn1 + elu1 fused into conv2's input path (+ per-step BN partial stats)
    y2, s2 = _conv2(y1, scale1, shift1, w2m, B)                        # (N,H*W,C) bf16
    scale2, shift2 = _bn_scale_shift(s2, g2, b2, count)
    # bn2 + residual (kept f32) + elu2
    out = _bn_add_elu(y2, x.reshape(N, H * W, C), scale2, shift2, B)   # (N,H*W,C) f32

    return jnp.transpose(out.reshape(N, H, W, C), (0, 3, 1, 2))        # NCHW


# ----------------------------------------------------------------------------
# Pure-JAX reference mirroring the kernel numerics: bf16 conv operands, f32
# accumulation, BN statistics from the f32 conv output, BN affine applied to
# the bf16-stored conv output (as the Pallas pipeline does).
# ----------------------------------------------------------------------------
def _reference(x_nchw, params):
    w1, g1, b1, w2, g2, b2 = params
    x = jnp.transpose(x_nchw, (0, 2, 3, 1)).astype(jnp.float32)

    def conv(v, w):
        return jax.lax.conv_general_dilated(
            v.astype(jnp.bfloat16), w.astype(jnp.bfloat16),
            window_strides=(1, 1), padding="SAME",
            dimension_numbers=("NHWC", "HWIO", "NHWC"),
            preferred_element_type=jnp.float32)

    def bn_affine(y, g, b):
        mean = jnp.mean(y, axis=(0, 1, 2), keepdims=True)
        var = jnp.mean((y - mean) ** 2, axis=(0, 1, 2), keepdims=True)
        scale = g * jax.lax.rsqrt(var + _EPS)
        shift = b - mean * scale
        y_bf16 = y.astype(jnp.bfloat16).astype(jnp.float32)   # storage rounding
        return scale * y_bf16 + shift

    elu = lambda v: jnp.where(v > 0, v, jnp.expm1(v))
    h = elu(bn_affine(conv(x, w1), g1, b1))
    o = elu(bn_affine(conv(h, w2), g2, b2) + x)
    return jnp.transpose(o, (0, 3, 1, 2))


if __name__ == "__main__":
    # Small shapes consistent with the module; in_planes == out_planes is
    # required by the residual add in the original forward().
    N, C, H, W = 2, 4, 16, 16
    key = jax.random.PRNGKey(0)
    ks = jax.random.split(key, 7)

    x = jax.random.normal(ks[0], (N, C, H, W), jnp.float32)
    # Synthetic parameters (shapes from __init__): conv weights HWIO, BN (1, C).
    w1 = 0.1 * jax.random.normal(ks[1], (3, 3, C, C), jnp.float32)
    w2 = 0.1 * jax.random.normal(ks[2], (3, 3, C, C), jnp.float32)
    g1 = 1.0 + 0.1 * jax.random.normal(ks[3], (1, C), jnp.float32)
    b1 = 0.1 * jax.random.normal(ks[4], (1, C), jnp.float32)
    g2 = 1.0 + 0.1 * jax.random.normal(ks[5], (1, C), jnp.float32)
    b2 = 0.1 * jax.random.normal(ks[6], (1, C), jnp.float32)
    params = (w1, g1, b1, w2, g2, b2)

    out = jax.block_until_ready(resnet_basic_block(x, params))
    ref = jax.block_until_ready(_reference(x, params))
    # bf16 storage of the pre-BN conv outputs bounds the deviation at ~one
    # bf16 ULP amplified by the BN scale (<~1e-2 worst case); typical error is
    # ~1e-6 because the reference mirrors the same roundings.
    np.testing.assert_allclose(np.asarray(out), np.asarray(ref),
                               rtol=2e-2, atol=2e-2)
    print("KERNEL_OK")
</pallas_src>

<mosaic_0001>
module attributes {stable_mosaic.version = 11 : i64} {
  func.func @_conv1_kernel(%arg0: i32, %arg1: memref<1x18x18x4xbf16, #tpu.memory_space<vmem>>, %arg2: memref<9x4x4xbf16, #tpu.memory_space<vmem>>, %arg3: memref<1x16x16x4xbf16, #tpu.memory_space<vmem>>, %arg4: memref<1x2x4xf32, #tpu.memory_space<vmem>>) attributes {dimension_semantics = [#tpu.dimension_semantics<parallel>], iteration_bounds = array<i64: 2>, scalar_prefetch = 0 : i64, scratch_operands = 0 : i64, tpu.core_type = #tpu.core_type<tc>, window_params = [{transform_indices = @transform_0, window_bounds = array<i64: 1, 18, 18, 4>}, {pipeline_mode = #tpu.pipeline_mode<synchronous>, transform_indices = @transform_1, window_bounds = array<i64: 9, 4, 4>}, {transform_indices = @transform_2, window_bounds = array<i64: 1, 16, 16, 4>}, {transform_indices = @transform_3, window_bounds = array<i64: 1, 2, 4>}]} {
    %c0 = arith.constant 0 : index
    %c0_0 = arith.constant 0 : index
    %c0_1 = arith.constant 0 : index
    %c0_2 = arith.constant 0 : index
    %0 = vector.load %arg1[%c0, %c0_0, %c0_1, %c0_2] : memref<1x18x18x4xbf16, #tpu.memory_space<vmem>>, vector<1x16x16x4xbf16>
    %1 = vector.shape_cast %0 : vector<1x16x16x4xbf16> to vector<256x4xbf16>
    %c0_3 = arith.constant 0 : index
    %c0_4 = arith.constant 0 : index
    %c0_5 = arith.constant 0 : index
    %2 = vector.load %arg2[%c0_3, %c0_4, %c0_5] : memref<9x4x4xbf16, #tpu.memory_space<vmem>>, vector<1x4x4xbf16>
    %3 = vector.shape_cast %2 : vector<1x4x4xbf16> to vector<4x4xbf16>
    %cst = arith.constant dense<0.000000e+00> : vector<256x4xf32>
    %4 = tpu.matmul %1, %3, %cst {dimension_numbers = #tpu.dot_dimension_numbers<[1], [0], [0], [1], [0, 0, 1, 1], [], []>} : vector<256x4xbf16>, vector<4x4xbf16>, vector<256x4xf32> -> vector<256x4xf32>
    %c0_6 = arith.constant 0 : index
    %c0_7 = arith.constant 0 : index
    %c1 = arith.constant 1 : index
    %c0_8 = arith.constant 0 : index
    %5 = vector.load %arg1[%c0_6, %c0_7, %c1, %c0_8] : memref<1x18x18x4xbf16, #tpu.memory_space<vmem>>, vector<1x16x16x4xbf16>
    %6 = vector.shape_cast %5 : vector<1x16x16x4xbf16> to vector<256x4xbf16>
    %c1_9 = arith.constant 1 : index
    %c0_10 = arith.constant 0 : index
    %c0_11 = arith.constant 0 : index
    %7 = vector.load %arg2[%c1_9, %c0_10, %c0_11] : memref<9x4x4xbf16, #tpu.memory_space<vmem>>, vector<1x4x4xbf16>
    %8 = vector.shape_cast %7 : vector<1x4x4xbf16> to vector<4x4xbf16>
    %cst_12 = arith.constant dense<0.000000e+00> : vector<256x4xf32>
    %9 = tpu.matmul %6, %8, %cst_12 {dimension_numbers = #tpu.dot_dimension_numbers<[1], [0], [0], [1], [0, 0, 1, 1], [], []>} : vector<256x4xbf16>, vector<4x4xbf16>, vector<256x4xf32> -> vector<256x4xf32>
    %10 = arith.addf %4, %9 : vector<256x4xf32>
    %c0_13 = arith.constant 0 : index
    %c0_14 = arith.constant 0 : index
    %c2 = arith.constant 2 : index
    %c0_15 = arith.constant 0 : index
    %11 = vector.load %arg1[%c0_13, %c0_14, %c2, %c0_15] : memref<1x18x18x4xbf16, #tpu.memory_space<vmem>>, vector<1x16x16x4xbf16>
    %12 = vector.shape_cast %11 : vector<1x16x16x4xbf16> to vector<256x4xbf16>
    %c2_16 = arith.constant 2 : index
    %c0_17 = arith.constant 0 : index
    %c0_18 = arith.constant 0 : index
    %13 = vector.load %arg2[%c2_16, %c0_17, %c0_18] : memref<9x4x4xbf16, #tpu.memory_space<vmem>>, vector<1x4x4xbf16>
    %14 = vector.shape_cast %13 : vector<1x4x4xbf16> to vector<4x4xbf16>
    %cst_19 = arith.constant dense<0.000000e+00> : vector<256x4xf32>
    %15 = tpu.matmul %12, %14, %cst_19 {dimension_numbers = #tpu.dot_dimension_numbers<[1], [0], [0], [1], [0, 0, 1, 1], [], []>} : vector<256x4xbf16>, vector<4x4xbf16>, vector<256x4xf32> -> vector<256x4xf32>
    %16 = arith.addf %10, %15 : vector<256x4xf32>
    %c0_20 = arith.constant 0 : index
    %c1_21 = arith.constant 1 : index
    %c0_22 = arith.constant 0 : index
    %c0_23 = arith.constant 0 : index
    %17 = vector.load %arg1[%c0_20, %c1_21, %c0_22, %c0_23] : memref<1x18x18x4xbf16, #tpu.memory_space<vmem>>, vector<1x16x16x4xbf16>
    %18 = vector.shape_cast %17 : vector<1x16x16x4xbf16> to vector<256x4xbf16>
    %c3 = arith.constant 3 : index
    %c0_24 = arith.constant 0 : index
    %c0_25 = arith.constant 0 : index
    %19 = vector.load %arg2[%c3, %c0_24, %c0_25] : memref<9x4x4xbf16, #tpu.memory_space<vmem>>, vector<1x4x4xbf16>
    %20 = vector.shape_cast %19 : vector<1x4x4xbf16> to vector<4x4xbf16>
    %cst_26 = arith.constant dense<0.000000e+00> : vector<256x4xf32>
    %21 = tpu.matmul %18, %20, %cst_26 {dimension_numbers = #tpu.dot_dimension_numbers<[1], [0], [0], [1], [0, 0, 1, 1], [], []>} : vector<256x4xbf16>, vector<4x4xbf16>, vector<256x4xf32> -> vector<256x4xf32>
    %22 = arith.addf %16, %21 : vector<256x4xf32>
    %c0_27 = arith.constant 0 : index
    %c1_28 = arith.constant 1 : index
    %c1_29 = arith.constant 1 : index
    %c0_30 = arith.constant 0 : index
    %23 = vector.load %arg1[%c0_27, %c1_28, %c1_29, %c0_30] : memref<1x18x18x4xbf16, #tpu.memory_space<vmem>>, vector<1x16x16x4xbf16>
    %24 = vector.shape_cast %23 : vector<1x16x16x4xbf16> to vector<256x4xbf16>
    %c4 = arith.constant 4 : index
    %c0_31 = arith.constant 0 : index
    %c0_32 = arith.constant 0 : index
    %25 = vector.load %arg2[%c4, %c0_31, %c0_32] : memref<9x4x4xbf16, #tpu.memory_space<vmem>>, vector<1x4x4xbf16>
    %26 = vector.shape_cast %25 : vector<1x4x4xbf16> to vector<4x4xbf16>
    %cst_33 = arith.constant dense<0.000000e+00> : vector<256x4xf32>
    %27 = tpu.matmul %24, %26, %cst_33 {dimension_numbers = #tpu.dot_dimension_numbers<[1], [0], [0], [1], [0, 0, 1, 1], [], []>} : vector<256x4xbf16>, vector<4x4xbf16>, vector<256x4xf32> -> vector<256x4xf32>
    %28 = arith.addf %22, %27 : vector<256x4xf32>
    %c0_34 = arith.constant 0 : index
    %c1_35 = arith.constant 1 : index
    %c2_36 = arith.constant 2 : index
    %c0_37 = arith.constant 0 : index
    %29 = vector.load %arg1[%c0_34, %c1_35, %c2_36, %c0_37] : memref<1x18x18x4xbf16, #tpu.memory_space<vmem>>, vector<1x16x16x4xbf16>
    %30 = vector.shape_cast %29 : vector<1x16x16x4xbf16> to vector<256x4xbf16>
    %c5 = arith.constant 5 : index
    %c0_38 = arith.constant 0 : index
    %c0_39 = arith.constant 0 : index
    %31 = vector.load %arg2[%c5, %c0_38, %c0_39] : memref<9x4x4xbf16, #tpu.memory_space<vmem>>, vector<1x4x4xbf16>
    %32 = vector.shape_cast %31 : vector<1x4x4xbf16> to vector<4x4xbf16>
    %cst_40 = arith.constant dense<0.000000e+00> : vector<256x4xf32>
    %33 = tpu.matmul %30, %32, %cst_40 {dimension_numbers = #tpu.dot_dimension_numbers<[1], [0], [0], [1], [0, 0, 1, 1], [], []>} : vector<256x4xbf16>, vector<4x4xbf16>, vector<256x4xf32> -> vector<256x4xf32>
    %34 = arith.addf %28, %33 : vector<256x4xf32>
    %c0_41 = arith.constant 0 : index
    %c2_42 = arith.constant 2 : index
    %c0_43 = arith.constant 0 : index
    %c0_44 = arith.constant 0 : index
    %35 = vector.load %arg1[%c0_41, %c2_42, %c0_43, %c0_44] : memref<1x18x18x4xbf16, #tpu.memory_space<vmem>>, vector<1x16x16x4xbf16>
    %36 = vector.shape_cast %35 : vector<1x16x16x4xbf16> to vector<256x4xbf16>
    %c6 = arith.constant 6 : index
    %c0_45 = arith.constant 0 : index
    %c0_46 = arith.constant 0 : index
    %37 = vector.load %arg2[%c6, %c0_45, %c0_46] : memref<9x4x4xbf16, #tpu.memory_space<vmem>>, vector<1x4x4xbf16>
    %38 = vector.shape_cast %37 : vector<1x4x4xbf16> to vector<4x4xbf16>
    %cst_47 = arith.constant dense<0.000000e+00> : vector<256x4xf32>
    %39 = tpu.matmul %36, %38, %cst_47 {dimension_numbers = #tpu.dot_dimension_numbers<[1], [0], [0], [1], [0, 0, 1, 1], [], []>} : vector<256x4xbf16>, vector<4x4xbf16>, vector<256x4xf32> -> vector<256x4xf32>
    %40 = arith.addf %34, %39 : vector<256x4xf32>
    %c0_48 = arith.constant 0 : index
    %c2_49 = arith.constant 2 : index
    %c1_50 = arith.constant 1 : index
    %c0_51 = arith.constant 0 : index
    %41 = vector.load %arg1[%c0_48, %c2_49, %c1_50, %c0_51] : memref<1x18x18x4xbf16, #tpu.memory_space<vmem>>, vector<1x16x16x4xbf16>
    %42 = vector.shape_cast %41 : vector<1x16x16x4xbf16> to vector<256x4xbf16>
    %c7 = arith.constant 7 : index
    %c0_52 = arith.constant 0 : index
    %c0_53 = arith.constant 0 : index
    %43 = vector.load %arg2[%c7, %c0_52, %c0_53] : memref<9x4x4xbf16, #tpu.memory_space<vmem>>, vector<1x4x4xbf16>
    %44 = vector.shape_cast %43 : vector<1x4x4xbf16> to vector<4x4xbf16>
    %cst_54 = arith.constant dense<0.000000e+00> : vector<256x4xf32>
    %45 = tpu.matmul %42, %44, %cst_54 {dimension_numbers = #tpu.dot_dimension_numbers<[1], [0], [0], [1], [0, 0, 1, 1], [], []>} : vector<256x4xbf16>, vector<4x4xbf16>, vector<256x4xf32> -> vector<256x4xf32>
    %46 = arith.addf %40, %45 : vector<256x4xf32>
    %c0_55 = arith.constant 0 : index
    %c2_56 = arith.constant 2 : index
    %c2_57 = arith.constant 2 : index
    %c0_58 = arith.constant 0 : index
    %47 = vector.load %arg1[%c0_55, %c2_56, %c2_57, %c0_58] : memref<1x18x18x4xbf16, #tpu.memory_space<vmem>>, vector<1x16x16x4xbf16>
    %48 = vector.shape_cast %47 : vector<1x16x16x4xbf16> to vector<256x4xbf16>
    %c8 = arith.constant 8 : index
    %c0_59 = arith.constant 0 : index
    %c0_60 = arith.constant 0 : index
    %49 = vector.load %arg2[%c8, %c0_59, %c0_60] : memref<9x4x4xbf16, #tpu.memory_space<vmem>>, vector<1x4x4xbf16>
    %50 = vector.shape_cast %49 : vector<1x4x4xbf16> to vector<4x4xbf16>
    %cst_61 = arith.constant dense<0.000000e+00> : vector<256x4xf32>
    %51 = tpu.matmul %48, %50, %cst_61 {dimension_numbers = #tpu.dot_dimension_numbers<[1], [0], [0], [1], [0, 0, 1, 1], [], []>} : vector<256x4xbf16>, vector<4x4xbf16>, vector<256x4xf32> -> vector<256x4xf32>
    %52 = arith.addf %46, %51 : vector<256x4xf32>
    %cst_62 = arith.constant dense<0.000000e+00> : vector<4xf32>
    %53 = vector.multi_reduction <add>, %52, %cst_62 [0] : vector<256x4xf32> to vector<4xf32>
    %54 = vector.shape_cast %53 : vector<4xf32> to vector<1x4xf32>
    %c0_63 = arith.constant 0 : index
    %c0_64 = arith.constant 0 : index
    %c0_65 = arith.constant 0 : index
    %55 = vector.load %arg4[%c0_63, %c0_64, %c0_65] : memref<1x2x4xf32, #tpu.memory_space<vmem>>, vector<1x1x4xf32>
    %56 = vector.shape_cast %55 : vector<1x1x4xf32> to vector<1x4xf32>
    %57 = vector.shape_cast %54 : vector<1x4xf32> to vector<1x1x4xf32>
    tpu.vector_store %arg4[%c0_63, %c0_64, %c0_65], %57 {strides = array<i32>} : memref<1x2x4xf32, #tpu.memory_space<vmem>>, vector<1x1x4xf32>,
    %58 = arith.mulf %52, %52 : vector<256x4xf32>
    %cst_66 = arith.constant dense<0.000000e+00> : vector<4xf32>
    %59 = vector.multi_reduction <add>, %58, %cst_66 [0] : vector<256x4xf32> to vector<4xf32>
    %60 = vector.shape_cast %59 : vector<4xf32> to vector<1x4xf32>
    %c0_67 = arith.constant 0 : index
    %c1_68 = arith.constant 1 : index
    %c0_69 = arith.constant 0 : index
    %61 = vector.load %arg4[%c0_67, %c1_68, %c0_69] : memref<1x2x4xf32, #tpu.memory_space<vmem>>, vector<1x1x4xf32>
    %62 = vector.shape_cast %61 : vector<1x1x4xf32> to vector<1x4xf32>
    %63 = vector.shape_cast %60 : vector<1x4xf32> to vector<1x1x4xf32>
    tpu.vector_store %arg4[%c0_67, %c1_68, %c0_69], %63 {strides = array<i32>} : memref<1x2x4xf32, #tpu.memory_space<vmem>>, vector<1x1x4xf32>,
    %64 = vector.shape_cast %52 : vector<256x4xf32> to vector<1x16x16x4xf32>
    %65 = arith.truncf %64 : vector<1x16x16x4xf32> to vector<1x16x16x4xbf16>
    %c0_70 = arith.constant 0 : index
    %c0_71 = arith.constant 0 : index
    %c0_72 = arith.constant 0 : index
    %c0_73 = arith.constant 0 : index
    %66 = vector.load %arg3[%c0_70, %c0_71, %c0_72, %c0_73] : memref<1x16x16x4xbf16, #tpu.memory_space<vmem>>, vector<1x16x16x4xbf16>
    tpu.vector_store %arg3[%c0_70, %c0_71, %c0_72, %c0_73], %65 {strides = array<i32>} : memref<1x16x16x4xbf16, #tpu.memory_space<vmem>>, vector<1x16x16x4xbf16>,
    return
  }
  func.func @transform_0(%arg0: i32) -> (i32, i32, i32, i32) {
    %c0_i32 = arith.constant 0 : i32
    %c0_i32_0 = arith.constant 0 : i32
    %c0_i32_1 = arith.constant 0 : i32
    %c0_i32_2 = arith.constant 0 : i32
    return %arg0, %c0_i32, %c0_i32_0, %c0_i32_1 : i32, i32, i32, i32
  }
  func.func @transform_1(%arg0: i32) -> (i32, i32, i32) {
    %c0_i32 = arith.constant 0 : i32
    %c0_i32_0 = arith.constant 0 : i32
    %c0_i32_1 = arith.constant 0 : i32
    %c0_i32_2 = arith.constant 0 : i32
    return %c0_i32, %c0_i32_0, %c0_i32_1 : i32, i32, i32
  }
  func.func @transform_2(%arg0: i32) -> (i32, i32, i32, i32) {
    %c0_i32 = arith.constant 0 : i32
    %c0_i32_0 = arith.constant 0 : i32
    %c0_i32_1 = arith.constant 0 : i32
    %c0_i32_2 = arith.constant 0 : i32
    return %arg0, %c0_i32, %c0_i32_0, %c0_i32_1 : i32, i32, i32, i32
  }
  func.func @transform_3(%arg0: i32) -> (i32, i32, i32) {
    %c0_i32 = arith.constant 0 : i32
    %c0_i32_0 = arith.constant 0 : i32
    %c0_i32_1 = arith.constant 0 : i32
    return %arg0, %c0_i32, %c0_i32_0 : i32, i32, i32
  }
}

module attributes {stable_mosaic.version = 11 : i64} {
  func.func @_bn_add_elu_kernel(%arg0: i32, %arg1: memref<1x256x4xbf16, #tpu.memory_space<vmem>>, %arg2: memref<1x256x4xf32, #tpu.memory_space<vmem>>, %arg3: memref<1x4xf32, #tpu.memory_space<vmem>>, %arg4: memref<1x4xf32, #tpu.memory_space<vmem>>, %arg5: memref<1x256x4xf32, #tpu.memory_space<vmem>>) attributes {dimension_semantics = [#tpu.dimension_semantics<parallel>], iteration_bounds = array<i64: 2>, scalar_prefetch = 0 : i64, scratch_operands = 0 : i64, tpu.core_type = #tpu.core_type<tc>, window_params = [{transform_indices = @transform_0, window_bounds = array<i64: 1, 256, 4>}, {transform_indices = @transform_1, window_bounds = array<i64: 1, 256, 4>}, {pipeline_mode = #tpu.pipeline_mode<synchronous>, transform_indices = @transform_2, window_bounds = array<i64: 1, 4>}, {pipeline_mode = #tpu.pipeline_mode<synchronous>, transform_indices = @transform_3, window_bounds = array<i64: 1, 4>}, {transform_indices = @transform_4, window_bounds = array<i64: 1, 256, 4>}]} {
    %c0 = arith.constant 0 : index
    %c0_0 = arith.constant 0 : index
    %0 = vector.load %arg3[%c0, %c0_0] : memref<1x4xf32, #tpu.memory_space<vmem>>, vector<1x4xf32>
    %c0_1 = arith.constant 0 : index
    %c0_2 = arith.constant 0 : index
    %c0_3 = arith.constant 0 : index
    %1 = vector.load %arg1[%c0_1, %c0_2, %c0_3] : memref<1x256x4xbf16, #tpu.memory_space<vmem>>, vector<1x256x4xbf16>
    %2 = arith.extf %1 : vector<1x256x4xbf16> to vector<1x256x4xf32>
    %3 = vector.shape_cast %0 : vector<1x4xf32> to vector<1x1x4xf32>
    %4 = vector.broadcast %3 : vector<1x1x4xf32> to vector<1x256x4xf32>
    %5 = arith.mulf %4, %2 : vector<1x256x4xf32>
    %c0_4 = arith.constant 0 : index
    %c0_5 = arith.constant 0 : index
    %6 = vector.load %arg4[%c0_4, %c0_5] : memref<1x4xf32, #tpu.memory_space<vmem>>, vector<1x4xf32>
    %7 = vector.shape_cast %6 : vector<1x4xf32> to vector<1x1x4xf32>
    %8 = vector.broadcast %7 : vector<1x1x4xf32> to vector<1x256x4xf32>
    %9 = arith.addf %5, %8 : vector<1x256x4xf32>
    %c0_6 = arith.constant 0 : index
    %c0_7 = arith.constant 0 : index
    %c0_8 = arith.constant 0 : index
    %10 = vector.load %arg2[%c0_6, %c0_7, %c0_8] : memref<1x256x4xf32, #tpu.memory_space<vmem>>, vector<1x256x4xf32>
    %11 = arith.addf %9, %10 : vector<1x256x4xf32>
    %cst = arith.constant 0.000000e+00 : f32
    %12 = vector.broadcast %cst : f32 to vector<1x256x4xf32>
    %13 = arith.cmpf ogt, %11, %12 : vector<1x256x4xf32>
    %cst_9 = arith.constant 0.000000e+00 : f32
    %14 = vector.broadcast %cst_9 : f32 to vector<1x256x4xf32>
    %15 = arith.minimumf %11, %14 : vector<1x256x4xf32>
    %16 = math.exp %15 : vector<1x256x4xf32>
    %cst_10 = arith.constant 1.000000e+00 : f32
    %17 = vector.broadcast %cst_10 : f32 to vector<1x256x4xf32>
    %18 = arith.subf %16, %17 : vector<1x256x4xf32>
    %19 = arith.select %13, %11, %18 : vector<1x256x4xi1>, vector<1x256x4xf32>
    %c0_11 = arith.constant 0 : index
    %c0_12 = arith.constant 0 : index
    %c0_13 = arith.constant 0 : index
    %20 = vector.load %arg5[%c0_11, %c0_12, %c0_13] : memref<1x256x4xf32, #tpu.memory_space<vmem>>, vector<1x256x4xf32>
    tpu.vector_store %arg5[%c0_11, %c0_12, %c0_13], %19 {strides = array<i32>} : memref<1x256x4xf32, #tpu.memory_space<vmem>>, vector<1x256x4xf32>,
    return
  }
  func.func @transform_0(%arg0: i32) -> (i32, i32, i32) {
    %c0_i32 = arith.constant 0 : i32
    %c0_i32_0 = arith.constant 0 : i32
    %c0_i32_1 = arith.constant 0 : i32
    return %arg0, %c0_i32, %c0_i32_0 : i32, i32, i32
  }
  func.func @transform_1(%arg0: i32) -> (i32, i32, i32) {
    %c0_i32 = arith.constant 0 : i32
    %c0_i32_0 = arith.constant 0 : i32
    %c0_i32_1 = arith.constant 0 : i32
    return %arg0, %c0_i32, %c0_i32_0 : i32, i32, i32
  }
  func.func @transform_2(%arg0: i32) -> (i32, i32) {
    %c0_i32 = arith.constant 0 : i32
    %c0_i32_0 = arith.constant 0 : i32
    %c0_i32_1 = arith.constant 0 : i32
    return %c0_i32, %c0_i32_0 : i32, i32
  }
  func.func @transform_3(%arg0: i32) -> (i32, i32) {
    %c0_i32 = arith.constant 0 : i32
    %c0_i32_0 = arith.constant 0 : i32
    %c0_i32_1 = arith.constant 0 : i32
    return %c0_i32, %c0_i32_0 : i32, i32
  }
  func.func @transform_4(%arg0: i32) -> (i32, i32, i32) {
    %c0_i32 = arith.constant 0 : i32
    %c0_i32_0 = arith.constant 0 : i32
    %c0_i32_1 = arith.constant 0 : i32
    return %arg0, %c0_i32, %c0_i32_0 : i32, i32, i32
  }
}

module attributes {stable_mosaic.version = 11 : i64} {
  func.func @_bn_elu_conv2_kernel(%arg0: i32, %arg1: memref<1x16x16x4xbf16, #tpu.memory_space<vmem>>, %arg2: memref<1x4xf32, #tpu.memory_space<vmem>>, %arg3: memref<1x4xf32, #tpu.memory_space<vmem>>, %arg4: memref<9x4x4xbf16, #tpu.memory_space<vmem>>, %arg5: memref<1x256x4xbf16, #tpu.memory_space<vmem>>, %arg6: memref<1x2x4xf32, #tpu.memory_space<vmem>>, %arg7: memref<1x18x18x4xbf16, #tpu.memory_space<vmem>>) attributes {dimension_semantics = [#tpu.dimension_semantics<parallel>], iteration_bounds = array<i64: 2>, scalar_prefetch = 0 : i64, scratch_operands = 1 : i64, tpu.core_type = #tpu.core_type<tc>, window_params = [{transform_indices = @transform_0, window_bounds = array<i64: 1, 16, 16, 4>}, {pipeline_mode = #tpu.pipeline_mode<synchronous>, transform_indices = @transform_1, window_bounds = array<i64: 1, 4>}, {pipeline_mode = #tpu.pipeline_mode<synchronous>, transform_indices = @transform_2, window_bounds = array<i64: 1, 4>}, {pipeline_mode = #tpu.pipeline_mode<synchronous>, transform_indices = @transform_3, window_bounds = array<i64: 9, 4, 4>}, {transform_indices = @transform_4, window_bounds = array<i64: 1, 256, 4>}, {transform_indices = @transform_5, window_bounds = array<i64: 1, 2, 4>}]} {
    %c0 = arith.constant 0 : index
    %c0_0 = arith.constant 0 : index
    %0 = vector.load %arg2[%c0, %c0_0] : memref<1x4xf32, #tpu.memory_space<vmem>>, vector<1x4xf32>
    %1 = vector.shape_cast %0 : vector<1x4xf32> to vector<1x1x1x4xf32>
    %c0_1 = arith.constant 0 : index
    %c0_2 = arith.constant 0 : index
    %2 = vector.load %arg3[%c0_1, %c0_2] : memref<1x4xf32, #tpu.memory_space<vmem>>, vector<1x4xf32>
    %3 = vector.shape_cast %2 : vector<1x4xf32> to vector<1x1x1x4xf32>
    %c0_3 = arith.constant 0 : index
    %c0_4 = arith.constant 0 : index
    %c0_5 = arith.constant 0 : index
    %c0_6 = arith.constant 0 : index
    %4 = vector.load %arg1[%c0_3, %c0_4, %c0_5, %c0_6] : memref<1x16x16x4xbf16, #tpu.memory_space<vmem>>, vector<1x16x16x4xbf16>
    %5 = arith.extf %4 : vector<1x16x16x4xbf16> to vector<1x16x16x4xf32>
    %6 = vector.broadcast %1 : vector<1x1x1x4xf32> to vector<1x16x16x4xf32>
    %7 = arith.mulf %6, %5 : vector<1x16x16x4xf32>
    %8 = vector.broadcast %3 : vector<1x1x1x4xf32> to vector<1x16x16x4xf32>
    %9 = arith.addf %7, %8 : vector<1x16x16x4xf32>
    %cst = arith.constant 0.000000e+00 : f32
    %10 = vector.broadcast %cst : f32 to vector<1x16x16x4xf32>
    %11 = arith.cmpf ogt, %9, %10 : vector<1x16x16x4xf32>
    %cst_7 = arith.constant 0.000000e+00 : f32
    %12 = vector.broadcast %cst_7 : f32 to vector<1x16x16x4xf32>
    %13 = arith.minimumf %9, %12 : vector<1x16x16x4xf32>
    %14 = math.exp %13 : vector<1x16x16x4xf32>
    %cst_8 = arith.constant 1.000000e+00 : f32
    %15 = vector.broadcast %cst_8 : f32 to vector<1x16x16x4xf32>
    %16 = arith.subf %14, %15 : vector<1x16x16x4xf32>
    %17 = arith.select %11, %9, %16 : vector<1x16x16x4xi1>, vector<1x16x16x4xf32>
    %cst_9 = arith.constant 0.000000e+00 : bf16
    %18 = vector.broadcast %cst_9 : bf16 to vector<1x1x18x4xbf16>
    %cst_10 = arith.constant 0.000000e+00 : bf16
    %19 = vector.broadcast %cst_10 : bf16 to vector<1x18x1x4xbf16>
    %c0_11 = arith.constant 0 : index
    %c0_12 = arith.constant 0 : index
    %c0_13 = arith.constant 0 : index
    %c0_14 = arith.constant 0 : index
    %20 = vector.load %arg7[%c0_11, %c0_12, %c0_13, %c0_14] : memref<1x18x18x4xbf16, #tpu.memory_space<vmem>>, vector<1x1x18x4xbf16>
    tpu.vector_store %arg7[%c0_11, %c0_12, %c0_13, %c0_14], %18 {strides = array<i32>} : memref<1x18x18x4xbf16, #tpu.memory_space<vmem>>, vector<1x1x18x4xbf16>,
    %c0_15 = arith.constant 0 : index
    %c17 = arith.constant 17 : index
    %c0_16 = arith.constant 0 : index
    %c0_17 = arith.constant 0 : index
    %21 = vector.load %arg7[%c0_15, %c17, %c0_16, %c0_17] : memref<1x18x18x4xbf16, #tpu.memory_space<vmem>>, vector<1x1x18x4xbf16>
    tpu.vector_store %arg7[%c0_15, %c17, %c0_16, %c0_17], %18 {strides = array<i32>} : memref<1x18x18x4xbf16, #tpu.memory_space<vmem>>, vector<1x1x18x4xbf16>,
    %c0_18 = arith.constant 0 : index
    %c0_19 = arith.constant 0 : index
    %c0_20 = arith.constant 0 : index
    %c0_21 = arith.constant 0 : index
    %22 = vector.load %arg7[%c0_18, %c0_19, %c0_20, %c0_21] : memref<1x18x18x4xbf16, #tpu.memory_space<vmem>>, vector<1x18x1x4xbf16>
    tpu.vector_store %arg7[%c0_18, %c0_19, %c0_20, %c0_21], %19 {strides = array<i32>} : memref<1x18x18x4xbf16, #tpu.memory_space<vmem>>, vector<1x18x1x4xbf16>,
    %c0_22 = arith.constant 0 : index
    %c0_23 = arith.constant 0 : index
    %c17_24 = arith.constant 17 : index
    %c0_25 = arith.constant 0 : index
    %23 = vector.load %arg7[%c0_22, %c0_23, %c17_24, %c0_25] : memref<1x18x18x4xbf16, #tpu.memory_space<vmem>>, vector<1x18x1x4xbf16>
    tpu.vector_store %arg7[%c0_22, %c0_23, %c17_24, %c0_25], %19 {strides = array<i32>} : memref<1x18x18x4xbf16, #tpu.memory_space<vmem>>, vector<1x18x1x4xbf16>,
    %24 = arith.truncf %17 : vector<1x16x16x4xf32> to vector<1x16x16x4xbf16>
    %c0_26 = arith.constant 0 : index
    %c1 = arith.constant 1 : index
    %c1_27 = arith.constant 1 : index
    %c0_28 = arith.constant 0 : index
    %25 = vector.load %arg7[%c0_26, %c1, %c1_27, %c0_28] : memref<1x18x18x4xbf16, #tpu.memory_space<vmem>>, vector<1x16x16x4xbf16>
    tpu.vector_store %arg7[%c0_26, %c1, %c1_27, %c0_28], %24 {strides = array<i32>} : memref<1x18x18x4xbf16, #tpu.memory_space<vmem>>, vector<1x16x16x4xbf16>,
    %c0_29 = arith.constant 0 : index
    %c0_30 = arith.constant 0 : index
    %c0_31 = arith.constant 0 : index
    %c0_32 = arith.constant 0 : index
    %26 = vector.load %arg7[%c0_29, %c0_30, %c0_31, %c0_32] : memref<1x18x18x4xbf16, #tpu.memory_space<vmem>>, vector<1x16x16x4xbf16>
    %27 = vector.shape_cast %26 : vector<1x16x16x4xbf16> to vector<256x4xbf16>
    %c0_33 = arith.constant 0 : index
    %c0_34 = arith.constant 0 : index
    %c0_35 = arith.constant 0 : index
    %28 = vector.load %arg4[%c0_33, %c0_34, %c0_35] : memref<9x4x4xbf16, #tpu.memory_space<vmem>>, vector<1x4x4xbf16>
    %29 = vector.shape_cast %28 : vector<1x4x4xbf16> to vector<4x4xbf16>
    %cst_36 = arith.constant dense<0.000000e+00> : vector<256x4xf32>
    %30 = tpu.matmul %27, %29, %cst_36 {dimension_numbers = #tpu.dot_dimension_numbers<[1], [0], [0], [1], [0, 0, 1, 1], [], []>} : vector<256x4xbf16>, vector<4x4xbf16>, vector<256x4xf32> -> vector<256x4xf32>
    %c0_37 = arith.constant 0 : index
    %c0_38 = arith.constant 0 : index
    %c1_39 = arith.constant 1 : index
    %c0_40 = arith.constant 0 : index
    %31 = vector.load %arg7[%c0_37, %c0_38, %c1_39, %c0_40] : memref<1x18x18x4xbf16, #tpu.memory_space<vmem>>, vector<1x16x16x4xbf16>
    %32 = vector.shape_cast %31 : vector<1x16x16x4xbf16> to vector<256x4xbf16>
    %c1_41 = arith.constant 1 : index
    %c0_42 = arith.constant 0 : index
    %c0_43 = arith.constant 0 : index
    %33 = vector.load %arg4[%c1_41, %c0_42, %c0_43] : memref<9x4x4xbf16, #tpu.memory_space<vmem>>, vector<1x4x4xbf16>
    %34 = vector.shape_cast %33 : vector<1x4x4xbf16> to vector<4x4xbf16>
    %cst_44 = arith.constant dense<0.000000e+00> : vector<256x4xf32>
    %35 = tpu.matmul %32, %34, %cst_44 {dimension_numbers = #tpu.dot_dimension_numbers<[1], [0], [0], [1], [0, 0, 1, 1], [], []>} : vector<256x4xbf16>, vector<4x4xbf16>, vector<256x4xf32> -> vector<256x4xf32>
    %36 = arith.addf %30, %35 : vector<256x4xf32>
    %c0_45 = arith.constant 0 : index
    %c0_46 = arith.constant 0 : index
    %c2 = arith.constant 2 : index
    %c0_47 = arith.constant 0 : index
    %37 = vector.load %arg7[%c0_45, %c0_46, %c2, %c0_47] : memref<1x18x18x4xbf16, #tpu.memory_space<vmem>>, vector<1x16x16x4xbf16>
    %38 = vector.shape_cast %37 : vector<1x16x16x4xbf16> to vector<256x4xbf16>
    %c2_48 = arith.constant 2 : index
    %c0_49 = arith.constant 0 : index
    %c0_50 = arith.constant 0 : index
    %39 = vector.load %arg4[%c2_48, %c0_49, %c0_50] : memref<9x4x4xbf16, #tpu.memory_space<vmem>>, vector<1x4x4xbf16>
    %40 = vector.shape_cast %39 : vector<1x4x4xbf16> to vector<4x4xbf16>
    %cst_51 = arith.constant dense<0.000000e+00> : vector<256x4xf32>
    %41 = tpu.matmul %38, %40, %cst_51 {dimension_numbers = #tpu.dot_dimension_numbers<[1], [0], [0], [1], [0, 0, 1, 1], [], []>} : vector<256x4xbf16>, vector<4x4xbf16>, vector<256x4xf32> -> vector<256x4xf32>
    %42 = arith.addf %36, %41 : vector<256x4xf32>
    %c0_52 = arith.constant 0 : index
    %c1_53 = arith.constant 1 : index
    %c0_54 = arith.constant 0 : index
    %c0_55 = arith.constant 0 : index
    %43 = vector.load %arg7[%c0_52, %c1_53, %c0_54, %c0_55] : memref<1x18x18x4xbf16, #tpu.memory_space<vmem>>, vector<1x16x16x4xbf16>
    %44 = vector.shape_cast %43 : vector<1x16x16x4xbf16> to vector<256x4xbf16>
    %c3 = arith.constant 3 : index
    %c0_56 = arith.constant 0 : index
    %c0_57 = arith.constant 0 : index
    %45 = vector.load %arg4[%c3, %c0_56, %c0_57] : memref<9x4x4xbf16, #tpu.memory_space<vmem>>, vector<1x4x4xbf16>
    %46 = vector.shape_cast %45 : vector<1x4x4xbf16> to vector<4x4xbf16>
    %cst_58 = arith.constant dense<0.000000e+00> : vector<256x4xf32>
    %47 = tpu.matmul %44, %46, %cst_58 {dimension_numbers = #tpu.dot_dimension_numbers<[1], [0], [0], [1], [0, 0, 1, 1], [], []>} : vector<256x4xbf16>, vector<4x4xbf16>, vector<256x4xf32> -> vector<256x4xf32>
    %48 = arith.addf %42, %47 : vector<256x4xf32>
    %c0_59 = arith.constant 0 : index
    %c1_60 = arith.constant 1 : index
    %c1_61 = arith.constant 1 : index
    %c0_62 = arith.constant 0 : index
    %49 = vector.load %arg7[%c0_59, %c1_60, %c1_61, %c0_62] : memref<1x18x18x4xbf16, #tpu.memory_space<vmem>>, vector<1x16x16x4xbf16>
    %50 = vector.shape_cast %49 : vector<1x16x16x4xbf16> to vector<256x4xbf16>
    %c4 = arith.constant 4 : index
    %c0_63 = arith.constant 0 : index
    %c0_64 = arith.constant 0 : index
    %51 = vector.load %arg4[%c4, %c0_63, %c0_64] : memref<9x4x4xbf16, #tpu.memory_space<vmem>>, vector<1x4x4xbf16>
    %52 = vector.shape_cast %51 : vector<1x4x4xbf16> to vector<4x4xbf16>
    %cst_65 = arith.constant dense<0.000000e+00> : vector<256x4xf32>
    %53 = tpu.matmul %50, %52, %cst_65 {dimension_numbers = #tpu.dot_dimension_numbers<[1], [0], [0], [1], [0, 0, 1, 1], [], []>} : vector<256x4xbf16>, vector<4x4xbf16>, vector<256x4xf32> -> vector<256x4xf32>
    %54 = arith.addf %48, %53 : vector<256x4xf32>
    %c0_66 = arith.constant 0 : index
    %c1_67 = arith.constant 1 : index
    %c2_68 = arith.constant 2 : index
    %c0_69 = arith.constant 0 : index
    %55 = vector.load %arg7[%c0_66, %c1_67, %c2_68, %c0_69] : memref<1x18x18x4xbf16, #tpu.memory_space<vmem>>, vector<1x16x16x4xbf16>
    %56 = vector.shape_cast %55 : vector<1x16x16x4xbf16> to vector<256x4xbf16>
    %c5 = arith.constant 5 : index
    %c0_70 = arith.constant 0 : index
    %c0_71 = arith.constant 0 : index
    %57 = vector.load %arg4[%c5, %c0_70, %c0_71] : memref<9x4x4xbf16, #tpu.memory_space<vmem>>, vector<1x4x4xbf16>
    %58 = vector.shape_cast %57 : vector<1x4x4xbf16> to vector<4x4xbf16>
    %cst_72 = arith.constant dense<0.000000e+00> : vector<256x4xf32>
    %59 = tpu.matmul %56, %58, %cst_72 {dimension_numbers = #tpu.dot_dimension_numbers<[1], [0], [0], [1], [0, 0, 1, 1], [], []>} : vector<256x4xbf16>, vector<4x4xbf16>, vector<256x4xf32> -> vector<256x4xf32>
    %60 = arith.addf %54, %59 : vector<256x4xf32>
    %c0_73 = arith.constant 0 : index
    %c2_74 = arith.constant 2 : index
    %c0_75 = arith.constant 0 : index
    %c0_76 = arith.constant 0 : index
    %61 = vector.load %arg7[%c0_73, %c2_74, %c0_75, %c0_76] : memref<1x18x18x4xbf16, #tpu.memory_space<vmem>>, vector<1x16x16x4xbf16>
    %62 = vector.shape_cast %61 : vector<1x16x16x4xbf16> to vector<256x4xbf16>
    %c6 = arith.constant 6 : index
    %c0_77 = arith.constant 0 : index
    %c0_78 = arith.constant 0 : index
    %63 = vector.load %arg4[%c6, %c0_77, %c0_78] : memref<9x4x4xbf16, #tpu.memory_space<vmem>>, vector<1x4x4xbf16>
    %64 = vector.shape_cast %63 : vector<1x4x4xbf16> to vector<4x4xbf16>
    %cst_79 = arith.constant dense<0.000000e+00> : vector<256x4xf32>
    %65 = tpu.matmul %62, %64, %cst_79 {dimension_numbers = #tpu.dot_dimension_numbers<[1], [0], [0], [1], [0, 0, 1, 1], [], []>} : vector<256x4xbf16>, vector<4x4xbf16>, vector<256x4xf32> -> vector<256x4xf32>
    %66 = arith.addf %60, %65 : vector<256x4xf32>
    %c0_80 = arith.constant 0 : index
    %c2_81 = arith.constant 2 : index
    %c1_82 = arith.constant 1 : index
    %c0_83 = arith.constant 0 : index
    %67 = vector.load %arg7[%c0_80, %c2_81, %c1_82, %c0_83] : memref<1x18x18x4xbf16, #tpu.memory_space<vmem>>, vector<1x16x16x4xbf16>
    %68 = vector.shape_cast %67 : vector<1x16x16x4xbf16> to vector<256x4xbf16>
    %c7 = arith.constant 7 : index
    %c0_84 = arith.constant 0 : index
    %c0_85 = arith.constant 0 : index
    %69 = vector.load %arg4[%c7, %c0_84, %c0_85] : memref<9x4x4xbf16, #tpu.memory_space<vmem>>, vector<1x4x4xbf16>
    %70 = vector.shape_cast %69 : vector<1x4x4xbf16> to vector<4x4xbf16>
    %cst_86 = arith.constant dense<0.000000e+00> : vector<256x4xf32>
    %71 = tpu.matmul %68, %70, %cst_86 {dimension_numbers = #tpu.dot_dimension_numbers<[1], [0], [0], [1], [0, 0, 1, 1], [], []>} : vector<256x4xbf16>, vector<4x4xbf16>, vector<256x4xf32> -> vector<256x4xf32>
    %72 = arith.addf %66, %71 : vector<256x4xf32>
    %c0_87 = arith.constant 0 : index
    %c2_88 = arith.constant 2 : index
    %c2_89 = arith.constant 2 : index
    %c0_90 = arith.constant 0 : index
    %73 = vector.load %arg7[%c0_87, %c2_88, %c2_89, %c0_90] : memref<1x18x18x4xbf16, #tpu.memory_space<vmem>>, vector<1x16x16x4xbf16>
    %74 = vector.shape_cast %73 : vector<1x16x16x4xbf16> to vector<256x4xbf16>
    %c8 = arith.constant 8 : index
    %c0_91 = arith.constant 0 : index
    %c0_92 = arith.constant 0 : index
    %75 = vector.load %arg4[%c8, %c0_91, %c0_92] : memref<9x4x4xbf16, #tpu.memory_space<vmem>>, vector<1x4x4xbf16>
    %76 = vector.shape_cast %75 : vector<1x4x4xbf16> to vector<4x4xbf16>
    %cst_93 = arith.constant dense<0.000000e+00> : vector<256x4xf32>
    %77 = tpu.matmul %74, %76, %cst_93 {dimension_numbers = #tpu.dot_dimension_numbers<[1], [0], [0], [1], [0, 0, 1, 1], [], []>} : vector<256x4xbf16>, vector<4x4xbf16>, vector<256x4xf32> -> vector<256x4xf32>
    %78 = arith.addf %72, %77 : vector<256x4xf32>
    %cst_94 = arith.constant dense<0.000000e+00> : vector<4xf32>
    %79 = vector.multi_reduction <add>, %78, %cst_94 [0] : vector<256x4xf32> to vector<4xf32>
    %80 = vector.shape_cast %79 : vector<4xf32> to vector<1x4xf32>
    %c0_95 = arith.constant 0 : index
    %c0_96 = arith.constant 0 : index
    %c0_97 = arith.constant 0 : index
    %81 = vector.load %arg6[%c0_95, %c0_96, %c0_97] : memref<1x2x4xf32, #tpu.memory_space<vmem>>, vector<1x1x4xf32>
    %82 = vector.shape_cast %81 : vector<1x1x4xf32> to vector<1x4xf32>
    %83 = vector.shape_cast %80 : vector<1x4xf32> to vector<1x1x4xf32>
    tpu.vector_store %arg6[%c0_95, %c0_96, %c0_97], %83 {strides = array<i32>} : memref<1x2x4xf32, #tpu.memory_space<vmem>>, vector<1x1x4xf32>,
    %84 = arith.mulf %78, %78 : vector<256x4xf32>
    %cst_98 = arith.constant dense<0.000000e+00> : vector<4xf32>
    %85 = vector.multi_reduction <add>, %84, %cst_98 [0] : vector<256x4xf32> to vector<4xf32>
    %86 = vector.shape_cast %85 : vector<4xf32> to vector<1x4xf32>
    %c0_99 = arith.constant 0 : index
    %c1_100 = arith.constant 1 : index
    %c0_101 = arith.constant 0 : index
    %87 = vector.load %arg6[%c0_99, %c1_100, %c0_101] : memref<1x2x4xf32, #tpu.memory_space<vmem>>, vector<1x1x4xf32>
    %88 = vector.shape_cast %87 : vector<1x1x4xf32> to vector<1x4xf32>
    %89 = vector.shape_cast %86 : vector<1x4xf32> to vector<1x1x4xf32>
    tpu.vector_store %arg6[%c0_99, %c1_100, %c0_101], %89 {strides = array<i32>} : memref<1x2x4xf32, #tpu.memory_space<vmem>>, vector<1x1x4xf32>,
    %90 = vector.shape_cast %78 : vector<256x4xf32> to vector<1x256x4xf32>
    %91 = arith.truncf %90 : vector<1x256x4xf32> to vector<1x256x4xbf16>
    %c0_102 = arith.constant 0 : index
    %c0_103 = arith.constant 0 : index
    %c0_104 = arith.constant 0 : index
    %92 = vector.load %arg5[%c0_102, %c0_103, %c0_104] : memref<1x256x4xbf16, #tpu.memory_space<vmem>>, vector<1x256x4xbf16>
    tpu.vector_store %arg5[%c0_102, %c0_103, %c0_104], %91 {strides = array<i32>} : memref<1x256x4xbf16, #tpu.memory_space<vmem>>, vector<1x256x4xbf16>,
    return
  }
  func.func @transform_0(%arg0: i32) -> (i32, i32, i32, i32) {
    %c0_i32 = arith.constant 0 : i32
    %c0_i32_0 = arith.constant 0 : i32
    %c0_i32_1 = arith.constant 0 : i32
    %c0_i32_2 = arith.constant 0 : i32
    return %arg0, %c0_i32, %c0_i32_0, %c0_i32_1 : i32, i32, i32, i32
  }
  func.func @transform_1(%arg0: i32) -> (i32, i32) {
    %c0_i32 = arith.constant 0 : i32
    %c0_i32_0 = arith.constant 0 : i32
    %c0_i32_1 = arith.constant 0 : i32
    return %c0_i32, %c0_i32_0 : i32, i32
  }
  func.func @transform_2(%arg0: i32) -> (i32, i32) {
    %c0_i32 = arith.constant 0 : i32
    %c0_i32_0 = arith.constant 0 : i32
    %c0_i32_1 = arith.constant 0 : i32
    return %c0_i32, %c0_i32_0 : i32, i32
  }
  func.func @transform_3(%arg0: i32) -> (i32, i32, i32) {
    %c0_i32 = arith.constant 0 : i32
    %c0_i32_0 = arith.constant 0 : i32
    %c0_i32_1 = arith.constant 0 : i32
    %c0_i32_2 = arith.constant 0 : i32
    return %c0_i32, %c0_i32_0, %c0_i32_1 : i32, i32, i32
  }
  func.func @transform_4(%arg0: i32) -> (i32, i32, i32) {
    %c0_i32 = arith.constant 0 : i32
    %c0_i32_0 = arith.constant 0 : i32
    %c0_i32_1 = arith.constant 0 : i32
    return %arg0, %c0_i32, %c0_i32_0 : i32, i32, i32
  }
  func.func @transform_5(%arg0: i32) -> (i32, i32, i32) {
    %c0_i32 = arith.constant 0 : i32
    %c0_i32_0 = arith.constant 0 : i32
    %c0_i32_1 = arith.constant 0 : i32
    return %arg0, %c0_i32, %c0_i32_0 : i32, i32, i32
  }
}

</mosaic_0001>

<llo_original>
// kernel: resnet_basic_block.5
$region0: #{resnet_basic_block.5}
  #allocation0 [shape = 'u32[]', space=smem, size = 0x4, offset = 0x4, fixed_abs, tag = 'smem constant byte address 0x4 - core index']
  #allocation1 [shape = 'u32[72,128]{1,0:T(1,128)}', space=vmem, size = 0x9000, scoped, tag = 'internal scratch']
  %s0 = inlined_call_operand.vmem [shape: bf16[2,256,4], index: 0, kind: input, shape index: {}]
  %s1 = inlined_call_operand.vmem [shape: f32[2,256,4], index: 1, kind: input, shape index: {}]
  %s2 = inlined_call_operand.vmem [shape: f32[1,4], index: 2, kind: input, shape index: {}]
  %s3 = inlined_call_operand.vmem [shape: f32[1,4], index: 3, kind: input, shape index: {}]
  %s4 = inlined_call_operand.vmem [shape: f32[2,256,4], index: 4, kind: output, shape index: {}]
  %s5 = sld [smem:[#allocation0]]
  $region49: #{resnet_basic_block.5} parent=0
    _
  %s7 = ssub.s32 1, %s5
  %s8 = scalar_select 0, %s7, %s5
  loop: start=0, step=1, limit=4
  $region2: #{resnet_basic_block.5} parent=0 // loop_pre_header
    _
  $region3: #{resnet_basic_block.5} parent=0 // loop_header
    %s10 = sphi 0, %s14
    %p11 = scmp.ge.s32.totalorder %s10, 4
    %s20 = sphi 0, %s22
    %s23 = sphi 0, %s20
    %s24 = sphi 0, %s23
    %s40 = sphi 0, %s24
    %s46 = sphi 0, %s48
    %s49 = sphi 0, %s46
    %s50 = sphi 0, %s49
    %s66 = sphi 0, %s50
    %s70 = sphi 0, %s70
    %s72 = sphi 0, %s70
    %s73 = sphi 0, %s72
    %s87 = sphi 0, %s73
    %s91 = sphi 0, %s91
    %s93 = sphi 0, %s91
    %s94 = sphi 0, %s93
    %s108 = sphi 0, %s94
    %s114 = sphi 0, %s116
    %s117 = sphi 0, %s114
    %s118 = sphi 0, %s117
    %s134 = sphi 0, %s118
  $region4: #{resnet_basic_block.5} parent=0 // loop_header_branch
    %13 = sbr.rel (%p11) target = $region8
  $region5: #{resnet_basic_block.5} parent=0 // loop_body
    %s15 = ssub.s32 %s10, 1
    %s16 = ssub.s32 %s10, 2
    %s17 = sadd.s32 %s10, 1
    %s18 = ssub.s32 %s10, %s17
    %p19 = scmp.eq.s32.totalorder %s18, 0
    %s21 = sadd.s32 %s20, 1
    %s22 = scalar_select %p19, %s20, %s21
    %p25 = pneg %p19
    %p26 = scmp.eq.s32.totalorder %s10, 1
    %p27 = por %p25, %p26
    %p28 = scmp.ne.s32.totalorder %s20, %s23
    %p29 = scmp.eq.s32.totalorder %s10, 0
    %p30 = por %p28, %p29
    %p31 = scmp.ne.s32.totalorder %s20, %s23
    %p32 = scmp.eq.s32.totalorder %s15, 1
    %p33 = por %p31, %p32
    %p34 = scmp.ne.s32.totalorder %s23, %s24
    %p35 = scmp.eq.s32.totalorder %s15, 0
    %p36 = por %p34, %p35
    %p37 = scmp.ne.s32.totalorder %s23, %s24
    %p38 = scmp.eq.s32.totalorder %s16, 1
    %p39 = por %p37, %p38
    %p41 = scmp.ne.s32.totalorder %s24, %s40
    %p42 = scmp.eq.s32.totalorder %s16, 0
    %p43 = por %p41, %p42
    %s44 = ssub.s32 %s10, %s17
    %p45 = scmp.eq.s32.totalorder %s44, 0
    %s47 = sadd.s32 %s46, 1
    %s48 = scalar_select %p45, %s46, %s47
    %p51 = pneg %p45
    %p52 = scmp.eq.s32.totalorder %s10, 1
    %p53 = por %p51, %p52
    %p54 = scmp.ne.s32.totalorder %s46, %s49
    %p55 = scmp.eq.s32.totalorder %s10, 0
    %p56 = por %p54, %p55
    %p57 = scmp.ne.s32.totalorder %s46, %s49
    %p58 = scmp.eq.s32.totalorder %s15, 1
    %p59 = por %p57, %p58
    %p60 = scmp.ne.s32.totalorder %s49, %s50
    %p61 = scmp.eq.s32.totalorder %s15, 0
    %p62 = por %p60, %p61
    %p63 = scmp.ne.s32.totalorder %s49, %s50
    %p64 = scmp.eq.s32.totalorder %s16, 1
    %p65 = por %p63, %p64
    %p67 = scmp.ne.s32.totalorder %s50, %s66
    %p68 = scmp.eq.s32.totalorder %s16, 0
    %p69 = por %p67, %p68
    %s71 = sadd.s32 %s70, 1
    %p74 = scmp.eq.s32.totalorder %s10, 1
    %p75 = scmp.ne.s32.totalorder %s70, %s72
    %p76 = scmp.eq.s32.totalorder %s10, 0
    %p77 = por %p75, %p76
    %p78 = scmp.ne.s32.totalorder %s70, %s72
    %p79 = scmp.eq.s32.totalorder %s15, 1
    %p80 = por %p78, %p79
    %p81 = scmp.ne.s32.totalorder %s72, %s73
    %p82 = scmp.eq.s32.totalorder %s15, 0
    %p83 = por %p81, %p82
    %p84 = scmp.ne.s32.totalorder %s72, %s73
    %p85 = scmp.eq.s32.totalorder %s16, 1
    %p86 = por %p84, %p85
    %p88 = scmp.ne.s32.totalorder %s73, %s87
    %p89 = scmp.eq.s32.totalorder %s16, 0
    %p90 = por %p88, %p89
    %s92 = sadd.s32 %s91, 1
    %p95 = scmp.eq.s32.totalorder %s10, 1
    %p96 = scmp.ne.s32.totalorder %s91, %s93
    %p97 = scmp.eq.s32.totalorder %s10, 0
    %p98 = por %p96, %p97
    %p99 = scmp.ne.s32.totalorder %s91, %s93
    %p100 = scmp.eq.s32.totalorder %s15, 1
    %p101 = por %p99, %p100
    %p102 = scmp.ne.s32.totalorder %s93, %s94
    %p103 = scmp.eq.s32.totalorder %s15, 0
    %p104 = por %p102, %p103
    %p105 = scmp.ne.s32.totalorder %s93, %s94
    %p106 = scmp.eq.s32.totalorder %s16, 1
    %p107 = por %p105, %p106
    %p109 = scmp.ne.s32.totalorder %s94, %s108
    %p110 = scmp.eq.s32.totalorder %s16, 0
    %p111 = por %p109, %p110
    %s112 = ssub.s32 %s10, %s17
    %p113 = scmp.eq.s32.totalorder %s112, 0
    %s115 = sadd.s32 %s114, 1
    %s116 = scalar_select %p113, %s114, %s115
    %p119 = pneg %p113
    %p120 = scmp.eq.s32.totalorder %s10, 1
    %p121 = por %p119, %p120
    %p122 = scmp.ne.s32.totalorder %s114, %s117
    %p123 = scmp.eq.s32.totalorder %s10, 0
    %p124 = por %p122, %p123
    %p125 = scmp.ne.s32.totalorder %s114, %s117
    %p126 = scmp.eq.s32.totalorder %s15, 1
    %p127 = por %p125, %p126
    %p128 = scmp.ne.s32.totalorder %s117, %s118
    %p129 = scmp.eq.s32.totalorder %s15, 0
    %p130 = por %p128, %p129
    %p131 = scmp.ne.s32.totalorder %s117, %s118
    %p132 = scmp.eq.s32.totalorder %s16, 1
    %p133 = por %p131, %p132
    %p135 = scmp.ne.s32.totalorder %s118, %s134
    %p136 = scmp.eq.s32.totalorder %s16, 0
    %p137 = por %p135, %p136
    %p138 = scmp.le.s32.totalorder 1, %s10
    %p139 = scmp.lt.s32.totalorder %s10, 3
    %p140 = pnand %p138, %p139
    %p141 = pneg %p140
    // Predicated region
    $region9: #{resnet_basic_block.5} parent=5 // pred_check
      _
    $region10: #{resnet_basic_block.5} parent=5 // pred_check_branch
      %143 = sbr.rel (%p140) target = $region12
    $region11: #{resnet_basic_block.5} parent=5 // pred_region
      %s144 = ssub.s32 %s10, 1
      // Predicated region
      $region13: #{resnet_basic_block.5} parent=11 // pred_check
        %p145 = pneg %p83
      $region14: #{resnet_basic_block.5} parent=11 // pred_check_branch
        %147 = sbr.rel (%p145) target = $region16
      $region15: #{resnet_basic_block.5} parent=11 // pred_region
        _
      $region16: #{resnet_basic_block.5} parent=11 // pred_fallthru
        _
      // Predicated region
      $region17: #{resnet_basic_block.5} parent=11 // pred_check
        %p148 = pneg %p104
      $region18: #{resnet_basic_block.5} parent=11 // pred_check_branch
        %150 = sbr.rel (%p148) target = $region20
      $region19: #{resnet_basic_block.5} parent=11 // pred_region
        _
      $region20: #{resnet_basic_block.5} parent=11 // pred_fallthru
        _
    $region12: #{resnet_basic_block.5} parent=5 // pred_fallthru
      _
    %p151 = scmp.lt.s32.totalorder %s10, 2
    // Predicated region
    $region21: #{resnet_basic_block.5} parent=5 // pred_check
      %p152 = pneg %p151
    $region22: #{resnet_basic_block.5} parent=5 // pred_check_branch
      %154 = sbr.rel (%p152) target = $region24
    $region23: #{resnet_basic_block.5} parent=5 // pred_region
      // Predicated region
      $region25: #{resnet_basic_block.5} parent=23 // pred_check
        %p155 = pneg %p30
      $region26: #{resnet_basic_block.5} parent=23 // pred_check_branch
        %157 = sbr.rel (%p155) target = $region28
      $region27: #{resnet_basic_block.5} parent=23 // pred_region
        %p158 = scmp.lt.s32.totalorder %s10, 1
        %s159 = scalar_select %p158, %s10, 1
        %s160 = smul.addr %s159, 32
        %s161 = smul.addr %s160, 4
        %s162 = scalar_lea.vmem %s0, %s161
      $region28: #{resnet_basic_block.5} parent=23 // pred_fallthru
        _
      // Predicated region
      $region29: #{resnet_basic_block.5} parent=23 // pred_check
        %p163 = pneg %p56
      $region30: #{resnet_basic_block.5} parent=23 // pred_check_branch
        %165 = sbr.rel (%p163) target = $region32
      $region31: #{resnet_basic_block.5} parent=23 // pred_region
        %p166 = scmp.lt.s32.totalorder %s10, 1
        %s167 = scalar_select %p166, %s10, 1
        %s168 = smul.addr %s167, 32
        %s169 = smul.addr %s168, 8
        %s170 = scalar_lea.vmem %s1, %s169
      $region32: #{resnet_basic_block.5} parent=23 // pred_fallthru
        _
    $region24: #{resnet_basic_block.5} parent=5 // pred_fallthru
      _
    %p171 = scmp.le.s32.totalorder 1, %s10
    %p172 = scmp.lt.s32.totalorder %s10, 3
    %p173 = pnand %p171, %p172
    %p174 = pneg %p173
    // Predicated region
    $region33: #{resnet_basic_block.5} parent=5 // pred_check
      _
    $region34: #{resnet_basic_block.5} parent=5 // pred_check_branch
      %176 = sbr.rel (%p173) target = $region36
    $region35: #{resnet_basic_block.5} parent=5 // pred_region
      %s177 = ssub.s32 %s10, 1
      %p178 = scmp.lt.s32.totalorder %s15, 1
      %s179 = scalar_select %p178, %s15, 1
      %s180 = smul.addr %s179, 32
      %s181 = smul.addr %s180, 4
      %s182 = scalar_lea.vmem %s0, %s181
      %p183 = pneg %p36
      %p184 = pneg %p33
      %p185 = scmp.lt.s32.totalorder %s15, 1
      %s186 = scalar_select %p185, %s15, 1
      %s187 = smul.addr %s186, 32
      %s188 = smul.addr %s187, 8
      %s189 = scalar_lea.vmem %s1, %s188
      %p190 = pneg %p62
      %p191 = pneg %p59
      %p192 = pneg %p83
      %p193 = pneg %p80
      %p194 = pneg %p104
      %p195 = pneg %p101
      %p196 = pneg %p130
      %p197 = pneg %p127
      %p198 = scmp.lt.s32.totalorder %s15, 1
      %s199 = scalar_select %p198, %s15, 1
      %s200 = smul.addr %s199, 32
      %s201 = smul.addr %s200, 8
      %s202 = scalar_lea.vmem %s4, %s201
      %p203 = scmp.lt.s32.totalorder %s15, 1
      %s204 = scalar_select %p203, %s15, 1
      %s205 = smul.addr %s204, 32
      %s206 = smul.addr %s205, 4
      %s207 = scalar_lea.vmem %s0, %s206
      %p208 = scmp.lt.s32.totalorder %s15, 1
      %s209 = scalar_select %p208, %s15, 1
      %s210 = smul.addr %s209, 32
      %s211 = smul.addr %s210, 8
      %s212 = scalar_lea.vmem %s1, %s211
      %p213 = scmp.lt.s32.totalorder %s15, 1
      %s214 = scalar_select %p213, %s15, 1
      %s215 = smul.addr %s214, 32
      %s216 = smul.addr %s215, 8
      %s217 = scalar_lea.vmem %s4, %s216
      %v218 = vld [vmem:[%s2] sm:$0x1]
      %v219 = vld [vmem:[%s207] sm:$0xf]
      %v220 = vld [vmem:[%s207 + $0x4] sm:$0xf]
      %v221 = vld [vmem:[%s207 + $0x8] sm:$0xf]
      %v222 = vld [vmem:[%s207 + $0xc] sm:$0xf]
      %v223 = vld [vmem:[%s207 + $0x10] sm:$0xf]
      %v224 = vld [vmem:[%s207 + $0x14] sm:$0xf]
      %v225 = vld [vmem:[%s207 + $0x18] sm:$0xf]
      %v226 = vld [vmem:[%s207 + $0x1c] sm:$0xf]
      %v227 = vld [vmem:[%s207 + $0x20] sm:$0xf]
      %v228 = vld [vmem:[%s207 + $0x24] sm:$0xf]
      %v229 = vld [vmem:[%s207 + $0x28] sm:$0xf]
      %v230 = vld [vmem:[%s207 + $0x2c] sm:$0xf]
      %v231 = vld [vmem:[%s207 + $0x30] sm:$0xf]
      %v232 = vld [vmem:[%s207 + $0x34] sm:$0xf]
      %v233 = vld [vmem:[%s207 + $0x38] sm:$0xf]
      %v234 = vld [vmem:[%s207 + $0x3c] sm:$0xf]
      %v235 = vld [vmem:[%s207 + $0x40] sm:$0xf]
      %v236 = vld [vmem:[%s207 + $0x44] sm:$0xf]
      %v237 = vld [vmem:[%s207 + $0x48] sm:$0xf]
      %v238 = vld [vmem:[%s207 + $0x4c] sm:$0xf]
      %v239 = vld [vmem:[%s207 + $0x50] sm:$0xf]
      %v240 = vld [vmem:[%s207 + $0x54] sm:$0xf]
      %v241 = vld [vmem:[%s207 + $0x58] sm:$0xf]
      %v242 = vld [vmem:[%s207 + $0x5c] sm:$0xf]
      %v243 = vld [vmem:[%s207 + $0x60] sm:$0xf]
      %v244 = vld [vmem:[%s207 + $0x64] sm:$0xf]
      %v245 = vld [vmem:[%s207 + $0x68] sm:$0xf]
      %v246 = vld [vmem:[%s207 + $0x6c] sm:$0xf]
      %v247 = vld [vmem:[%s207 + $0x70] sm:$0xf]
      %v248 = vld [vmem:[%s207 + $0x74] sm:$0xf]
      %v249 = vld [vmem:[%s207 + $0x78] sm:$0xf]
      %v250 = vld [vmem:[%s207 + $0x7c] sm:$0xf]
      %v251 = vunpack.c.l.bf16 %v219
      %v252 = vunpack.c.l.bf16 %v220
      %v253 = vunpack.c.l.bf16 %v221
      %v254 = vunpack.c.l.bf16 %v222
      %v255 = vunpack.c.l.bf16 %v223
      %v256 = vunpack.c.l.bf16 %v224
      %v257 = vunpack.c.l.bf16 %v225
      %v258 = vunpack.c.l.bf16 %v226
      %v259 = vunpack.c.l.bf16 %v227
      %v260 = vunpack.c.l.bf16 %v228
      %v261 = vunpack.c.l.bf16 %v229
      %v262 = vunpack.c.l.bf16 %v230
      %v263 = vunpack.c.l.bf16 %v231
      %v264 = vunpack.c.l.bf16 %v232
      %v265 = vunpack.c.l.bf16 %v233
      %v266 = vunpack.c.l.bf16 %v234
      %v267 = vunpack.c.l.bf16 %v235
      %v268 = vunpack.c.l.bf16 %v236
      %v269 = vunpack.c.l.bf16 %v237
      %v270 = vunpack.c.l.bf16 %v238
      %v271 = vunpack.c.l.bf16 %v239
      %v272 = vunpack.c.l.bf16 %v240
      %v273 = vunpack.c.l.bf16 %v241
      %v274 = vunpack.c.l.bf16 %v242
      %v275 = vunpack.c.l.bf16 %v243
      %v276 = vunpack.c.l.bf16 %v244
      %v277 = vunpack.c.l.bf16 %v245
      %v278 = vunpack.c.l.bf16 %v246
      %v279 = vunpack.c.l.bf16 %v247
      %v280 = vunpack.c.l.bf16 %v248
      %v281 = vunpack.c.l.bf16 %v249
      %v282 = vunpack.c.l.bf16 %v250
      %v284 = vperm.slane %v218, 0
      %v286 = vmul.f32 %v284, %v251
      %v287 = vmul.f32 %v284, %v252
      %v288 = vmul.f32 %v284, %v253
      %v289 = vmul.f32 %v284, %v254
      %v290 = vmul.f32 %v284, %v255
      %v291 = vmul.f32 %v284, %v256
      %v292 = vmul.f32 %v284, %v257
      %v293 = vmul.f32 %v284, %v258
      %v294 = vmul.f32 %v284, %v259
      %v295 = vmul.f32 %v284, %v260
      %v296 = vmul.f32 %v284, %v261
      %v297 = vmul.f32 %v284, %v262
      %v298 = vmul.f32 %v284, %v263
      %v299 = vmul.f32 %v284, %v264
      %v300 = vmul.f32 %v284, %v265
      %v301 = vmul.f32 %v284, %v266
      %v302 = vmul.f32 %v284, %v267
      %v303 = vmul.f32 %v284, %v268
      %v304 = vmul.f32 %v284, %v269
      %v305 = vmul.f32 %v284, %v270
      %v306 = vmul.f32 %v284, %v271
      %v307 = vmul.f32 %v284, %v272
      %v308 = vmul.f32 %v284, %v273
      %v309 = vmul.f32 %v284, %v274
      %v310 = vmul.f32 %v284, %v275
      %v311 = vmul.f32 %v284, %v276
      %v312 = vmul.f32 %v284, %v277
      %v313 = vmul.f32 %v284, %v278
      %v314 = vmul.f32 %v284, %v279
      %v315 = vmul.f32 %v284, %v280
      %v316 = vmul.f32 %v284, %v281
      %v317 = vmul.f32 %v284, %v282
      %v318 = vld [vmem:[%s3] sm:$0x1]
      %v320 = vperm.slane %v318, 0
      %v322 = vadd.f32 %v286, %v320
      %v323 = vadd.f32 %v287, %v320
      %v324 = vadd.f32 %v288, %v320
      %v325 = vadd.f32 %v289, %v320
      %v326 = vadd.f32 %v290, %v320
      %v327 = vadd.f32 %v291, %v320
      %v328 = vadd.f32 %v292, %v320
      %v329 = vadd.f32 %v293, %v320
      %v330 = vadd.f32 %v294, %v320
      %v331 = vadd.f32 %v295, %v320
      %v332 = vadd.f32 %v296, %v320
      %v333 = vadd.f32 %v297, %v320
      %v334 = vadd.f32 %v298, %v320
      %v335 = vadd.f32 %v299, %v320
      %v336 = vadd.f32 %v300, %v320
      %v337 = vadd.f32 %v301, %v320
      %v338 = vadd.f32 %v302, %v320
      %v339 = vadd.f32 %v303, %v320
      %v340 = vadd.f32 %v304, %v320
      %v341 = vadd.f32 %v305, %v320
      %v342 = vadd.f32 %v306, %v320
      %v343 = vadd.f32 %v307, %v320
      %v344 = vadd.f32 %v308, %v320
      %v345 = vadd.f32 %v309, %v320
      %v346 = vadd.f32 %v310, %v320
      %v347 = vadd.f32 %v311, %v320
      %v348 = vadd.f32 %v312, %v320
      %v349 = vadd.f32 %v313, %v320
      %v350 = vadd.f32 %v314, %v320
      %v351 = vadd.f32 %v315, %v320
      %v352 = vadd.f32 %v316, %v320
      %v353 = vadd.f32 %v317, %v320
      %v354 = vld [vmem:[%s212] sm:$0xff]
      %v355 = vld [vmem:[%s212 + $0x8] sm:$0xff]
      %v356 = vld [vmem:[%s212 + $0x10] sm:$0xff]
      %v357 = vld [vmem:[%s212 + $0x18] sm:$0xff]
      %v358 = vld [vmem:[%s212 + $0x20] sm:$0xff]
      %v359 = vld [vmem:[%s212 + $0x28] sm:$0xff]
      %v360 = vld [vmem:[%s212 + $0x30] sm:$0xff]
      %v361 = vld [vmem:[%s212 + $0x38] sm:$0xff]
      %v362 = vld [vmem:[%s212 + $0x40] sm:$0xff]
      %v363 = vld [vmem:[%s212 + $0x48] sm:$0xff]
      %v364 = vld [vmem:[%s212 + $0x50] sm:$0xff]
      %v365 = vld [vmem:[%s212 + $0x58] sm:$0xff]
      %v366 = vld [vmem:[%s212 + $0x60] sm:$0xff]
      %v367 = vld [vmem:[%s212 + $0x68] sm:$0xff]
      %v368 = vld [vmem:[%s212 + $0x70] sm:$0xff]
      %v369 = vld [vmem:[%s212 + $0x78] sm:$0xff]
      %v370 = vld [vmem:[%s212 + $0x80] sm:$0xff]
      %v371 = vld [vmem:[%s212 + $0x88] sm:$0xff]
      %v372 = vld [vmem:[%s212 + $0x90] sm:$0xff]
      %v373 = vld [vmem:[%s212 + $0x98] sm:$0xff]
      %v374 = vld [vmem:[%s212 + $0xa0] sm:$0xff]
      %v375 = vld [vmem:[%s212 + $0xa8] sm:$0xff]
      %v376 = vld [vmem:[%s212 + $0xb0] sm:$0xff]
      %v377 = vld [vmem:[%s212 + $0xb8] sm:$0xff]
      %v378 = vld [vmem:[%s212 + $0xc0] sm:$0xff]
      %v379 = vld [vmem:[%s212 + $0xc8] sm:$0xff]
      %v380 = vld [vmem:[%s212 + $0xd0] sm:$0xff]
      %v381 = vld [vmem:[%s212 + $0xd8] sm:$0xff]
      %v382 = vld [vmem:[%s212 + $0xe0] sm:$0xff]
      %v383 = vld [vmem:[%s212 + $0xe8] sm:$0xff]
      %v384 = vld [vmem:[%s212 + $0xf0] sm:$0xff]
      %v385 = vld [vmem:[%s212 + $0xf8] sm:$0xff]
      %v386 = vadd.f32 %v322, %v354
      %v387 = vadd.f32 %v323, %v355
      %v388 = vadd.f32 %v324, %v356
      %v389 = vadd.f32 %v325, %v357
      %v390 = vadd.f32 %v326, %v358
      %v391 = vadd.f32 %v327, %v359
      %v392 = vadd.f32 %v328, %v360
      %v393 = vadd.f32 %v329, %v361
      %v394 = vadd.f32 %v330, %v362
      %v395 = vadd.f32 %v331, %v363
      %v396 = vadd.f32 %v332, %v364
      %v397 = vadd.f32 %v333, %v365
      %v398 = vadd.f32 %v334, %v366
      %v399 = vadd.f32 %v335, %v367
      %v400 = vadd.f32 %v336, %v368
      %v401 = vadd.f32 %v337, %v369
      %v402 = vadd.f32 %v338, %v370
      %v403 = vadd.f32 %v339, %v371
      %v404 = vadd.f32 %v340, %v372
      %v405 = vadd.f32 %v341, %v373
      %v406 = vadd.f32 %v342, %v374
      %v407 = vadd.f32 %v343, %v375
      %v408 = vadd.f32 %v344, %v376
      %v409 = vadd.f32 %v345, %v377
      %v410 = vadd.f32 %v346, %v378
      %v411 = vadd.f32 %v347, %v379
      %v412 = vadd.f32 %v348, %v380
      %v413 = vadd.f32 %v349, %v381
      %v414 = vadd.f32 %v350, %v382
      %v415 = vadd.f32 %v351, %v383
      %v416 = vadd.f32 %v352, %v384
      %v417 = vadd.f32 %v353, %v385
      %vm418 = vcmp.gt.f32.partialorder %v386, 0.0
      %vm419 = vcmp.gt.f32.partialorder %v387, 0.0
      %vm420 = vcmp.gt.f32.partialorder %v388, 0.0
      %vm421 = vcmp.gt.f32.partialorder %v389, 0.0
      %vm422 = vcmp.gt.f32.partialorder %v390, 0.0
      %vm423 = vcmp.gt.f32.partialorder %v391, 0.0
      %vm424 = vcmp.gt.f32.partialorder %v392, 0.0
      %vm425 = vcmp.gt.f32.partialorder %v393, 0.0
      %vm426 = vcmp.gt.f32.partialorder %v394, 0.0
      %vm427 = vcmp.gt.f32.partialorder %v395, 0.0
      %vm428 = vcmp.gt.f32.partialorder %v396, 0.0
      %vm429 = vcmp.gt.f32.partialorder %v397, 0.0
      %vm430 = vcmp.gt.f32.partialorder %v398, 0.0
      %vm431 = vcmp.gt.f32.partialorder %v399, 0.0
      %vm432 = vcmp.gt.f32.partialorder %v400, 0.0
      %vm433 = vcmp.gt.f32.partialorder %v401, 0.0
      %vm434 = vcmp.gt.f32.partialorder %v402, 0.0
      %vm435 = vcmp.gt.f32.partialorder %v403, 0.0
      %vm436 = vcmp.gt.f32.partialorder %v404, 0.0
      %vm437 = vcmp.gt.f32.partialorder %v405, 0.0
      %vm438 = vcmp.gt.f32.partialorder %v406, 0.0
      %vm439 = vcmp.gt.f32.partialorder %v407, 0.0
      %vm440 = vcmp.gt.f32.partialorder %v408, 0.0
      %vm441 = vcmp.gt.f32.partialorder %v409, 0.0
      %vm442 = vcmp.gt.f32.partialorder %v410, 0.0
      %vm443 = vcmp.gt.f32.partialorder %v411, 0.0
      %vm444 = vcmp.gt.f32.partialorder %v412, 0.0
      %vm445 = vcmp.gt.f32.partialorder %v413, 0.0
      %vm446 = vcmp.gt.f32.partialorder %v414, 0.0
      %vm447 = vcmp.gt.f32.partialorder %v415, 0.0
      %vm448 = vcmp.gt.f32.partialorder %v416, 0.0
      %vm449 = vcmp.gt.f32.partialorder %v417, 0.0
      %v450 = vmin.f32 %v386, 0.0
      %v451 = vmin.f32 %v387, 0.0
      %v452 = vmin.f32 %v388, 0.0
      %v453 = vmin.f32 %v389, 0.0
      %v454 = vmin.f32 %v390, 0.0
      %v455 = vmin.f32 %v391, 0.0
      %v456 = vmin.f32 %v392, 0.0
      %v457 = vmin.f32 %v393, 0.0
      %v458 = vmin.f32 %v394, 0.0
      %v459 = vmin.f32 %v395, 0.0
      %v460 = vmin.f32 %v396, 0.0
      %v461 = vmin.f32 %v397, 0.0
      %v462 = vmin.f32 %v398, 0.0
      %v463 = vmin.f32 %v399, 0.0
      %v464 = vmin.f32 %v400, 0.0
      %v465 = vmin.f32 %v401, 0.0
      %v466 = vmin.f32 %v402, 0.0
      %v467 = vmin.f32 %v403, 0.0
      %v468 = vmin.f32 %v404, 0.0
      %v469 = vmin.f32 %v405, 0.0
      %v470 = vmin.f32 %v406, 0.0
      %v471 = vmin.f32 %v407, 0.0
      %v472 = vmin.f32 %v408, 0.0
      %v473 = vmin.f32 %v409, 0.0
      %v474 = vmin.f32 %v410, 0.0
      %v475 = vmin.f32 %v411, 0.0
      %v476 = vmin.f32 %v412, 0.0
      %v477 = vmin.f32 %v413, 0.0
      %v478 = vmin.f32 %v414, 0.0
      %v479 = vmin.f32 %v415, 0.0
      %v480 = vmin.f32 %v416, 0.0
      %v481 = vmin.f32 %v417, 0.0
      %v482 = vmul.f32 %v450, 1.442695
      %v483 = vpow.pop %v482
      %v484 = vmul.f32 %v451, 1.442695
      %v485 = vpow.pop %v484
      %v486 = vmul.f32 %v452, 1.442695
      %v487 = vpow.pop %v486
      %v488 = vmul.f32 %v453, 1.442695
      %v489 = vpow.pop %v488
      %v490 = vmul.f32 %v454, 1.442695
      %v491 = vpow.pop %v490
      %v492 = vmul.f32 %v455, 1.442695
      %v493 = vpow.pop %v492
      %v494 = vmul.f32 %v456, 1.442695
      %v495 = vpow.pop %v494
      %v496 = vmul.f32 %v457, 1.442695
      %v497 = vpow.pop %v496
      %v498 = vmul.f32 %v458, 1.442695
      %v499 = vpow.pop %v498
      %v500 = vmul.f32 %v459, 1.442695
      %v501 = vpow.pop %v500
      %v502 = vmul.f32 %v460, 1.442695
      %v503 = vpow.pop %v502
      %v504 = vmul.f32 %v461, 1.442695
      %v505 = vpow.pop %v504
      %v506 = vmul.f32 %v462, 1.442695
      %v507 = vpow.pop %v506
      %v508 = vmul.f32 %v463, 1.442695
      %v509 = vpow.pop %v508
      %v510 = vmul.f32 %v464, 1.442695
      %v511 = vpow.pop %v510
      %v512 = vmul.f32 %v465, 1.442695
      %v513 = vpow.pop %v512
      %v514 = vmul.f32 %v466, 1.442695
      %v515 = vpow.pop %v514
      %v516 = vmul.f32 %v467, 1.442695
      %v517 = vpow.pop %v516
      %v518 = vmul.f32 %v468, 1.442695
      %v519 = vpow.pop %v518
      %v520 = vmul.f32 %v469, 1.442695
      %v521 = vpow.pop %v520
      %v522 = vmul.f32 %v470, 1.442695
      %v523 = vpow.pop %v522
      %v524 = vmul.f32 %v471, 1.442695
      %v525 = vpow.pop %v524
      %v526 = vmul.f32 %v472, 1.442695
      %v527 = vpow.pop %v526
      %v528 = vmul.f32 %v473, 1.442695
      %v529 = vpow.pop %v528
      %v530 = vmul.f32 %v474, 1.442695
      %v531 = vpow.pop %v530
      %v532 = vmul.f32 %v475, 1.442695
      %v533 = vpow.pop %v532
      %v534 = vmul.f32 %v476, 1.442695
      %v535 = vpow.pop %v534
      %v536 = vmul.f32 %v477, 1.442695
      %v537 = vpow.pop %v536
      %v538 = vmul.f32 %v478, 1.442695
      %v539 = vpow.pop %v538
      %v540 = vmul.f32 %v479, 1.442695
      %v541 = vpow.pop %v540
      %v542 = vmul.f32 %v480, 1.442695
      %v543 = vpow.pop %v542
      %v544 = vmul.f32 %v481, 1.442695
      %v545 = vpow.pop %v544
      %v546 = vsub.f32 %v483, 1.0
      %v547 = vsub.f32 %v485, 1.0
      %v548 = vsub.f32 %v487, 1.0
      %v549 = vsub.f32 %v489, 1.0
      %v550 = vsub.f32 %v491, 1.0
      %v551 = vsub.f32 %v493, 1.0
      %v552 = vsub.f32 %v495, 1.0
      %v553 = vsub.f32 %v497, 1.0
      %v554 = vsub.f32 %v499, 1.0
      %v555 = vsub.f32 %v501, 1.0
      %v556 = vsub.f32 %v503, 1.0
      %v557 = vsub.f32 %v505, 1.0
      %v558 = vsub.f32 %v507, 1.0
      %v559 = vsub.f32 %v509, 1.0
      %v560 = vsub.f32 %v511, 1.0
      %v561 = vsub.f32 %v513, 1.0
      %v562 = vsub.f32 %v515, 1.0
      %v563 = vsub.f32 %v517, 1.0
      %v564 = vsub.f32 %v519, 1.0
      %v565 = vsub.f32 %v521, 1.0
      %v566 = vsub.f32 %v523, 1.0
      %v567 = vsub.f32 %v525, 1.0
      %v568 = vsub.f32 %v527, 1.0
      %v569 = vsub.f32 %v529, 1.0
      %v570 = vsub.f32 %v531, 1.0
      %v571 = vsub.f32 %v533, 1.0
      %v572 = vsub.f32 %v535, 1.0
      %v573 = vsub.f32 %v537, 1.0
      %v574 = vsub.f32 %v539, 1.0
      %v575 = vsub.f32 %v541, 1.0
      %v576 = vsub.f32 %v543, 1.0
      %v577 = vsub.f32 %v545, 1.0
      %v578 = vsel %vm418, %v386, %v546
      %v579 = vsel %vm419, %v387, %v547
      %v580 = vsel %vm420, %v388, %v548
      %v581 = vsel %vm421, %v389, %v549
      %v582 = vsel %vm422, %v390, %v550
      %v583 = vsel %vm423, %v391, %v551
      %v584 = vsel %vm424, %v392, %v552
      %v585 = vsel %vm425, %v393, %v553
      %v586 = vsel %vm426, %v394, %v554
      %v587 = vsel %vm427, %v395, %v555
      %v588 = vsel %vm428, %v396, %v556
      %v589 = vsel %vm429, %v397, %v557
      %v590 = vsel %vm430, %v398, %v558
      %v591 = vsel %vm431, %v399, %v559
      %v592 = vsel %vm432, %v400, %v560
      %v593 = vsel %vm433, %v401, %v561
      %v594 = vsel %vm434, %v402, %v562
      %v595 = vsel %vm435, %v403, %v563
      %v596 = vsel %vm436, %v404, %v564
      %v597 = vsel %vm437, %v405, %v565
      %v598 = vsel %vm438, %v406, %v566
      %v599 = vsel %vm439, %v407, %v567
      %v600 = vsel %vm440, %v408, %v568
      %v601 = vsel %vm441, %v409, %v569
      %v602 = vsel %vm442, %v410, %v570
      %v603 = vsel %vm443, %v411, %v571
      %v604 = vsel %vm444, %v412, %v572
      %v605 = vsel %vm445, %v413, %v573
      %v606 = vsel %vm446, %v414, %v574
      %v607 = vsel %vm447, %v415, %v575
      %v608 = vsel %vm448, %v416, %v576
      %v609 = vsel %vm449, %v417, %v577
      %vm610 = vcmask 31744
      %611 = vst.msk [vmem:[%s217] sm:$0xff] %vm610, %v578
      %612 = vst.msk [vmem:[%s217 + $0x8] sm:$0xff] %vm610, %v579
      %613 = vst.msk [vmem:[%s217 + $0x10] sm:$0xff] %vm610, %v580
      %614 = vst.msk [vmem:[%s217 + $0x18] sm:$0xff] %vm610, %v581
      %615 = vst.msk [vmem:[%s217 + $0x20] sm:$0xff] %vm610, %v582
      %616 = vst.msk [vmem:[%s217 + $0x28] sm:$0xff] %vm610, %v583
      %617 = vst.msk [vmem:[%s217 + $0x30] sm:$0xff] %vm610, %v584
      %618 = vst.msk [vmem:[%s217 + $0x38] sm:$0xff] %vm610, %v585
      %619 = vst.msk [vmem:[%s217 + $0x40] sm:$0xff] %vm610, %v586
      %620 = vst.msk [vmem:[%s217 + $0x48] sm:$0xff] %vm610, %v587
      %621 = vst.msk [vmem:[%s217 + $0x50] sm:$0xff] %vm610, %v588
      %622 = vst.msk [vmem:[%s217 + $0x58] sm:$0xff] %vm610, %v589
      %623 = vst.msk [vmem:[%s217 + $0x60] sm:$0xff] %vm610, %v590
      %624 = vst.msk [vmem:[%s217 + $0x68] sm:$0xff] %vm610, %v591
      %625 = vst.msk [vmem:[%s217 + $0x70] sm:$0xff] %vm610, %v592
      %626 = vst.msk [vmem:[%s217 + $0x78] sm:$0xff] %vm610, %v593
      %627 = vst.msk [vmem:[%s217 + $0x80] sm:$0xff] %vm610, %v594
      %628 = vst.msk [vmem:[%s217 + $0x88] sm:$0xff] %vm610, %v595
      %629 = vst.msk [vmem:[%s217 + $0x90] sm:$0xff] %vm610, %v596
      %630 = vst.msk [vmem:[%s217 + $0x98] sm:$0xff] %vm610, %v597
      %631 = vst.msk [vmem:[%s217 + $0xa0] sm:$0xff] %vm610, %v598
      %632 = vst.msk [vmem:[%s217 + $0xa8] sm:$0xff] %vm610, %v599
      %633 = vst.msk [vmem:[%s217 + $0xb0] sm:$0xff] %vm610, %v600
      %634 = vst.msk [vmem:[%s217 + $0xb8] sm:$0xff] %vm610, %v601
      %635 = vst.msk [vmem:[%s217 + $0xc0] sm:$0xff] %vm610, %v602
      %636 = vst.msk [vmem:[%s217 + $0xc8] sm:$0xff] %vm610, %v603
      %637 = vst.msk [vmem:[%s217 + $0xd0] sm:$0xff] %vm610, %v604
      %638 = vst.msk [vmem:[%s217 + $0xd8] sm:$0xff] %vm610, %v605
      %639 = vst.msk [vmem:[%s217 + $0xe0] sm:$0xff] %vm610, %v606
      %640 = vst.msk [vmem:[%s217 + $0xe8] sm:$0xff] %vm610, %v607
      %641 = vst.msk [vmem:[%s217 + $0xf0] sm:$0xff] %vm610, %v608
      %642 = vst.msk [vmem:[%s217 + $0xf8] sm:$0xff] %vm610, %v609
      %p643 = scmp.lt.s32.totalorder %s15, 1
      %s644 = scalar_select %p643, %s15, 1
      %s645 = smul.addr %s644, 32
      %s646 = smul.addr %s645, 8
      %s647 = scalar_lea.vmem %s4, %s646
      // Predicated region
      $region37: #{resnet_basic_block.5} parent=35 // pred_check
        %p648 = pneg %p127
      $region38: #{resnet_basic_block.5} parent=35 // pred_check_branch
        %650 = sbr.rel (%p648) target = $region40
      $region39: #{resnet_basic_block.5} parent=35 // pred_region
        _
      $region40: #{resnet_basic_block.5} parent=35 // pred_fallthru
        _
    $region36: #{resnet_basic_block.5} parent=5 // pred_fallthru
      _
    %p651 = scmp.le.s32.totalorder 2, %s10
    // Predicated region
    $region41: #{resnet_basic_block.5} parent=5 // pred_check
      %p652 = pneg %p651
    $region42: #{resnet_basic_block.5} parent=5 // pred_check_branch
      %654 = sbr.rel (%p652) target = $region44
    $region43: #{resnet_basic_block.5} parent=5 // pred_region
      %s655 = ssub.s32 %s10, 2
      // Predicated region
      $region45: #{resnet_basic_block.5} parent=43 // pred_check
        %p656 = pneg %p133
      $region46: #{resnet_basic_block.5} parent=43 // pred_check_branch
        %658 = sbr.rel (%p656) target = $region48
      $region47: #{resnet_basic_block.5} parent=43 // pred_region
        %p659 = scmp.lt.s32.totalorder %s16, 1
        %s660 = scalar_select %p659, %s16, 1
        %s661 = smul.addr %s660, 32
        %s662 = smul.addr %s661, 8
        %s663 = scalar_lea.vmem %s4, %s662
      $region48: #{resnet_basic_block.5} parent=43 // pred_fallthru
        _
    $region44: #{resnet_basic_block.5} parent=5 // pred_fallthru
      _
  $region6: #{resnet_basic_block.5} parent=0 // loop_footer
    %s14 = sadd.s32 1, %s10
  $region7: #{resnet_basic_block.5} parent=0 // loop_footer_branch
    %9 = sbr.rel target = $region3
  $region8: #{resnet_basic_block.5} parent=0 // loop_exit
    _

// kernel: resnet_basic_block.3
$region0: #{resnet_basic_block.3}
  #allocation0 [shape = 'u32[]', space=smem, size = 0x4, offset = 0x4, fixed_abs, tag = 'smem constant byte address 0x4 - core index']
  #allocation1 [shape = 'u32[72,128]{1,0:T(1,128)}', space=vmem, size = 0x9000, scoped, tag = 'internal scratch']
  %s0 = inlined_call_operand.vmem [shape: bf16[2,18,18,4], index: 0, kind: input, shape index: {}]
  %s1 = inlined_call_operand.vmem [shape: bf16[9,4,4], index: 1, kind: input, shape index: {}]
  %s2 = inlined_call_operand.vmem [shape: bf16[2,16,16,4], index: 2, kind: output, shape index: {0}]
  %s3 = inlined_call_operand.vmem [shape: f32[2,2,4], index: 3, kind: output, shape index: {1}]
  %4 = xla_tuple %s2, %s3
  %s5 = sld [smem:[#allocation0]]
  $region49: #{resnet_basic_block.3} parent=0
    _
  %s7 = ssub.s32 1, %s5
  %s8 = scalar_select 0, %s7, %s5
  loop: start=0, step=1, limit=4
  $region2: #{resnet_basic_block.3} parent=0 // loop_pre_header
    _
  $region3: #{resnet_basic_block.3} parent=0 // loop_header
    %s10 = sphi 0, %s14
    %p11 = scmp.ge.s32.totalorder %s10, 4
    %s20 = sphi 0, %s22
    %s23 = sphi 0, %s20
    %s24 = sphi 0, %s23
    %s40 = sphi 0, %s24
    %s44 = sphi 0, %s44
    %s46 = sphi 0, %s44
    %s47 = sphi 0, %s46
    %s61 = sphi 0, %s47
    %s67 = sphi 0, %s69
    %s70 = sphi 0, %s67
    %s71 = sphi 0, %s70
    %s87 = sphi 0, %s71
    %s93 = sphi 0, %s95
    %s96 = sphi 0, %s93
    %s97 = sphi 0, %s96
    %s113 = sphi 0, %s97
  $region4: #{resnet_basic_block.3} parent=0 // loop_header_branch
    %13 = sbr.rel (%p11) target = $region8
  $region5: #{resnet_basic_block.3} parent=0 // loop_body
    %s15 = ssub.s32 %s10, 1
    %s16 = ssub.s32 %s10, 2
    %s17 = sadd.s32 %s10, 1
    %s18 = ssub.s32 %s10, %s17
    %p19 = scmp.eq.s32.totalorder %s18, 0
    %s21 = sadd.s32 %s20, 1
    %s22 = scalar_select %p19, %s20, %s21
    %p25 = pneg %p19
    %p26 = scmp.eq.s32.totalorder %s10, 1
    %p27 = por %p25, %p26
    %p28 = scmp.ne.s32.totalorder %s20, %s23
    %p29 = scmp.eq.s32.totalorder %s10, 0
    %p30 = por %p28, %p29
    %p31 = scmp.ne.s32.totalorder %s20, %s23
    %p32 = scmp.eq.s32.totalorder %s15, 1
    %p33 = por %p31, %p32
    %p34 = scmp.ne.s32.totalorder %s23, %s24
    %p35 = scmp.eq.s32.totalorder %s15, 0
    %p36 = por %p34, %p35
    %p37 = scmp.ne.s32.totalorder %s23, %s24
    %p38 = scmp.eq.s32.totalorder %s16, 1
    %p39 = por %p37, %p38
    %p41 = scmp.ne.s32.totalorder %s24, %s40
    %p42 = scmp.eq.s32.totalorder %s16, 0
    %p43 = por %p41, %p42
    %s45 = sadd.s32 %s44, 1
    %p48 = scmp.eq.s32.totalorder %s10, 1
    %p49 = scmp.ne.s32.totalorder %s44, %s46
    %p50 = scmp.eq.s32.totalorder %s10, 0
    %p51 = por %p49, %p50
    %p52 = scmp.ne.s32.totalorder %s44, %s46
    %p53 = scmp.eq.s32.totalorder %s15, 1
    %p54 = por %p52, %p53
    %p55 = scmp.ne.s32.totalorder %s46, %s47
    %p56 = scmp.eq.s32.totalorder %s15, 0
    %p57 = por %p55, %p56
    %p58 = scmp.ne.s32.totalorder %s46, %s47
    %p59 = scmp.eq.s32.totalorder %s16, 1
    %p60 = por %p58, %p59
    %p62 = scmp.ne.s32.totalorder %s47, %s61
    %p63 = scmp.eq.s32.totalorder %s16, 0
    %p64 = por %p62, %p63
    %s65 = ssub.s32 %s10, %s17
    %p66 = scmp.eq.s32.totalorder %s65, 0
    %s68 = sadd.s32 %s67, 1
    %s69 = scalar_select %p66, %s67, %s68
    %p72 = pneg %p66
    %p73 = scmp.eq.s32.totalorder %s10, 1
    %p74 = por %p72, %p73
    %p75 = scmp.ne.s32.totalorder %s67, %s70
    %p76 = scmp.eq.s32.totalorder %s10, 0
    %p77 = por %p75, %p76
    %p78 = scmp.ne.s32.totalorder %s67, %s70
    %p79 = scmp.eq.s32.totalorder %s15, 1
    %p80 = por %p78, %p79
    %p81 = scmp.ne.s32.totalorder %s70, %s71
    %p82 = scmp.eq.s32.totalorder %s15, 0
    %p83 = por %p81, %p82
    %p84 = scmp.ne.s32.totalorder %s70, %s71
    %p85 = scmp.eq.s32.totalorder %s16, 1
    %p86 = por %p84, %p85
    %p88 = scmp.ne.s32.totalorder %s71, %s87
    %p89 = scmp.eq.s32.totalorder %s16, 0
    %p90 = por %p88, %p89
    %s91 = ssub.s32 %s10, %s17
    %p92 = scmp.eq.s32.totalorder %s91, 0
    %s94 = sadd.s32 %s93, 1
    %s95 = scalar_select %p92, %s93, %s94
    %p98 = pneg %p92
    %p99 = scmp.eq.s32.totalorder %s10, 1
    %p100 = por %p98, %p99
    %p101 = scmp.ne.s32.totalorder %s93, %s96
    %p102 = scmp.eq.s32.totalorder %s10, 0
    %p103 = por %p101, %p102
    %p104 = scmp.ne.s32.totalorder %s93, %s96
    %p105 = scmp.eq.s32.totalorder %s15, 1
    %p106 = por %p104, %p105
    %p107 = scmp.ne.s32.totalorder %s96, %s97
    %p108 = scmp.eq.s32.totalorder %s15, 0
    %p109 = por %p107, %p108
    %p110 = scmp.ne.s32.totalorder %s96, %s97
    %p111 = scmp.eq.s32.totalorder %s16, 1
    %p112 = por %p110, %p111
    %p114 = scmp.ne.s32.totalorder %s97, %s113
    %p115 = scmp.eq.s32.totalorder %s16, 0
    %p116 = por %p114, %p115
    %p117 = scmp.le.s32.totalorder 1, %s10
    %p118 = scmp.lt.s32.totalorder %s10, 3
    %p119 = pnand %p117, %p118
    %p120 = pneg %p119
    // Predicated region
    $region9: #{resnet_basic_block.3} parent=5 // pred_check
      _
    $region10: #{resnet_basic_block.3} parent=5 // pred_check_branch
      %122 = sbr.rel (%p119) target = $region12
    $region11: #{resnet_basic_block.3} parent=5 // pred_region
      %s123 = ssub.s32 %s10, 1
      // Predicated region
      $region13: #{resnet_basic_block.3} parent=11 // pred_check
        %p124 = pneg %p57
      $region14: #{resnet_basic_block.3} parent=11 // pred_check_branch
        %126 = sbr.rel (%p124) target = $region16
      $region15: #{resnet_basic_block.3} parent=11 // pred_region
        _
      $region16: #{resnet_basic_block.3} parent=11 // pred_fallthru
        _
    $region12: #{resnet_basic_block.3} parent=5 // pred_fallthru
      _
    %p127 = scmp.lt.s32.totalorder %s10, 2
    // Predicated region
    $region17: #{resnet_basic_block.3} parent=5 // pred_check
      %p128 = pneg %p127
    $region18: #{resnet_basic_block.3} parent=5 // pred_check_branch
      %130 = sbr.rel (%p128) target = $region20
    $region19: #{resnet_basic_block.3} parent=5 // pred_region
      // Predicated region
      $region21: #{resnet_basic_block.3} parent=19 // pred_check
        %p131 = pneg %p30
      $region22: #{resnet_basic_block.3} parent=19 // pred_check_branch
        %133 = sbr.rel (%p131) target = $region24
      $region23: #{resnet_basic_block.3} parent=19 // pred_region
        %p134 = scmp.lt.s32.totalorder %s10, 1
        %s135 = scalar_select %p134, %s10, 1
        %s136 = smul.addr %s135, 54
        %s137 = smul.addr %s136, 4
        %s138 = scalar_lea.vmem %s0, %s137
      $region24: #{resnet_basic_block.3} parent=19 // pred_fallthru
        _
    $region20: #{resnet_basic_block.3} parent=5 // pred_fallthru
      _
    %p139 = scmp.le.s32.totalorder 1, %s10
    %p140 = scmp.lt.s32.totalorder %s10, 3
    %p141 = pnand %p139, %p140
    %p142 = pneg %p141
    // Predicated region
    $region25: #{resnet_basic_block.3} parent=5 // pred_check
      _
    $region26: #{resnet_basic_block.3} parent=5 // pred_check_branch
      %144 = sbr.rel (%p141) target = $region28
    $region27: #{resnet_basic_block.3} parent=5 // pred_region
      %s145 = ssub.s32 %s10, 1
      %p146 = scmp.lt.s32.totalorder %s15, 1
      %s147 = scalar_select %p146, %s15, 1
      %s148 = smul.addr %s147, 54
      %s149 = smul.addr %s148, 4
      %s150 = scalar_lea.vmem %s0, %s149
      %p151 = pneg %p36
      %p152 = pneg %p33
      %p153 = pneg %p57
      %p154 = pneg %p54
      %p155 = pneg %p83
      %p156 = pneg %p80
      %p157 = scmp.lt.s32.totalorder %s15, 1
      %s158 = scalar_select %p157, %s15, 1
      %s159 = smul.addr %s158, 32
      %s160 = smul.addr %s159, 4
      %s161 = scalar_lea.vmem %s2, %s160
      %p162 = pneg %p109
      %p163 = pneg %p106
      %p164 = scmp.lt.s32.totalorder %s15, 1
      %s165 = scalar_select %p164, %s15, 1
      %s166 = smul.addr %s165, 2
      %s167 = scalar_lea.vmem %s3, %s166
      %p168 = scmp.lt.s32.totalorder %s15, 1
      %s169 = scalar_select %p168, %s15, 1
      %s170 = smul.addr %s169, 54
      %s171 = smul.addr %s170, 4
      %s172 = scalar_lea.vmem %s0, %s171
      %p173 = scmp.lt.s32.totalorder %s15, 1
      %s174 = scalar_select %p173, %s15, 1
      %s175 = smul.addr %s174, 32
      %s176 = smul.addr %s175, 4
      %s177 = scalar_lea.vmem %s2, %s176
      %p178 = scmp.lt.s32.totalorder %s15, 1
      %s179 = scalar_select %p178, %s15, 1
      %s180 = smul.addr %s179, 2
      %s181 = scalar_lea.vmem %s3, %s180
      %v183 = vld [vmem:[%s172] sm:$0xf]
      %v184 = vld [vmem:[%s172 + $0x4] sm:$0xf]
      %v185 = vld [vmem:[%s172 + $0xc] sm:$0xf]
      %v186 = vld [vmem:[%s172 + $0x10] sm:$0xf]
      %v187 = vld [vmem:[%s172 + $0x18] sm:$0xf]
      %v188 = vld [vmem:[%s172 + $0x1c] sm:$0xf]
      %v189 = vld [vmem:[%s172 + $0x24] sm:$0xf]
      %v190 = vld [vmem:[%s172 + $0x28] sm:$0xf]
      %v191 = vld [vmem:[%s172 + $0x30] sm:$0xf]
      %v192 = vld [vmem:[%s172 + $0x34] sm:$0xf]
      %v193 = vld [vmem:[%s172 + $0x3c] sm:$0xf]
      %v194 = vld [vmem:[%s172 + $0x40] sm:$0xf]
      %v195 = vld [vmem:[%s172 + $0x48] sm:$0xf]
      %v196 = vld [vmem:[%s172 + $0x4c] sm:$0xf]
      %v197 = vld [vmem:[%s172 + $0x54] sm:$0xf]
      %v198 = vld [vmem:[%s172 + $0x58] sm:$0xf]
      %v199 = vld [vmem:[%s172 + $0x60] sm:$0xf]
      %v200 = vld [vmem:[%s172 + $0x64] sm:$0xf]
      %v201 = vld [vmem:[%s172 + $0x6c] sm:$0xf]
      %v202 = vld [vmem:[%s172 + $0x70] sm:$0xf]
      %v203 = vld [vmem:[%s172 + $0x78] sm:$0xf]
      %v204 = vld [vmem:[%s172 + $0x7c] sm:$0xf]
      %v205 = vld [vmem:[%s172 + $0x84] sm:$0xf]
      %v206 = vld [vmem:[%s172 + $0x88] sm:$0xf]
      %v207 = vld [vmem:[%s172 + $0x90] sm:$0xf]
      %v208 = vld [vmem:[%s172 + $0x94] sm:$0xf]
      %v209 = vld [vmem:[%s172 + $0x9c] sm:$0xf]
      %v210 = vld [vmem:[%s172 + $0xa0] sm:$0xf]
      %v211 = vld [vmem:[%s172 + $0xa8] sm:$0xf]
      %v212 = vld [vmem:[%s172 + $0xac] sm:$0xf]
      %v213 = vld [vmem:[%s172 + $0xb4] sm:$0xf]
      %v214 = vld [vmem:[%s172 + $0xb8] sm:$0xf]
      %v215 = vld [vmem:[%s1] sm:$0x3]
      %v216 = vld [vmem:[%s172 + $0x8] sm:$0x1]
      %v217 = vld [vmem:[%s172 + $0x14] sm:$0x1]
      %v218 = vld [vmem:[%s172 + $0x20] sm:$0x1]
      %v219 = vld [vmem:[%s172 + $0x2c] sm:$0x1]
      %v220 = vld [vmem:[%s172 + $0x38] sm:$0x1]
      %v221 = vld [vmem:[%s172 + $0x44] sm:$0x1]
      %v222 = vld [vmem:[%s172 + $0x50] sm:$0x1]
      %v223 = vld [vmem:[%s172 + $0x5c] sm:$0x1]
      %v224 = vld [vmem:[%s172 + $0x68] sm:$0x1]
      %v225 = vld [vmem:[%s172 + $0x74] sm:$0x1]
      %v226 = vld [vmem:[%s172 + $0x80] sm:$0x1]
      %v227 = vld [vmem:[%s172 + $0x8c] sm:$0x1]
      %v228 = vld [vmem:[%s172 + $0x98] sm:$0x1]
      %v229 = vld [vmem:[%s172 + $0xa4] sm:$0x1]
      %v230 = vld [vmem:[%s172 + $0xb0] sm:$0x1]
      %v231 = vld [vmem:[%s172 + $0xbc] sm:$0x1]
      %vm232 = vsmask.f32 3328
      %vm233 = vsmask.f32 7440
      %vm234 = vmor %vm232, %vm233
      %v236 = vshrl.u32 %v183, 16
      %v238 = vrot.slane %v236, 4
      %v239 = vshll.u32 %v183, 16
      %v241 = vrot.slane %v239, 5
      %v242 = vor.u32 %v238, %v241
      %v243 = vrot.slane %v242, 4
      %v245 = vshll.u32 %v184, 16
      %v247 = vrot.slane %v245, 5
      %v248 = vsel %vm234, %v243, %v247
      %v249 = vshrl.u32 %v184, 16
      %v251 = vrot.slane %v249, 4
      %v252 = vor.u32 %v251, %v247
      %v253 = vrot.slane %v252, 4
      %v255 = vshll.u32 %v216, 16
      %v257 = vrot.slane %v255, 5
      %v258 = vsel %vm234, %v253, %v257
      %v260 = vshrl.u32 %v185, 16
      %v262 = vrot.slane %v260, 4
      %v263 = vshll.u32 %v185, 16
      %v265 = vrot.slane %v263, 5
      %v266 = vor.u32 %v262, %v265
      %v267 = vrot.slane %v266, 4
      %v269 = vshll.u32 %v186, 16
      %v271 = vrot.slane %v269, 5
      %v272 = vsel %vm234, %v267, %v271
      %v273 = vshrl.u32 %v186, 16
      %v275 = vrot.slane %v273, 4
      %v276 = vor.u32 %v275, %v271
      %v277 = vrot.slane %v276, 4
      %v279 = vshll.u32 %v217, 16
      %v281 = vrot.slane %v279, 5
      %v282 = vsel %vm234, %v277, %v281
      %v284 = vshrl.u32 %v187, 16
      %v286 = vrot.slane %v284, 4
      %v287 = vshll.u32 %v187, 16
      %v289 = vrot.slane %v287, 5
      %v290 = vor.u32 %v286, %v289
      %v291 = vrot.slane %v290, 4
      %v293 = vshll.u32 %v188, 16
      %v295 = vrot.slane %v293, 5
      %v296 = vsel %vm234, %v291, %v295
      %v297 = vshrl.u32 %v188, 16
      %v299 = vrot.slane %v297, 4
      %v300 = vor.u32 %v299, %v295
      %v301 = vrot.slane %v300, 4
      %v303 = vshll.u32 %v218, 16
      %v305 = vrot.slane %v303, 5
      %v306 = vsel %vm234, %v301, %v305
      %v308 = vshrl.u32 %v189, 16
      %v310 = vrot.slane %v308, 4
      %v311 = vshll.u32 %v189, 16
      %v313 = vrot.slane %v311, 5
      %v314 = vor.u32 %v310, %v313
      %v315 = vrot.slane %v314, 4
      %v317 = vshll.u32 %v190, 16
      %v319 = vrot.slane %v317, 5
      %v320 = vsel %vm234, %v315, %v319
      %v321 = vshrl.u32 %v190, 16
      %v323 = vrot.slane %v321, 4
      %v324 = vor.u32 %v323, %v319
      %v325 = vrot.slane %v324, 4
      %v327 = vshll.u32 %v219, 16
      %v329 = vrot.slane %v327, 5
      %v330 = vsel %vm234, %v325, %v329
      %v332 = vshrl.u32 %v191, 16
      %v334 = vrot.slane %v332, 4
      %v335 = vshll.u32 %v191, 16
      %v337 = vrot.slane %v335, 5
      %v338 = vor.u32 %v334, %v337
      %v339 = vrot.slane %v338, 4
      %v341 = vshll.u32 %v192, 16
      %v343 = vrot.slane %v341, 5
      %v344 = vsel %vm234, %v339, %v343
      %v345 = vshrl.u32 %v192, 16
      %v347 = vrot.slane %v345, 4
      %v348 = vor.u32 %v347, %v343
      %v349 = vrot.slane %v348, 4
      %v351 = vshll.u32 %v220, 16
      %v353 = vrot.slane %v351, 5
      %v354 = vsel %vm234, %v349, %v353
      %v356 = vshrl.u32 %v193, 16
      %v358 = vrot.slane %v356, 4
      %v359 = vshll.u32 %v193, 16
      %v361 = vrot.slane %v359, 5
      %v362 = vor.u32 %v358, %v361
      %v363 = vrot.slane %v362, 4
      %v365 = vshll.u32 %v194, 16
      %v367 = vrot.slane %v365, 5
      %v368 = vsel %vm234, %v363, %v367
      %v369 = vshrl.u32 %v194, 16
      %v371 = vrot.slane %v369, 4
      %v372 = vor.u32 %v371, %v367
      %v373 = vrot.slane %v372, 4
      %v375 = vshll.u32 %v221, 16
      %v377 = vrot.slane %v375, 5
      %v378 = vsel %vm234, %v373, %v377
      %v380 = vshrl.u32 %v195, 16
      %v382 = vrot.slane %v380, 4
      %v383 = vshll.u32 %v195, 16
      %v385 = vrot.slane %v383, 5
      %v386 = vor.u32 %v382, %v385
      %v387 = vrot.slane %v386, 4
      %v389 = vshll.u32 %v196, 16
      %v391 = vrot.slane %v389, 5
      %v392 = vsel %vm234, %v387, %v391
      %v393 = vshrl.u32 %v196, 16
      %v395 = vrot.slane %v393, 4
      %v396 = vor.u32 %v395, %v391
      %v397 = vrot.slane %v396, 4
      %v399 = vshll.u32 %v222, 16
      %v401 = vrot.slane %v399, 5
      %v402 = vsel %vm234, %v397, %v401
      %v404 = vshrl.u32 %v197, 16
      %v406 = vrot.slane %v404, 4
      %v407 = vshll.u32 %v197, 16
      %v409 = vrot.slane %v407, 5
      %v410 = vor.u32 %v406, %v409
      %v411 = vrot.slane %v410, 4
      %v413 = vshll.u32 %v198, 16
      %v415 = vrot.slane %v413, 5
      %v416 = vsel %vm234, %v411, %v415
      %v417 = vshrl.u32 %v198, 16
      %v419 = vrot.slane %v417, 4
      %v420 = vor.u32 %v419, %v415
      %v421 = vrot.slane %v420, 4
      %v423 = vshll.u32 %v223, 16
      %v425 = vrot.slane %v423, 5
      %v426 = vsel %vm234, %v421, %v425
      %v428 = vshrl.u32 %v199, 16
      %v430 = vrot.slane %v428, 4
      %v431 = vshll.u32 %v199, 16
      %v433 = vrot.slane %v431, 5
      %v434 = vor.u32 %v430, %v433
      %v435 = vrot.slane %v434, 4
      %v437 = vshll.u32 %v200, 16
      %v439 = vrot.slane %v437, 5
      %v440 = vsel %vm234, %v435, %v439
      %v441 = vshrl.u32 %v200, 16
      %v443 = vrot.slane %v441, 4
      %v444 = vor.u32 %v443, %v439
      %v445 = vrot.slane %v444, 4
      %v447 = vshll.u32 %v224, 16
      %v449 = vrot.slane %v447, 5
      %v450 = vsel %vm234, %v445, %v449
      %v452 = vshrl.u32 %v201, 16
      %v454 = vrot.slane %v452, 4
      %v455 = vshll.u32 %v201, 16
      %v457 = vrot.slane %v455, 5
      %v458 = vor.u32 %v454, %v457
      %v459 = vrot.slane %v458, 4
      %v461 = vshll.u32 %v202, 16
      %v463 = vrot.slane %v461, 5
      %v464 = vsel %vm234, %v459, %v463
      %v465 = vshrl.u32 %v202, 16
      %v467 = vrot.slane %v465, 4
      %v468 = vor.u32 %v467, %v463
      %v469 = vrot.slane %v468, 4
      %v471 = vshll.u32 %v225, 16
      %v473 = vrot.slane %v471, 5
      %v474 = vsel %vm234, %v469, %v473
      %v476 = vshrl.u32 %v203, 16
      %v478 = vrot.slane %v476, 4
      %v479 = vshll.u32 %v203, 16
      %v481 = vrot.slane %v479, 5
      %v482 = vor.u32 %v478, %v481
      %v483 = vrot.slane %v482, 4
      %v485 = vshll.u32 %v204, 16
      %v487 = vrot.slane %v485, 5
      %v488 = vsel %vm234, %v483, %v487
      %v489 = vshrl.u32 %v204, 16
      %v491 = vrot.slane %v489, 4
      %v492 = vor.u32 %v491, %v487
      %v493 = vrot.slane %v492, 4
      %v495 = vshll.u32 %v226, 16
      %v497 = vrot.slane %v495, 5
      %v498 = vsel %vm234, %v493, %v497
      %v500 = vshrl.u32 %v205, 16
      %v502 = vrot.slane %v500, 4
      %v503 = vshll.u32 %v205, 16
      %v505 = vrot.slane %v503, 5
      %v506 = vor.u32 %v502, %v505
      %v507 = vrot.slane %v506, 4
      %v509 = vshll.u32 %v206, 16
      %v511 = vrot.slane %v509, 5
      %v512 = vsel %vm234, %v507, %v511
      %v513 = vshrl.u32 %v206, 16
      %v515 = vrot.slane %v513, 4
      %v516 = vor.u32 %v515, %v511
      %v517 = vrot.slane %v516, 4
      %v519 = vshll.u32 %v227, 16
      %v521 = vrot.slane %v519, 5
      %v522 = vsel %vm234, %v517, %v521
      %v524 = vshrl.u32 %v207, 16
      %v526 = vrot.slane %v524, 4
      %v527 = vshll.u32 %v207, 16
      %v529 = vrot.slane %v527, 5
      %v530 = vor.u32 %v526, %v529
      %v531 = vrot.slane %v530, 4
      %v533 = vshll.u32 %v208, 16
      %v535 = vrot.slane %v533, 5
      %v536 = vsel %vm234, %v531, %v535
      %v537 = vshrl.u32 %v208, 16
      %v539 = vrot.slane %v537, 4
      %v540 = vor.u32 %v539, %v535
      %v541 = vrot.slane %v540, 4
      %v543 = vshll.u32 %v228, 16
      %v545 = vrot.slane %v543, 5
      %v546 = vsel %vm234, %v541, %v545
      %v548 = vshrl.u32 %v209, 16
      %v550 = vrot.slane %v548, 4
      %v551 = vshll.u32 %v209, 16
      %v553 = vrot.slane %v551, 5
      %v554 = vor.u32 %v550, %v553
      %v555 = vrot.slane %v554, 4
      %v557 = vshll.u32 %v210, 16
      %v559 = vrot.slane %v557, 5
      %v560 = vsel %vm234, %v555, %v559
      %v561 = vshrl.u32 %v210, 16
      %v563 = vrot.slane %v561, 4
      %v564 = vor.u32 %v563, %v559
      %v565 = vrot.slane %v564, 4
      %v567 = vshll.u32 %v229, 16
      %v569 = vrot.slane %v567, 5
      %v570 = vsel %vm234, %v565, %v569
      %v572 = vshrl.u32 %v211, 16
      %v574 = vrot.slane %v572, 4
      %v575 = vshll.u32 %v211, 16
      %v577 = vrot.slane %v575, 5
      %v578 = vor.u32 %v574, %v577
      %v579 = vrot.slane %v578, 4
      %v581 = vshll.u32 %v212, 16
      %v583 = vrot.slane %v581, 5
      %v584 = vsel %vm234, %v579, %v583
      %v585 = vshrl.u32 %v212, 16
      %v587 = vrot.slane %v585, 4
      %v588 = vor.u32 %v587, %v583
      %v589 = vrot.slane %v588, 4
      %v591 = vshll.u32 %v230, 16
      %v593 = vrot.slane %v591, 5
      %v594 = vsel %vm234, %v589, %v593
      %v596 = vshrl.u32 %v213, 16
      %v598 = vrot.slane %v596, 4
      %v599 = vshll.u32 %v213, 16
      %v601 = vrot.slane %v599, 5
      %v602 = vor.u32 %v598, %v601
      %v603 = vrot.slane %v602, 4
      %v605 = vshll.u32 %v214, 16
      %v607 = vrot.slane %v605, 5
      %v608 = vsel %vm234, %v603, %v607
      %v609 = vshrl.u32 %v214, 16
      %v611 = vrot.slane %v609, 4
      %v612 = vor.u32 %v611, %v607
      %v613 = vrot.slane %v612, 4
      %v615 = vshll.u32 %v231, 16
      %v617 = vrot.slane %v615, 5
      %v618 = vsel %vm234, %v613, %v617
      %s619 = scalar_lea.vmem %s1, 2
      %v620 = vld [vmem:[%s619] sm:$0x3]
      %v621 = vunpack.c.l.b16 %v248
      %v622 = vunpack.c.l.b16 %v258
      %v623 = vunpack.c.l.b16 %v272
      %v624 = vunpack.c.l.b16 %v282
      %v625 = vunpack.c.l.b16 %v296
      %v626 = vunpack.c.l.b16 %v306
      %v627 = vunpack.c.l.b16 %v320
      %v628 = vunpack.c.l.b16 %v330
      %v629 = vunpack.c.l.b16 %v344
      %v630 = vunpack.c.l.b16 %v354
      %v631 = vunpack.c.l.b16 %v368
      %v632 = vunpack.c.l.b16 %v378
      %v633 = vunpack.c.l.b16 %v392
      %v634 = vunpack.c.l.b16 %v402
      %v635 = vunpack.c.l.b16 %v416
      %v636 = vunpack.c.l.b16 %v426
      %v637 = vunpack.c.l.b16 %v440
      %v638 = vunpack.c.l.b16 %v450
      %v639 = vunpack.c.l.b16 %v464
      %v640 = vunpack.c.l.b16 %v474
      %v641 = vunpack.c.l.b16 %v488
      %v642 = vunpack.c.l.b16 %v498
      %v643 = vunpack.c.l.b16 %v512
      %v644 = vunpack.c.l.b16 %v522
      %v645 = vunpack.c.l.b16 %v536
      %v646 = vunpack.c.l.b16 %v546
      %v647 = vunpack.c.l.b16 %v560
      %v648 = vunpack.c.l.b16 %v570
      %v649 = vunpack.c.l.b16 %v584
      %v650 = vunpack.c.l.b16 %v594
      %v651 = vunpack.c.l.b16 %v608
      %v652 = vunpack.c.l.b16 %v618
      %v653 = vpack.c.b16 %v622, %v621
      %v654 = vpack.c.b16 %v624, %v623
      %v655 = vpack.c.b16 %v626, %v625
      %v656 = vpack.c.b16 %v628, %v627
      %v657 = vpack.c.b16 %v630, %v629
      %v658 = vpack.c.b16 %v632, %v631
      %v659 = vpack.c.b16 %v634, %v633
      %v660 = vpack.c.b16 %v636, %v635
      %v661 = vpack.c.b16 %v638, %v637
      %v662 = vpack.c.b16 %v640, %v639
      %v663 = vpack.c.b16 %v642, %v641
      %v664 = vpack.c.b16 %v644, %v643
      %v665 = vpack.c.b16 %v646, %v645
      %v666 = vpack.c.b16 %v648, %v647
      %v667 = vpack.c.b16 %v650, %v649
      %v668 = vpack.c.b16 %v652, %v651
      %vm669 = vcmask 31744
      %v671 = vsel %vm669, %v653, 0
      %v674 = vsel %vm669, %v654, 0
      %v677 = vsel %vm669, %v655, 0
      %v680 = vsel %vm669, %v656, 0
      %v683 = vsel %vm669, %v657, 0
      %v686 = vsel %vm669, %v658, 0
      %v689 = vsel %vm669, %v659, 0
      %v692 = vsel %vm669, %v660, 0
      %v695 = vsel %vm669, %v661, 0
      %v698 = vsel %vm669, %v662, 0
      %v701 = vsel %vm669, %v663, 0
      %v704 = vsel %vm669, %v664, 0
      %v707 = vsel %vm669, %v665, 0
      %v710 = vsel %vm669, %v666, 0
      %v713 = vsel %vm669, %v667, 0
      %v716 = vsel %vm669, %v668, 0
      %vm718 = vcmask 1041408
      %v720 = vsel %vm718, %v620, 0
      %722 = vmatpush.bf16.msra.mxu0 0
      %723 = vmatpush.bf16.msra.mxu0 0
      %724 = vmatpush.bf16.msra.mxu0 0
      %725 = vmatpush.bf16.msra.mxu0 0
      %726 = vmatpush.bf16.msra.mxu0 0
      %727 = vmatpush.bf16.msra.mxu0 0
      %728 = vmatpush.bf16.msra.mxu0 0
      %729 = vmatpush.bf16.msra.mxu0 %v720
      %730 = vmatmul.bf16.gmra.mxu0 %v671
      %v731 = vpop.f32.mrf.mxu0
      %v732 = vadd.f32 0.0, %v731
      %v733 = vpop.f32.mrf.mxu0
      %v734 = vadd.f32 0.0, %v733
      %735 = vmatmul.bf16.gmra.mxu0 %v674
      %v736 = vpop.f32.mrf.mxu0
      %v737 = vadd.f32 0.0, %v736
      %v738 = vpop.f32.mrf.mxu0
      %v739 = vadd.f32 0.0, %v738
      %740 = vmatmul.bf16.gmra.mxu0 %v677
      %v741 = vpop.f32.mrf.mxu0
      %v742 = vadd.f32 0.0, %v741
      %v743 = vpop.f32.mrf.mxu0
      %v744 = vadd.f32 0.0, %v743
      %745 = vmatmul.bf16.gmra.mxu0 %v680
      %v746 = vpop.f32.mrf.mxu0
      %v747 = vadd.f32 0.0, %v746
      %v748 = vpop.f32.mrf.mxu0
      %v749 = vadd.f32 0.0, %v748
      %750 = vmatmul.bf16.gmra.mxu0 %v683
      %v751 = vpop.f32.mrf.mxu0
      %v752 = vadd.f32 0.0, %v751
      %v753 = vpop.f32.mrf.mxu0
      %v754 = vadd.f32 0.0, %v753
      %755 = vmatmul.bf16.gmra.mxu0 %v686
      %v756 = vpop.f32.mrf.mxu0
      %v757 = vadd.f32 0.0, %v756
      %v758 = vpop.f32.mrf.mxu0
      %v759 = vadd.f32 0.0, %v758
      %760 = vmatmul.bf16.gmra.mxu0 %v689
      %v761 = vpop.f32.mrf.mxu0
      %v762 = vadd.f32 0.0, %v761
      %v763 = vpop.f32.mrf.mxu0
      %v764 = vadd.f32 0.0, %v763
      %765 = vmatmul.bf16.gmra.mxu0 %v692
      %v766 = vpop.f32.mrf.mxu0
      %v767 = vadd.f32 0.0, %v766
      %v768 = vpop.f32.mrf.mxu0
      %v769 = vadd.f32 0.0, %v768
      %770 = vmatmul.bf16.gmra.mxu0 %v695
      %v771 = vpop.f32.mrf.mxu0
      %v772 = vadd.f32 0.0, %v771
      %v773 = vpop.f32.mrf.mxu0
      %v774 = vadd.f32 0.0, %v773
      %775 = vmatmul.bf16.gmra.mxu0 %v698
      %v776 = vpop.f32.mrf.mxu0
      %v777 = vadd.f32 0.0, %v776
      %v778 = vpop.f32.mrf.mxu0
      %v779 = vadd.f32 0.0, %v778
      %780 = vmatmul.bf16.gmra.mxu0 %v701
      %v781 = vpop.f32.mrf.mxu0
      %v782 = vadd.f32 0.0, %v781
      %v783 = vpop.f32.mrf.mxu0
      %v784 = vadd.f32 0.0, %v783
      %785 = vmatmul.bf16.gmra.mxu0 %v704
      %v786 = vpop.f32.mrf.mxu0
      %v787 = vadd.f32 0.0, %v786
      %v788 = vpop.f32.mrf.mxu0
      %v789 = vadd.f32 0.0, %v788
      %790 = vmatmul.bf16.gmra.mxu0 %v707
      %v791 = vpop.f32.mrf.mxu0
      %v792 = vadd.f32 0.0, %v791
      %v793 = vpop.f32.mrf.mxu0
      %v794 = vadd.f32 0.0, %v793
      %795 = vmatmul.bf16.gmra.mxu0 %v710
      %v796 = vpop.f32.mrf.mxu0
      %v797 = vadd.f32 0.0, %v796
      %v798 = vpop.f32.mrf.mxu0
      %v799 = vadd.f32 0.0, %v798
      %800 = vmatmul.bf16.gmra.mxu0 %v713
      %v801 = vpop.f32.mrf.mxu0
      %v802 = vadd.f32 0.0, %v801
      %v803 = vpop.f32.mrf.mxu0
      %v804 = vadd.f32 0.0, %v803
      %805 = vmatmul.bf16.gmra.mxu0 %v716
      %v806 = vpop.f32.mrf.mxu0
      %v807 = vadd.f32 0.0, %v806
      %v808 = vpop.f32.mrf.mxu0
      %v809 = vadd.f32 0.0, %v808
      %810 = vdwg.mxu0
      %v843 = vunpack.c.l.b16 %v183
      %v844 = vunpack.c.l.b16 %v184
      %v845 = vunpack.c.l.b16 %v185
      %v846 = vunpack.c.l.b16 %v186
      %v847 = vunpack.c.l.b16 %v187
      %v848 = vunpack.c.l.b16 %v188
      %v849 = vunpack.c.l.b16 %v189
      %v850 = vunpack.c.l.b16 %v190
      %v851 = vunpack.c.l.b16 %v191
      %v852 = vunpack.c.l.b16 %v192
      %v853 = vunpack.c.l.b16 %v193
      %v854 = vunpack.c.l.b16 %v194
      %v855 = vunpack.c.l.b16 %v195
      %v856 = vunpack.c.l.b16 %v196
      %v857 = vunpack.c.l.b16 %v197
      %v858 = vunpack.c.l.b16 %v198
      %v859 = vunpack.c.l.b16 %v199
      %v860 = vunpack.c.l.b16 %v200
      %v861 = vunpack.c.l.b16 %v201
      %v862 = vunpack.c.l.b16 %v202
      %v863 = vunpack.c.l.b16 %v203
      %v864 = vunpack.c.l.b16 %v204
      %v865 = vunpack.c.l.b16 %v205
      %v866 = vunpack.c.l.b16 %v206
      %v867 = vunpack.c.l.b16 %v207
      %v868 = vunpack.c.l.b16 %v208
      %v869 = vunpack.c.l.b16 %v209
      %v870 = vunpack.c.l.b16 %v210
      %v871 = vunpack.c.l.b16 %v211
      %v872 = vunpack.c.l.b16 %v212
      %v873 = vunpack.c.l.b16 %v213
      %v874 = vunpack.c.l.b16 %v214
      %v875 = vpack.c.b16 %v844, %v843
      %v876 = vpack.c.b16 %v846, %v845
      %v877 = vpack.c.b16 %v848, %v847
      %v878 = vpack.c.b16 %v850, %v849
      %v879 = vpack.c.b16 %v852, %v851
      %v880 = vpack.c.b16 %v854, %v853
      %v881 = vpack.c.b16 %v856, %v855
      %v882 = vpack.c.b16 %v858, %v857
      %v883 = vpack.c.b16 %v860, %v859
      %v884 = vpack.c.b16 %v862, %v861
      %v885 = vpack.c.b16 %v864, %v863
      %v886 = vpack.c.b16 %v866, %v865
      %v887 = vpack.c.b16 %v868, %v867
      %v888 = vpack.c.b16 %v870, %v869
      %v889 = vpack.c.b16 %v872, %v871
      %v890 = vpack.c.b16 %v874, %v873
      %v892 = vsel %vm669, %v875, 0
      %v895 = vsel %vm669, %v876, 0
      %v898 = vsel %vm669, %v877, 0
      %v901 = vsel %vm669, %v878, 0
      %v904 = vsel %vm669, %v879, 0
      %v907 = vsel %vm669, %v880, 0
      %v910 = vsel %vm669, %v881, 0
      %v913 = vsel %vm669, %v882, 0
      %v916 = vsel %vm669, %v883, 0
      %v919 = vsel %vm669, %v884, 0
      %v922 = vsel %vm669, %v885, 0
      %v925 = vsel %vm669, %v886, 0
      %v928 = vsel %vm669, %v887, 0
      %v931 = vsel %vm669, %v888, 0
      %v934 = vsel %vm669, %v889, 0
      %v937 = vsel %vm669, %v890, 0
      %v940 = vsel %vm718, %v215, 0
      %942 = vmatpush.bf16.msra.mxu0 0
      %943 = vmatpush.bf16.msra.mxu0 0
      %944 = vmatpush.bf16.msra.mxu0 0
      %945 = vmatpush.bf16.msra.mxu0 0
      %946 = vmatpush.bf16.msra.mxu0 0
      %947 = vmatpush.bf16.msra.mxu0 0
      %948 = vmatpush.bf16.msra.mxu0 0
      %949 = vmatpush.bf16.msra.mxu0 %v940
      %950 = vmatmul.bf16.gmra.mxu0 %v892
      %v951 = vpop.f32.mrf.mxu0
      %v952 = vadd.f32 %v732, %v951
      %v953 = vpop.f32.mrf.mxu0
      %v954 = vadd.f32 %v734, %v953
      %955 = vmatmul.bf16.gmra.mxu0 %v895
      %v956 = vpop.f32.mrf.mxu0
      %v957 = vadd.f32 %v737, %v956
      %v958 = vpop.f32.mrf.mxu0
      %v959 = vadd.f32 %v739, %v958
      %960 = vmatmul.bf16.gmra.mxu0 %v898
      %v961 = vpop.f32.mrf.mxu0
      %v962 = vadd.f32 %v742, %v961
      %v963 = vpop.f32.mrf.mxu0
      %v964 = vadd.f32 %v744, %v963
      %965 = vmatmul.bf16.gmra.mxu0 %v901
      %v966 = vpop.f32.mrf.mxu0
      %v967 = vadd.f32 %v747, %v966
      %v968 = vpop.f32.mrf.mxu0
      %v969 = vadd.f32 %v749, %v968
      %970 = vmatmul.bf16.gmra.mxu0 %v904
      %v971 = vpop.f32.mrf.mxu0
      %v972 = vadd.f32 %v752, %v971
      %v973 = vpop.f32.mrf.mxu0
      %v974 = vadd.f32 %v754, %v973
      %975 = vmatmul.bf16.gmra.mxu0 %v907
      %v976 = vpop.f32.mrf.mxu0
      %v977 = vadd.f32 %v757, %v976
      %v978 = vpop.f32.mrf.mxu0
      %v979 = vadd.f32 %v759, %v978
      %980 = vmatmul.bf16.gmra.mxu0 %v910
      %v981 = vpop.f32.mrf.mxu0
      %v982 = vadd.f32 %v762, %v981
      %v983 = vpop.f32.mrf.mxu0
      %v984 = vadd.f32 %v764, %v983
      %985 = vmatmul.bf16.gmra.mxu0 %v913
      %v986 = vpop.f32.mrf.mxu0
      %v987 = vadd.f32 %v767, %v986
      %v988 = vpop.f32.mrf.mxu0
      %v989 = vadd.f32 %v769, %v988
      %990 = vmatmul.bf16.gmra.mxu0 %v916
      %v991 = vpop.f32.mrf.mxu0
      %v992 = vadd.f32 %v772, %v991
      %v993 = vpop.f32.mrf.mxu0
      %v994 = vadd.f32 %v774, %v993
      %995 = vmatmul.bf16.gmra.mxu0 %v919
      %v996 = vpop.f32.mrf.mxu0
      %v997 = vadd.f32 %v777, %v996
      %v998 = vpop.f32.mrf.mxu0
      %v999 = vadd.f32 %v779, %v998
      %1000 = vmatmul.bf16.gmra.mxu0 %v922
      %v1001 = vpop.f32.mrf.mxu0
      %v1002 = vadd.f32 %v782, %v1001
      %v1003 = vpop.f32.mrf.mxu0
      %v1004 = vadd.f32 %v784, %v1003
      %1005 = vmatmul.bf16.gmra.mxu0 %v925
      %v1006 = vpop.f32.mrf.mxu0
      %v1007 = vadd.f32 %v787, %v1006
      %v1008 = vpop.f32.mrf.mxu0
      %v1009 = vadd.f32 %v789, %v1008
      %1010 = vmatmul.bf16.gmra.mxu0 %v928
      %v1011 = vpop.f32.mrf.mxu0
      %v1012 = vadd.f32 %v792, %v1011
      %v1013 = vpop.f32.mrf.mxu0
      %v1014 = vadd.f32 %v794, %v1013
      %1015 = vmatmul.bf16.gmra.mxu0 %v931
      %v1016 = vpop.f32.mrf.mxu0
      %v1017 = vadd.f32 %v797, %v1016
      %v1018 = vpop.f32.mrf.mxu0
      %v1019 = vadd.f32 %v799, %v1018
      %1020 = vmatmul.bf16.gmra.mxu0 %v934
      %v1021 = vpop.f32.mrf.mxu0
      %v1022 = vadd.f32 %v802, %v1021
      %v1023 = vpop.f32.mrf.mxu0
      %v1024 = vadd.f32 %v804, %v1023
      %1025 = vmatmul.bf16.gmra.mxu0 %v937
      %v1026 = vpop.f32.mrf.mxu0
      %v1027 = vadd.f32 %v807, %v1026
      %v1028 = vpop.f32.mrf.mxu0
      %v1029 = vadd.f32 %v809, %v1028
      %1030 = vdwg.mxu0
      %v1031 = vld [vmem:[%s172] sm:$0xe]
      %v1032 = vld [vmem:[%s172 + $0xc] sm:$0xe]
      %v1033 = vld [vmem:[%s172 + $0x18] sm:$0xe]
      %v1034 = vld [vmem:[%s172 + $0x24] sm:$0xe]
      %v1035 = vld [vmem:[%s172 + $0x30] sm:$0xe]
      %v1036 = vld [vmem:[%s172 + $0x3c] sm:$0xe]
      %v1037 = vld [vmem:[%s172 + $0x48] sm:$0xe]
      %v1038 = vld [vmem:[%s172 + $0x54] sm:$0xe]
      %v1039 = vld [vmem:[%s172 + $0x60] sm:$0xe]
      %v1040 = vld [vmem:[%s172 + $0x6c] sm:$0xe]
      %v1041 = vld [vmem:[%s172 + $0x78] sm:$0xe]
      %v1042 = vld [vmem:[%s172 + $0x84] sm:$0xe]
      %v1043 = vld [vmem:[%s172 + $0x90] sm:$0xe]
      %v1044 = vld [vmem:[%s172 + $0x9c] sm:$0xe]
      %v1045 = vld [vmem:[%s172 + $0xa8] sm:$0xe]
      %v1046 = vld [vmem:[%s172 + $0xb4] sm:$0xe]
      %vm1079 = vcmask 1042432
      %vm1080 = vcmask 1046532
      %vm1081 = vmor %vm1079, %vm1080
      %v1082 = vrot.slane %v1031, 5
      %v1083 = vrot.slane %v1082, 4
      %v1084 = vrot.slane %v184, 5
      %v1085 = vsel %vm1081, %v1083, %v1084
      %v1086 = vrot.slane %v1084, 4
      %v1087 = vrot.slane %v216, 5
      %v1088 = vsel %vm1081, %v1086, %v1087
      %v1089 = vrot.slane %v1032, 5
      %v1090 = vrot.slane %v1089, 4
      %v1091 = vrot.slane %v186, 5
      %v1092 = vsel %vm1081, %v1090, %v1091
      %v1093 = vrot.slane %v1091, 4
      %v1094 = vrot.slane %v217, 5
      %v1095 = vsel %vm1081, %v1093, %v1094
      %v1096 = vrot.slane %v1033, 5
      %v1097 = vrot.slane %v1096, 4
      %v1098 = vrot.slane %v188, 5
      %v1099 = vsel %vm1081, %v1097, %v1098
      %v1100 = vrot.slane %v1098, 4
      %v1101 = vrot.slane %v218, 5
      %v1102 = vsel %vm1081, %v1100, %v1101
      %v1103 = vrot.slane %v1034, 5
      %v1104 = vrot.slane %v1103, 4
      %v1105 = vrot.slane %v190, 5
      %v1106 = vsel %vm1081, %v1104, %v1105
      %v1107 = vrot.slane %v1105, 4
      %v1108 = vrot.slane %v219, 5
      %v1109 = vsel %vm1081, %v1107, %v1108
      %v1110 = vrot.slane %v1035, 5
      %v1111 = vrot.slane %v1110, 4
      %v1112 = vrot.slane %v192, 5
      %v1113 = vsel %vm1081, %v1111, %v1112
      %v1114 = vrot.slane %v1112, 4
      %v1115 = vrot.slane %v220, 5
      %v1116 = vsel %vm1081, %v1114, %v1115
      %v1117 = vrot.slane %v1036, 5
      %v1118 = vrot.slane %v1117, 4
      %v1119 = vrot.slane %v194, 5
      %v1120 = vsel %vm1081, %v1118, %v1119
      %v1121 = vrot.slane %v1119, 4
      %v1122 = vrot.slane %v221, 5
      %v1123 = vsel %vm1081, %v1121, %v1122
      %v1124 = vrot.slane %v1037, 5
      %v1125 = vrot.slane %v1124, 4
      %v1126 = vrot.slane %v196, 5
      %v1127 = vsel %vm1081, %v1125, %v1126
      %v1128 = vrot.slane %v1126, 4
      %v1129 = vrot.slane %v222, 5
      %v1130 = vsel %vm1081, %v1128, %v1129
      %v1131 = vrot.slane %v1038, 5
      %v1132 = vrot.slane %v1131, 4
      %v1133 = vrot.slane %v198, 5
      %v1134 = vsel %vm1081, %v1132, %v1133
      %v1135 = vrot.slane %v1133, 4
      %v1136 = vrot.slane %v223, 5
      %v1137 = vsel %vm1081, %v1135, %v1136
      %v1138 = vrot.slane %v1039, 5
      %v1139 = vrot.slane %v1138, 4
      %v1140 = vrot.slane %v200, 5
      %v1141 = vsel %vm1081, %v1139, %v1140
      %v1142 = vrot.slane %v1140, 4
      %v1143 = vrot.slane %v224, 5
      %v1144 = vsel %vm1081, %v1142, %v1143
      %v1145 = vrot.slane %v1040, 5
      %v1146 = vrot.slane %v1145, 4
      %v1147 = vrot.slane %v202, 5
      %v1148 = vsel %vm1081, %v1146, %v1147
      %v1149 = vrot.slane %v1147, 4
      %v1150 = vrot.slane %v225, 5
      %v1151 = vsel %vm1081, %v1149, %v1150
      %v1152 = vrot.slane %v1041, 5
      %v1153 = vrot.slane %v1152, 4
      %v1154 = vrot.slane %v204, 5
      %v1155 = vsel %vm1081, %v1153, %v1154
      %v1156 = vrot.slane %v1154, 4
      %v1157 = vrot.slane %v226, 5
      %v1158 = vsel %vm1081, %v1156, %v1157
      %v1159 = vrot.slane %v1042, 5
      %v1160 = vrot.slane %v1159, 4
      %v1161 = vrot.slane %v206, 5
      %v1162 = vsel %vm1081, %v1160, %v1161
      %v1163 = vrot.slane %v1161, 4
      %v1164 = vrot.slane %v227, 5
      %v1165 = vsel %vm1081, %v1163, %v1164
      %v1166 = vrot.slane %v1043, 5
      %v1167 = vrot.slane %v1166, 4
      %v1168 = vrot.slane %v208, 5
      %v1169 = vsel %vm1081, %v1167, %v1168
      %v1170 = vrot.slane %v1168, 4
      %v1171 = vrot.slane %v228, 5
      %v1172 = vsel %vm1081, %v1170, %v1171
      %v1173 = vrot.slane %v1044, 5
      %v1174 = vrot.slane %v1173, 4
      %v1175 = vrot.slane %v210, 5
      %v1176 = vsel %vm1081, %v1174, %v1175
      %v1177 = vrot.slane %v1175, 4
      %v1178 = vrot.slane %v229, 5
      %v1179 = vsel %vm1081, %v1177, %v1178
      %v1180 = vrot.slane %v1045, 5
      %v1181 = vrot.slane %v1180, 4
      %v1182 = vrot.slane %v212, 5
      %v1183 = vsel %vm1081, %v1181, %v1182
      %v1184 = vrot.slane %v1182, 4
      %v1185 = vrot.slane %v230, 5
      %v1186 = vsel %vm1081, %v1184, %v1185
      %v1187 = vrot.slane %v1046, 5
      %v1188 = vrot.slane %v1187, 4
      %v1189 = vrot.slane %v214, 5
      %v1190 = vsel %vm1081, %v1188, %v1189
      %v1191 = vrot.slane %v1189, 4
      %v1192 = vrot.slane %v231, 5
      %v1193 = vsel %vm1081, %v1191, %v1192
      %s1194 = scalar_lea.vmem %s1, 4
      %v1195 = vld [vmem:[%s1194] sm:$0x3]
      %v1196 = vunpack.c.l.b16 %v1085
      %v1197 = vunpack.c.l.b16 %v1088
      %v1198 = vunpack.c.l.b16 %v1092
      %v1199 = vunpack.c.l.b16 %v1095
      %v1200 = vunpack.c.l.b16 %v1099
      %v1201 = vunpack.c.l.b16 %v1102
      %v1202 = vunpack.c.l.b16 %v1106
      %v1203 = vunpack.c.l.b16 %v1109
      %v1204 = vunpack.c.l.b16 %v1113
      %v1205 = vunpack.c.l.b16 %v1116
      %v1206 = vunpack.c.l.b16 %v1120
      %v1207 = vunpack.c.l.b16 %v1123
      %v1208 = vunpack.c.l.b16 %v1127
      %v1209 = vunpack.c.l.b16 %v1130
      %v1210 = vunpack.c.l.b16 %v1134
      %v1211 = vunpack.c.l.b16 %v1137
      %v1212 = vunpack.c.l.b16 %v1141
      %v1213 = vunpack.c.l.b16 %v1144
      %v1214 = vunpack.c.l.b16 %v1148
      %v1215 = vunpack.c.l.b16 %v1151
      %v1216 = vunpack.c.l.b16 %v1155
      %v1217 = vunpack.c.l.b16 %v1158
      %v1218 = vunpack.c.l.b16 %v1162
      %v1219 = vunpack.c.l.b16 %v1165
      %v1220 = vunpack.c.l.b16 %v1169
      %v1221 = vunpack.c.l.b16 %v1172
      %v1222 = vunpack.c.l.b16 %v1176
      %v1223 = vunpack.c.l.b16 %v1179
      %v1224 = vunpack.c.l.b16 %v1183
      %v1225 = vunpack.c.l.b16 %v1186
      %v1226 = vunpack.c.l.b16 %v1190
      %v1227 = vunpack.c.l.b16 %v1193
      %v1228 = vpack.c.b16 %v1197, %v1196
      %v1229 = vpack.c.b16 %v1199, %v1198
      %v1230 = vpack.c.b16 %v1201, %v1200
      %v1231 = vpack.c.b16 %v1203, %v1202
      %v1232 = vpack.c.b16 %v1205, %v1204
      %v1233 = vpack.c.b16 %v1207, %v1206
      %v1234 = vpack.c.b16 %v1209, %v1208
      %v1235 = vpack.c.b16 %v1211, %v1210
      %v1236 = vpack.c.b16 %v1213, %v1212
      %v1237 = vpack.c.b16 %v1215, %v1214
      %v1238 = vpack.c.b16 %v1217, %v1216
      %v1239 = vpack.c.b16 %v1219, %v1218
      %v1240 = vpack.c.b16 %v1221, %v1220
      %v1241 = vpack.c.b16 %v1223, %v1222
      %v1242 = vpack.c.b16 %v1225, %v1224
      %v1243 = vpack.c.b16 %v1227, %v1226
      %v1245 = vsel %vm669, %v1228, 0
      %v1248 = vsel %vm669, %v1229, 0
      %v1251 = vsel %vm669, %v1230, 0
      %v1254 = vsel %vm669, %v1231, 0
      %v1257 = vsel %vm669, %v1232, 0
      %v1260 = vsel %vm669, %v1233, 0
      %v1263 = vsel %vm669, %v1234, 0
      %v1266 = vsel %vm669, %v1235, 0
      %v1269 = vsel %vm669, %v1236, 0
      %v1272 = vsel %vm669, %v1237, 0
      %v1275 = vsel %vm669, %v1238, 0
      %v1278 = vsel %vm669, %v1239, 0
      %v1281 = vsel %vm669, %v1240, 0
      %v1284 = vsel %vm669, %v1241, 0
      %v1287 = vsel %vm669, %v1242, 0
      %v1290 = vsel %vm669, %v1243, 0
      %v1293 = vsel %vm718, %v1195, 0
      %1295 = vmatpush.bf16.msra.mxu0 0
      %1296 = vmatpush.bf16.msra.mxu0 0
      %1297 = vmatpush.bf16.msra.mxu0 0
      %1298 = vmatpush.bf16.msra.mxu0 0
      %1299 = vmatpush.bf16.msra.mxu0 0
      %1300 = vmatpush.bf16.msra.mxu0 0
      %1301 = vmatpush.bf16.msra.mxu0 0
      %1302 = vmatpush.bf16.msra.mxu0 %v1293
      %1303 = vmatmul.bf16.gmra.mxu0 %v1245
      %v1304 = vpop.f32.mrf.mxu0
      %v1305 = vadd.f32 0.0, %v1304
      %v1306 = vpop.f32.mrf.mxu0
      %v1307 = vadd.f32 0.0, %v1306
      %1308 = vmatmul.bf16.gmra.mxu0 %v1248
      %v1309 = vpop.f32.mrf.mxu0
      %v1310 = vadd.f32 0.0, %v1309
      %v1311 = vpop.f32.mrf.mxu0
      %v1312 = vadd.f32 0.0, %v1311
      %1313 = vmatmul.bf16.gmra.mxu0 %v1251
      %v1314 = vpop.f32.mrf.mxu0
      %v1315 = vadd.f32 0.0, %v1314
      %v1316 = vpop.f32.mrf.mxu0
      %v1317 = vadd.f32 0.0, %v1316
      %1318 = vmatmul.bf16.gmra.mxu0 %v1254
      %v1319 = vpop.f32.mrf.mxu0
      %v1320 = vadd.f32 0.0, %v1319
      %v1321 = vpop.f32.mrf.mxu0
      %v1322 = vadd.f32 0.0, %v1321
      %1323 = vmatmul.bf16.gmra.mxu0 %v1257
      %v1324 = vpop.f32.mrf.mxu0
      %v1325 = vadd.f32 0.0, %v1324
      %v1326 = vpop.f32.mrf.mxu0
      %v1327 = vadd.f32 0.0, %v1326
      %1328 = vmatmul.bf16.gmra.mxu0 %v1260
      %v1329 = vpop.f32.mrf.mxu0
      %v1330 = vadd.f32 0.0, %v1329
      %v1331 = vpop.f32.mrf.mxu0
      %v1332 = vadd.f32 0.0, %v1331
      %1333 = vmatmul.bf16.gmra.mxu0 %v1263
      %v1334 = vpop.f32.mrf.mxu0
      %v1335 = vadd.f32 0.0, %v1334
      %v1336 = vpop.f32.mrf.mxu0
      %v1337 = vadd.f32 0.0, %v1336
      %1338 = vmatmul.bf16.gmra.mxu0 %v1266
      %v1339 = vpop.f32.mrf.mxu0
      %v1340 = vadd.f32 0.0, %v1339
      %v1341 = vpop.f32.mrf.mxu0
      %v1342 = vadd.f32 0.0, %v1341
      %1343 = vmatmul.bf16.gmra.mxu0 %v1269
      %v1344 = vpop.f32.mrf.mxu0
      %v1345 = vadd.f32 0.0, %v1344
      %v1346 = vpop.f32.mrf.mxu0
      %v1347 = vadd.f32 0.0, %v1346
      %1348 = vmatmul.bf16.gmra.mxu0 %v1272
      %v1349 = vpop.f32.mrf.mxu0
      %v1350 = vadd.f32 0.0, %v1349
      %v1351 = vpop.f32.mrf.mxu0
      %v1352 = vadd.f32 0.0, %v1351
      %1353 = vmatmul.bf16.gmra.mxu0 %v1275
      %v1354 = vpop.f32.mrf.mxu0
      %v1355 = vadd.f32 0.0, %v1354
      %v1356 = vpop.f32.mrf.mxu0
      %v1357 = vadd.f32 0.0, %v1356
      %1358 = vmatmul.bf16.gmra.mxu0 %v1278
      %v1359 = vpop.f32.mrf.mxu0
      %v1360 = vadd.f32 0.0, %v1359
      %v1361 = vpop.f32.mrf.mxu0
      %v1362 = vadd.f32 0.0, %v1361
      %1363 = vmatmul.bf16.gmra.mxu0 %v1281
      %v1364 = vpop.f32.mrf.mxu0
      %v1365 = vadd.f32 0.0, %v1364
      %v1366 = vpop.f32.mrf.mxu0
      %v1367 = vadd.f32 0.0, %v1366
      %1368 = vmatmul.bf16.gmra.mxu0 %v1284
      %v1369 = vpop.f32.mrf.mxu0
      %v1370 = vadd.f32 0.0, %v1369
      %v1371 = vpop.f32.mrf.mxu0
      %v1372 = vadd.f32 0.0, %v1371
      %1373 = vmatmul.bf16.gmra.mxu0 %v1287
      %v1374 = vpop.f32.mrf.mxu0
      %v1375 = vadd.f32 0.0, %v1374
      %v1376 = vpop.f32.mrf.mxu0
      %v1377 = vadd.f32 0.0, %v1376
      %1378 = vmatmul.bf16.gmra.mxu0 %v1290
      %v1379 = vpop.f32.mrf.mxu0
      %v1380 = vadd.f32 0.0, %v1379
      %v1381 = vpop.f32.mrf.mxu0
      %v1382 = vadd.f32 0.0, %v1381
      %1383 = vdwg.mxu0
      %v1384 = vadd.f32 %v952, %v1305
      %v1385 = vadd.f32 %v954, %v1307
      %v1386 = vadd.f32 %v957, %v1310
      %v1387 = vadd.f32 %v959, %v1312
      %v1388 = vadd.f32 %v962, %v1315
      %v1389 = vadd.f32 %v964, %v1317
      %v1390 = vadd.f32 %v967, %v1320
      %v1391 = vadd.f32 %v969, %v1322
      %v1392 = vadd.f32 %v972, %v1325
      %v1393 = vadd.f32 %v974, %v1327
      %v1394 = vadd.f32 %v977, %v1330
      %v1395 = vadd.f32 %v979, %v1332
      %v1396 = vadd.f32 %v982, %v1335
      %v1397 = vadd.f32 %v984, %v1337
      %v1398 = vadd.f32 %v987, %v1340
      %v1399 = vadd.f32 %v989, %v1342
      %v1400 = vadd.f32 %v992, %v1345
      %v1401 = vadd.f32 %v994, %v1347
      %v1402 = vadd.f32 %v997, %v1350
      %v1403 = vadd.f32 %v999, %v1352
      %v1404 = vadd.f32 %v1002, %v1355
      %v1405 = vadd.f32 %v1004, %v1357
      %v1406 = vadd.f32 %v1007, %v1360
      %v1407 = vadd.f32 %v1009, %v1362
      %v1408 = vadd.f32 %v1012, %v1365
      %v1409 = vadd.f32 %v1014, %v1367
      %v1410 = vadd.f32 %v1017, %v1370
      %v1411 = vadd.f32 %v1019, %v1372
      %v1412 = vadd.f32 %v1022, %v1375
      %v1413 = vadd.f32 %v1024, %v1377
      %v1414 = vadd.f32 %v1027, %v1380
      %v1415 = vadd.f32 %v1029, %v1382
      %s1416 = scalar_lea.vmem %s172, 12
      %v1417 = vld [vmem:[%s1416] sm:$0xf]
      %v1418 = vld [vmem:[%s1416 + $0x4] sm:$0xf]
      %v1419 = vld [vmem:[%s1416 + $0xc] sm:$0xf]
      %v1420 = vld [vmem:[%s1416 + $0x10] sm:$0xf]
      %v1421 = vld [vmem:[%s1416 + $0x18] sm:$0xf]
      %v1422 = vld [vmem:[%s1416 + $0x1c] sm:$0xf]
      %v1423 = vld [vmem:[%s1416 + $0x24] sm:$0xf]
      %v1424 = vld [vmem:[%s1416 + $0x28] sm:$0xf]
      %v1425 = vld [vmem:[%s1416 + $0x30] sm:$0xf]
      %v1426 = vld [vmem:[%s1416 + $0x34] sm:$0xf]
      %v1427 = vld [vmem:[%s1416 + $0x3c] sm:$0xf]
      %v1428 = vld [vmem:[%s1416 + $0x40] sm:$0xf]
      %v1429 = vld [vmem:[%s1416 + $0x48] sm:$0xf]
      %v1430 = vld [vmem:[%s1416 + $0x4c] sm:$0xf]
      %v1431 = vld [vmem:[%s1416 + $0x54] sm:$0xf]
      %v1432 = vld [vmem:[%s1416 + $0x58] sm:$0xf]
      %v1433 = vld [vmem:[%s1416 + $0x60] sm:$0xf]
      %v1434 = vld [vmem:[%s1416 + $0x64] sm:$0xf]
      %v1435 = vld [vmem:[%s1416 + $0x6c] sm:$0xf]
      %v1436 = vld [vmem:[%s1416 + $0x70] sm:$0xf]
      %v1437 = vld [vmem:[%s1416 + $0x78] sm:$0xf]
      %v1438 = vld [vmem:[%s1416 + $0x7c] sm:$0xf]
      %v1439 = vld [vmem:[%s1416 + $0x84] sm:$0xf]
      %v1440 = vld [vmem:[%s1416 + $0x88] sm:$0xf]
      %v1441 = vld [vmem:[%s1416 + $0x90] sm:$0xf]
      %v1442 = vld [vmem:[%s1416 + $0x94] sm:$0xf]
      %v1443 = vld [vmem:[%s1416 + $0x9c] sm:$0xf]
      %v1444 = vld [vmem:[%s1416 + $0xa0] sm:$0xf]
      %v1445 = vld [vmem:[%s1416 + $0xa8] sm:$0xf]
      %v1446 = vld [vmem:[%s1416 + $0xac] sm:$0xf]
      %v1447 = vld [vmem:[%s1416 + $0xb4] sm:$0xf]
      %v1448 = vld [vmem:[%s1416 + $0xb8] sm:$0xf]
      %s1449 = scalar_lea.vmem %s1, 6
      %v1450 = vld [vmem:[%s1449] sm:$0x3]
      %v1483 = vunpack.c.l.b16 %v1417
      %v1484 = vunpack.c.l.b16 %v1418
      %v1485 = vunpack.c.l.b16 %v1419
      %v1486 = vunpack.c.l.b16 %v1420
      %v1487 = vunpack.c.l.b16 %v1421
      %v1488 = vunpack.c.l.b16 %v1422
      %v1489 = vunpack.c.l.b16 %v1423
      %v1490 = vunpack.c.l.b16 %v1424
      %v1491 = vunpack.c.l.b16 %v1425
      %v1492 = vunpack.c.l.b16 %v1426
      %v1493 = vunpack.c.l.b16 %v1427
      %v1494 = vunpack.c.l.b16 %v1428
      %v1495 = vunpack.c.l.b16 %v1429
      %v1496 = vunpack.c.l.b16 %v1430
      %v1497 = vunpack.c.l.b16 %v1431
      %v1498 = vunpack.c.l.b16 %v1432
      %v1499 = vunpack.c.l.b16 %v1433
      %v1500 = vunpack.c.l.b16 %v1434
      %v1501 = vunpack.c.l.b16 %v1435
      %v1502 = vunpack.c.l.b16 %v1436
      %v1503 = vunpack.c.l.b16 %v1437
      %v1504 = vunpack.c.l.b16 %v1438
      %v1505 = vunpack.c.l.b16 %v1439
      %v1506 = vunpack.c.l.b16 %v1440
      %v1507 = vunpack.c.l.b16 %v1441
      %v1508 = vunpack.c.l.b16 %v1442
      %v1509 = vunpack.c.l.b16 %v1443
      %v1510 = vunpack.c.l.b16 %v1444
      %v1511 = vunpack.c.l.b16 %v1445
      %v1512 = vunpack.c.l.b16 %v1446
      %v1513 = vunpack.c.l.b16 %v1447
      %v1514 = vunpack.c.l.b16 %v1448
      %v1515 = vpack.c.b16 %v1484, %v1483
      %v1516 = vpack.c.b16 %v1486, %v1485
      %v1517 = vpack.c.b16 %v1488, %v1487
      %v1518 = vpack.c.b16 %v1490, %v1489
      %v1519 = vpack.c.b16 %v1492, %v1491
      %v1520 = vpack.c.b16 %v1494, %v1493
      %v1521 = vpack.c.b16 %v1496, %v1495
      %v1522 = vpack.c.b16 %v1498, %v1497
      %v1523 = vpack.c.b16 %v1500, %v1499
      %v1524 = vpack.c.b16 %v1502, %v1501
      %v1525 = vpack.c.b16 %v1504, %v1503
      %v1526 = vpack.c.b16 %v1506, %v1505
      %v1527 = vpack.c.b16 %v1508, %v1507
      %v1528 = vpack.c.b16 %v1510, %v1509
      %v1529 = vpack.c.b16 %v1512, %v1511
      %v1530 = vpack.c.b16 %v1514, %v1513
      %v1532 = vsel %vm669, %v1515, 0
      %v1535 = vsel %vm669, %v1516, 0
      %v1538 = vsel %vm669, %v1517, 0
      %v1541 = vsel %vm669, %v1518, 0
      %v1544 = vsel %vm669, %v1519, 0
      %v1547 = vsel %vm669, %v1520, 0
      %v1550 = vsel %vm669, %v1521, 0
      %v1553 = vsel %vm669, %v1522, 0
      %v1556 = vsel %vm669, %v1523, 0
      %v1559 = vsel %vm669, %v1524, 0
      %v1562 = vsel %vm669, %v1525, 0
      %v1565 = vsel %vm669, %v1526, 0
      %v1568 = vsel %vm669, %v1527, 0
      %v1571 = vsel %vm669, %v1528, 0
      %v1574 = vsel %vm669, %v1529, 0
      %v1577 = vsel %vm669, %v1530, 0
      %v1580 = vsel %vm718, %v1450, 0
      %1582 = vmatpush.bf16.msra.mxu0 0
      %1583 = vmatpush.bf16.msra.mxu0 0
      %1584 = vmatpush.bf16.msra.mxu0 0
      %1585 = vmatpush.bf16.msra.mxu0 0
      %1586 = vmatpush.bf16.msra.mxu0 0
      %1587 = vmatpush.bf16.msra.mxu0 0
      %1588 = vmatpush.bf16.msra.mxu0 0
      %1589 = vmatpush.bf16.msra.mxu0 %v1580
      %1590 = vmatmul.bf16.gmra.mxu0 %v1532
      %v1591 = vpop.f32.mrf.mxu0
      %v1592 = vadd.f32 0.0, %v1591
      %v1593 = vpop.f32.mrf.mxu0
      %v1594 = vadd.f32 0.0, %v1593
      %1595 = vmatmul.bf16.gmra.mxu0 %v1535
      %v1596 = vpop.f32.mrf.mxu0
      %v1597 = vadd.f32 0.0, %v1596
      %v1598 = vpop.f32.mrf.mxu0
      %v1599 = vadd.f32 0.0, %v1598
      %1600 = vmatmul.bf16.gmra.mxu0 %v1538
      %v1601 = vpop.f32.mrf.mxu0
      %v1602 = vadd.f32 0.0, %v1601
      %v1603 = vpop.f32.mrf.mxu0
      %v1604 = vadd.f32 0.0, %v1603
      %1605 = vmatmul.bf16.gmra.mxu0 %v1541
      %v1606 = vpop.f32.mrf.mxu0
      %v1607 = vadd.f32 0.0, %v1606
      %v1608 = vpop.f32.mrf.mxu0
      %v1609 = vadd.f32 0.0, %v1608
      %1610 = vmatmul.bf16.gmra.mxu0 %v1544
      %v1611 = vpop.f32.mrf.mxu0
      %v1612 = vadd.f32 0.0, %v1611
      %v1613 = vpop.f32.mrf.mxu0
      %v1614 = vadd.f32 0.0, %v1613
      %1615 = vmatmul.bf16.gmra.mxu0 %v1547
      %v1616 = vpop.f32.mrf.mxu0
      %v1617 = vadd.f32 0.0, %v1616
      %v1618 = vpop.f32.mrf.mxu0
      %v1619 = vadd.f32 0.0, %v1618
      %1620 = vmatmul.bf16.gmra.mxu0 %v1550
      %v1621 = vpop.f32.mrf.mxu0
      %v1622 = vadd.f32 0.0, %v1621
      %v1623 = vpop.f32.mrf.mxu0
      %v1624 = vadd.f32 0.0, %v1623
      %1625 = vmatmul.bf16.gmra.mxu0 %v1553
      %v1626 = vpop.f32.mrf.mxu0
      %v1627 = vadd.f32 0.0, %v1626
      %v1628 = vpop.f32.mrf.mxu0
      %v1629 = vadd.f32 0.0, %v1628
      %1630 = vmatmul.bf16.gmra.mxu0 %v1556
      %v1631 = vpop.f32.mrf.mxu0
      %v1632 = vadd.f32 0.0, %v1631
      %v1633 = vpop.f32.mrf.mxu0
      %v1634 = vadd.f32 0.0, %v1633
      %1635 = vmatmul.bf16.gmra.mxu0 %v1559
      %v1636 = vpop.f32.mrf.mxu0
      %v1637 = vadd.f32 0.0, %v1636
      %v1638 = vpop.f32.mrf.mxu0
      %v1639 = vadd.f32 0.0, %v1638
      %1640 = vmatmul.bf16.gmra.mxu0 %v1562
      %v1641 = vpop.f32.mrf.mxu0
      %v1642 = vadd.f32 0.0, %v1641
      %v1643 = vpop.f32.mrf.mxu0
      %v1644 = vadd.f32 0.0, %v1643
      %1645 = vmatmul.bf16.gmra.mxu0 %v1565
      %v1646 = vpop.f32.mrf.mxu0
      %v1647 = vadd.f32 0.0, %v1646
      %v1648 = vpop.f32.mrf.mxu0
      %v1649 = vadd.f32 0.0, %v1648
      %1650 = vmatmul.bf16.gmra.mxu0 %v1568
      %v1651 = vpop.f32.mrf.mxu0
      %v1652 = vadd.f32 0.0, %v1651
      %v1653 = vpop.f32.mrf.mxu0
      %v1654 = vadd.f32 0.0, %v1653
      %1655 = vmatmul.bf16.gmra.mxu0 %v1571
      %v1656 = vpop.f32.mrf.mxu0
      %v1657 = vadd.f32 0.0, %v1656
      %v1658 = vpop.f32.mrf.mxu0
      %v1659 = vadd.f32 0.0, %v1658
      %1660 = vmatmul.bf16.gmra.mxu0 %v1574
      %v1661 = vpop.f32.mrf.mxu0
      %v1662 = vadd.f32 0.0, %v1661
      %v1663 = vpop.f32.mrf.mxu0
      %v1664 = vadd.f32 0.0, %v1663
      %1665 = vmatmul.bf16.gmra.mxu0 %v1577
      %v1666 = vpop.f32.mrf.mxu0
      %v1667 = vadd.f32 0.0, %v1666
      %v1668 = vpop.f32.mrf.mxu0
      %v1669 = vadd.f32 0.0, %v1668
      %1670 = vdwg.mxu0
      %v1671 = vadd.f32 %v1384, %v1592
      %v1672 = vadd.f32 %v1385, %v1594
      %v1673 = vadd.f32 %v1386, %v1597
      %v1674 = vadd.f32 %v1387, %v1599
      %v1675 = vadd.f32 %v1388, %v1602
      %v1676 = vadd.f32 %v1389, %v1604
      %v1677 = vadd.f32 %v1390, %v1607
      %v1678 = vadd.f32 %v1391, %v1609
      %v1679 = vadd.f32 %v1392, %v1612
      %v1680 = vadd.f32 %v1393, %v1614
      %v1681 = vadd.f32 %v1394, %v1617
      %v1682 = vadd.f32 %v1395, %v1619
      %v1683 = vadd.f32 %v1396, %v1622
      %v1684 = vadd.f32 %v1397, %v1624
      %v1685 = vadd.f32 %v1398, %v1627
      %v1686 = vadd.f32 %v1399, %v1629
      %v1687 = vadd.f32 %v1400, %v1632
      %v1688 = vadd.f32 %v1401, %v1634
      %v1689 = vadd.f32 %v1402, %v1637
      %v1690 = vadd.f32 %v1403, %v1639
      %v1691 = vadd.f32 %v1404, %v1642
      %v1692 = vadd.f32 %v1405, %v1644
      %v1693 = vadd.f32 %v1406, %v1647
      %v1694 = vadd.f32 %v1407, %v1649
      %v1695 = vadd.f32 %v1408, %v1652
      %v1696 = vadd.f32 %v1409, %v1654
      %v1697 = vadd.f32 %v1410, %v1657
      %v1698 = vadd.f32 %v1411, %v1659
      %v1699 = vadd.f32 %v1412, %v1662
      %v1700 = vadd.f32 %v1413, %v1664
      %v1701 = vadd.f32 %v1414, %v1667
      %v1702 = vadd.f32 %v1415, %v1669
      %v1703 = vld [vmem:[%s1416] sm:$0xf]
      %v1704 = vld [vmem:[%s1416 + $0x4] sm:$0xf]
      %v1705 = vld [vmem:[%s1416 + $0x8] sm:$0x1]
      %v1706 = vld [vmem:[%s1416 + $0xc] sm:$0xf]
      %v1707 = vld [vmem:[%s1416 + $0x10] sm:$0xf]
      %v1708 = vld [vmem:[%s1416 + $0x14] sm:$0x1]
      %v1709 = vld [vmem:[%s1416 + $0x18] sm:$0xf]
      %v1710 = vld [vmem:[%s1416 + $0x1c] sm:$0xf]
      %v1711 = vld [vmem:[%s1416 + $0x20] sm:$0x1]
      %v1712 = vld [vmem:[%s1416 + $0x24] sm:$0xf]
      %v1713 = vld [vmem:[%s1416 + $0x28] sm:$0xf]
      %v1714 = vld [vmem:[%s1416 + $0x2c] sm:$0x1]
      %v1715 = vld [vmem:[%s1416 + $0x30] sm:$0xf]
      %v1716 = vld [vmem:[%s1416 + $0x34] sm:$0xf]
      %v1717 = vld [vmem:[%s1416 + $0x38] sm:$0x1]
      %v1718 = vld [vmem:[%s1416 + $0x3c] sm:$0xf]
      %v1719 = vld [vmem:[%s1416 + $0x40] sm:$0xf]
      %v1720 = vld [vmem:[%s1416 + $0x44] sm:$0x1]
      %v1721 = vld [vmem:[%s1416 + $0x48] sm:$0xf]
      %v1722 = vld [vmem:[%s1416 + $0x4c] sm:$0xf]
      %v1723 = vld [vmem:[%s1416 + $0x50] sm:$0x1]
      %v1724 = vld [vmem:[%s1416 + $0x54] sm:$0xf]
      %v1725 = vld [vmem:[%s1416 + $0x58] sm:$0xf]
      %v1726 = vld [vmem:[%s1416 + $0x5c] sm:$0x1]
      %v1727 = vld [vmem:[%s1416 + $0x60] sm:$0xf]
      %v1728 = vld [vmem:[%s1416 + $0x64] sm:$0xf]
      %v1729 = vld [vmem:[%s1416 + $0x68] sm:$0x1]
      %v1730 = vld [vmem:[%s1416 + $0x6c] sm:$0xf]
      %v1731 = vld [vmem:[%s1416 + $0x70] sm:$0xf]
      %v1732 = vld [vmem:[%s1416 + $0x74] sm:$0x1]
      %v1733 = vld [vmem:[%s1416 + $0x78] sm:$0xf]
      %v1734 = vld [vmem:[%s1416 + $0x7c] sm:$0xf]
      %v1735 = vld [vmem:[%s1416 + $0x80] sm:$0x1]
      %v1736 = vld [vmem:[%s1416 + $0x84] sm:$0xf]
      %v1737 = vld [vmem:[%s1416 + $0x88] sm:$0xf]
      %v1738 = vld [vmem:[%s1416 + $0x8c] sm:$0x1]
      %v1739 = vld [vmem:[%s1416 + $0x90] sm:$0xf]
      %v1740 = vld [vmem:[%s1416 + $0x94] sm:$0xf]
      %v1741 = vld [vmem:[%s1416 + $0x98] sm:$0x1]
      %v1742 = vld [vmem:[%s1416 + $0x9c] sm:$0xf]
      %v1743 = vld [vmem:[%s1416 + $0xa0] sm:$0xf]
      %v1744 = vld [vmem:[%s1416 + $0xa4] sm:$0x1]
      %v1745 = vld [vmem:[%s1416 + $0xa8] sm:$0xf]
      %v1746 = vld [vmem:[%s1416 + $0xac] sm:$0xf]
      %v1747 = vld [vmem:[%s1416 + $0xb0] sm:$0x1]
      %v1748 = vld [vmem:[%s1416 + $0xb4] sm:$0xf]
      %v1749 = vld [vmem:[%s1416 + $0xb8] sm:$0xf]
      %v1750 = vld [vmem:[%s1416 + $0xbc] sm:$0x1]
      %v1752 = vshrl.u32 %v1703, 16
      %v1754 = vrot.slane %v1752, 4
      %v1755 = vshll.u32 %v1703, 16
      %v1757 = vrot.slane %v1755, 5
      %v1758 = vor.u32 %v1754, %v1757
      %v1759 = vrot.slane %v1758, 4
      %v1761 = vshll.u32 %v1704, 16
      %v1763 = vrot.slane %v1761, 5
      %v1764 = vsel %vm234, %v1759, %v1763
      %v1765 = vshrl.u32 %v1704, 16
      %v1767 = vrot.slane %v1765, 4
      %v1768 = vor.u32 %v1767, %v1763
      %v1769 = vrot.slane %v1768, 4
      %v1771 = vshll.u32 %v1705, 16
      %v1773 = vrot.slane %v1771, 5
      %v1774 = vsel %vm234, %v1769, %v1773
      %v1776 = vshrl.u32 %v1706, 16
      %v1778 = vrot.slane %v1776, 4
      %v1779 = vshll.u32 %v1706, 16
      %v1781 = vrot.slane %v1779, 5
      %v1782 = vor.u32 %v1778, %v1781
      %v1783 = vrot.slane %v1782, 4
      %v1785 = vshll.u32 %v1707, 16
      %v1787 = vrot.slane %v1785, 5
      %v1788 = vsel %vm234, %v1783, %v1787
      %v1789 = vshrl.u32 %v1707, 16
      %v1791 = vrot.slane %v1789, 4
      %v1792 = vor.u32 %v1791, %v1787
      %v1793 = vrot.slane %v1792, 4
      %v1795 = vshll.u32 %v1708, 16
      %v1797 = vrot.slane %v1795, 5
      %v1798 = vsel %vm234, %v1793, %v1797
      %v1800 = vshrl.u32 %v1709, 16
      %v1802 = vrot.slane %v1800, 4
      %v1803 = vshll.u32 %v1709, 16
      %v1805 = vrot.slane %v1803, 5
      %v1806 = vor.u32 %v1802, %v1805
      %v1807 = vrot.slane %v1806, 4
      %v1809 = vshll.u32 %v1710, 16
      %v1811 = vrot.slane %v1809, 5
      %v1812 = vsel %vm234, %v1807, %v1811
      %v1813 = vshrl.u32 %v1710, 16
      %v1815 = vrot.slane %v1813, 4
      %v1816 = vor.u32 %v1815, %v1811
      %v1817 = vrot.slane %v1816, 4
      %v1819 = vshll.u32 %v1711, 16
      %v1821 = vrot.slane %v1819, 5
      %v1822 = vsel %vm234, %v1817, %v1821
      %v1824 = vshrl.u32 %v1712, 16
      %v1826 = vrot.slane %v1824, 4
      %v1827 = vshll.u32 %v1712, 16
      %v1829 = vrot.slane %v1827, 5
      %v1830 = vor.u32 %v1826, %v1829
      %v1831 = vrot.slane %v1830, 4
      %v1833 = vshll.u32 %v1713, 16
      %v1835 = vrot.slane %v1833, 5
      %v1836 = vsel %vm234, %v1831, %v1835
      %v1837 = vshrl.u32 %v1713, 16
      %v1839 = vrot.slane %v1837, 4
      %v1840 = vor.u32 %v1839, %v1835
      %v1841 = vrot.slane %v1840, 4
      %v1843 = vshll.u32 %v1714, 16
      %v1845 = vrot.slane %v1843, 5
      %v1846 = vsel %vm234, %v1841, %v1845
      %v1848 = vshrl.u32 %v1715, 16
      %v1850 = vrot.slane %v1848, 4
      %v1851 = vshll.u32 %v1715, 16
      %v1853 = vrot.slane %v1851, 5
      %v1854 = vor.u32 %v1850, %v1853
      %v1855 = vrot.slane %v1854, 4
      %v1857 = vshll.u32 %v1716, 16
      %v1859 = vrot.slane %v1857, 5
      %v1860 = vsel %vm234, %v1855, %v1859
      %v1861 = vshrl.u32 %v1716, 16
      %v1863 = vrot.slane %v1861, 4
      %v1864 = vor.u32 %v1863, %v1859
      %v1865 = vrot.slane %v1864, 4
      %v1867 = vshll.u32 %v1717, 16
      %v1869 = vrot.slane %v1867, 5
      %v1870 = vsel %vm234, %v1865, %v1869
      %v1872 = vshrl.u32 %v1718, 16
      %v1874 = vrot.slane %v1872, 4
      %v1875 = vshll.u32 %v1718, 16
      %v1877 = vrot.slane %v1875, 5
      %v1878 = vor.u32 %v1874, %v1877
      %v1879 = vrot.slane %v1878, 4
      %v1881 = vshll.u32 %v1719, 16
      %v1883 = vrot.slane %v1881, 5
      %v1884 = vsel %vm234, %v1879, %v1883
      %v1885 = vshrl.u32 %v1719, 16
      %v1887 = vrot.slane %v1885, 4
      %v1888 = vor.u32 %v1887, %v1883
      %v1889 = vrot.slane %v1888, 4
      %v1891 = vshll.u32 %v1720, 16
      %v1893 = vrot.slane %v1891, 5
      %v1894 = vsel %vm234, %v1889, %v1893
      %v1896 = vshrl.u32 %v1721, 16
      %v1898 = vrot.slane %v1896, 4
      %v1899 = vshll.u32 %v1721, 16
      %v1901 = vrot.slane %v1899, 5
      %v1902 = vor.u32 %v1898, %v1901
      %v1903 = vrot.slane %v1902, 4
      %v1905 = vshll.u32 %v1722, 16
      %v1907 = vrot.slane %v1905, 5
      %v1908 = vsel %vm234, %v1903, %v1907
      %v1909 = vshrl.u32 %v1722, 16
      %v1911 = vrot.slane %v1909, 4
      %v1912 = vor.u32 %v1911, %v1907
      %v1913 = vrot.slane %v1912, 4
      %v1915 = vshll.u32 %v1723, 16
      %v1917 = vrot.slane %v1915, 5
      %v1918 = vsel %vm234, %v1913, %v1917
      %v1920 = vshrl.u32 %v1724, 16
      %v1922 = vrot.slane %v1920, 4
      %v1923 = vshll.u32 %v1724, 16
      %v1925 = vrot.slane %v1923, 5
      %v1926 = vor.u32 %v1922, %v1925
      %v1927 = vrot.slane %v1926, 4
      %v1929 = vshll.u32 %v1725, 16
      %v1931 = vrot.slane %v1929, 5
      %v1932 = vsel %vm234, %v1927, %v1931
      %v1933 = vshrl.u32 %v1725, 16
      %v1935 = vrot.slane %v1933, 4
      %v1936 = vor.u32 %v1935, %v1931
      %v1937 = vrot.slane %v1936, 4
      %v1939 = vshll.u32 %v1726, 16
      %v1941 = vrot.slane %v1939, 5
      %v1942 = vsel %vm234, %v1937, %v1941
      %v1944 = vshrl.u32 %v1727, 16
      %v1946 = vrot.slane %v1944, 4
      %v1947 = vshll.u32 %v1727, 16
      %v1949 = vrot.slane %v1947, 5
      %v1950 = vor.u32 %v1946, %v1949
      %v1951 = vrot.slane %v1950, 4
      %v1953 = vshll.u32 %v1728, 16
      %v1955 = vrot.slane %v1953, 5
      %v1956 = vsel %vm234, %v1951, %v1955
      %v1957 = vshrl.u32 %v1728, 16
      %v1959 = vrot.slane %v1957, 4
      %v1960 = vor.u32 %v1959, %v1955
      %v1961 = vrot.slane %v1960, 4
      %v1963 = vshll.u32 %v1729, 16
      %v1965 = vrot.slane %v1963, 5
      %v1966 = vsel %vm234, %v1961, %v1965
      %v1968 = vshrl.u32 %v1730, 16
      %v1970 = vrot.slane %v1968, 4
      %v1971 = vshll.u32 %v1730, 16
      %v1973 = vrot.slane %v1971, 5
      %v1974 = vor.u32 %v1970, %v1973
      %v1975 = vrot.slane %v1974, 4
      %v1977 = vshll.u32 %v1731, 16
      %v1979 = vrot.slane %v1977, 5
      %v1980 = vsel %vm234, %v1975, %v1979
      %v1981 = vshrl.u32 %v1731, 16
      %v1983 = vrot.slane %v1981, 4
      %v1984 = vor.u32 %v1983, %v1979
      %v1985 = vrot.slane %v1984, 4
      %v1987 = vshll.u32 %v1732, 16
      %v1989 = vrot.slane %v1987, 5
      %v1990 = vsel %vm234, %v1985, %v1989
      %v1992 = vshrl.u32 %v1733, 16
      %v1994 = vrot.slane %v1992, 4
      %v1995 = vshll.u32 %v1733, 16
      %v1997 = vrot.slane %v1995, 5
      %v1998 = vor.u32 %v1994, %v1997
      %v1999 = vrot.slane %v1998, 4
      %v2001 = vshll.u32 %v1734, 16
      %v2003 = vrot.slane %v2001, 5
      %v2004 = vsel %vm234, %v1999, %v2003
      %v2005 = vshrl.u32 %v1734, 16
      %v2007 = vrot.slane %v2005, 4
      %v2008 = vor.u32 %v2007, %v2003
      %v2009 = vrot.slane %v2008, 4
      %v2011 = vshll.u32 %v1735, 16
      %v2013 = vrot.slane %v2011, 5
      %v2014 = vsel %vm234, %v2009, %v2013
      %v2016 = vshrl.u32 %v1736, 16
      %v2018 = vrot.slane %v2016, 4
      %v2019 = vshll.u32 %v1736, 16
      %v2021 = vrot.slane %v2019, 5
      %v2022 = vor.u32 %v2018, %v2021
      %v2023 = vrot.slane %v2022, 4
      %v2025 = vshll.u32 %v1737, 16
      %v2027 = vrot.slane %v2025, 5
      %v2028 = vsel %vm234, %v2023, %v2027
      %v2029 = vshrl.u32 %v1737, 16
      %v2031 = vrot.slane %v2029, 4
      %v2032 = vor.u32 %v2031, %v2027
      %v2033 = vrot.slane %v2032, 4
      %v2035 = vshll.u32 %v1738, 16
      %v2037 = vrot.slane %v2035, 5
      %v2038 = vsel %vm234, %v2033, %v2037
      %v2040 = vshrl.u32 %v1739, 16
      %v2042 = vrot.slane %v2040, 4
      %v2043 = vshll.u32 %v1739, 16
      %v2045 = vrot.slane %v2043, 5
      %v2046 = vor.u32 %v2042, %v2045
      %v2047 = vrot.slane %v2046, 4
      %v2049 = vshll.u32 %v1740, 16
      %v2051 = vrot.slane %v2049, 5
      %v2052 = vsel %vm234, %v2047, %v2051
      %v2053 = vshrl.u32 %v1740, 16
      %v2055 = vrot.slane %v2053, 4
      %v2056 = vor.u32 %v2055, %v2051
      %v2057 = vrot.slane %v2056, 4
      %v2059 = vshll.u32 %v1741, 16
      %v2061 = vrot.slane %v2059, 5
      %v2062 = vsel %vm234, %v2057, %v2061
      %v2064 = vshrl.u32 %v1742, 16
      %v2066 = vrot.slane %v2064, 4
      %v2067 = vshll.u32 %v1742, 16
      %v2069 = vrot.slane %v2067, 5
      %v2070 = vor.u32 %v2066, %v2069
      %v2071 = vrot.slane %v2070, 4
      %v2073 = vshll.u32 %v1743, 16
      %v2075 = vrot.slane %v2073, 5
      %v2076 = vsel %vm234, %v2071, %v2075
      %v2077 = vshrl.u32 %v1743, 16
      %v2079 = vrot.slane %v2077, 4
      %v2080 = vor.u32 %v2079, %v2075
      %v2081 = vrot.slane %v2080, 4
      %v2083 = vshll.u32 %v1744, 16
      %v2085 = vrot.slane %v2083, 5
      %v2086 = vsel %vm234, %v2081, %v2085
      %v2088 = vshrl.u32 %v1745, 16
      %v2090 = vrot.slane %v2088, 4
      %v2091 = vshll.u32 %v1745, 16
      %v2093 = vrot.slane %v2091, 5
      %v2094 = vor.u32 %v2090, %v2093
      %v2095 = vrot.slane %v2094, 4
      %v2097 = vshll.u32 %v1746, 16
      %v2099 = vrot.slane %v2097, 5
      %v2100 = vsel %vm234, %v2095, %v2099
      %v2101 = vshrl.u32 %v1746, 16
      %v2103 = vrot.slane %v2101, 4
      %v2104 = vor.u32 %v2103, %v2099
      %v2105 = vrot.slane %v2104, 4
      %v2107 = vshll.u32 %v1747, 16
      %v2109 = vrot.slane %v2107, 5
      %v2110 = vsel %vm234, %v2105, %v2109
      %v2112 = vshrl.u32 %v1748, 16
      %v2114 = vrot.slane %v2112, 4
      %v2115 = vshll.u32 %v1748, 16
      %v2117 = vrot.slane %v2115, 5
      %v2118 = vor.u32 %v2114, %v2117
      %v2119 = vrot.slane %v2118, 4
      %v2121 = vshll.u32 %v1749, 16
      %v2123 = vrot.slane %v2121, 5
      %v2124 = vsel %vm234, %v2119, %v2123
      %v2125 = vshrl.u32 %v1749, 16
      %v2127 = vrot.slane %v2125, 4
      %v2128 = vor.u32 %v2127, %v2123
      %v2129 = vrot.slane %v2128, 4
      %v2131 = vshll.u32 %v1750, 16
      %v2133 = vrot.slane %v2131, 5
      %v2134 = vsel %vm234, %v2129, %v2133
      %s2135 = scalar_lea.vmem %s1, 8
      %v2136 = vld [vmem:[%s2135] sm:$0x3]
      %v2137 = vunpack.c.l.b16 %v1764
      %v2138 = vunpack.c.l.b16 %v1774
      %v2139 = vunpack.c.l.b16 %v1788
      %v2140 = vunpack.c.l.b16 %v1798
      %v2141 = vunpack.c.l.b16 %v1812
      %v2142 = vunpack.c.l.b16 %v1822
      %v2143 = vunpack.c.l.b16 %v1836
      %v2144 = vunpack.c.l.b16 %v1846
      %v2145 = vunpack.c.l.b16 %v1860
      %v2146 = vunpack.c.l.b16 %v1870
      %v2147 = vunpack.c.l.b16 %v1884
      %v2148 = vunpack.c.l.b16 %v1894
      %v2149 = vunpack.c.l.b16 %v1908
      %v2150 = vunpack.c.l.b16 %v1918
      %v2151 = vunpack.c.l.b16 %v1932
      %v2152 = vunpack.c.l.b16 %v1942
      %v2153 = vunpack.c.l.b16 %v1956
      %v2154 = vunpack.c.l.b16 %v1966
      %v2155 = vunpack.c.l.b16 %v1980
      %v2156 = vunpack.c.l.b16 %v1990
      %v2157 = vunpack.c.l.b16 %v2004
      %v2158 = vunpack.c.l.b16 %v2014
      %v2159 = vunpack.c.l.b16 %v2028
      %v2160 = vunpack.c.l.b16 %v2038
      %v2161 = vunpack.c.l.b16 %v2052
      %v2162 = vunpack.c.l.b16 %v2062
      %v2163 = vunpack.c.l.b16 %v2076
      %v2164 = vunpack.c.l.b16 %v2086
      %v2165 = vunpack.c.l.b16 %v2100
      %v2166 = vunpack.c.l.b16 %v2110
      %v2167 = vunpack.c.l.b16 %v2124
      %v2168 = vunpack.c.l.b16 %v2134
      %v2169 = vpack.c.b16 %v2138, %v2137
      %v2170 = vpack.c.b16 %v2140, %v2139
      %v2171 = vpack.c.b16 %v2142, %v2141
      %v2172 = vpack.c.b16 %v2144, %v2143
      %v2173 = vpack.c.b16 %v2146, %v2145
      %v2174 = vpack.c.b16 %v2148, %v2147
      %v2175 = vpack.c.b16 %v2150, %v2149
      %v2176 = vpack.c.b16 %v2152, %v2151
      %v2177 = vpack.c.b16 %v2154, %v2153
      %v2178 = vpack.c.b16 %v2156, %v2155
      %v2179 = vpack.c.b16 %v2158, %v2157
      %v2180 = vpack.c.b16 %v2160, %v2159
      %v2181 = vpack.c.b16 %v2162, %v2161
      %v2182 = vpack.c.b16 %v2164, %v2163
      %v2183 = vpack.c.b16 %v2166, %v2165
      %v2184 = vpack.c.b16 %v2168, %v2167
      %v2186 = vsel %vm669, %v2169, 0
      %v2189 = vsel %vm669, %v2170, 0
      %v2192 = vsel %vm669, %v2171, 0
      %v2195 = vsel %vm669, %v2172, 0
      %v2198 = vsel %vm669, %v2173, 0
      %v2201 = vsel %vm669, %v2174, 0
      %v2204 = vsel %vm669, %v2175, 0
      %v2207 = vsel %vm669, %v2176, 0
      %v2210 = vsel %vm669, %v2177, 0
      %v2213 = vsel %vm669, %v2178, 0
      %v2216 = vsel %vm669, %v2179, 0
      %v2219 = vsel %vm669, %v2180, 0
      %v2222 = vsel %vm669, %v2181, 0
      %v2225 = vsel %vm669, %v2182, 0
      %v2228 = vsel %vm669, %v2183, 0
      %v2231 = vsel %vm669, %v2184, 0
      %v2234 = vsel %vm718, %v2136, 0
      %2236 = vmatpush.bf16.msra.mxu0 0
      %2237 = vmatpush.bf16.msra.mxu0 0
      %2238 = vmatpush.bf16.msra.mxu0 0
      %2239 = vmatpush.bf16.msra.mxu0 0
      %2240 = vmatpush.bf16.msra.mxu0 0
      %2241 = vmatpush.bf16.msra.mxu0 0
      %2242 = vmatpush.bf16.msra.mxu0 0
      %2243 = vmatpush.bf16.msra.mxu0 %v2234
      %2244 = vmatmul.bf16.gmra.mxu0 %v2186
      %v2245 = vpop.f32.mrf.mxu0
      %v2246 = vadd.f32 0.0, %v2245
      %v2247 = vpop.f32.mrf.mxu0
      %v2248 = vadd.f32 0.0, %v2247
      %2249 = vmatmul.bf16.gmra.mxu0 %v2189
      %v2250 = vpop.f32.mrf.mxu0
      %v2251 = vadd.f32 0.0, %v2250
      %v2252 = vpop.f32.mrf.mxu0
      %v2253 = vadd.f32 0.0, %v2252
      %2254 = vmatmul.bf16.gmra.mxu0 %v2192
      %v2255 = vpop.f32.mrf.mxu0
      %v2256 = vadd.f32 0.0, %v2255
      %v2257 = vpop.f32.mrf.mxu0
      %v2258 = vadd.f32 0.0, %v2257
      %2259 = vmatmul.bf16.gmra.mxu0 %v2195
      %v2260 = vpop.f32.mrf.mxu0
      %v2261 = vadd.f32 0.0, %v2260
      %v2262 = vpop.f32.mrf.mxu0
      %v2263 = vadd.f32 0.0, %v2262
      %2264 = vmatmul.bf16.gmra.mxu0 %v2198
      %v2265 = vpop.f32.mrf.mxu0
      %v2266 = vadd.f32 0.0, %v2265
      %v2267 = vpop.f32.mrf.mxu0
      %v2268 = vadd.f32 0.0, %v2267
      %2269 = vmatmul.bf16.gmra.mxu0 %v2201
      %v2270 = vpop.f32.mrf.mxu0
      %v2271 = vadd.f32 0.0, %v2270
      %v2272 = vpop.f32.mrf.mxu0
      %v2273 = vadd.f32 0.0, %v2272
      %2274 = vmatmul.bf16.gmra.mxu0 %v2204
      %v2275 = vpop.f32.mrf.mxu0
      %v2276 = vadd.f32 0.0, %v2275
      %v2277 = vpop.f32.mrf.mxu0
      %v2278 = vadd.f32 0.0, %v2277
      %2279 = vmatmul.bf16.gmra.mxu0 %v2207
      %v2280 = vpop.f32.mrf.mxu0
      %v2281 = vadd.f32 0.0, %v2280
      %v2282 = vpop.f32.mrf.mxu0
      %v2283 = vadd.f32 0.0, %v2282
      %2284 = vmatmul.bf16.gmra.mxu0 %v2210
      %v2285 = vpop.f32.mrf.mxu0
      %v2286 = vadd.f32 0.0, %v2285
      %v2287 = vpop.f32.mrf.mxu0
      %v2288 = vadd.f32 0.0, %v2287
      %2289 = vmatmul.bf16.gmra.mxu0 %v2213
      %v2290 = vpop.f32.mrf.mxu0
      %v2291 = vadd.f32 0.0, %v2290
      %v2292 = vpop.f32.mrf.mxu0
      %v2293 = vadd.f32 0.0, %v2292
      %2294 = vmatmul.bf16.gmra.mxu0 %v2216
      %v2295 = vpop.f32.mrf.mxu0
      %v2296 = vadd.f32 0.0, %v2295
      %v2297 = vpop.f32.mrf.mxu0
      %v2298 = vadd.f32 0.0, %v2297
      %2299 = vmatmul.bf16.gmra.mxu0 %v2219
      %v2300 = vpop.f32.mrf.mxu0
      %v2301 = vadd.f32 0.0, %v2300
      %v2302 = vpop.f32.mrf.mxu0
      %v2303 = vadd.f32 0.0, %v2302
      %2304 = vmatmul.bf16.gmra.mxu0 %v2222
      %v2305 = vpop.f32.mrf.mxu0
      %v2306 = vadd.f32 0.0, %v2305
      %v2307 = vpop.f32.mrf.mxu0
      %v2308 = vadd.f32 0.0, %v2307
      %2309 = vmatmul.bf16.gmra.mxu0 %v2225
      %v2310 = vpop.f32.mrf.mxu0
      %v2311 = vadd.f32 0.0, %v2310
      %v2312 = vpop.f32.mrf.mxu0
      %v2313 = vadd.f32 0.0, %v2312
      %2314 = vmatmul.bf16.gmra.mxu0 %v2228
      %v2315 = vpop.f32.mrf.mxu0
      %v2316 = vadd.f32 0.0, %v2315
      %v2317 = vpop.f32.mrf.mxu0
      %v2318 = vadd.f32 0.0, %v2317
      %2319 = vmatmul.bf16.gmra.mxu0 %v2231
      %v2320 = vpop.f32.mrf.mxu0
      %v2321 = vadd.f32 0.0, %v2320
      %v2322 = vpop.f32.mrf.mxu0
      %v2323 = vadd.f32 0.0, %v2322
      %2324 = vdwg.mxu0
      %v2325 = vadd.f32 %v1671, %v2246
      %v2326 = vadd.f32 %v1672, %v2248
      %v2327 = vadd.f32 %v1673, %v2251
      %v2328 = vadd.f32 %v1674, %v2253
      %v2329 = vadd.f32 %v1675, %v2256
      %v2330 = vadd.f32 %v1676, %v2258
      %v2331 = vadd.f32 %v1677, %v2261
      %v2332 = vadd.f32 %v1678, %v2263
      %v2333 = vadd.f32 %v1679, %v2266
      %v2334 = vadd.f32 %v1680, %v2268
      %v2335 = vadd.f32 %v1681, %v2271
      %v2336 = vadd.f32 %v1682, %v2273
      %v2337 = vadd.f32 %v1683, %v2276
      %v2338 = vadd.f32 %v1684, %v2278
      %v2339 = vadd.f32 %v1685, %v2281
      %v2340 = vadd.f32 %v1686, %v2283
      %v2341 = vadd.f32 %v1687, %v2286
      %v2342 = vadd.f32 %v1688, %v2288
      %v2343 = vadd.f32 %v1689, %v2291
      %v2344 = vadd.f32 %v1690, %v2293
      %v2345 = vadd.f32 %v1691, %v2296
      %v2346 = vadd.f32 %v1692, %v2298
      %v2347 = vadd.f32 %v1693, %v2301
      %v2348 = vadd.f32 %v1694, %v2303
      %v2349 = vadd.f32 %v1695, %v2306
      %v2350 = vadd.f32 %v1696, %v2308
      %v2351 = vadd.f32 %v1697, %v2311
      %v2352 = vadd.f32 %v1698, %v2313
      %v2353 = vadd.f32 %v1699, %v2316
      %v2354 = vadd.f32 %v1700, %v2318
      %v2355 = vadd.f32 %v1701, %v2321
      %v2356 = vadd.f32 %v1702, %v2323
      %v2357 = vld [vmem:[%s1416] sm:$0xe]
      %v2358 = vld [vmem:[%s1416 + $0xc] sm:$0xe]
      %v2359 = vld [vmem:[%s1416 + $0x18] sm:$0xe]
      %v2360 = vld [vmem:[%s1416 + $0x24] sm:$0xe]
      %v2361 = vld [vmem:[%s1416 + $0x30] sm:$0xe]
      %v2362 = vld [vmem:[%s1416 + $0x3c] sm:$0xe]
      %v2363 = vld [vmem:[%s1416 + $0x48] sm:$0xe]
      %v2364 = vld [vmem:[%s1416 + $0x54] sm:$0xe]
      %v2365 = vld [vmem:[%s1416 + $0x60] sm:$0xe]
      %v2366 = vld [vmem:[%s1416 + $0x6c] sm:$0xe]
      %v2367 = vld [vmem:[%s1416 + $0x78] sm:$0xe]
      %v2368 = vld [vmem:[%s1416 + $0x84] sm:$0xe]
      %v2369 = vld [vmem:[%s1416 + $0x90] sm:$0xe]
      %v2370 = vld [vmem:[%s1416 + $0x9c] sm:$0xe]
      %v2371 = vld [vmem:[%s1416 + $0xa8] sm:$0xe]
      %v2372 = vld [vmem:[%s1416 + $0xb4] sm:$0xe]
      %v2421 = vrot.slane %v2357, 5
      %v2422 = vrot.slane %v2421, 4
      %v2423 = vrot.slane %v1704, 5
      %v2424 = vsel %vm1081, %v2422, %v2423
      %v2425 = vrot.slane %v2423, 4
      %v2426 = vrot.slane %v1705, 5
      %v2427 = vsel %vm1081, %v2425, %v2426
      %v2428 = vrot.slane %v2358, 5
      %v2429 = vrot.slane %v2428, 4
      %v2430 = vrot.slane %v1707, 5
      %v2431 = vsel %vm1081, %v2429, %v2430
      %v2432 = vrot.slane %v2430, 4
      %v2433 = vrot.slane %v1708, 5
      %v2434 = vsel %vm1081, %v2432, %v2433
      %v2435 = vrot.slane %v2359, 5
      %v2436 = vrot.slane %v2435, 4
      %v2437 = vrot.slane %v1710, 5
      %v2438 = vsel %vm1081, %v2436, %v2437
      %v2439 = vrot.slane %v2437, 4
      %v2440 = vrot.slane %v1711, 5
      %v2441 = vsel %vm1081, %v2439, %v2440
      %v2442 = vrot.slane %v2360, 5
      %v2443 = vrot.slane %v2442, 4
      %v2444 = vrot.slane %v1713, 5
      %v2445 = vsel %vm1081, %v2443, %v2444
      %v2446 = vrot.slane %v2444, 4
      %v2447 = vrot.slane %v1714, 5
      %v2448 = vsel %vm1081, %v2446, %v2447
      %v2449 = vrot.slane %v2361, 5
      %v2450 = vrot.slane %v2449, 4
      %v2451 = vrot.slane %v1716, 5
      %v2452 = vsel %vm1081, %v2450, %v2451
      %v2453 = vrot.slane %v2451, 4
      %v2454 = vrot.slane %v1717, 5
      %v2455 = vsel %vm1081, %v2453, %v2454
      %v2456 = vrot.slane %v2362, 5
      %v2457 = vrot.slane %v2456, 4
      %v2458 = vrot.slane %v1719, 5
      %v2459 = vsel %vm1081, %v2457, %v2458
      %v2460 = vrot.slane %v2458, 4
      %v2461 = vrot.slane %v1720, 5
      %v2462 = vsel %vm1081, %v2460, %v2461
      %v2463 = vrot.slane %v2363, 5
      %v2464 = vrot.slane %v2463, 4
      %v2465 = vrot.slane %v1722, 5
      %v2466 = vsel %vm1081, %v2464, %v2465
      %v2467 = vrot.slane %v2465, 4
      %v2468 = vrot.slane %v1723, 5
      %v2469 = vsel %vm1081, %v2467, %v2468
      %v2470 = vrot.slane %v2364, 5
      %v2471 = vrot.slane %v2470, 4
      %v2472 = vrot.slane %v1725, 5
      %v2473 = vsel %vm1081, %v2471, %v2472
      %v2474 = vrot.slane %v2472, 4
      %v2475 = vrot.slane %v1726, 5
      %v2476 = vsel %vm1081, %v2474, %v2475
      %v2477 = vrot.slane %v2365, 5
      %v2478 = vrot.slane %v2477, 4
      %v2479 = vrot.slane %v1728, 5
      %v2480 = vsel %vm1081, %v2478, %v2479
      %v2481 = vrot.slane %v2479, 4
      %v2482 = vrot.slane %v1729, 5
      %v2483 = vsel %vm1081, %v2481, %v2482
      %v2484 = vrot.slane %v2366, 5
      %v2485 = vrot.slane %v2484, 4
      %v2486 = vrot.slane %v1731, 5
      %v2487 = vsel %vm1081, %v2485, %v2486
      %v2488 = vrot.slane %v2486, 4
      %v2489 = vrot.slane %v1732, 5
      %v2490 = vsel %vm1081, %v2488, %v2489
      %v2491 = vrot.slane %v2367, 5
      %v2492 = vrot.slane %v2491, 4
      %v2493 = vrot.slane %v1734, 5
      %v2494 = vsel %vm1081, %v2492, %v2493
      %v2495 = vrot.slane %v2493, 4
      %v2496 = vrot.slane %v1735, 5
      %v2497 = vsel %vm1081, %v2495, %v2496
      %v2498 = vrot.slane %v2368, 5
      %v2499 = vrot.slane %v2498, 4
      %v2500 = vrot.slane %v1737, 5
      %v2501 = vsel %vm1081, %v2499, %v2500
      %v2502 = vrot.slane %v2500, 4
      %v2503 = vrot.slane %v1738, 5
      %v2504 = vsel %vm1081, %v2502, %v2503
      %v2505 = vrot.slane %v2369, 5
      %v2506 = vrot.slane %v2505, 4
      %v2507 = vrot.slane %v1740, 5
      %v2508 = vsel %vm1081, %v2506, %v2507
      %v2509 = vrot.slane %v2507, 4
      %v2510 = vrot.slane %v1741, 5
      %v2511 = vsel %vm1081, %v2509, %v2510
      %v2512 = vrot.slane %v2370, 5
      %v2513 = vrot.slane %v2512, 4
      %v2514 = vrot.slane %v1743, 5
      %v2515 = vsel %vm1081, %v2513, %v2514
      %v2516 = vrot.slane %v2514, 4
      %v2517 = vrot.slane %v1744, 5
      %v2518 = vsel %vm1081, %v2516, %v2517
      %v2519 = vrot.slane %v2371, 5
      %v2520 = vrot.slane %v2519, 4
      %v2521 = vrot.slane %v1746, 5
      %v2522 = vsel %vm1081, %v2520, %v2521
      %v2523 = vrot.slane %v2521, 4
      %v2524 = vrot.slane %v1747, 5
      %v2525 = vsel %vm1081, %v2523, %v2524
      %v2526 = vrot.slane %v2372, 5
      %v2527 = vrot.slane %v2526, 4
      %v2528 = vrot.slane %v1749, 5
      %v2529 = vsel %vm1081, %v2527, %v2528
      %v2530 = vrot.slane %v2528, 4
      %v2531 = vrot.slane %v1750, 5
      %v2532 = vsel %vm1081, %v2530, %v2531
      %s2533 = scalar_lea.vmem %s1, 10
      %v2534 = vld [vmem:[%s2533] sm:$0x3]
      %v2535 = vunpack.c.l.b16 %v2424
      %v2536 = vunpack.c.l.b16 %v2427
      %v2537 = vunpack.c.l.b16 %v2431
      %v2538 = vunpack.c.l.b16 %v2434
      %v2539 = vunpack.c.l.b16 %v2438
      %v2540 = vunpack.c.l.b16 %v2441
      %v2541 = vunpack.c.l.b16 %v2445
      %v2542 = vunpack.c.l.b16 %v2448
      %v2543 = vunpack.c.l.b16 %v2452
      %v2544 = vunpack.c.l.b16 %v2455
      %v2545 = vunpack.c.l.b16 %v2459
      %v2546 = vunpack.c.l.b16 %v2462
      %v2547 = vunpack.c.l.b16 %v2466
      %v2548 = vunpack.c.l.b16 %v2469
      %v2549 = vunpack.c.l.b16 %v2473
      %v2550 = vunpack.c.l.b16 %v2476
      %v2551 = vunpack.c.l.b16 %v2480
      %v2552 = vunpack.c.l.b16 %v2483
      %v2553 = vunpack.c.l.b16 %v2487
      %v2554 = vunpack.c.l.b16 %v2490
      %v2555 = vunpack.c.l.b16 %v2494
      %v2556 = vunpack.c.l.b16 %v2497
      %v2557 = vunpack.c.l.b16 %v2501
      %v2558 = vunpack.c.l.b16 %v2504
      %v2559 = vunpack.c.l.b16 %v2508
      %v2560 = vunpack.c.l.b16 %v2511
      %v2561 = vunpack.c.l.b16 %v2515
      %v2562 = vunpack.c.l.b16 %v2518
      %v2563 = vunpack.c.l.b16 %v2522
      %v2564 = vunpack.c.l.b16 %v2525
      %v2565 = vunpack.c.l.b16 %v2529
      %v2566 = vunpack.c.l.b16 %v2532
      %v2567 = vpack.c.b16 %v2536, %v2535
      %v2568 = vpack.c.b16 %v2538, %v2537
      %v2569 = vpack.c.b16 %v2540, %v2539
      %v2570 = vpack.c.b16 %v2542, %v2541
      %v2571 = vpack.c.b16 %v2544, %v2543
      %v2572 = vpack.c.b16 %v2546, %v2545
      %v2573 = vpack.c.b16 %v2548, %v2547
      %v2574 = vpack.c.b16 %v2550, %v2549
      %v2575 = vpack.c.b16 %v2552, %v2551
      %v2576 = vpack.c.b16 %v2554, %v2553
      %v2577 = vpack.c.b16 %v2556, %v2555
      %v2578 = vpack.c.b16 %v2558, %v2557
      %v2579 = vpack.c.b16 %v2560, %v2559
      %v2580 = vpack.c.b16 %v2562, %v2561
      %v2581 = vpack.c.b16 %v2564, %v2563
      %v2582 = vpack.c.b16 %v2566, %v2565
      %v2584 = vsel %vm669, %v2567, 0
      %v2587 = vsel %vm669, %v2568, 0
      %v2590 = vsel %vm669, %v2569, 0
      %v2593 = vsel %vm669, %v2570, 0
      %v2596 = vsel %vm669, %v2571, 0
      %v2599 = vsel %vm669, %v2572, 0
      %v2602 = vsel %vm669, %v2573, 0
      %v2605 = vsel %vm669, %v2574, 0
      %v2608 = vsel %vm669, %v2575, 0
      %v2611 = vsel %vm669, %v2576, 0
      %v2614 = vsel %vm669, %v2577, 0
      %v2617 = vsel %vm669, %v2578, 0
      %v2620 = vsel %vm669, %v2579, 0
      %v2623 = vsel %vm669, %v2580, 0
      %v2626 = vsel %vm669, %v2581, 0
      %v2629 = vsel %vm669, %v2582, 0
      %v2632 = vsel %vm718, %v2534, 0
      %2634 = vmatpush.bf16.msra.mxu0 0
      %2635 = vmatpush.bf16.msra.mxu0 0
      %2636 = vmatpush.bf16.msra.mxu0 0
      %2637 = vmatpush.bf16.msra.mxu0 0
      %2638 = vmatpush.bf16.msra.mxu0 0
      %2639 = vmatpush.bf16.msra.mxu0 0
      %2640 = vmatpush.bf16.msra.mxu0 0
      %2641 = vmatpush.bf16.msra.mxu0 %v2632
      %2642 = vmatmul.bf16.gmra.mxu0 %v2584
      %v2643 = vpop.f32.mrf.mxu0
      %v2644 = vadd.f32 0.0, %v2643
      %v2645 = vpop.f32.mrf.mxu0
      %v2646 = vadd.f32 0.0, %v2645
      %2647 = vmatmul.bf16.gmra.mxu0 %v2587
      %v2648 = vpop.f32.mrf.mxu0
      %v2649 = vadd.f32 0.0, %v2648
      %v2650 = vpop.f32.mrf.mxu0
      %v2651 = vadd.f32 0.0, %v2650
      %2652 = vmatmul.bf16.gmra.mxu0 %v2590
      %v2653 = vpop.f32.mrf.mxu0
      %v2654 = vadd.f32 0.0, %v2653
      %v2655 = vpop.f32.mrf.mxu0
      %v2656 = vadd.f32 0.0, %v2655
      %2657 = vmatmul.bf16.gmra.mxu0 %v2593
      %v2658 = vpop.f32.mrf.mxu0
      %v2659 = vadd.f32 0.0, %v2658
      %v2660 = vpop.f32.mrf.mxu0
      %v2661 = vadd.f32 0.0, %v2660
      %2662 = vmatmul.bf16.gmra.mxu0 %v2596
      %v2663 = vpop.f32.mrf.mxu0
      %v2664 = vadd.f32 0.0, %v2663
      %v2665 = vpop.f32.mrf.mxu0
      %v2666 = vadd.f32 0.0, %v2665
      %2667 = vmatmul.bf16.gmra.mxu0 %v2599
      %v2668 = vpop.f32.mrf.mxu0
      %v2669 = vadd.f32 0.0, %v2668
      %v2670 = vpop.f32.mrf.mxu0
      %v2671 = vadd.f32 0.0, %v2670
      %2672 = vmatmul.bf16.gmra.mxu0 %v2602
      %v2673 = vpop.f32.mrf.mxu0
      %v2674 = vadd.f32 0.0, %v2673
      %v2675 = vpop.f32.mrf.mxu0
      %v2676 = vadd.f32 0.0, %v2675
      %2677 = vmatmul.bf16.gmra.mxu0 %v2605
      %v2678 = vpop.f32.mrf.mxu0
      %v2679 = vadd.f32 0.0, %v2678
      %v2680 = vpop.f32.mrf.mxu0
      %v2681 = vadd.f32 0.0, %v2680
      %2682 = vmatmul.bf16.gmra.mxu0 %v2608
      %v2683 = vpop.f32.mrf.mxu0
      %v2684 = vadd.f32 0.0, %v2683
      %v2685 = vpop.f32.mrf.mxu0
      %v2686 = vadd.f32 0.0, %v2685
      %2687 = vmatmul.bf16.gmra.mxu0 %v2611
      %v2688 = vpop.f32.mrf.mxu0
      %v2689 = vadd.f32 0.0, %v2688
      %v2690 = vpop.f32.mrf.mxu0
      %v2691 = vadd.f32 0.0, %v2690
      %2692 = vmatmul.bf16.gmra.mxu0 %v2614
      %v2693 = vpop.f32.mrf.mxu0
      %v2694 = vadd.f32 0.0, %v2693
      %v2695 = vpop.f32.mrf.mxu0
      %v2696 = vadd.f32 0.0, %v2695
      %2697 = vmatmul.bf16.gmra.mxu0 %v2617
      %v2698 = vpop.f32.mrf.mxu0
      %v2699 = vadd.f32 0.0, %v2698
      %v2700 = vpop.f32.mrf.mxu0
      %v2701 = vadd.f32 0.0, %v2700
      %2702 = vmatmul.bf16.gmra.mxu0 %v2620
      %v2703 = vpop.f32.mrf.mxu0
      %v2704 = vadd.f32 0.0, %v2703
      %v2705 = vpop.f32.mrf.mxu0
      %v2706 = vadd.f32 0.0, %v2705
      %2707 = vmatmul.bf16.gmra.mxu0 %v2623
      %v2708 = vpop.f32.mrf.mxu0
      %v2709 = vadd.f32 0.0, %v2708
      %v2710 = vpop.f32.mrf.mxu0
      %v2711 = vadd.f32 0.0, %v2710
      %2712 = vmatmul.bf16.gmra.mxu0 %v2626
      %v2713 = vpop.f32.mrf.mxu0
      %v2714 = vadd.f32 0.0, %v2713
      %v2715 = vpop.f32.mrf.mxu0
      %v2716 = vadd.f32 0.0, %v2715
      %2717 = vmatmul.bf16.gmra.mxu0 %v2629
      %v2718 = vpop.f32.mrf.mxu0
      %v2719 = vadd.f32 0.0, %v2718
      %v2720 = vpop.f32.mrf.mxu0
      %v2721 = vadd.f32 0.0, %v2720
      %2722 = vdwg.mxu0
      %v2723 = vadd.f32 %v2325, %v2644
      %v2724 = vadd.f32 %v2326, %v2646
      %v2725 = vadd.f32 %v2327, %v2649
      %v2726 = vadd.f32 %v2328, %v2651
      %v2727 = vadd.f32 %v2329, %v2654
      %v2728 = vadd.f32 %v2330, %v2656
      %v2729 = vadd.f32 %v2331, %v2659
      %v2730 = vadd.f32 %v2332, %v2661
      %v2731 = vadd.f32 %v2333, %v2664
      %v2732 = vadd.f32 %v2334, %v2666
      %v2733 = vadd.f32 %v2335, %v2669
      %v2734 = vadd.f32 %v2336, %v2671
      %v2735 = vadd.f32 %v2337, %v2674
      %v2736 = vadd.f32 %v2338, %v2676
      %v2737 = vadd.f32 %v2339, %v2679
      %v2738 = vadd.f32 %v2340, %v2681
      %v2739 = vadd.f32 %v2341, %v2684
      %v2740 = vadd.f32 %v2342, %v2686
      %v2741 = vadd.f32 %v2343, %v2689
      %v2742 = vadd.f32 %v2344, %v2691
      %v2743 = vadd.f32 %v2345, %v2694
      %v2744 = vadd.f32 %v2346, %v2696
      %v2745 = vadd.f32 %v2347, %v2699
      %v2746 = vadd.f32 %v2348, %v2701
      %v2747 = vadd.f32 %v2349, %v2704
      %v2748 = vadd.f32 %v2350, %v2706
      %v2749 = vadd.f32 %v2351, %v2709
      %v2750 = vadd.f32 %v2352, %v2711
      %v2751 = vadd.f32 %v2353, %v2714
      %v2752 = vadd.f32 %v2354, %v2716
      %v2753 = vadd.f32 %v2355, %v2719
      %v2754 = vadd.f32 %v2356, %v2721
      %s2755 = scalar_lea.vmem %s172, 24
      %v2756 = vld [vmem:[%s2755] sm:$0xf]
      %v2757 = vld [vmem:[%s2755 + $0x4] sm:$0xf]
      %v2758 = vld [vmem:[%s2755 + $0xc] sm:$0xf]
      %v2759 = vld [vmem:[%s2755 + $0x10] sm:$0xf]
      %v2760 = vld [vmem:[%s2755 + $0x18] sm:$0xf]
      %v2761 = vld [vmem:[%s2755 + $0x1c] sm:$0xf]
      %v2762 = vld [vmem:[%s2755 + $0x24] sm:$0xf]
      %v2763 = vld [vmem:[%s2755 + $0x28] sm:$0xf]
      %v2764 = vld [vmem:[%s2755 + $0x30] sm:$0xf]
      %v2765 = vld [vmem:[%s2755 + $0x34] sm:$0xf]
      %v2766 = vld [vmem:[%s2755 + $0x3c] sm:$0xf]
      %v2767 = vld [vmem:[%s2755 + $0x40] sm:$0xf]
      %v2768 = vld [vmem:[%s2755 + $0x48] sm:$0xf]
      %v2769 = vld [vmem:[%s2755 + $0x4c] sm:$0xf]
      %v2770 = vld [vmem:[%s2755 + $0x54] sm:$0xf]
      %v2771 = vld [vmem:[%s2755 + $0x58] sm:$0xf]
      %v2772 = vld [vmem:[%s2755 + $0x60] sm:$0xf]
      %v2773 = vld [vmem:[%s2755 + $0x64] sm:$0xf]
      %v2774 = vld [vmem:[%s2755 + $0x6c] sm:$0xf]
      %v2775 = vld [vmem:[%s2755 + $0x70] sm:$0xf]
      %v2776 = vld [vmem:[%s2755 + $0x78] sm:$0xf]
      %v2777 = vld [vmem:[%s2755 + $0x7c] sm:$0xf]
      %v2778 = vld [vmem:[%s2755 + $0x84] sm:$0xf]
      %v2779 = vld [vmem:[%s2755 + $0x88] sm:$0xf]
      %v2780 = vld [vmem:[%s2755 + $0x90] sm:$0xf]
      %v2781 = vld [vmem:[%s2755 + $0x94] sm:$0xf]
      %v2782 = vld [vmem:[%s2755 + $0x9c] sm:$0xf]
      %v2783 = vld [vmem:[%s2755 + $0xa0] sm:$0xf]
      %v2784 = vld [vmem:[%s2755 + $0xa8] sm:$0xf]
      %v2785 = vld [vmem:[%s2755 + $0xac] sm:$0xf]
      %v2786 = vld [vmem:[%s2755 + $0xb4] sm:$0xf]
      %v2787 = vld [vmem:[%s2755 + $0xb8] sm:$0xf]
      %s2788 = scalar_lea.vmem %s1, 12
      %v2789 = vld [vmem:[%s2788] sm:$0x3]
      %v2822 = vunpack.c.l.b16 %v2756
      %v2823 = vunpack.c.l.b16 %v2757
      %v2824 = vunpack.c.l.b16 %v2758
      %v2825 = vunpack.c.l.b16 %v2759
      %v2826 = vunpack.c.l.b16 %v2760
      %v2827 = vunpack.c.l.b16 %v2761
      %v2828 = vunpack.c.l.b16 %v2762
      %v2829 = vunpack.c.l.b16 %v2763
      %v2830 = vunpack.c.l.b16 %v2764
      %v2831 = vunpack.c.l.b16 %v2765
      %v2832 = vunpack.c.l.b16 %v2766
      %v2833 = vunpack.c.l.b16 %v2767
      %v2834 = vunpack.c.l.b16 %v2768
      %v2835 = vunpack.c.l.b16 %v2769
      %v2836 = vunpack.c.l.b16 %v2770
      %v2837 = vunpack.c.l.b16 %v2771
      %v2838 = vunpack.c.l.b16 %v2772
      %v2839 = vunpack.c.l.b16 %v2773
      %v2840 = vunpack.c.l.b16 %v2774
      %v2841 = vunpack.c.l.b16 %v2775
      %v2842 = vunpack.c.l.b16 %v2776
      %v2843 = vunpack.c.l.b16 %v2777
      %v2844 = vunpack.c.l.b16 %v2778
      %v2845 = vunpack.c.l.b16 %v2779
      %v2846 = vunpack.c.l.b16 %v2780
      %v2847 = vunpack.c.l.b16 %v2781
      %v2848 = vunpack.c.l.b16 %v2782
      %v2849 = vunpack.c.l.b16 %v2783
      %v2850 = vunpack.c.l.b16 %v2784
      %v2851 = vunpack.c.l.b16 %v2785
      %v2852 = vunpack.c.l.b16 %v2786
      %v2853 = vunpack.c.l.b16 %v2787
      %v2854 = vpack.c.b16 %v2823, %v2822
      %v2855 = vpack.c.b16 %v2825, %v2824
      %v2856 = vpack.c.b16 %v2827, %v2826
      %v2857 = vpack.c.b16 %v2829, %v2828
      %v2858 = vpack.c.b16 %v2831, %v2830
      %v2859 = vpack.c.b16 %v2833, %v2832
      %v2860 = vpack.c.b16 %v2835, %v2834
      %v2861 = vpack.c.b16 %v2837, %v2836
      %v2862 = vpack.c.b16 %v2839, %v2838
      %v2863 = vpack.c.b16 %v2841, %v2840
      %v2864 = vpack.c.b16 %v2843, %v2842
      %v2865 = vpack.c.b16 %v2845, %v2844
      %v2866 = vpack.c.b16 %v2847, %v2846
      %v2867 = vpack.c.b16 %v2849, %v2848
      %v2868 = vpack.c.b16 %v2851, %v2850
      %v2869 = vpack.c.b16 %v2853, %v2852
      %v2871 = vsel %vm669, %v2854, 0
      %v2874 = vsel %vm669, %v2855, 0
      %v2877 = vsel %vm669, %v2856, 0
      %v2880 = vsel %vm669, %v2857, 0
      %v2883 = vsel %vm669, %v2858, 0
      %v2886 = vsel %vm669, %v2859, 0
      %v2889 = vsel %vm669, %v2860, 0
      %v2892 = vsel %vm669, %v2861, 0
      %v2895 = vsel %vm669, %v2862, 0
      %v2898 = vsel %vm669, %v2863, 0
      %v2901 = vsel %vm669, %v2864, 0
      %v2904 = vsel %vm669, %v2865, 0
      %v2907 = vsel %vm669, %v2866, 0
      %v2910 = vsel %vm669, %v2867, 0
      %v2913 = vsel %vm669, %v2868, 0
      %v2916 = vsel %vm669, %v2869, 0
      %v2919 = vsel %vm718, %v2789, 0
      %2921 = vmatpush.bf16.msra.mxu0 0
      %2922 = vmatpush.bf16.msra.mxu0 0
      %2923 = vmatpush.bf16.msra.mxu0 0
      %2924 = vmatpush.bf16.msra.mxu0 0
      %2925 = vmatpush.bf16.msra.mxu0 0
      %2926 = vmatpush.bf16.msra.mxu0 0
      %2927 = vmatpush.bf16.msra.mxu0 0
      %2928 = vmatpush.bf16.msra.mxu0 %v2919
      %2929 = vmatmul.bf16.gmra.mxu0 %v2871
      %v2930 = vpop.f32.mrf.mxu0
      %v2931 = vadd.f32 0.0, %v2930
      %v2932 = vpop.f32.mrf.mxu0
      %v2933 = vadd.f32 0.0, %v2932
      %2934 = vmatmul.bf16.gmra.mxu0 %v2874
      %v2935 = vpop.f32.mrf.mxu0
      %v2936 = vadd.f32 0.0, %v2935
      %v2937 = vpop.f32.mrf.mxu0
      %v2938 = vadd.f32 0.0, %v2937
      %2939 = vmatmul.bf16.gmra.mxu0 %v2877
      %v2940 = vpop.f32.mrf.mxu0
      %v2941 = vadd.f32 0.0, %v2940
      %v2942 = vpop.f32.mrf.mxu0
      %v2943 = vadd.f32 0.0, %v2942
      %2944 = vmatmul.bf16.gmra.mxu0 %v2880
      %v2945 = vpop.f32.mrf.mxu0
      %v2946 = vadd.f32 0.0, %v2945
      %v2947 = vpop.f32.mrf.mxu0
      %v2948 = vadd.f32 0.0, %v2947
      %2949 = vmatmul.bf16.gmra.mxu0 %v2883
      %v2950 = vpop.f32.mrf.mxu0
      %v2951 = vadd.f32 0.0, %v2950
      %v2952 = vpop.f32.mrf.mxu0
      %v2953 = vadd.f32 0.0, %v2952
      %2954 = vmatmul.bf16.gmra.mxu0 %v2886
      %v2955 = vpop.f32.mrf.mxu0
      %v2956 = vadd.f32 0.0, %v2955
      %v2957 = vpop.f32.mrf.mxu0
      %v2958 = vadd.f32 0.0, %v2957
      %2959 = vmatmul.bf16.gmra.mxu0 %v2889
      %v2960 = vpop.f32.mrf.mxu0
      %v2961 = vadd.f32 0.0, %v2960
      %v2962 = vpop.f32.mrf.mxu0
      %v2963 = vadd.f32 0.0, %v2962
      %2964 = vmatmul.bf16.gmra.mxu0 %v2892
      %v2965 = vpop.f32.mrf.mxu0
      %v2966 = vadd.f32 0.0, %v2965
      %v2967 = vpop.f32.mrf.mxu0
      %v2968 = vadd.f32 0.0, %v2967
      %2969 = vmatmul.bf16.gmra.mxu0 %v2895
      %v2970 = vpop.f32.mrf.mxu0
      %v2971 = vadd.f32 0.0, %v2970
      %v2972 = vpop.f32.mrf.mxu0
      %v2973 = vadd.f32 0.0, %v2972
      %2974 = vmatmul.bf16.gmra.mxu0 %v2898
      %v2975 = vpop.f32.mrf.mxu0
      %v2976 = vadd.f32 0.0, %v2975
      %v2977 = vpop.f32.mrf.mxu0
      %v2978 = vadd.f32 0.0, %v2977
      %2979 = vmatmul.bf16.gmra.mxu0 %v2901
      %v2980 = vpop.f32.mrf.mxu0
      %v2981 = vadd.f32 0.0, %v2980
      %v2982 = vpop.f32.mrf.mxu0
      %v2983 = vadd.f32 0.0, %v2982
      %2984 = vmatmul.bf16.gmra.mxu0 %v2904
      %v2985 = vpop.f32.mrf.mxu0
      %v2986 = vadd.f32 0.0, %v2985
      %v2987 = vpop.f32.mrf.mxu0
      %v2988 = vadd.f32 0.0, %v2987
      %2989 = vmatmul.bf16.gmra.mxu0 %v2907
      %v2990 = vpop.f32.mrf.mxu0
      %v2991 = vadd.f32 0.0, %v2990
      %v2992 = vpop.f32.mrf.mxu0
      %v2993 = vadd.f32 0.0, %v2992
      %2994 = vmatmul.bf16.gmra.mxu0 %v2910
      %v2995 = vpop.f32.mrf.mxu0
      %v2996 = vadd.f32 0.0, %v2995
      %v2997 = vpop.f32.mrf.mxu0
      %v2998 = vadd.f32 0.0, %v2997
      %2999 = vmatmul.bf16.gmra.mxu0 %v2913
      %v3000 = vpop.f32.mrf.mxu0
      %v3001 = vadd.f32 0.0, %v3000
      %v3002 = vpop.f32.mrf.mxu0
      %v3003 = vadd.f32 0.0, %v3002
      %3004 = vmatmul.bf16.gmra.mxu0 %v2916
      %v3005 = vpop.f32.mrf.mxu0
      %v3006 = vadd.f32 0.0, %v3005
      %v3007 = vpop.f32.mrf.mxu0
      %v3008 = vadd.f32 0.0, %v3007
      %3009 = vdwg.mxu0
      %v3010 = vadd.f32 %v2723, %v2931
      %v3011 = vadd.f32 %v2724, %v2933
      %v3012 = vadd.f32 %v2725, %v2936
      %v3013 = vadd.f32 %v2726, %v2938
      %v3014 = vadd.f32 %v2727, %v2941
      %v3015 = vadd.f32 %v2728, %v2943
      %v3016 = vadd.f32 %v2729, %v2946
      %v3017 = vadd.f32 %v2730, %v2948
      %v3018 = vadd.f32 %v2731, %v2951
      %v3019 = vadd.f32 %v2732, %v2953
      %v3020 = vadd.f32 %v2733, %v2956
      %v3021 = vadd.f32 %v2734, %v2958
      %v3022 = vadd.f32 %v2735, %v2961
      %v3023 = vadd.f32 %v2736, %v2963
      %v3024 = vadd.f32 %v2737, %v2966
      %v3025 = vadd.f32 %v2738, %v2968
      %v3026 = vadd.f32 %v2739, %v2971
      %v3027 = vadd.f32 %v2740, %v2973
      %v3028 = vadd.f32 %v2741, %v2976
      %v3029 = vadd.f32 %v2742, %v2978
      %v3030 = vadd.f32 %v2743, %v2981
      %v3031 = vadd.f32 %v2744, %v2983
      %v3032 = vadd.f32 %v2745, %v2986
      %v3033 = vadd.f32 %v2746, %v2988
      %v3034 = vadd.f32 %v2747, %v2991
      %v3035 = vadd.f32 %v2748, %v2993
      %v3036 = vadd.f32 %v2749, %v2996
      %v3037 = vadd.f32 %v2750, %v2998
      %v3038 = vadd.f32 %v2751, %v3001
      %v3039 = vadd.f32 %v2752, %v3003
      %v3040 = vadd.f32 %v2753, %v3006
      %v3041 = vadd.f32 %v2754, %v3008
      %v3042 = vld [vmem:[%s2755] sm:$0xf]
      %v3043 = vld [vmem:[%s2755 + $0x4] sm:$0xf]
      %v3044 = vld [vmem:[%s2755 + $0x8] sm:$0x1]
      %v3045 = vld [vmem:[%s2755 + $0xc] sm:$0xf]
      %v3046 = vld [vmem:[%s2755 + $0x10] sm:$0xf]
      %v3047 = vld [vmem:[%s2755 + $0x14] sm:$0x1]
      %v3048 = vld [vmem:[%s2755 + $0x18] sm:$0xf]
      %v3049 = vld [vmem:[%s2755 + $0x1c] sm:$0xf]
      %v3050 = vld [vmem:[%s2755 + $0x20] sm:$0x1]
      %v3051 = vld [vmem:[%s2755 + $0x24] sm:$0xf]
      %v3052 = vld [vmem:[%s2755 + $0x28] sm:$0xf]
      %v3053 = vld [vmem:[%s2755 + $0x2c] sm:$0x1]
      %v3054 = vld [vmem:[%s2755 + $0x30] sm:$0xf]
      %v3055 = vld [vmem:[%s2755 + $0x34] sm:$0xf]
      %v3056 = vld [vmem:[%s2755 + $0x38] sm:$0x1]
      %v3057 = vld [vmem:[%s2755 + $0x3c] sm:$0xf]
      %v3058 = vld [vmem:[%s2755 + $0x40] sm:$0xf]
      %v3059 = vld [vmem:[%s2755 + $0x44] sm:$0x1]
      %v3060 = vld [vmem:[%s2755 + $0x48] sm:$0xf]
      %v3061 = vld [vmem:[%s2755 + $0x4c] sm:$0xf]
      %v3062 = vld [vmem:[%s2755 + $0x50] sm:$0x1]
      %v3063 = vld [vmem:[%s2755 + $0x54] sm:$0xf]
      %v3064 = vld [vmem:[%s2755 + $0x58] sm:$0xf]
      %v3065 = vld [vmem:[%s2755 + $0x5c] sm:$0x1]
      %v3066 = vld [vmem:[%s2755 + $0x60] sm:$0xf]
      %v3067 = vld [vmem:[%s2755 + $0x64] sm:$0xf]
      %v3068 = vld [vmem:[%s2755 + $0x68] sm:$0x1]
      %v3069 = vld [vmem:[%s2755 + $0x6c] sm:$0xf]
      %v3070 = vld [vmem:[%s2755 + $0x70] sm:$0xf]
      %v3071 = vld [vmem:[%s2755 + $0x74] sm:$0x1]
      %v3072 = vld [vmem:[%s2755 + $0x78] sm:$0xf]
      %v3073 = vld [vmem:[%s2755 + $0x7c] sm:$0xf]
      %v3074 = vld [vmem:[%s2755 + $0x80] sm:$0x1]
      %v3075 = vld [vmem:[%s2755 + $0x84] sm:$0xf]
      %v3076 = vld [vmem:[%s2755 + $0x88] sm:$0xf]
      %v3077 = vld [vmem:[%s2755 + $0x8c] sm:$0x1]
      %v3078 = vld [vmem:[%s2755 + $0x90] sm:$0xf]
      %v3079 = vld [vmem:[%s2755 + $0x94] sm:$0xf]
      %v3080 = vld [vmem:[%s2755 + $0x98] sm:$0x1]
      %v3081 = vld [vmem:[%s2755 + $0x9c] sm:$0xf]
      %v3082 = vld [vmem:[%s2755 + $0xa0] sm:$0xf]
      %v3083 = vld [vmem:[%s2755 + $0xa4] sm:$0x1]
      %v3084 = vld [vmem:[%s2755 + $0xa8] sm:$0xf]
      %v3085 = vld [vmem:[%s2755 + $0xac] sm:$0xf]
      %v3086 = vld [vmem:[%s2755 + $0xb0] sm:$0x1]
      %v3087 = vld [vmem:[%s2755 + $0xb4] sm:$0xf]
      %v3088 = vld [vmem:[%s2755 + $0xb8] sm:$0xf]
      %v3089 = vld [vmem:[%s2755 + $0xbc] sm:$0x1]
      %v3091 = vshrl.u32 %v3042, 16
      %v3093 = vrot.slane %v3091, 4
      %v3094 = vshll.u32 %v3042, 16
      %v3096 = vrot.slane %v3094, 5
      %v3097 = vor.u32 %v3093, %v3096
      %v3098 = vrot.slane %v3097, 4
      %v3100 = vshll.u32 %v3043, 16
      %v3102 = vrot.slane %v3100, 5
      %v3103 = vsel %vm234, %v3098, %v3102
      %v3104 = vshrl.u32 %v3043, 16
      %v3106 = vrot.slane %v3104, 4
      %v3107 = vor.u32 %v3106, %v3102
      %v3108 = vrot.slane %v3107, 4
      %v3110 = vshll.u32 %v3044, 16
      %v3112 = vrot.slane %v3110, 5
      %v3113 = vsel %vm234, %v3108, %v3112
      %v3115 = vshrl.u32 %v3045, 16
      %v3117 = vrot.slane %v3115, 4
      %v3118 = vshll.u32 %v3045, 16
      %v3120 = vrot.slane %v3118, 5
      %v3121 = vor.u32 %v3117, %v3120
      %v3122 = vrot.slane %v3121, 4
      %v3124 = vshll.u32 %v3046, 16
      %v3126 = vrot.slane %v3124, 5
      %v3127 = vsel %vm234, %v3122, %v3126
      %v3128 = vshrl.u32 %v3046, 16
      %v3130 = vrot.slane %v3128, 4
      %v3131 = vor.u32 %v3130, %v3126
      %v3132 = vrot.slane %v3131, 4
      %v3134 = vshll.u32 %v3047, 16
      %v3136 = vrot.slane %v3134, 5
      %v3137 = vsel %vm234, %v3132, %v3136
      %v3139 = vshrl.u32 %v3048, 16
      %v3141 = vrot.slane %v3139, 4
      %v3142 = vshll.u32 %v3048, 16
      %v3144 = vrot.slane %v3142, 5
      %v3145 = vor.u32 %v3141, %v3144
      %v3146 = vrot.slane %v3145, 4
      %v3148 = vshll.u32 %v3049, 16
      %v3150 = vrot.slane %v3148, 5
      %v3151 = vsel %vm234, %v3146, %v3150
      %v3152 = vshrl.u32 %v3049, 16
      %v3154 = vrot.slane %v3152, 4
      %v3155 = vor.u32 %v3154, %v3150
      %v3156 = vrot.slane %v3155, 4
      %v3158 = vshll.u32 %v3050, 16
      %v3160 = vrot.slane %v3158, 5
      %v3161 = vsel %vm234, %v3156, %v3160
      %v3163 = vshrl.u32 %v3051, 16
      %v3165 = vrot.slane %v3163, 4
      %v3166 = vshll.u32 %v3051, 16
      %v3168 = vrot.slane %v3166, 5
      %v3169 = vor.u32 %v3165, %v3168
      %v3170 = vrot.slane %v3169, 4
      %v3172 = vshll.u32 %v3052, 16
      %v3174 = vrot.slane %v3172, 5
      %v3175 = vsel %vm234, %v3170, %v3174
      %v3176 = vshrl.u32 %v3052, 16
      %v3178 = vrot.slane %v3176, 4
      %v3179 = vor.u32 %v3178, %v3174
      %v3180 = vrot.slane %v3179, 4
      %v3182 = vshll.u32 %v3053, 16
      %v3184 = vrot.slane %v3182, 5
      %v3185 = vsel %vm234, %v3180, %v3184
      %v3187 = vshrl.u32 %v3054, 16
      %v3189 = vrot.slane %v3187, 4
      %v3190 = vshll.u32 %v3054, 16
      %v3192 = vrot.slane %v3190, 5
      %v3193 = vor.u32 %v3189, %v3192
      %v3194 = vrot.slane %v3193, 4
      %v3196 = vshll.u32 %v3055, 16
      %v3198 = vrot.slane %v3196, 5
      %v3199 = vsel %vm234, %v3194, %v3198
      %v3200 = vshrl.u32 %v3055, 16
      %v3202 = vrot.slane %v3200, 4
      %v3203 = vor.u32 %v3202, %v3198
      %v3204 = vrot.slane %v3203, 4
      %v3206 = vshll.u32 %v3056, 16
      %v3208 = vrot.slane %v3206, 5
      %v3209 = vsel %vm234, %v3204, %v3208
      %v3211 = vshrl.u32 %v3057, 16
      %v3213 = vrot.slane %v3211, 4
      %v3214 = vshll.u32 %v3057, 16
      %v3216 = vrot.slane %v3214, 5
      %v3217 = vor.u32 %v3213, %v3216
      %v3218 = vrot.slane %v3217, 4
      %v3220 = vshll.u32 %v3058, 16
      %v3222 = vrot.slane %v3220, 5
      %v3223 = vsel %vm234, %v3218, %v3222
      %v3224 = vshrl.u32 %v3058, 16
      %v3226 = vrot.slane %v3224, 4
      %v3227 = vor.u32 %v3226, %v3222
      %v3228 = vrot.slane %v3227, 4
      %v3230 = vshll.u32 %v3059, 16
      %v3232 = vrot.slane %v3230, 5
      %v3233 = vsel %vm234, %v3228, %v3232
      %v3235 = vshrl.u32 %v3060, 16
      %v3237 = vrot.slane %v3235, 4
      %v3238 = vshll.u32 %v3060, 16
      %v3240 = vrot.slane %v3238, 5
      %v3241 = vor.u32 %v3237, %v3240
      %v3242 = vrot.slane %v3241, 4
      %v3244 = vshll.u32 %v3061, 16
      %v3246 = vrot.slane %v3244, 5
      %v3247 = vsel %vm234, %v3242, %v3246
      %v3248 = vshrl.u32 %v3061, 16
      %v3250 = vrot.slane %v3248, 4
      %v3251 = vor.u32 %v3250, %v3246
      %v3252 = vrot.slane %v3251, 4
      %v3254 = vshll.u32 %v3062, 16
      %v3256 = vrot.slane %v3254, 5
      %v3257 = vsel %vm234, %v3252, %v3256
      %v3259 = vshrl.u32 %v3063, 16
      %v3261 = vrot.slane %v3259, 4
      %v3262 = vshll.u32 %v3063, 16
      %v3264 = vrot.slane %v3262, 5
      %v3265 = vor.u32 %v3261, %v3264
      %v3266 = vrot.slane %v3265, 4
      %v3268 = vshll.u32 %v3064, 16
      %v3270 = vrot.slane %v3268, 5
      %v3271 = vsel %vm234, %v3266, %v3270
      %v3272 = vshrl.u32 %v3064, 16
      %v3274 = vrot.slane %v3272, 4
      %v3275 = vor.u32 %v3274, %v3270
      %v3276 = vrot.slane %v3275, 4
      %v3278 = vshll.u32 %v3065, 16
      %v3280 = vrot.slane %v3278, 5
      %v3281 = vsel %vm234, %v3276, %v3280
      %v3283 = vshrl.u32 %v3066, 16
      %v3285 = vrot.slane %v3283, 4
      %v3286 = vshll.u32 %v3066, 16
      %v3288 = vrot.slane %v3286, 5
      %v3289 = vor.u32 %v3285, %v3288
      %v3290 = vrot.slane %v3289, 4
      %v3292 = vshll.u32 %v3067, 16
      %v3294 = vrot.slane %v3292, 5
      %v3295 = vsel %vm234, %v3290, %v3294
      %v3296 = vshrl.u32 %v3067, 16
      %v3298 = vrot.slane %v3296, 4
      %v3299 = vor.u32 %v3298, %v3294
      %v3300 = vrot.slane %v3299, 4
      %v3302 = vshll.u32 %v3068, 16
      %v3304 = vrot.slane %v3302, 5
      %v3305 = vsel %vm234, %v3300, %v3304
      %v3307 = vshrl.u32 %v3069, 16
      %v3309 = vrot.slane %v3307, 4
      %v3310 = vshll.u32 %v3069, 16
      %v3312 = vrot.slane %v3310, 5
      %v3313 = vor.u32 %v3309, %v3312
      %v3314 = vrot.slane %v3313, 4
      %v3316 = vshll.u32 %v3070, 16
      %v3318 = vrot.slane %v3316, 5
      %v3319 = vsel %vm234, %v3314, %v3318
      %v3320 = vshrl.u32 %v3070, 16
      %v3322 = vrot.slane %v3320, 4
      %v3323 = vor.u32 %v3322, %v3318
      %v3324 = vrot.slane %v3323, 4
      %v3326 = vshll.u32 %v3071, 16
      %v3328 = vrot.slane %v3326, 5
      %v3329 = vsel %vm234, %v3324, %v3328
      %v3331 = vshrl.u32 %v3072, 16
      %v3333 = vrot.slane %v3331, 4
      %v3334 = vshll.u32 %v3072, 16
      %v3336 = vrot.slane %v3334, 5
      %v3337 = vor.u32 %v3333, %v3336
      %v3338 = vrot.slane %v3337, 4
      %v3340 = vshll.u32 %v3073, 16
      %v3342 = vrot.slane %v3340, 5
      %v3343 = vsel %vm234, %v3338, %v3342
      %v3344 = vshrl.u32 %v3073, 16
      %v3346 = vrot.slane %v3344, 4
      %v3347 = vor.u32 %v3346, %v3342
      %v3348 = vrot.slane %v3347, 4
      %v3350 = vshll.u32 %v3074, 16
      %v3352 = vrot.slane %v3350, 5
      %v3353 = vsel %vm234, %v3348, %v3352
      %v3355 = vshrl.u32 %v3075, 16
      %v3357 = vrot.slane %v3355, 4
      %v3358 = vshll.u32 %v3075, 16
      %v3360 = vrot.slane %v3358, 5
      %v3361 = vor.u32 %v3357, %v3360
      %v3362 = vrot.slane %v3361, 4
      %v3364 = vshll.u32 %v3076, 16
      %v3366 = vrot.slane %v3364, 5
      %v3367 = vsel %vm234, %v3362, %v3366
      %v3368 = vshrl.u32 %v3076, 16
      %v3370 = vrot.slane %v3368, 4
      %v3371 = vor.u32 %v3370, %v3366
      %v3372 = vrot.slane %v3371, 4
      %v3374 = vshll.u32 %v3077, 16
      %v3376 = vrot.slane %v3374, 5
      %v3377 = vsel %vm234, %v3372, %v3376
      %v3379 = vshrl.u32 %v3078, 16
      %v3381 = vrot.slane %v3379, 4
      %v3382 = vshll.u32 %v3078, 16
      %v3384 = vrot.slane %v3382, 5
      %v3385 = vor.u32 %v3381, %v3384
      %v3386 = vrot.slane %v3385, 4
      %v3388 = vshll.u32 %v3079, 16
      %v3390 = vrot.slane %v3388, 5
      %v3391 = vsel %vm234, %v3386, %v3390
      %v3392 = vshrl.u32 %v3079, 16
      %v3394 = vrot.slane %v3392, 4
      %v3395 = vor.u32 %v3394, %v3390
      %v3396 = vrot.slane %v3395, 4
      %v3398 = vshll.u32 %v3080, 16
      %v3400 = vrot.slane %v3398, 5
      %v3401 = vsel %vm234, %v3396, %v3400
      %v3403 = vshrl.u32 %v3081, 16
      %v3405 = vrot.slane %v3403, 4
      %v3406 = vshll.u32 %v3081, 16
      %v3408 = vrot.slane %v3406, 5
      %v3409 = vor.u32 %v3405, %v3408
      %v3410 = vrot.slane %v3409, 4
      %v3412 = vshll.u32 %v3082, 16
      %v3414 = vrot.slane %v3412, 5
      %v3415 = vsel %vm234, %v3410, %v3414
      %v3416 = vshrl.u32 %v3082, 16
      %v3418 = vrot.slane %v3416, 4
      %v3419 = vor.u32 %v3418, %v3414
      %v3420 = vrot.slane %v3419, 4
      %v3422 = vshll.u32 %v3083, 16
      %v3424 = vrot.slane %v3422, 5
      %v3425 = vsel %vm234, %v3420, %v3424
      %v3427 = vshrl.u32 %v3084, 16
      %v3429 = vrot.slane %v3427, 4
      %v3430 = vshll.u32 %v3084, 16
      %v3432 = vrot.slane %v3430, 5
      %v3433 = vor.u32 %v3429, %v3432
      %v3434 = vrot.slane %v3433, 4
      %v3436 = vshll.u32 %v3085, 16
      %v3438 = vrot.slane %v3436, 5
      %v3439 = vsel %vm234, %v3434, %v3438
      %v3440 = vshrl.u32 %v3085, 16
      %v3442 = vrot.slane %v3440, 4
      %v3443 = vor.u32 %v3442, %v3438
      %v3444 = vrot.slane %v3443, 4
      %v3446 = vshll.u32 %v3086, 16
      %v3448 = vrot.slane %v3446, 5
      %v3449 = vsel %vm234, %v3444, %v3448
      %v3451 = vshrl.u32 %v3087, 16
      %v3453 = vrot.slane %v3451, 4
      %v3454 = vshll.u32 %v3087, 16
      %v3456 = vrot.slane %v3454, 5
      %v3457 = vor.u32 %v3453, %v3456
      %v3458 = vrot.slane %v3457, 4
      %v3460 = vshll.u32 %v3088, 16
      %v3462 = vrot.slane %v3460, 5
      %v3463 = vsel %vm234, %v3458, %v3462
      %v3464 = vshrl.u32 %v3088, 16
      %v3466 = vrot.slane %v3464, 4
      %v3467 = vor.u32 %v3466, %v3462
      %v3468 = vrot.slane %v3467, 4
      %v3470 = vshll.u32 %v3089, 16
      %v3472 = vrot.slane %v3470, 5
      %v3473 = vsel %vm234, %v3468, %v3472
      %s3474 = scalar_lea.vmem %s1, 14
      %v3475 = vld [vmem:[%s3474] sm:$0x3]
      %v3476 = vunpack.c.l.b16 %v3103
      %v3477 = vunpack.c.l.b16 %v3113
      %v3478 = vunpack.c.l.b16 %v3127
      %v3479 = vunpack.c.l.b16 %v3137
      %v3480 = vunpack.c.l.b16 %v3151
      %v3481 = vunpack.c.l.b16 %v3161
      %v3482 = vunpack.c.l.b16 %v3175
      %v3483 = vunpack.c.l.b16 %v3185
      %v3484 = vunpack.c.l.b16 %v3199
      %v3485 = vunpack.c.l.b16 %v3209
      %v3486 = vunpack.c.l.b16 %v3223
      %v3487 = vunpack.c.l.b16 %v3233
      %v3488 = vunpack.c.l.b16 %v3247
      %v3489 = vunpack.c.l.b16 %v3257
      %v3490 = vunpack.c.l.b16 %v3271
      %v3491 = vunpack.c.l.b16 %v3281
      %v3492 = vunpack.c.l.b16 %v3295
      %v3493 = vunpack.c.l.b16 %v3305
      %v3494 = vunpack.c.l.b16 %v3319
      %v3495 = vunpack.c.l.b16 %v3329
      %v3496 = vunpack.c.l.b16 %v3343
      %v3497 = vunpack.c.l.b16 %v3353
      %v3498 = vunpack.c.l.b16 %v3367
      %v3499 = vunpack.c.l.b16 %v3377
      %v3500 = vunpack.c.l.b16 %v3391
      %v3501 = vunpack.c.l.b16 %v3401
      %v3502 = vunpack.c.l.b16 %v3415
      %v3503 = vunpack.c.l.b16 %v3425
      %v3504 = vunpack.c.l.b16 %v3439
      %v3505 = vunpack.c.l.b16 %v3449
      %v3506 = vunpack.c.l.b16 %v3463
      %v3507 = vunpack.c.l.b16 %v3473
      %v3508 = vpack.c.b16 %v3477, %v3476
      %v3509 = vpack.c.b16 %v3479, %v3478
      %v3510 = vpack.c.b16 %v3481, %v3480
      %v3511 = vpack.c.b16 %v3483, %v3482
      %v3512 = vpack.c.b16 %v3485, %v3484
      %v3513 = vpack.c.b16 %v3487, %v3486
      %v3514 = vpack.c.b16 %v3489, %v3488
      %v3515 = vpack.c.b16 %v3491, %v3490
      %v3516 = vpack.c.b16 %v3493, %v3492
      %v3517 = vpack.c.b16 %v3495, %v3494
      %v3518 = vpack.c.b16 %v3497, %v3496
      %v3519 = vpack.c.b16 %v3499, %v3498
      %v3520 = vpack.c.b16 %v3501, %v3500
      %v3521 = vpack.c.b16 %v3503, %v3502
      %v3522 = vpack.c.b16 %v3505, %v3504
      %v3523 = vpack.c.b16 %v3507, %v3506
      %v3525 = vsel %vm669, %v3508, 0
      %v3528 = vsel %vm669, %v3509, 0
      %v3531 = vsel %vm669, %v3510, 0
      %v3534 = vsel %vm669, %v3511, 0
      %v3537 = vsel %vm669, %v3512, 0
      %v3540 = vsel %vm669, %v3513, 0
      %v3543 = vsel %vm669, %v3514, 0
      %v3546 = vsel %vm669, %v3515, 0
      %v3549 = vsel %vm669, %v3516, 0
      %v3552 = vsel %vm669, %v3517, 0
      %v3555 = vsel %vm669, %v3518, 0
      %v3558 = vsel %vm669, %v3519, 0
      %v3561 = vsel %vm669, %v3520, 0
      %v3564 = vsel %vm669, %v3521, 0
      %v3567 = vsel %vm669, %v3522, 0
      %v3570 = vsel %vm669, %v3523, 0
      %v3573 = vsel %vm718, %v3475, 0
      %3575 = vmatpush.bf16.msra.mxu0 0
      %3576 = vmatpush.bf16.msra.mxu0 0
      %3577 = vmatpush.bf16.msra.mxu0 0
      %3578 = vmatpush.bf16.msra.mxu0 0
      %3579 = vmatpush.bf16.msra.mxu0 0
      %3580 = vmatpush.bf16.msra.mxu0 0
      %3581 = vmatpush.bf16.msra.mxu0 0
      %3582 = vmatpush.bf16.msra.mxu0 %v3573
      %3583 = vmatmul.bf16.gmra.mxu0 %v3525
      %v3584 = vpop.f32.mrf.mxu0
      %v3585 = vadd.f32 0.0, %v3584
      %v3586 = vpop.f32.mrf.mxu0
      %v3587 = vadd.f32 0.0, %v3586
      %3588 = vmatmul.bf16.gmra.mxu0 %v3528
      %v3589 = vpop.f32.mrf.mxu0
      %v3590 = vadd.f32 0.0, %v3589
      %v3591 = vpop.f32.mrf.mxu0
      %v3592 = vadd.f32 0.0, %v3591
      %3593 = vmatmul.bf16.gmra.mxu0 %v3531
      %v3594 = vpop.f32.mrf.mxu0
      %v3595 = vadd.f32 0.0, %v3594
      %v3596 = vpop.f32.mrf.mxu0
      %v3597 = vadd.f32 0.0, %v3596
      %3598 = vmatmul.bf16.gmra.mxu0 %v3534
      %v3599 = vpop.f32.mrf.mxu0
      %v3600 = vadd.f32 0.0, %v3599
      %v3601 = vpop.f32.mrf.mxu0
      %v3602 = vadd.f32 0.0, %v3601
      %3603 = vmatmul.bf16.gmra.mxu0 %v3537
      %v3604 = vpop.f32.mrf.mxu0
      %v3605 = vadd.f32 0.0, %v3604
      %v3606 = vpop.f32.mrf.mxu0
      %v3607 = vadd.f32 0.0, %v3606
      %3608 = vmatmul.bf16.gmra.mxu0 %v3540
      %v3609 = vpop.f32.mrf.mxu0
      %v3610 = vadd.f32 0.0, %v3609
      %v3611 = vpop.f32.mrf.mxu0
      %v3612 = vadd.f32 0.0, %v3611
      %3613 = vmatmul.bf16.gmra.mxu0 %v3543
      %v3614 = vpop.f32.mrf.mxu0
      %v3615 = vadd.f32 0.0, %v3614
      %v3616 = vpop.f32.mrf.mxu0
      %v3617 = vadd.f32 0.0, %v3616
      %3618 = vmatmul.bf16.gmra.mxu0 %v3546
      %v3619 = vpop.f32.mrf.mxu0
      %v3620 = vadd.f32 0.0, %v3619
      %v3621 = vpop.f32.mrf.mxu0
      %v3622 = vadd.f32 0.0, %v3621
      %3623 = vmatmul.bf16.gmra.mxu0 %v3549
      %v3624 = vpop.f32.mrf.mxu0
      %v3625 = vadd.f32 0.0, %v3624
      %v3626 = vpop.f32.mrf.mxu0
      %v3627 = vadd.f32 0.0, %v3626
      %3628 = vmatmul.bf16.gmra.mxu0 %v3552
      %v3629 = vpop.f32.mrf.mxu0
      %v3630 = vadd.f32 0.0, %v3629
      %v3631 = vpop.f32.mrf.mxu0
      %v3632 = vadd.f32 0.0, %v3631
      %3633 = vmatmul.bf16.gmra.mxu0 %v3555
      %v3634 = vpop.f32.mrf.mxu0
      %v3635 = vadd.f32 0.0, %v3634
      %v3636 = vpop.f32.mrf.mxu0
      %v3637 = vadd.f32 0.0, %v3636
      %3638 = vmatmul.bf16.gmra.mxu0 %v3558
      %v3639 = vpop.f32.mrf.mxu0
      %v3640 = vadd.f32 0.0, %v3639
      %v3641 = vpop.f32.mrf.mxu0
      %v3642 = vadd.f32 0.0, %v3641
      %3643 = vmatmul.bf16.gmra.mxu0 %v3561
      %v3644 = vpop.f32.mrf.mxu0
      %v3645 = vadd.f32 0.0, %v3644
      %v3646 = vpop.f32.mrf.mxu0
      %v3647 = vadd.f32 0.0, %v3646
      %3648 = vmatmul.bf16.gmra.mxu0 %v3564
      %v3649 = vpop.f32.mrf.mxu0
      %v3650 = vadd.f32 0.0, %v3649
      %v3651 = vpop.f32.mrf.mxu0
      %v3652 = vadd.f32 0.0, %v3651
      %3653 = vmatmul.bf16.gmra.mxu0 %v3567
      %v3654 = vpop.f32.mrf.mxu0
      %v3655 = vadd.f32 0.0, %v3654
      %v3656 = vpop.f32.mrf.mxu0
      %v3657 = vadd.f32 0.0, %v3656
      %3658 = vmatmul.bf16.gmra.mxu0 %v3570
      %v3659 = vpop.f32.mrf.mxu0
      %v3660 = vadd.f32 0.0, %v3659
      %v3661 = vpop.f32.mrf.mxu0
      %v3662 = vadd.f32 0.0, %v3661
      %3663 = vdwg.mxu0
      %v3664 = vadd.f32 %v3010, %v3585
      %v3665 = vadd.f32 %v3011, %v3587
      %v3666 = vadd.f32 %v3012, %v3590
      %v3667 = vadd.f32 %v3013, %v3592
      %v3668 = vadd.f32 %v3014, %v3595
      %v3669 = vadd.f32 %v3015, %v3597
      %v3670 = vadd.f32 %v3016, %v3600
      %v3671 = vadd.f32 %v3017, %v3602
      %v3672 = vadd.f32 %v3018, %v3605
      %v3673 = vadd.f32 %v3019, %v3607
      %v3674 = vadd.f32 %v3020, %v3610
      %v3675 = vadd.f32 %v3021, %v3612
      %v3676 = vadd.f32 %v3022, %v3615
      %v3677 = vadd.f32 %v3023, %v3617
      %v3678 = vadd.f32 %v3024, %v3620
      %v3679 = vadd.f32 %v3025, %v3622
      %v3680 = vadd.f32 %v3026, %v3625
      %v3681 = vadd.f32 %v3027, %v3627
      %v3682 = vadd.f32 %v3028, %v3630
      %v3683 = vadd.f32 %v3029, %v3632
      %v3684 = vadd.f32 %v3030, %v3635
      %v3685 = vadd.f32 %v3031, %v3637
      %v3686 = vadd.f32 %v3032, %v3640
      %v3687 = vadd.f32 %v3033, %v3642
      %v3688 = vadd.f32 %v3034, %v3645
      %v3689 = vadd.f32 %v3035, %v3647
      %v3690 = vadd.f32 %v3036, %v3650
      %v3691 = vadd.f32 %v3037, %v3652
      %v3692 = vadd.f32 %v3038, %v3655
      %v3693 = vadd.f32 %v3039, %v3657
      %v3694 = vadd.f32 %v3040, %v3660
      %v3695 = vadd.f32 %v3041, %v3662
      %v3696 = vld [vmem:[%s2755] sm:$0xe]
      %v3697 = vld [vmem:[%s2755 + $0xc] sm:$0xe]
      %v3698 = vld [vmem:[%s2755 + $0x18] sm:$0xe]
      %v3699 = vld [vmem:[%s2755 + $0x24] sm:$0xe]
      %v3700 = vld [vmem:[%s2755 + $0x30] sm:$0xe]
      %v3701 = vld [vmem:[%s2755 + $0x3c] sm:$0xe]
      %v3702 = vld [vmem:[%s2755 + $0x48] sm:$0xe]
      %v3703 = vld [vmem:[%s2755 + $0x54] sm:$0xe]
      %v3704 = vld [vmem:[%s2755 + $0x60] sm:$0xe]
      %v3705 = vld [vmem:[%s2755 + $0x6c] sm:$0xe]
      %v3706 = vld [vmem:[%s2755 + $0x78] sm:$0xe]
      %v3707 = vld [vmem:[%s2755 + $0x84] sm:$0xe]
      %v3708 = vld [vmem:[%s2755 + $0x90] sm:$0xe]
      %v3709 = vld [vmem:[%s2755 + $0x9c] sm:$0xe]
      %v3710 = vld [vmem:[%s2755 + $0xa8] sm:$0xe]
      %v3711 = vld [vmem:[%s2755 + $0xb4] sm:$0xe]
      %v3760 = vrot.slane %v3696, 5
      %v3761 = vrot.slane %v3760, 4
      %v3762 = vrot.slane %v3043, 5
      %v3763 = vsel %vm1081, %v3761, %v3762
      %v3764 = vrot.slane %v3762, 4
      %v3765 = vrot.slane %v3044, 5
      %v3766 = vsel %vm1081, %v3764, %v3765
      %v3767 = vrot.slane %v3697, 5
      %v3768 = vrot.slane %v3767, 4
      %v3769 = vrot.slane %v3046, 5
      %v3770 = vsel %vm1081, %v3768, %v3769
      %v3771 = vrot.slane %v3769, 4
      %v3772 = vrot.slane %v3047, 5
      %v3773 = vsel %vm1081, %v3771, %v3772
      %v3774 = vrot.slane %v3698, 5
      %v3775 = vrot.slane %v3774, 4
      %v3776 = vrot.slane %v3049, 5
      %v3777 = vsel %vm1081, %v3775, %v3776
      %v3778 = vrot.slane %v3776, 4
      %v3779 = vrot.slane %v3050, 5
      %v3780 = vsel %vm1081, %v3778, %v3779
      %v3781 = vrot.slane %v3699, 5
      %v3782 = vrot.slane %v3781, 4
      %v3783 = vrot.slane %v3052, 5
      %v3784 = vsel %vm1081, %v3782, %v3783
      %v3785 = vrot.slane %v3783, 4
      %v3786 = vrot.slane %v3053, 5
      %v3787 = vsel %vm1081, %v3785, %v3786
      %v3788 = vrot.slane %v3700, 5
      %v3789 = vrot.slane %v3788, 4
      %v3790 = vrot.slane %v3055, 5
      %v3791 = vsel %vm1081, %v3789, %v3790
      %v3792 = vrot.slane %v3790, 4
      %v3793 = vrot.slane %v3056, 5
      %v3794 = vsel %vm1081, %v3792, %v3793
      %v3795 = vrot.slane %v3701, 5
      %v3796 = vrot.slane %v3795, 4
      %v3797 = vrot.slane %v3058, 5
      %v3798 = vsel %vm1081, %v3796, %v3797
      %v3799 = vrot.slane %v3797, 4
      %v3800 = vrot.slane %v3059, 5
      %v3801 = vsel %vm1081, %v3799, %v3800
      %v3802 = vrot.slane %v3702, 5
      %v3803 = vrot.slane %v3802, 4
      %v3804 = vrot.slane %v3061, 5
      %v3805 = vsel %vm1081, %v3803, %v3804
      %v3806 = vrot.slane %v3804, 4
      %v3807 = vrot.slane %v3062, 5
      %v3808 = vsel %vm1081, %v3806, %v3807
      %v3809 = vrot.slane %v3703, 5
      %v3810 = vrot.slane %v3809, 4
      %v3811 = vrot.slane %v3064, 5
      %v3812 = vsel %vm1081, %v3810, %v3811
      %v3813 = vrot.slane %v3811, 4
      %v3814 = vrot.slane %v3065, 5
      %v3815 = vsel %vm1081, %v3813, %v3814
      %v3816 = vrot.slane %v3704, 5
      %v3817 = vrot.slane %v3816, 4
      %v3818 = vrot.slane %v3067, 5
      %v3819 = vsel %vm1081, %v3817, %v3818
      %v3820 = vrot.slane %v3818, 4
      %v3821 = vrot.slane %v3068, 5
      %v3822 = vsel %vm1081, %v3820, %v3821
      %v3823 = vrot.slane %v3705, 5
      %v3824 = vrot.slane %v3823, 4
      %v3825 = vrot.slane %v3070, 5
      %v3826 = vsel %vm1081, %v3824, %v3825
      %v3827 = vrot.slane %v3825, 4
      %v3828 = vrot.slane %v3071, 5
      %v3829 = vsel %vm1081, %v3827, %v3828
      %v3830 = vrot.slane %v3706, 5
      %v3831 = vrot.slane %v3830, 4
      %v3832 = vrot.slane %v3073, 5
      %v3833 = vsel %vm1081, %v3831, %v3832
      %v3834 = vrot.slane %v3832, 4
      %v3835 = vrot.slane %v3074, 5
      %v3836 = vsel %vm1081, %v3834, %v3835
      %v3837 = vrot.slane %v3707, 5
      %v3838 = vrot.slane %v3837, 4
      %v3839 = vrot.slane %v3076, 5
      %v3840 = vsel %vm1081, %v3838, %v3839
      %v3841 = vrot.slane %v3839, 4
      %v3842 = vrot.slane %v3077, 5
      %v3843 = vsel %vm1081, %v3841, %v3842
      %v3844 = vrot.slane %v3708, 5
      %v3845 = vrot.slane %v3844, 4
      %v3846 = vrot.slane %v3079, 5
      %v3847 = vsel %vm1081, %v3845, %v3846
      %v3848 = vrot.slane %v3846, 4
      %v3849 = vrot.slane %v3080, 5
      %v3850 = vsel %vm1081, %v3848, %v3849
      %v3851 = vrot.slane %v3709, 5
      %v3852 = vrot.slane %v3851, 4
      %v3853 = vrot.slane %v3082, 5
      %v3854 = vsel %vm1081, %v3852, %v3853
      %v3855 = vrot.slane %v3853, 4
      %v3856 = vrot.slane %v3083, 5
      %v3857 = vsel %vm1081, %v3855, %v3856
      %v3858 = vrot.slane %v3710, 5
      %v3859 = vrot.slane %v3858, 4
      %v3860 = vrot.slane %v3085, 5
      %v3861 = vsel %vm1081, %v3859, %v3860
      %v3862 = vrot.slane %v3860, 4
      %v3863 = vrot.slane %v3086, 5
      %v3864 = vsel %vm1081, %v3862, %v3863
      %v3865 = vrot.slane %v3711, 5
      %v3866 = vrot.slane %v3865, 4
      %v3867 = vrot.slane %v3088, 5
      %v3868 = vsel %vm1081, %v3866, %v3867
      %v3869 = vrot.slane %v3867, 4
      %v3870 = vrot.slane %v3089, 5
      %v3871 = vsel %vm1081, %v3869, %v3870
      %s3872 = scalar_lea.vmem %s1, 16
      %v3873 = vld [vmem:[%s3872] sm:$0x3]
      %v3874 = vunpack.c.l.b16 %v3763
      %v3875 = vunpack.c.l.b16 %v3766
      %v3876 = vunpack.c.l.b16 %v3770
      %v3877 = vunpack.c.l.b16 %v3773
      %v3878 = vunpack.c.l.b16 %v3777
      %v3879 = vunpack.c.l.b16 %v3780
      %v3880 = vunpack.c.l.b16 %v3784
      %v3881 = vunpack.c.l.b16 %v3787
      %v3882 = vunpack.c.l.b16 %v3791
      %v3883 = vunpack.c.l.b16 %v3794
      %v3884 = vunpack.c.l.b16 %v3798
      %v3885 = vunpack.c.l.b16 %v3801
      %v3886 = vunpack.c.l.b16 %v3805
      %v3887 = vunpack.c.l.b16 %v3808
      %v3888 = vunpack.c.l.b16 %v3812
      %v3889 = vunpack.c.l.b16 %v3815
      %v3890 = vunpack.c.l.b16 %v3819
      %v3891 = vunpack.c.l.b16 %v3822
      %v3892 = vunpack.c.l.b16 %v3826
      %v3893 = vunpack.c.l.b16 %v3829
      %v3894 = vunpack.c.l.b16 %v3833
      %v3895 = vunpack.c.l.b16 %v3836
      %v3896 = vunpack.c.l.b16 %v3840
      %v3897 = vunpack.c.l.b16 %v3843
      %v3898 = vunpack.c.l.b16 %v3847
      %v3899 = vunpack.c.l.b16 %v3850
      %v3900 = vunpack.c.l.b16 %v3854
      %v3901 = vunpack.c.l.b16 %v3857
      %v3902 = vunpack.c.l.b16 %v3861
      %v3903 = vunpack.c.l.b16 %v3864
      %v3904 = vunpack.c.l.b16 %v3868
      %v3905 = vunpack.c.l.b16 %v3871
      %v3906 = vpack.c.b16 %v3875, %v3874
      %v3907 = vpack.c.b16 %v3877, %v3876
      %v3908 = vpack.c.b16 %v3879, %v3878
      %v3909 = vpack.c.b16 %v3881, %v3880
      %v3910 = vpack.c.b16 %v3883, %v3882
      %v3911 = vpack.c.b16 %v3885, %v3884
      %v3912 = vpack.c.b16 %v3887, %v3886
      %v3913 = vpack.c.b16 %v3889, %v3888
      %v3914 = vpack.c.b16 %v3891, %v3890
      %v3915 = vpack.c.b16 %v3893, %v3892
      %v3916 = vpack.c.b16 %v3895, %v3894
      %v3917 = vpack.c.b16 %v3897, %v3896
      %v3918 = vpack.c.b16 %v3899, %v3898
      %v3919 = vpack.c.b16 %v3901, %v3900
      %v3920 = vpack.c.b16 %v3903, %v3902
      %v3921 = vpack.c.b16 %v3905, %v3904
      %v3923 = vsel %vm669, %v3906, 0
      %v3926 = vsel %vm669, %v3907, 0
      %v3929 = vsel %vm669, %v3908, 0
      %v3932 = vsel %vm669, %v3909, 0
      %v3935 = vsel %vm669, %v3910, 0
      %v3938 = vsel %vm669, %v3911, 0
      %v3941 = vsel %vm669, %v3912, 0
      %v3944 = vsel %vm669, %v3913, 0
      %v3947 = vsel %vm669, %v3914, 0
      %v3950 = vsel %vm669, %v3915, 0
      %v3953 = vsel %vm669, %v3916, 0
      %v3956 = vsel %vm669, %v3917, 0
      %v3959 = vsel %vm669, %v3918, 0
      %v3962 = vsel %vm669, %v3919, 0
      %v3965 = vsel %vm669, %v3920, 0
      %v3968 = vsel %vm669, %v3921, 0
      %v3971 = vsel %vm718, %v3873, 0
      %3973 = vmatpush.bf16.msra.mxu0 0
      %3974 = vmatpush.bf16.msra.mxu0 0
      %3975 = vmatpush.bf16.msra.mxu0 0
      %3976 = vmatpush.bf16.msra.mxu0 0
      %3977 = vmatpush.bf16.msra.mxu0 0
      %3978 = vmatpush.bf16.msra.mxu0 0
      %3979 = vmatpush.bf16.msra.mxu0 0
      %3980 = vmatpush.bf16.msra.mxu0 %v3971
      %3981 = vmatmul.bf16.gmra.mxu0 %v3923
      %v3982 = vpop.f32.mrf.mxu0
      %v3983 = vadd.f32 0.0, %v3982
      %v3984 = vpop.f32.mrf.mxu0
      %v3985 = vadd.f32 0.0, %v3984
      %3986 = vmatmul.bf16.gmra.mxu0 %v3926
      %v3987 = vpop.f32.mrf.mxu0
      %v3988 = vadd.f32 0.0, %v3987
      %v3989 = vpop.f32.mrf.mxu0
      %v3990 = vadd.f32 0.0, %v3989
      %3991 = vmatmul.bf16.gmra.mxu0 %v3929
      %v3992 = vpop.f32.mrf.mxu0
      %v3993 = vadd.f32 0.0, %v3992
      %v3994 = vpop.f32.mrf.mxu0
      %v3995 = vadd.f32 0.0, %v3994
      %3996 = vmatmul.bf16.gmra.mxu0 %v3932
      %v3997 = vpop.f32.mrf.mxu0
      %v3998 = vadd.f32 0.0, %v3997
      %v3999 = vpop.f32.mrf.mxu0
      %v4000 = vadd.f32 0.0, %v3999
      %4001 = vmatmul.bf16.gmra.mxu0 %v3935
      %v4002 = vpop.f32.mrf.mxu0
      %v4003 = vadd.f32 0.0, %v4002
      %v4004 = vpop.f32.mrf.mxu0
      %v4005 = vadd.f32 0.0, %v4004
      %4006 = vmatmul.bf16.gmra.mxu0 %v3938
      %v4007 = vpop.f32.mrf.mxu0
      %v4008 = vadd.f32 0.0, %v4007
      %v4009 = vpop.f32.mrf.mxu0
      %v4010 = vadd.f32 0.0, %v4009
      %4011 = vmatmul.bf16.gmra.mxu0 %v3941
      %v4012 = vpop.f32.mrf.mxu0
      %v4013 = vadd.f32 0.0, %v4012
      %v4014 = vpop.f32.mrf.mxu0
      %v4015 = vadd.f32 0.0, %v4014
      %4016 = vmatmul.bf16.gmra.mxu0 %v3944
      %v4017 = vpop.f32.mrf.mxu0
      %v4018 = vadd.f32 0.0, %v4017
      %v4019 = vpop.f32.mrf.mxu0
      %v4020 = vadd.f32 0.0, %v4019
      %4021 = vmatmul.bf16.gmra.mxu0 %v3947
      %v4022 = vpop.f32.mrf.mxu0
      %v4023 = vadd.f32 0.0, %v4022
      %v4024 = vpop.f32.mrf.mxu0
      %v4025 = vadd.f32 0.0, %v4024
      %4026 = vmatmul.bf16.gmra.mxu0 %v3950
      %v4027 = vpop.f32.mrf.mxu0
      %v4028 = vadd.f32 0.0, %v4027
      %v4029 = vpop.f32.mrf.mxu0
      %v4030 = vadd.f32 0.0, %v4029
      %4031 = vmatmul.bf16.gmra.mxu0 %v3953
      %v4032 = vpop.f32.mrf.mxu0
      %v4033 = vadd.f32 0.0, %v4032
      %v4034 = vpop.f32.mrf.mxu0
      %v4035 = vadd.f32 0.0, %v4034
      %4036 = vmatmul.bf16.gmra.mxu0 %v3956
      %v4037 = vpop.f32.mrf.mxu0
      %v4038 = vadd.f32 0.0, %v4037
      %v4039 = vpop.f32.mrf.mxu0
      %v4040 = vadd.f32 0.0, %v4039
      %4041 = vmatmul.bf16.gmra.mxu0 %v3959
      %v4042 = vpop.f32.mrf.mxu0
      %v4043 = vadd.f32 0.0, %v4042
      %v4044 = vpop.f32.mrf.mxu0
      %v4045 = vadd.f32 0.0, %v4044
      %4046 = vmatmul.bf16.gmra.mxu0 %v3962
      %v4047 = vpop.f32.mrf.mxu0
      %v4048 = vadd.f32 0.0, %v4047
      %v4049 = vpop.f32.mrf.mxu0
      %v4050 = vadd.f32 0.0, %v4049
      %4051 = vmatmul.bf16.gmra.mxu0 %v3965
      %v4052 = vpop.f32.mrf.mxu0
      %v4053 = vadd.f32 0.0, %v4052
      %v4054 = vpop.f32.mrf.mxu0
      %v4055 = vadd.f32 0.0, %v4054
      %4056 = vmatmul.bf16.gmra.mxu0 %v3968
      %v4057 = vpop.f32.mrf.mxu0
      %v4058 = vadd.f32 0.0, %v4057
      %v4059 = vpop.f32.mrf.mxu0
      %v4060 = vadd.f32 0.0, %v4059
      %4061 = vdwg.mxu0
      %v4062 = vadd.f32 %v3664, %v3983
      %v4063 = vadd.f32 %v3665, %v3985
      %v4064 = vadd.f32 %v3666, %v3988
      %v4065 = vadd.f32 %v3667, %v3990
      %v4066 = vadd.f32 %v3668, %v3993
      %v4067 = vadd.f32 %v3669, %v3995
      %v4068 = vadd.f32 %v3670, %v3998
      %v4069 = vadd.f32 %v3671, %v4000
      %v4070 = vadd.f32 %v3672, %v4003
      %v4071 = vadd.f32 %v3673, %v4005
      %v4072 = vadd.f32 %v3674, %v4008
      %v4073 = vadd.f32 %v3675, %v4010
      %v4074 = vadd.f32 %v3676, %v4013
      %v4075 = vadd.f32 %v3677, %v4015
      %v4076 = vadd.f32 %v3678, %v4018
      %v4077 = vadd.f32 %v3679, %v4020
      %v4078 = vadd.f32 %v3680, %v4023
      %v4079 = vadd.f32 %v3681, %v4025
      %v4080 = vadd.f32 %v3682, %v4028
      %v4081 = vadd.f32 %v3683, %v4030
      %v4082 = vadd.f32 %v3684, %v4033
      %v4083 = vadd.f32 %v3685, %v4035
      %v4084 = vadd.f32 %v3686, %v4038
      %v4085 = vadd.f32 %v3687, %v4040
      %v4086 = vadd.f32 %v3688, %v4043
      %v4087 = vadd.f32 %v3689, %v4045
      %v4088 = vadd.f32 %v3690, %v4048
      %v4089 = vadd.f32 %v3691, %v4050
      %v4090 = vadd.f32 %v3692, %v4053
      %v4091 = vadd.f32 %v3693, %v4055
      %v4092 = vadd.f32 %v3694, %v4058
      %v4093 = vadd.f32 %v3695, %v4060
      %v4094 = vsel %vm669, %v4062, 0.0
      %v4095 = vsel %vm669, %v4063, 0.0
      %v4096 = vadd.f32 %v4094, %v4095
      %v4097 = vsel %vm669, %v4064, 0.0
      %v4098 = vadd.f32 %v4096, %v4097
      %v4099 = vsel %vm669, %v4065, 0.0
      %v4100 = vadd.f32 %v4098, %v4099
      %v4101 = vsel %vm669, %v4066, 0.0
      %v4102 = vadd.f32 %v4100, %v4101
      %v4103 = vsel %vm669, %v4067, 0.0
      %v4104 = vadd.f32 %v4102, %v4103
      %v4105 = vsel %vm669, %v4068, 0.0
      %v4106 = vadd.f32 %v4104, %v4105
      %v4107 = vsel %vm669, %v4069, 0.0
      %v4108 = vadd.f32 %v4106, %v4107
      %v4109 = vsel %vm669, %v4070, 0.0
      %v4110 = vadd.f32 %v4108, %v4109
      %v4111 = vsel %vm669, %v4071, 0.0
      %v4112 = vadd.f32 %v4110, %v4111
      %v4113 = vsel %vm669, %v4072, 0.0
      %v4114 = vadd.f32 %v4112, %v4113
      %v4115 = vsel %vm669, %v4073, 0.0
      %v4116 = vadd.f32 %v4114, %v4115
      %v4117 = vsel %vm669, %v4074, 0.0
      %v4118 = vadd.f32 %v4116, %v4117
      %v4119 = vsel %vm669, %v4075, 0.0
      %v4120 = vadd.f32 %v4118, %v4119
      %v4121 = vsel %vm669, %v4076, 0.0
      %v4122 = vadd.f32 %v4120, %v4121
      %v4123 = vsel %vm669, %v4077, 0.0
      %v4124 = vadd.f32 %v4122, %v4123
      %v4125 = vsel %vm669, %v4078, 0.0
      %v4126 = vadd.f32 %v4124, %v4125
      %v4127 = vsel %vm669, %v4079, 0.0
      %v4128 = vadd.f32 %v4126, %v4127
      %v4129 = vsel %vm669, %v4080, 0.0
      %v4130 = vadd.f32 %v4128, %v4129
      %v4131 = vsel %vm669, %v4081, 0.0
      %v4132 = vadd.f32 %v4130, %v4131
      %v4133 = vsel %vm669, %v4082, 0.0
      %v4134 = vadd.f32 %v4132, %v4133
      %v4135 = vsel %vm669, %v4083, 0.0
      %v4136 = vadd.f32 %v4134, %v4135
      %v4137 = vsel %vm669, %v4084, 0.0
      %v4138 = vadd.f32 %v4136, %v4137
      %v4139 = vsel %vm669, %v4085, 0.0
      %v4140 = vadd.f32 %v4138, %v4139
      %v4141 = vsel %vm669, %v4086, 0.0
      %v4142 = vadd.f32 %v4140, %v4141
      %v4143 = vsel %vm669, %v4087, 0.0
      %v4144 = vadd.f32 %v4142, %v4143
      %v4145 = vsel %vm669, %v4088, 0.0
      %v4146 = vadd.f32 %v4144, %v4145
      %v4147 = vsel %vm669, %v4089, 0.0
      %v4148 = vadd.f32 %v4146, %v4147
      %v4149 = vsel %vm669, %v4090, 0.0
      %v4150 = vadd.f32 %v4148, %v4149
      %v4151 = vsel %vm669, %v4091, 0.0
      %v4152 = vadd.f32 %v4150, %v4151
      %v4153 = vsel %vm669, %v4092, 0.0
      %v4154 = vadd.f32 %v4152, %v4153
      %v4155 = vsel %vm669, %v4093, 0.0
      %v4156 = vadd.f32 %v4154, %v4155
      %v4157 = vrot.slane %v4156, 4
      %v4158 = vadd.f32 %v4156, %v4157
      %v4159 = vrot.slane %v4158, 2
      %v4160 = vadd.f32 %v4158, %v4159
      %v4161 = vrot.slane %v4160, 1
      %v4162 = vadd.f32 %v4160, %v4161
      %vm4163 = vcmask 24576
      %4164 = vst.msk [vmem:[%s181] sm:$0x1] %vm4163, %v4162
      %v4165 = vmul.f32 %v4062, %v4062
      %v4166 = vmul.f32 %v4063, %v4063
      %v4167 = vmul.f32 %v4064, %v4064
      %v4168 = vmul.f32 %v4065, %v4065
      %v4169 = vmul.f32 %v4066, %v4066
      %v4170 = vmul.f32 %v4067, %v4067
      %v4171 = vmul.f32 %v4068, %v4068
      %v4172 = vmul.f32 %v4069, %v4069
      %v4173 = vmul.f32 %v4070, %v4070
      %v4174 = vmul.f32 %v4071, %v4071
      %v4175 = vmul.f32 %v4072, %v4072
      %v4176 = vmul.f32 %v4073, %v4073
      %v4177 = vmul.f32 %v4074, %v4074
      %v4178 = vmul.f32 %v4075, %v4075
      %v4179 = vmul.f32 %v4076, %v4076
      %v4180 = vmul.f32 %v4077, %v4077
      %v4181 = vmul.f32 %v4078, %v4078
      %v4182 = vmul.f32 %v4079, %v4079
      %v4183 = vmul.f32 %v4080, %v4080
      %v4184 = vmul.f32 %v4081, %v4081
      %v4185 = vmul.f32 %v4082, %v4082
      %v4186 = vmul.f32 %v4083, %v4083
      %v4187 = vmul.f32 %v4084, %v4084
      %v4188 = vmul.f32 %v4085, %v4085
      %v4189 = vmul.f32 %v4086, %v4086
      %v4190 = vmul.f32 %v4087, %v4087
      %v4191 = vmul.f32 %v4088, %v4088
      %v4192 = vmul.f32 %v4089, %v4089
      %v4193 = vmul.f32 %v4090, %v4090
      %v4194 = vmul.f32 %v4091, %v4091
      %v4195 = vmul.f32 %v4092, %v4092
      %v4196 = vmul.f32 %v4093, %v4093
      %v4197 = vsel %vm669, %v4165, 0.0
      %v4198 = vsel %vm669, %v4166, 0.0
      %v4199 = vadd.f32 %v4197, %v4198
      %v4200 = vsel %vm669, %v4167, 0.0
      %v4201 = vadd.f32 %v4199, %v4200
      %v4202 = vsel %vm669, %v4168, 0.0
      %v4203 = vadd.f32 %v4201, %v4202
      %v4204 = vsel %vm669, %v4169, 0.0
      %v4205 = vadd.f32 %v4203, %v4204
      %v4206 = vsel %vm669, %v4170, 0.0
      %v4207 = vadd.f32 %v4205, %v4206
      %v4208 = vsel %vm669, %v4171, 0.0
      %v4209 = vadd.f32 %v4207, %v4208
      %v4210 = vsel %vm669, %v4172, 0.0
      %v4211 = vadd.f32 %v4209, %v4210
      %v4212 = vsel %vm669, %v4173, 0.0
      %v4213 = vadd.f32 %v4211, %v4212
      %v4214 = vsel %vm669, %v4174, 0.0
      %v4215 = vadd.f32 %v4213, %v4214
      %v4216 = vsel %vm669, %v4175, 0.0
      %v4217 = vadd.f32 %v4215, %v4216
      %v4218 = vsel %vm669, %v4176, 0.0
      %v4219 = vadd.f32 %v4217, %v4218
      %v4220 = vsel %vm669, %v4177, 0.0
      %v4221 = vadd.f32 %v4219, %v4220
      %v4222 = vsel %vm669, %v4178, 0.0
      %v4223 = vadd.f32 %v4221, %v4222
      %v4224 = vsel %vm669, %v4179, 0.0
      %v4225 = vadd.f32 %v4223, %v4224
      %v4226 = vsel %vm669, %v4180, 0.0
      %v4227 = vadd.f32 %v4225, %v4226
      %v4228 = vsel %vm669, %v4181, 0.0
      %v4229 = vadd.f32 %v4227, %v4228
      %v4230 = vsel %vm669, %v4182, 0.0
      %v4231 = vadd.f32 %v4229, %v4230
      %v4232 = vsel %vm669, %v4183, 0.0
      %v4233 = vadd.f32 %v4231, %v4232
      %v4234 = vsel %vm669, %v4184, 0.0
      %v4235 = vadd.f32 %v4233, %v4234
      %v4236 = vsel %vm669, %v4185, 0.0
      %v4237 = vadd.f32 %v4235, %v4236
      %v4238 = vsel %vm669, %v4186, 0.0
      %v4239 = vadd.f32 %v4237, %v4238
      %v4240 = vsel %vm669, %v4187, 0.0
      %v4241 = vadd.f32 %v4239, %v4240
      %v4242 = vsel %vm669, %v4188, 0.0
      %v4243 = vadd.f32 %v4241, %v4242
      %v4244 = vsel %vm669, %v4189, 0.0
      %v4245 = vadd.f32 %v4243, %v4244
      %v4246 = vsel %vm669, %v4190, 0.0
      %v4247 = vadd.f32 %v4245, %v4246
      %v4248 = vsel %vm669, %v4191, 0.0
      %v4249 = vadd.f32 %v4247, %v4248
      %v4250 = vsel %vm669, %v4192, 0.0
      %v4251 = vadd.f32 %v4249, %v4250
      %v4252 = vsel %vm669, %v4193, 0.0
      %v4253 = vadd.f32 %v4251, %v4252
      %v4254 = vsel %vm669, %v4194, 0.0
      %v4255 = vadd.f32 %v4253, %v4254
      %v4256 = vsel %vm669, %v4195, 0.0
      %v4257 = vadd.f32 %v4255, %v4256
      %v4258 = vsel %vm669, %v4196, 0.0
      %v4259 = vadd.f32 %v4257, %v4258
      %v4260 = vrot.slane %v4259, 4
      %v4261 = vadd.f32 %v4259, %v4260
      %v4262 = vrot.slane %v4261, 2
      %v4263 = vadd.f32 %v4261, %v4262
      %v4264 = vrot.slane %v4263, 1
      %v4265 = vadd.f32 %v4263, %v4264
      %4266 = vst.msk [vmem:[%s181 + $0x1] sm:$0x1] %vm4163, %v4265
      %v4267 = vpack.c.bf16 %v4062, %v4062
      %v4268 = vpack.c.bf16 %v4063, %v4063
      %v4269 = vpack.c.bf16 %v4064, %v4064
      %v4270 = vpack.c.bf16 %v4065, %v4065
      %v4271 = vpack.c.bf16 %v4066, %v4066
      %v4272 = vpack.c.bf16 %v4067, %v4067
      %v4273 = vpack.c.bf16 %v4068, %v4068
      %v4274 = vpack.c.bf16 %v4069, %v4069
      %v4275 = vpack.c.bf16 %v4070, %v4070
      %v4276 = vpack.c.bf16 %v4071, %v4071
      %v4277 = vpack.c.bf16 %v4072, %v4072
      %v4278 = vpack.c.bf16 %v4073, %v4073
      %v4279 = vpack.c.bf16 %v4074, %v4074
      %v4280 = vpack.c.bf16 %v4075, %v4075
      %v4281 = vpack.c.bf16 %v4076, %v4076
      %v4282 = vpack.c.bf16 %v4077, %v4077
      %v4283 = vpack.c.bf16 %v4078, %v4078
      %v4284 = vpack.c.bf16 %v4079, %v4079
      %v4285 = vpack.c.bf16 %v4080, %v4080
      %v4286 = vpack.c.bf16 %v4081, %v4081
      %v4287 = vpack.c.bf16 %v4082, %v4082
      %v4288 = vpack.c.bf16 %v4083, %v4083
      %v4289 = vpack.c.bf16 %v4084, %v4084
      %v4290 = vpack.c.bf16 %v4085, %v4085
      %v4291 = vpack.c.bf16 %v4086, %v4086
      %v4292 = vpack.c.bf16 %v4087, %v4087
      %v4293 = vpack.c.bf16 %v4088, %v4088
      %v4294 = vpack.c.bf16 %v4089, %v4089
      %v4295 = vpack.c.bf16 %v4090, %v4090
      %v4296 = vpack.c.bf16 %v4091, %v4091
      %v4297 = vpack.c.bf16 %v4092, %v4092
      %v4298 = vpack.c.bf16 %v4093, %v4093
      %vm4299 = vcmask 27648
      %4300 = vst.msk [vmem:[%s177] sm:$0xf] %vm4299, %v4267
      %4301 = vst.msk [vmem:[%s177 + $0x4] sm:$0xf] %vm4299, %v4268
      %4302 = vst.msk [vmem:[%s177 + $0x8] sm:$0xf] %vm4299, %v4269
      %4303 = vst.msk [vmem:[%s177 + $0xc] sm:$0xf] %vm4299, %v4270
      %4304 = vst.msk [vmem:[%s177 + $0x10] sm:$0xf] %vm4299, %v4271
      %4305 = vst.msk [vmem:[%s177 + $0x14] sm:$0xf] %vm4299, %v4272
      %4306 = vst.msk [vmem:[%s177 + $0x18] sm:$0xf] %vm4299, %v4273
      %4307 = vst.msk [vmem:[%s177 + $0x1c] sm:$0xf] %vm4299, %v4274
      %4308 = vst.msk [vmem:[%s177 + $0x20] sm:$0xf] %vm4299, %v4275
      %4309 = vst.msk [vmem:[%s177 + $0x24] sm:$0xf] %vm4299, %v4276
      %4310 = vst.msk [vmem:[%s177 + $0x28] sm:$0xf] %vm4299, %v4277
      %4311 = vst.msk [vmem:[%s177 + $0x2c] sm:$0xf] %vm4299, %v4278
      %4312 = vst.msk [vmem:[%s177 + $0x30] sm:$0xf] %vm4299, %v4279
      %4313 = vst.msk [vmem:[%s177 + $0x34] sm:$0xf] %vm4299, %v4280
      %4314 = vst.msk [vmem:[%s177 + $0x38] sm:$0xf] %vm4299, %v4281
      %4315 = vst.msk [vmem:[%s177 + $0x3c] sm:$0xf] %vm4299, %v4282
      %4316 = vst.msk [vmem:[%s177 + $0x40] sm:$0xf] %vm4299, %v4283
      %4317 = vst.msk [vmem:[%s177 + $0x44] sm:$0xf] %vm4299, %v4284
      %4318 = vst.msk [vmem:[%s177 + $0x48] sm:$0xf] %vm4299, %v4285
      %4319 = vst.msk [vmem:[%s177 + $0x4c] sm:$0xf] %vm4299, %v4286
      %4320 = vst.msk [vmem:[%s177 + $0x50] sm:$0xf] %vm4299, %v4287
      %4321 = vst.msk [vmem:[%s177 + $0x54] sm:$0xf] %vm4299, %v4288
      %4322 = vst.msk [vmem:[%s177 + $0x58] sm:$0xf] %vm4299, %v4289
      %4323 = vst.msk [vmem:[%s177 + $0x5c] sm:$0xf] %vm4299, %v4290
      %4324 = vst.msk [vmem:[%s177 + $0x60] sm:$0xf] %vm4299, %v4291
      %4325 = vst.msk [vmem:[%s177 + $0x64] sm:$0xf] %vm4299, %v4292
      %4326 = vst.msk [vmem:[%s177 + $0x68] sm:$0xf] %vm4299, %v4293
      %4327 = vst.msk [vmem:[%s177 + $0x6c] sm:$0xf] %vm4299, %v4294
      %4328 = vst.msk [vmem:[%s177 + $0x70] sm:$0xf] %vm4299, %v4295
      %4329 = vst.msk [vmem:[%s177 + $0x74] sm:$0xf] %vm4299, %v4296
      %4330 = vst.msk [vmem:[%s177 + $0x78] sm:$0xf] %vm4299, %v4297
      %4331 = vst.msk [vmem:[%s177 + $0x7c] sm:$0xf] %vm4299, %v4298
      %p4332 = scmp.lt.s32.totalorder %s15, 1
      %s4333 = scalar_select %p4332, %s15, 1
      %s4334 = smul.addr %s4333, 32
      %s4335 = smul.addr %s4334, 4
      %s4336 = scalar_lea.vmem %s2, %s4335
      %p4337 = scmp.lt.s32.totalorder %s15, 1
      %s4338 = scalar_select %p4337, %s15, 1
      %s4339 = smul.addr %s4338, 2
      %s4340 = scalar_lea.vmem %s3, %s4339
      // Predicated region
      $region29: #{resnet_basic_block.3} parent=27 // pred_check
        %p4341 = pneg %p80
      $region30: #{resnet_basic_block.3} parent=27 // pred_check_branch
        %4343 = sbr.rel (%p4341) target = $region32
      $region31: #{resnet_basic_block.3} parent=27 // pred_region
        _
      $region32: #{resnet_basic_block.3} parent=27 // pred_fallthru
        _
      // Predicated region
      $region33: #{resnet_basic_block.3} parent=27 // pred_check
        %p4344 = pneg %p106
      $region34: #{resnet_basic_block.3} parent=27 // pred_check_branch
        %4346 = sbr.rel (%p4344) target = $region36
      $region35: #{resnet_basic_block.3} parent=27 // pred_region
        _
      $region36: #{resnet_basic_block.3} parent=27 // pred_fallthru
        _
    $region28: #{resnet_basic_block.3} parent=5 // pred_fallthru
      _
    %p4347 = scmp.le.s32.totalorder 2, %s10
    // Predicated region
    $region37: #{resnet_basic_block.3} parent=5 // pred_check
      %p4348 = pneg %p4347
    $region38: #{resnet_basic_block.3} parent=5 // pred_check_branch
      %4350 = sbr.rel (%p4348) target = $region40
    $region39: #{resnet_basic_block.3} parent=5 // pred_region
      %s4351 = ssub.s32 %s10, 2
      // Predicated region
      $region41: #{resnet_basic_block.3} parent=39 // pred_check
        %p4352 = pneg %p86
      $region42: #{resnet_basic_block.3} parent=39 // pred_check_branch
        %4354 = sbr.rel (%p4352) target = $region44
      $region43: #{resnet_basic_block.3} parent=39 // pred_region
        %p4355 = scmp.lt.s32.totalorder %s16, 1
        %s4356 = scalar_select %p4355, %s16, 1
        %s4357 = smul.addr %s4356, 32
        %s4358 = smul.addr %s4357, 4
        %s4359 = scalar_lea.vmem %s2, %s4358
      $region44: #{resnet_basic_block.3} parent=39 // pred_fallthru
        _
      // Predicated region
      $region45: #{resnet_basic_block.3} parent=39 // pred_check
        %p4360 = pneg %p112
      $region46: #{resnet_basic_block.3} parent=39 // pred_check_branch
        %4362 = sbr.rel (%p4360) target = $region48
      $region47: #{resnet_basic_block.3} parent=39 // pred_region
        %p4363 = scmp.lt.s32.totalorder %s16, 1
        %s4364 = scalar_select %p4363, %s16, 1
        %s4365 = smul.addr %s4364, 2
        %s4366 = scalar_lea.vmem %s3, %s4365
      $region48: #{resnet_basic_block.3} parent=39 // pred_fallthru
        _
    $region40: #{resnet_basic_block.3} parent=5 // pred_fallthru
      _
  $region6: #{resnet_basic_block.3} parent=0 // loop_footer
    %s14 = sadd.s32 1, %s10
  $region7: #{resnet_basic_block.3} parent=0 // loop_footer_branch
    %9 = sbr.rel target = $region3
  $region8: #{resnet_basic_block.3} parent=0 // loop_exit
    _

// kernel: resnet_basic_block.4
$region0: #{resnet_basic_block.4}
  #allocation0 [shape = 'u32[]', space=smem, size = 0x4, offset = 0x4, fixed_abs, tag = 'smem constant byte address 0x4 - core index']
  #allocation1 [shape = 'u32[72,128]{1,0:T(1,128)}', space=vmem, size = 0x9000, scoped, tag = 'internal scratch']
  #allocation2 [shape = 'bf16[1,18,18,4]{3,2,1,0:T(8,128)(2,1)}', space=vmem, size = 0x1b000, scoped, tag = 'scratch operand']
  %s0 = inlined_call_operand.vmem [shape: bf16[2,16,16,4], index: 0, kind: input, shape index: {}]
  %s1 = inlined_call_operand.vmem [shape: f32[1,4], index: 1, kind: input, shape index: {}]
  %s2 = inlined_call_operand.vmem [shape: f32[1,4], index: 2, kind: input, shape index: {}]
  %s3 = inlined_call_operand.vmem [shape: bf16[9,4,4], index: 3, kind: input, shape index: {}]
  %s4 = inlined_call_operand.vmem [shape: bf16[2,256,4], index: 4, kind: output, shape index: {0}]
  %s5 = inlined_call_operand.vmem [shape: f32[2,2,4], index: 5, kind: output, shape index: {1}]
  %6 = xla_tuple %s4, %s5
  %s7 = sld [smem:[#allocation0]]
  $region57: #{resnet_basic_block.4} parent=0
    _
  %s9 = ssub.s32 1, %s7
  %s10 = scalar_select 0, %s9, %s7
  loop: start=0, step=1, limit=4
  $region2: #{resnet_basic_block.4} parent=0 // loop_pre_header
    _
  $region3: #{resnet_basic_block.4} parent=0 // loop_header
    %s12 = sphi 0, %s16
    %p13 = scmp.ge.s32.totalorder %s12, 4
    %s22 = sphi 0, %s24
    %s25 = sphi 0, %s22
    %s26 = sphi 0, %s25
    %s42 = sphi 0, %s26
    %s46 = sphi 0, %s46
    %s48 = sphi 0, %s46
    %s49 = sphi 0, %s48
    %s63 = sphi 0, %s49
    %s67 = sphi 0, %s67
    %s69 = sphi 0, %s67
    %s70 = sphi 0, %s69
    %s84 = sphi 0, %s70
    %s88 = sphi 0, %s88
    %s90 = sphi 0, %s88
    %s91 = sphi 0, %s90
    %s105 = sphi 0, %s91
    %s111 = sphi 0, %s113
    %s114 = sphi 0, %s111
    %s115 = sphi 0, %s114
    %s131 = sphi 0, %s115
    %s137 = sphi 0, %s139
    %s140 = sphi 0, %s137
    %s141 = sphi 0, %s140
    %s157 = sphi 0, %s141
  $region4: #{resnet_basic_block.4} parent=0 // loop_header_branch
    %15 = sbr.rel (%p13) target = $region8
  $region5: #{resnet_basic_block.4} parent=0 // loop_body
    %s17 = ssub.s32 %s12, 1
    %s18 = ssub.s32 %s12, 2
    %s19 = sadd.s32 %s12, 1
    %s20 = ssub.s32 %s12, %s19
    %p21 = scmp.eq.s32.totalorder %s20, 0
    %s23 = sadd.s32 %s22, 1
    %s24 = scalar_select %p21, %s22, %s23
    %p27 = pneg %p21
    %p28 = scmp.eq.s32.totalorder %s12, 1
    %p29 = por %p27, %p28
    %p30 = scmp.ne.s32.totalorder %s22, %s25
    %p31 = scmp.eq.s32.totalorder %s12, 0
    %p32 = por %p30, %p31
    %p33 = scmp.ne.s32.totalorder %s22, %s25
    %p34 = scmp.eq.s32.totalorder %s17, 1
    %p35 = por %p33, %p34
    %p36 = scmp.ne.s32.totalorder %s25, %s26
    %p37 = scmp.eq.s32.totalorder %s17, 0
    %p38 = por %p36, %p37
    %p39 = scmp.ne.s32.totalorder %s25, %s26
    %p40 = scmp.eq.s32.totalorder %s18, 1
    %p41 = por %p39, %p40
    %p43 = scmp.ne.s32.totalorder %s26, %s42
    %p44 = scmp.eq.s32.totalorder %s18, 0
    %p45 = por %p43, %p44
    %s47 = sadd.s32 %s46, 1
    %p50 = scmp.eq.s32.totalorder %s12, 1
    %p51 = scmp.ne.s32.totalorder %s46, %s48
    %p52 = scmp.eq.s32.totalorder %s12, 0
    %p53 = por %p51, %p52
    %p54 = scmp.ne.s32.totalorder %s46, %s48
    %p55 = scmp.eq.s32.totalorder %s17, 1
    %p56 = por %p54, %p55
    %p57 = scmp.ne.s32.totalorder %s48, %s49
    %p58 = scmp.eq.s32.totalorder %s17, 0
    %p59 = por %p57, %p58
    %p60 = scmp.ne.s32.totalorder %s48, %s49
    %p61 = scmp.eq.s32.totalorder %s18, 1
    %p62 = por %p60, %p61
    %p64 = scmp.ne.s32.totalorder %s49, %s63
    %p65 = scmp.eq.s32.totalorder %s18, 0
    %p66 = por %p64, %p65
    %s68 = sadd.s32 %s67, 1
    %p71 = scmp.eq.s32.totalorder %s12, 1
    %p72 = scmp.ne.s32.totalorder %s67, %s69
    %p73 = scmp.eq.s32.totalorder %s12, 0
    %p74 = por %p72, %p73
    %p75 = scmp.ne.s32.totalorder %s67, %s69
    %p76 = scmp.eq.s32.totalorder %s17, 1
    %p77 = por %p75, %p76
    %p78 = scmp.ne.s32.totalorder %s69, %s70
    %p79 = scmp.eq.s32.totalorder %s17, 0
    %p80 = por %p78, %p79
    %p81 = scmp.ne.s32.totalorder %s69, %s70
    %p82 = scmp.eq.s32.totalorder %s18, 1
    %p83 = por %p81, %p82
    %p85 = scmp.ne.s32.totalorder %s70, %s84
    %p86 = scmp.eq.s32.totalorder %s18, 0
    %p87 = por %p85, %p86
    %s89 = sadd.s32 %s88, 1
    %p92 = scmp.eq.s32.totalorder %s12, 1
    %p93 = scmp.ne.s32.totalorder %s88, %s90
    %p94 = scmp.eq.s32.totalorder %s12, 0
    %p95 = por %p93, %p94
    %p96 = scmp.ne.s32.totalorder %s88, %s90
    %p97 = scmp.eq.s32.totalorder %s17, 1
    %p98 = por %p96, %p97
    %p99 = scmp.ne.s32.totalorder %s90, %s91
    %p100 = scmp.eq.s32.totalorder %s17, 0
    %p101 = por %p99, %p100
    %p102 = scmp.ne.s32.totalorder %s90, %s91
    %p103 = scmp.eq.s32.totalorder %s18, 1
    %p104 = por %p102, %p103
    %p106 = scmp.ne.s32.totalorder %s91, %s105
    %p107 = scmp.eq.s32.totalorder %s18, 0
    %p108 = por %p106, %p107
    %s109 = ssub.s32 %s12, %s19
    %p110 = scmp.eq.s32.totalorder %s109, 0
    %s112 = sadd.s32 %s111, 1
    %s113 = scalar_select %p110, %s111, %s112
    %p116 = pneg %p110
    %p117 = scmp.eq.s32.totalorder %s12, 1
    %p118 = por %p116, %p117
    %p119 = scmp.ne.s32.totalorder %s111, %s114
    %p120 = scmp.eq.s32.totalorder %s12, 0
    %p121 = por %p119, %p120
    %p122 = scmp.ne.s32.totalorder %s111, %s114
    %p123 = scmp.eq.s32.totalorder %s17, 1
    %p124 = por %p122, %p123
    %p125 = scmp.ne.s32.totalorder %s114, %s115
    %p126 = scmp.eq.s32.totalorder %s17, 0
    %p127 = por %p125, %p126
    %p128 = scmp.ne.s32.totalorder %s114, %s115
    %p129 = scmp.eq.s32.totalorder %s18, 1
    %p130 = por %p128, %p129
    %p132 = scmp.ne.s32.totalorder %s115, %s131
    %p133 = scmp.eq.s32.totalorder %s18, 0
    %p134 = por %p132, %p133
    %s135 = ssub.s32 %s12, %s19
    %p136 = scmp.eq.s32.totalorder %s135, 0
    %s138 = sadd.s32 %s137, 1
    %s139 = scalar_select %p136, %s137, %s138
    %p142 = pneg %p136
    %p143 = scmp.eq.s32.totalorder %s12, 1
    %p144 = por %p142, %p143
    %p145 = scmp.ne.s32.totalorder %s137, %s140
    %p146 = scmp.eq.s32.totalorder %s12, 0
    %p147 = por %p145, %p146
    %p148 = scmp.ne.s32.totalorder %s137, %s140
    %p149 = scmp.eq.s32.totalorder %s17, 1
    %p150 = por %p148, %p149
    %p151 = scmp.ne.s32.totalorder %s140, %s141
    %p152 = scmp.eq.s32.totalorder %s17, 0
    %p153 = por %p151, %p152
    %p154 = scmp.ne.s32.totalorder %s140, %s141
    %p155 = scmp.eq.s32.totalorder %s18, 1
    %p156 = por %p154, %p155
    %p158 = scmp.ne.s32.totalorder %s141, %s157
    %p159 = scmp.eq.s32.totalorder %s18, 0
    %p160 = por %p158, %p159
    %p161 = scmp.le.s32.totalorder 1, %s12
    %p162 = scmp.lt.s32.totalorder %s12, 3
    %p163 = pnand %p161, %p162
    %p164 = pneg %p163
    // Predicated region
    $region9: #{resnet_basic_block.4} parent=5 // pred_check
      _
    $region10: #{resnet_basic_block.4} parent=5 // pred_check_branch
      %166 = sbr.rel (%p163) target = $region12
    $region11: #{resnet_basic_block.4} parent=5 // pred_region
      %s167 = ssub.s32 %s12, 1
      // Predicated region
      $region13: #{resnet_basic_block.4} parent=11 // pred_check
        %p168 = pneg %p59
      $region14: #{resnet_basic_block.4} parent=11 // pred_check_branch
        %170 = sbr.rel (%p168) target = $region16
      $region15: #{resnet_basic_block.4} parent=11 // pred_region
        _
      $region16: #{resnet_basic_block.4} parent=11 // pred_fallthru
        _
      // Predicated region
      $region17: #{resnet_basic_block.4} parent=11 // pred_check
        %p171 = pneg %p80
      $region18: #{resnet_basic_block.4} parent=11 // pred_check_branch
        %173 = sbr.rel (%p171) target = $region20
      $region19: #{resnet_basic_block.4} parent=11 // pred_region
        _
      $region20: #{resnet_basic_block.4} parent=11 // pred_fallthru
        _
      // Predicated region
      $region21: #{resnet_basic_block.4} parent=11 // pred_check
        %p174 = pneg %p101
      $region22: #{resnet_basic_block.4} parent=11 // pred_check_branch
        %176 = sbr.rel (%p174) target = $region24
      $region23: #{resnet_basic_block.4} parent=11 // pred_region
        _
      $region24: #{resnet_basic_block.4} parent=11 // pred_fallthru
        _
    $region12: #{resnet_basic_block.4} parent=5 // pred_fallthru
      _
    %p177 = scmp.lt.s32.totalorder %s12, 2
    // Predicated region
    $region25: #{resnet_basic_block.4} parent=5 // pred_check
      %p178 = pneg %p177
    $region26: #{resnet_basic_block.4} parent=5 // pred_check_branch
      %180 = sbr.rel (%p178) target = $region28
    $region27: #{resnet_basic_block.4} parent=5 // pred_region
      // Predicated region
      $region29: #{resnet_basic_block.4} parent=27 // pred_check
        %p181 = pneg %p32
      $region30: #{resnet_basic_block.4} parent=27 // pred_check_branch
        %183 = sbr.rel (%p181) target = $region32
      $region31: #{resnet_basic_block.4} parent=27 // pred_region
        %p184 = scmp.lt.s32.totalorder %s12, 1
        %s185 = scalar_select %p184, %s12, 1
        %s186 = smul.addr %s185, 32
        %s187 = smul.addr %s186, 4
        %s188 = scalar_lea.vmem %s0, %s187
      $region32: #{resnet_basic_block.4} parent=27 // pred_fallthru
        _
    $region28: #{resnet_basic_block.4} parent=5 // pred_fallthru
      _
    %p189 = scmp.le.s32.totalorder 1, %s12
    %p190 = scmp.lt.s32.totalorder %s12, 3
    %p191 = pnand %p189, %p190
    %p192 = pneg %p191
    // Predicated region
    $region33: #{resnet_basic_block.4} parent=5 // pred_check
      _
    $region34: #{resnet_basic_block.4} parent=5 // pred_check_branch
      %194 = sbr.rel (%p191) target = $region36
    $region35: #{resnet_basic_block.4} parent=5 // pred_region
      %s195 = ssub.s32 %s12, 1
      %p196 = scmp.lt.s32.totalorder %s17, 1
      %s197 = scalar_select %p196, %s17, 1
      %s198 = smul.addr %s197, 32
      %s199 = smul.addr %s198, 4
      %s200 = scalar_lea.vmem %s0, %s199
      %p201 = pneg %p38
      %p202 = pneg %p35
      %p203 = pneg %p59
      %p204 = pneg %p56
      %p205 = pneg %p80
      %p206 = pneg %p77
      %p207 = pneg %p101
      %p208 = pneg %p98
      %p209 = pneg %p127
      %p210 = pneg %p124
      %p211 = scmp.lt.s32.totalorder %s17, 1
      %s212 = scalar_select %p211, %s17, 1
      %s213 = smul.addr %s212, 32
      %s214 = smul.addr %s213, 4
      %s215 = scalar_lea.vmem %s4, %s214
      %p216 = pneg %p153
      %p217 = pneg %p150
      %p218 = scmp.lt.s32.totalorder %s17, 1
      %s219 = scalar_select %p218, %s17, 1
      %s220 = smul.addr %s219, 2
      %s221 = scalar_lea.vmem %s5, %s220
      %p222 = scmp.lt.s32.totalorder %s17, 1
      %s223 = scalar_select %p222, %s17, 1
      %s224 = smul.addr %s223, 32
      %s225 = smul.addr %s224, 4
      %s226 = scalar_lea.vmem %s0, %s225
      %p227 = scmp.lt.s32.totalorder %s17, 1
      %s228 = scalar_select %p227, %s17, 1
      %s229 = smul.addr %s228, 32
      %s230 = smul.addr %s229, 4
      %s231 = scalar_lea.vmem %s4, %s230
      %p232 = scmp.lt.s32.totalorder %s17, 1
      %s233 = scalar_select %p232, %s17, 1
      %s234 = smul.addr %s233, 2
      %s235 = scalar_lea.vmem %s5, %s234
      %v237 = vld [vmem:[%s1] sm:$0x1]
      %v238 = vld [vmem:[%s2] sm:$0x1]
      %v239 = vld [vmem:[%s226] sm:$0xf]
      %v240 = vld [vmem:[%s226 + $0x4] sm:$0xf]
      %v241 = vld [vmem:[%s226 + $0x8] sm:$0xf]
      %v242 = vld [vmem:[%s226 + $0xc] sm:$0xf]
      %v243 = vld [vmem:[%s226 + $0x10] sm:$0xf]
      %v244 = vld [vmem:[%s226 + $0x14] sm:$0xf]
      %v245 = vld [vmem:[%s226 + $0x18] sm:$0xf]
      %v246 = vld [vmem:[%s226 + $0x1c] sm:$0xf]
      %v247 = vld [vmem:[%s226 + $0x20] sm:$0xf]
      %v248 = vld [vmem:[%s226 + $0x24] sm:$0xf]
      %v249 = vld [vmem:[%s226 + $0x28] sm:$0xf]
      %v250 = vld [vmem:[%s226 + $0x2c] sm:$0xf]
      %v251 = vld [vmem:[%s226 + $0x30] sm:$0xf]
      %v252 = vld [vmem:[%s226 + $0x34] sm:$0xf]
      %v253 = vld [vmem:[%s226 + $0x38] sm:$0xf]
      %v254 = vld [vmem:[%s226 + $0x3c] sm:$0xf]
      %v255 = vld [vmem:[%s226 + $0x40] sm:$0xf]
      %v256 = vld [vmem:[%s226 + $0x44] sm:$0xf]
      %v257 = vld [vmem:[%s226 + $0x48] sm:$0xf]
      %v258 = vld [vmem:[%s226 + $0x4c] sm:$0xf]
      %v259 = vld [vmem:[%s226 + $0x50] sm:$0xf]
      %v260 = vld [vmem:[%s226 + $0x54] sm:$0xf]
      %v261 = vld [vmem:[%s226 + $0x58] sm:$0xf]
      %v262 = vld [vmem:[%s226 + $0x5c] sm:$0xf]
      %v263 = vld [vmem:[%s226 + $0x60] sm:$0xf]
      %v264 = vld [vmem:[%s226 + $0x64] sm:$0xf]
      %v265 = vld [vmem:[%s226 + $0x68] sm:$0xf]
      %v266 = vld [vmem:[%s226 + $0x6c] sm:$0xf]
      %v267 = vld [vmem:[%s226 + $0x70] sm:$0xf]
      %v268 = vld [vmem:[%s226 + $0x74] sm:$0xf]
      %v269 = vld [vmem:[%s226 + $0x78] sm:$0xf]
      %v270 = vld [vmem:[%s226 + $0x7c] sm:$0xf]
      %v271 = vunpack.c.l.bf16 %v239
      %v272 = vunpack.c.l.bf16 %v240
      %v273 = vunpack.c.l.bf16 %v241
      %v274 = vunpack.c.l.bf16 %v242
      %v275 = vunpack.c.l.bf16 %v243
      %v276 = vunpack.c.l.bf16 %v244
      %v277 = vunpack.c.l.bf16 %v245
      %v278 = vunpack.c.l.bf16 %v246
      %v279 = vunpack.c.l.bf16 %v247
      %v280 = vunpack.c.l.bf16 %v248
      %v281 = vunpack.c.l.bf16 %v249
      %v282 = vunpack.c.l.bf16 %v250
      %v283 = vunpack.c.l.bf16 %v251
      %v284 = vunpack.c.l.bf16 %v252
      %v285 = vunpack.c.l.bf16 %v253
      %v286 = vunpack.c.l.bf16 %v254
      %v287 = vunpack.c.l.bf16 %v255
      %v288 = vunpack.c.l.bf16 %v256
      %v289 = vunpack.c.l.bf16 %v257
      %v290 = vunpack.c.l.bf16 %v258
      %v291 = vunpack.c.l.bf16 %v259
      %v292 = vunpack.c.l.bf16 %v260
      %v293 = vunpack.c.l.bf16 %v261
      %v294 = vunpack.c.l.bf16 %v262
      %v295 = vunpack.c.l.bf16 %v263
      %v296 = vunpack.c.l.bf16 %v264
      %v297 = vunpack.c.l.bf16 %v265
      %v298 = vunpack.c.l.bf16 %v266
      %v299 = vunpack.c.l.bf16 %v267
      %v300 = vunpack.c.l.bf16 %v268
      %v301 = vunpack.c.l.bf16 %v269
      %v302 = vunpack.c.l.bf16 %v270
      %v304 = vperm.slane %v237, 0
      %v306 = vmul.f32 %v304, %v271
      %v307 = vmul.f32 %v304, %v272
      %v308 = vmul.f32 %v304, %v273
      %v309 = vmul.f32 %v304, %v274
      %v310 = vmul.f32 %v304, %v275
      %v311 = vmul.f32 %v304, %v276
      %v312 = vmul.f32 %v304, %v277
      %v313 = vmul.f32 %v304, %v278
      %v314 = vmul.f32 %v304, %v279
      %v315 = vmul.f32 %v304, %v280
      %v316 = vmul.f32 %v304, %v281
      %v317 = vmul.f32 %v304, %v282
      %v318 = vmul.f32 %v304, %v283
      %v319 = vmul.f32 %v304, %v284
      %v320 = vmul.f32 %v304, %v285
      %v321 = vmul.f32 %v304, %v286
      %v322 = vmul.f32 %v304, %v287
      %v323 = vmul.f32 %v304, %v288
      %v324 = vmul.f32 %v304, %v289
      %v325 = vmul.f32 %v304, %v290
      %v326 = vmul.f32 %v304, %v291
      %v327 = vmul.f32 %v304, %v292
      %v328 = vmul.f32 %v304, %v293
      %v329 = vmul.f32 %v304, %v294
      %v330 = vmul.f32 %v304, %v295
      %v331 = vmul.f32 %v304, %v296
      %v332 = vmul.f32 %v304, %v297
      %v333 = vmul.f32 %v304, %v298
      %v334 = vmul.f32 %v304, %v299
      %v335 = vmul.f32 %v304, %v300
      %v336 = vmul.f32 %v304, %v301
      %v337 = vmul.f32 %v304, %v302
      %v339 = vperm.slane %v238, 0
      %v341 = vadd.f32 %v306, %v339
      %v342 = vadd.f32 %v307, %v339
      %v343 = vadd.f32 %v308, %v339
      %v344 = vadd.f32 %v309, %v339
      %v345 = vadd.f32 %v310, %v339
      %v346 = vadd.f32 %v311, %v339
      %v347 = vadd.f32 %v312, %v339
      %v348 = vadd.f32 %v313, %v339
      %v349 = vadd.f32 %v314, %v339
      %v350 = vadd.f32 %v315, %v339
      %v351 = vadd.f32 %v316, %v339
      %v352 = vadd.f32 %v317, %v339
      %v353 = vadd.f32 %v318, %v339
      %v354 = vadd.f32 %v319, %v339
      %v355 = vadd.f32 %v320, %v339
      %v356 = vadd.f32 %v321, %v339
      %v357 = vadd.f32 %v322, %v339
      %v358 = vadd.f32 %v323, %v339
      %v359 = vadd.f32 %v324, %v339
      %v360 = vadd.f32 %v325, %v339
      %v361 = vadd.f32 %v326, %v339
      %v362 = vadd.f32 %v327, %v339
      %v363 = vadd.f32 %v328, %v339
      %v364 = vadd.f32 %v329, %v339
      %v365 = vadd.f32 %v330, %v339
      %v366 = vadd.f32 %v331, %v339
      %v367 = vadd.f32 %v332, %v339
      %v368 = vadd.f32 %v333, %v339
      %v369 = vadd.f32 %v334, %v339
      %v370 = vadd.f32 %v335, %v339
      %v371 = vadd.f32 %v336, %v339
      %v372 = vadd.f32 %v337, %v339
      %vm373 = vcmp.gt.f32.partialorder %v341, 0.0
      %vm374 = vcmp.gt.f32.partialorder %v342, 0.0
      %vm375 = vcmp.gt.f32.partialorder %v343, 0.0
      %vm376 = vcmp.gt.f32.partialorder %v344, 0.0
      %vm377 = vcmp.gt.f32.partialorder %v345, 0.0
      %vm378 = vcmp.gt.f32.partialorder %v346, 0.0
      %vm379 = vcmp.gt.f32.partialorder %v347, 0.0
      %vm380 = vcmp.gt.f32.partialorder %v348, 0.0
      %vm381 = vcmp.gt.f32.partialorder %v349, 0.0
      %vm382 = vcmp.gt.f32.partialorder %v350, 0.0
      %vm383 = vcmp.gt.f32.partialorder %v351, 0.0
      %vm384 = vcmp.gt.f32.partialorder %v352, 0.0
      %vm385 = vcmp.gt.f32.partialorder %v353, 0.0
      %vm386 = vcmp.gt.f32.partialorder %v354, 0.0
      %vm387 = vcmp.gt.f32.partialorder %v355, 0.0
      %vm388 = vcmp.gt.f32.partialorder %v356, 0.0
      %vm389 = vcmp.gt.f32.partialorder %v357, 0.0
      %vm390 = vcmp.gt.f32.partialorder %v358, 0.0
      %vm391 = vcmp.gt.f32.partialorder %v359, 0.0
      %vm392 = vcmp.gt.f32.partialorder %v360, 0.0
      %vm393 = vcmp.gt.f32.partialorder %v361, 0.0
      %vm394 = vcmp.gt.f32.partialorder %v362, 0.0
      %vm395 = vcmp.gt.f32.partialorder %v363, 0.0
      %vm396 = vcmp.gt.f32.partialorder %v364, 0.0
      %vm397 = vcmp.gt.f32.partialorder %v365, 0.0
      %vm398 = vcmp.gt.f32.partialorder %v366, 0.0
      %vm399 = vcmp.gt.f32.partialorder %v367, 0.0
      %vm400 = vcmp.gt.f32.partialorder %v368, 0.0
      %vm401 = vcmp.gt.f32.partialorder %v369, 0.0
      %vm402 = vcmp.gt.f32.partialorder %v370, 0.0
      %vm403 = vcmp.gt.f32.partialorder %v371, 0.0
      %vm404 = vcmp.gt.f32.partialorder %v372, 0.0
      %v405 = vmin.f32 %v341, 0.0
      %v406 = vmin.f32 %v342, 0.0
      %v407 = vmin.f32 %v343, 0.0
      %v408 = vmin.f32 %v344, 0.0
      %v409 = vmin.f32 %v345, 0.0
      %v410 = vmin.f32 %v346, 0.0
      %v411 = vmin.f32 %v347, 0.0
      %v412 = vmin.f32 %v348, 0.0
      %v413 = vmin.f32 %v349, 0.0
      %v414 = vmin.f32 %v350, 0.0
      %v415 = vmin.f32 %v351, 0.0
      %v416 = vmin.f32 %v352, 0.0
      %v417 = vmin.f32 %v353, 0.0
      %v418 = vmin.f32 %v354, 0.0
      %v419 = vmin.f32 %v355, 0.0
      %v420 = vmin.f32 %v356, 0.0
      %v421 = vmin.f32 %v357, 0.0
      %v422 = vmin.f32 %v358, 0.0
      %v423 = vmin.f32 %v359, 0.0
      %v424 = vmin.f32 %v360, 0.0
      %v425 = vmin.f32 %v361, 0.0
      %v426 = vmin.f32 %v362, 0.0
      %v427 = vmin.f32 %v363, 0.0
      %v428 = vmin.f32 %v364, 0.0
      %v429 = vmin.f32 %v365, 0.0
      %v430 = vmin.f32 %v366, 0.0
      %v431 = vmin.f32 %v367, 0.0
      %v432 = vmin.f32 %v368, 0.0
      %v433 = vmin.f32 %v369, 0.0
      %v434 = vmin.f32 %v370, 0.0
      %v435 = vmin.f32 %v371, 0.0
      %v436 = vmin.f32 %v372, 0.0
      %v437 = vmul.f32 %v405, 1.442695
      %v438 = vpow.pop %v437
      %v439 = vmul.f32 %v406, 1.442695
      %v440 = vpow.pop %v439
      %v441 = vmul.f32 %v407, 1.442695
      %v442 = vpow.pop %v441
      %v443 = vmul.f32 %v408, 1.442695
      %v444 = vpow.pop %v443
      %v445 = vmul.f32 %v409, 1.442695
      %v446 = vpow.pop %v445
      %v447 = vmul.f32 %v410, 1.442695
      %v448 = vpow.pop %v447
      %v449 = vmul.f32 %v411, 1.442695
      %v450 = vpow.pop %v449
      %v451 = vmul.f32 %v412, 1.442695
      %v452 = vpow.pop %v451
      %v453 = vmul.f32 %v413, 1.442695
      %v454 = vpow.pop %v453
      %v455 = vmul.f32 %v414, 1.442695
      %v456 = vpow.pop %v455
      %v457 = vmul.f32 %v415, 1.442695
      %v458 = vpow.pop %v457
      %v459 = vmul.f32 %v416, 1.442695
      %v460 = vpow.pop %v459
      %v461 = vmul.f32 %v417, 1.442695
      %v462 = vpow.pop %v461
      %v463 = vmul.f32 %v418, 1.442695
      %v464 = vpow.pop %v463
      %v465 = vmul.f32 %v419, 1.442695
      %v466 = vpow.pop %v465
      %v467 = vmul.f32 %v420, 1.442695
      %v468 = vpow.pop %v467
      %v469 = vmul.f32 %v421, 1.442695
      %v470 = vpow.pop %v469
      %v471 = vmul.f32 %v422, 1.442695
      %v472 = vpow.pop %v471
      %v473 = vmul.f32 %v423, 1.442695
      %v474 = vpow.pop %v473
      %v475 = vmul.f32 %v424, 1.442695
      %v476 = vpow.pop %v475
      %v477 = vmul.f32 %v425, 1.442695
      %v478 = vpow.pop %v477
      %v479 = vmul.f32 %v426, 1.442695
      %v480 = vpow.pop %v479
      %v481 = vmul.f32 %v427, 1.442695
      %v482 = vpow.pop %v481
      %v483 = vmul.f32 %v428, 1.442695
      %v484 = vpow.pop %v483
      %v485 = vmul.f32 %v429, 1.442695
      %v486 = vpow.pop %v485
      %v487 = vmul.f32 %v430, 1.442695
      %v488 = vpow.pop %v487
      %v489 = vmul.f32 %v431, 1.442695
      %v490 = vpow.pop %v489
      %v491 = vmul.f32 %v432, 1.442695
      %v492 = vpow.pop %v491
      %v493 = vmul.f32 %v433, 1.442695
      %v494 = vpow.pop %v493
      %v495 = vmul.f32 %v434, 1.442695
      %v496 = vpow.pop %v495
      %v497 = vmul.f32 %v435, 1.442695
      %v498 = vpow.pop %v497
      %v499 = vmul.f32 %v436, 1.442695
      %v500 = vpow.pop %v499
      %v501 = vsub.f32 %v438, 1.0
      %v502 = vsub.f32 %v440, 1.0
      %v503 = vsub.f32 %v442, 1.0
      %v504 = vsub.f32 %v444, 1.0
      %v505 = vsub.f32 %v446, 1.0
      %v506 = vsub.f32 %v448, 1.0
      %v507 = vsub.f32 %v450, 1.0
      %v508 = vsub.f32 %v452, 1.0
      %v509 = vsub.f32 %v454, 1.0
      %v510 = vsub.f32 %v456, 1.0
      %v511 = vsub.f32 %v458, 1.0
      %v512 = vsub.f32 %v460, 1.0
      %v513 = vsub.f32 %v462, 1.0
      %v514 = vsub.f32 %v464, 1.0
      %v515 = vsub.f32 %v466, 1.0
      %v516 = vsub.f32 %v468, 1.0
      %v517 = vsub.f32 %v470, 1.0
      %v518 = vsub.f32 %v472, 1.0
      %v519 = vsub.f32 %v474, 1.0
      %v520 = vsub.f32 %v476, 1.0
      %v521 = vsub.f32 %v478, 1.0
      %v522 = vsub.f32 %v480, 1.0
      %v523 = vsub.f32 %v482, 1.0
      %v524 = vsub.f32 %v484, 1.0
      %v525 = vsub.f32 %v486, 1.0
      %v526 = vsub.f32 %v488, 1.0
      %v527 = vsub.f32 %v490, 1.0
      %v528 = vsub.f32 %v492, 1.0
      %v529 = vsub.f32 %v494, 1.0
      %v530 = vsub.f32 %v496, 1.0
      %v531 = vsub.f32 %v498, 1.0
      %v532 = vsub.f32 %v500, 1.0
      %v533 = vsel %vm373, %v341, %v501
      %v534 = vsel %vm374, %v342, %v502
      %v535 = vsel %vm375, %v343, %v503
      %v536 = vsel %vm376, %v344, %v504
      %v537 = vsel %vm377, %v345, %v505
      %v538 = vsel %vm378, %v346, %v506
      %v539 = vsel %vm379, %v347, %v507
      %v540 = vsel %vm380, %v348, %v508
      %v541 = vsel %vm381, %v349, %v509
      %v542 = vsel %vm382, %v350, %v510
      %v543 = vsel %vm383, %v351, %v511
      %v544 = vsel %vm384, %v352, %v512
      %v545 = vsel %vm385, %v353, %v513
      %v546 = vsel %vm386, %v354, %v514
      %v547 = vsel %vm387, %v355, %v515
      %v548 = vsel %vm388, %v356, %v516
      %v549 = vsel %vm389, %v357, %v517
      %v550 = vsel %vm390, %v358, %v518
      %v551 = vsel %vm391, %v359, %v519
      %v552 = vsel %vm392, %v360, %v520
      %v553 = vsel %vm393, %v361, %v521
      %v554 = vsel %vm394, %v362, %v522
      %v555 = vsel %vm395, %v363, %v523
      %v556 = vsel %vm396, %v364, %v524
      %v557 = vsel %vm397, %v365, %v525
      %v558 = vsel %vm398, %v366, %v526
      %v559 = vsel %vm399, %v367, %v527
      %v560 = vsel %vm400, %v368, %v528
      %v561 = vsel %vm401, %v369, %v529
      %v562 = vsel %vm402, %v370, %v530
      %v563 = vsel %vm403, %v371, %v531
      %v564 = vsel %vm404, %v372, %v532
      %vm565 = vcmask 27648
      %566 = vst.msk [vmem:[#allocation2] sm:$0xf] %vm565, 0
      %567 = vst.msk [vmem:[#allocation2 + $0x4] sm:$0xf] %vm565, 0
      %vm568 = vcmask 24576
      %569 = vst.msk [vmem:[#allocation2 + $0x8] sm:$0x1] %vm568, 0
      %s570 = scalar_lea.vmem [#allocation2], 204
      %571 = vst.msk [vmem:[%s570] sm:$0xf] %vm565, 0
      %572 = vst.msk [vmem:[%s570 + $0x4] sm:$0xf] %vm565, 0
      %573 = vst.msk [vmem:[%s570 + $0x8] sm:$0x1] %vm568, 0
      %vm574 = vcmask 24576
      %vm575 = vsmask.f32 256
      %vm576 = vmand %vm574, %vm575
      %v577 = vld [vmem:[#allocation2] sm:$0x1]
      %v578 = vsel %vm576, 0, %v577
      %579 = vst [vmem:[#allocation2] sm:$0x1] %v578
      %v580 = vld [vmem:[#allocation2 + $0xc] sm:$0x1]
      %v581 = vsel %vm576, 0, %v580
      %582 = vst [vmem:[#allocation2 + $0xc] sm:$0x1] %v581
      %v583 = vld [vmem:[#allocation2 + $0x18] sm:$0x1]
      %v584 = vsel %vm576, 0, %v583
      %585 = vst [vmem:[#allocation2 + $0x18] sm:$0x1] %v584
      %v586 = vld [vmem:[#allocation2 + $0x24] sm:$0x1]
      %v587 = vsel %vm576, 0, %v586
      %588 = vst [vmem:[#allocation2 + $0x24] sm:$0x1] %v587
      %v589 = vld [vmem:[#allocation2 + $0x30] sm:$0x1]
      %v590 = vsel %vm576, 0, %v589
      %591 = vst [vmem:[#allocation2 + $0x30] sm:$0x1] %v590
      %v592 = vld [vmem:[#allocation2 + $0x3c] sm:$0x1]
      %v593 = vsel %vm576, 0, %v592
      %594 = vst [vmem:[#allocation2 + $0x3c] sm:$0x1] %v593
      %v595 = vld [vmem:[#allocation2 + $0x48] sm:$0x1]
      %v596 = vsel %vm576, 0, %v595
      %597 = vst [vmem:[#allocation2 + $0x48] sm:$0x1] %v596
      %v598 = vld [vmem:[#allocation2 + $0x54] sm:$0x1]
      %v599 = vsel %vm576, 0, %v598
      %600 = vst [vmem:[#allocation2 + $0x54] sm:$0x1] %v599
      %v601 = vld [vmem:[#allocation2 + $0x60] sm:$0x1]
      %v602 = vsel %vm576, 0, %v601
      %603 = vst [vmem:[#allocation2 + $0x60] sm:$0x1] %v602
      %v604 = vld [vmem:[#allocation2 + $0x6c] sm:$0x1]
      %v605 = vsel %vm576, 0, %v604
      %606 = vst [vmem:[#allocation2 + $0x6c] sm:$0x1] %v605
      %v607 = vld [vmem:[#allocation2 + $0x78] sm:$0x1]
      %v608 = vsel %vm576, 0, %v607
      %609 = vst [vmem:[#allocation2 + $0x78] sm:$0x1] %v608
      %v610 = vld [vmem:[#allocation2 + $0x84] sm:$0x1]
      %v611 = vsel %vm576, 0, %v610
      %612 = vst [vmem:[#allocation2 + $0x84] sm:$0x1] %v611
      %v613 = vld [vmem:[#allocation2 + $0x90] sm:$0x1]
      %v614 = vsel %vm576, 0, %v613
      %615 = vst [vmem:[#allocation2 + $0x90] sm:$0x1] %v614
      %v616 = vld [vmem:[#allocation2 + $0x9c] sm:$0x1]
      %v617 = vsel %vm576, 0, %v616
      %618 = vst [vmem:[#allocation2 + $0x9c] sm:$0x1] %v617
      %v619 = vld [vmem:[#allocation2 + $0xa8] sm:$0x1]
      %v620 = vsel %vm576, 0, %v619
      %621 = vst [vmem:[#allocation2 + $0xa8] sm:$0x1] %v620
      %v622 = vld [vmem:[#allocation2 + $0xb4] sm:$0x1]
      %v623 = vsel %vm576, 0, %v622
      %624 = vst [vmem:[#allocation2 + $0xb4] sm:$0x1] %v623
      %v625 = vld [vmem:[#allocation2 + $0xc0] sm:$0x1]
      %v626 = vsel %vm576, 0, %v625
      %627 = vst [vmem:[#allocation2 + $0xc0] sm:$0x1] %v626
      %v628 = vld [vmem:[#allocation2 + $0xcc] sm:$0x1]
      %v629 = vsel %vm576, 0, %v628
      %630 = vst [vmem:[#allocation2 + $0xcc] sm:$0x1] %v629
      %vm631 = vsmask.f32 7938
      %vm632 = vmand %vm574, %vm631
      %v633 = vld [vmem:[#allocation2 + $0x8] sm:$0x1]
      %v634 = vsel %vm632, 0, %v633
      %635 = vst [vmem:[#allocation2 + $0x8] sm:$0x1] %v634
      %v636 = vld [vmem:[#allocation2 + $0x14] sm:$0x1]
      %v637 = vsel %vm632, 0, %v636
      %638 = vst [vmem:[#allocation2 + $0x14] sm:$0x1] %v637
      %v639 = vld [vmem:[#allocation2 + $0x20] sm:$0x1]
      %v640 = vsel %vm632, 0, %v639
      %641 = vst [vmem:[#allocation2 + $0x20] sm:$0x1] %v640
      %v642 = vld [vmem:[#allocation2 + $0x2c] sm:$0x1]
      %v643 = vsel %vm632, 0, %v642
      %644 = vst [vmem:[#allocation2 + $0x2c] sm:$0x1] %v643
      %v645 = vld [vmem:[#allocation2 + $0x38] sm:$0x1]
      %v646 = vsel %vm632, 0, %v645
      %647 = vst [vmem:[#allocation2 + $0x38] sm:$0x1] %v646
      %v648 = vld [vmem:[#allocation2 + $0x44] sm:$0x1]
      %v649 = vsel %vm632, 0, %v648
      %650 = vst [vmem:[#allocation2 + $0x44] sm:$0x1] %v649
      %v651 = vld [vmem:[#allocation2 + $0x50] sm:$0x1]
      %v652 = vsel %vm632, 0, %v651
      %653 = vst [vmem:[#allocation2 + $0x50] sm:$0x1] %v652
      %v654 = vld [vmem:[#allocation2 + $0x5c] sm:$0x1]
      %v655 = vsel %vm632, 0, %v654
      %656 = vst [vmem:[#allocation2 + $0x5c] sm:$0x1] %v655
      %v657 = vld [vmem:[#allocation2 + $0x68] sm:$0x1]
      %v658 = vsel %vm632, 0, %v657
      %659 = vst [vmem:[#allocation2 + $0x68] sm:$0x1] %v658
      %v660 = vld [vmem:[#allocation2 + $0x74] sm:$0x1]
      %v661 = vsel %vm632, 0, %v660
      %662 = vst [vmem:[#allocation2 + $0x74] sm:$0x1] %v661
      %v663 = vld [vmem:[#allocation2 + $0x80] sm:$0x1]
      %v664 = vsel %vm632, 0, %v663
      %665 = vst [vmem:[#allocation2 + $0x80] sm:$0x1] %v664
      %v666 = vld [vmem:[#allocation2 + $0x8c] sm:$0x1]
      %v667 = vsel %vm632, 0, %v666
      %668 = vst [vmem:[#allocation2 + $0x8c] sm:$0x1] %v667
      %v669 = vld [vmem:[#allocation2 + $0x98] sm:$0x1]
      %v670 = vsel %vm632, 0, %v669
      %671 = vst [vmem:[#allocation2 + $0x98] sm:$0x1] %v670
      %v672 = vld [vmem:[#allocation2 + $0xa4] sm:$0x1]
      %v673 = vsel %vm632, 0, %v672
      %674 = vst [vmem:[#allocation2 + $0xa4] sm:$0x1] %v673
      %v675 = vld [vmem:[#allocation2 + $0xb0] sm:$0x1]
      %v676 = vsel %vm632, 0, %v675
      %677 = vst [vmem:[#allocation2 + $0xb0] sm:$0x1] %v676
      %v678 = vld [vmem:[#allocation2 + $0xbc] sm:$0x1]
      %v679 = vsel %vm632, 0, %v678
      %680 = vst [vmem:[#allocation2 + $0xbc] sm:$0x1] %v679
      %v681 = vld [vmem:[#allocation2 + $0xc8] sm:$0x1]
      %v682 = vsel %vm632, 0, %v681
      %683 = vst [vmem:[#allocation2 + $0xc8] sm:$0x1] %v682
      %v684 = vld [vmem:[#allocation2 + $0xd4] sm:$0x1]
      %v685 = vsel %vm632, 0, %v684
      %686 = vst [vmem:[#allocation2 + $0xd4] sm:$0x1] %v685
      %v687 = vpack.c.bf16 %v533, %v533
      %v688 = vpack.c.bf16 %v534, %v534
      %v689 = vpack.c.bf16 %v535, %v535
      %v690 = vpack.c.bf16 %v536, %v536
      %v691 = vpack.c.bf16 %v537, %v537
      %v692 = vpack.c.bf16 %v538, %v538
      %v693 = vpack.c.bf16 %v539, %v539
      %v694 = vpack.c.bf16 %v540, %v540
      %v695 = vpack.c.bf16 %v541, %v541
      %v696 = vpack.c.bf16 %v542, %v542
      %v697 = vpack.c.bf16 %v543, %v543
      %v698 = vpack.c.bf16 %v544, %v544
      %v699 = vpack.c.bf16 %v545, %v545
      %v700 = vpack.c.bf16 %v546, %v546
      %v701 = vpack.c.bf16 %v547, %v547
      %v702 = vpack.c.bf16 %v548, %v548
      %v703 = vpack.c.bf16 %v549, %v549
      %v704 = vpack.c.bf16 %v550, %v550
      %v705 = vpack.c.bf16 %v551, %v551
      %v706 = vpack.c.bf16 %v552, %v552
      %v707 = vpack.c.bf16 %v553, %v553
      %v708 = vpack.c.bf16 %v554, %v554
      %v709 = vpack.c.bf16 %v555, %v555
      %v710 = vpack.c.bf16 %v556, %v556
      %v711 = vpack.c.bf16 %v557, %v557
      %v712 = vpack.c.bf16 %v558, %v558
      %v713 = vpack.c.bf16 %v559, %v559
      %v714 = vpack.c.bf16 %v560, %v560
      %v715 = vpack.c.bf16 %v561, %v561
      %v716 = vpack.c.bf16 %v562, %v562
      %v717 = vpack.c.bf16 %v563, %v563
      %v718 = vpack.c.bf16 %v564, %v564
      %vm719 = vsmask.f32 4368
      %vm720 = vmor %vm575, %vm719
      %v722 = vshrl.u32 %v687, 16
      %v724 = vrot.slane %v722, 7
      %v725 = vshll.u32 %v687, 16
      %v727 = vor.u32 %v724, %v725
      %v728 = vrot.slane %v724, 4
      %v730 = vshrl.u32 %v688, 16
      %v732 = vrot.slane %v730, 7
      %v733 = vshll.u32 %v688, 16
      %v735 = vor.u32 %v732, %v733
      %v736 = vsel %vm720, %v728, %v735
      %v737 = vrot.slane %v732, 4
      %v739 = vshrl.u32 %v689, 16
      %v741 = vrot.slane %v739, 7
      %v742 = vshll.u32 %v689, 16
      %v744 = vor.u32 %v741, %v742
      %v745 = vrot.slane %v741, 4
      %v747 = vshrl.u32 %v690, 16
      %v749 = vrot.slane %v747, 7
      %v750 = vshll.u32 %v690, 16
      %v752 = vor.u32 %v749, %v750
      %v753 = vsel %vm720, %v745, %v752
      %v754 = vrot.slane %v749, 4
      %v756 = vshrl.u32 %v691, 16
      %v758 = vrot.slane %v756, 7
      %v759 = vshll.u32 %v691, 16
      %v761 = vor.u32 %v758, %v759
      %v762 = vrot.slane %v758, 4
      %v764 = vshrl.u32 %v692, 16
      %v766 = vrot.slane %v764, 7
      %v767 = vshll.u32 %v692, 16
      %v769 = vor.u32 %v766, %v767
      %v770 = vsel %vm720, %v762, %v769
      %v771 = vrot.slane %v766, 4
      %v773 = vshrl.u32 %v693, 16
      %v775 = vrot.slane %v773, 7
      %v776 = vshll.u32 %v693, 16
      %v778 = vor.u32 %v775, %v776
      %v779 = vrot.slane %v775, 4
      %v781 = vshrl.u32 %v694, 16
      %v783 = vrot.slane %v781, 7
      %v784 = vshll.u32 %v694, 16
      %v786 = vor.u32 %v783, %v784
      %v787 = vsel %vm720, %v779, %v786
      %v788 = vrot.slane %v783, 4
      %v790 = vshrl.u32 %v695, 16
      %v792 = vrot.slane %v790, 7
      %v793 = vshll.u32 %v695, 16
      %v795 = vor.u32 %v792, %v793
      %v796 = vrot.slane %v792, 4
      %v798 = vshrl.u32 %v696, 16
      %v800 = vrot.slane %v798, 7
      %v801 = vshll.u32 %v696, 16
      %v803 = vor.u32 %v800, %v801
      %v804 = vsel %vm720, %v796, %v803
      %v805 = vrot.slane %v800, 4
      %v807 = vshrl.u32 %v697, 16
      %v809 = vrot.slane %v807, 7
      %v810 = vshll.u32 %v697, 16
      %v812 = vor.u32 %v809, %v810
      %v813 = vrot.slane %v809, 4
      %v815 = vshrl.u32 %v698, 16
      %v817 = vrot.slane %v815, 7
      %v818 = vshll.u32 %v698, 16
      %v820 = vor.u32 %v817, %v818
      %v821 = vsel %vm720, %v813, %v820
      %v822 = vrot.slane %v817, 4
      %v824 = vshrl.u32 %v699, 16
      %v826 = vrot.slane %v824, 7
      %v827 = vshll.u32 %v699, 16
      %v829 = vor.u32 %v826, %v827
      %v830 = vrot.slane %v826, 4
      %v832 = vshrl.u32 %v700, 16
      %v834 = vrot.slane %v832, 7
      %v835 = vshll.u32 %v700, 16
      %v837 = vor.u32 %v834, %v835
      %v838 = vsel %vm720, %v830, %v837
      %v839 = vrot.slane %v834, 4
      %v841 = vshrl.u32 %v701, 16
      %v843 = vrot.slane %v841, 7
      %v844 = vshll.u32 %v701, 16
      %v846 = vor.u32 %v843, %v844
      %v847 = vrot.slane %v843, 4
      %v849 = vshrl.u32 %v702, 16
      %v851 = vrot.slane %v849, 7
      %v852 = vshll.u32 %v702, 16
      %v854 = vor.u32 %v851, %v852
      %v855 = vsel %vm720, %v847, %v854
      %v856 = vrot.slane %v851, 4
      %v858 = vshrl.u32 %v703, 16
      %v860 = vrot.slane %v858, 7
      %v861 = vshll.u32 %v703, 16
      %v863 = vor.u32 %v860, %v861
      %v864 = vrot.slane %v860, 4
      %v866 = vshrl.u32 %v704, 16
      %v868 = vrot.slane %v866, 7
      %v869 = vshll.u32 %v704, 16
      %v871 = vor.u32 %v868, %v869
      %v872 = vsel %vm720, %v864, %v871
      %v873 = vrot.slane %v868, 4
      %v875 = vshrl.u32 %v705, 16
      %v877 = vrot.slane %v875, 7
      %v878 = vshll.u32 %v705, 16
      %v880 = vor.u32 %v877, %v878
      %v881 = vrot.slane %v877, 4
      %v883 = vshrl.u32 %v706, 16
      %v885 = vrot.slane %v883, 7
      %v886 = vshll.u32 %v706, 16
      %v888 = vor.u32 %v885, %v886
      %v889 = vsel %vm720, %v881, %v888
      %v890 = vrot.slane %v885, 4
      %v892 = vshrl.u32 %v707, 16
      %v894 = vrot.slane %v892, 7
      %v895 = vshll.u32 %v707, 16
      %v897 = vor.u32 %v894, %v895
      %v898 = vrot.slane %v894, 4
      %v900 = vshrl.u32 %v708, 16
      %v902 = vrot.slane %v900, 7
      %v903 = vshll.u32 %v708, 16
      %v905 = vor.u32 %v902, %v903
      %v906 = vsel %vm720, %v898, %v905
      %v907 = vrot.slane %v902, 4
      %v909 = vshrl.u32 %v709, 16
      %v911 = vrot.slane %v909, 7
      %v912 = vshll.u32 %v709, 16
      %v914 = vor.u32 %v911, %v912
      %v915 = vrot.slane %v911, 4
      %v917 = vshrl.u32 %v710, 16
      %v919 = vrot.slane %v917, 7
      %v920 = vshll.u32 %v710, 16
      %v922 = vor.u32 %v919, %v920
      %v923 = vsel %vm720, %v915, %v922
      %v924 = vrot.slane %v919, 4
      %v926 = vshrl.u32 %v711, 16
      %v928 = vrot.slane %v926, 7
      %v929 = vshll.u32 %v711, 16
      %v931 = vor.u32 %v928, %v929
      %v932 = vrot.slane %v928, 4
      %v934 = vshrl.u32 %v712, 16
      %v936 = vrot.slane %v934, 7
      %v937 = vshll.u32 %v712, 16
      %v939 = vor.u32 %v936, %v937
      %v940 = vsel %vm720, %v932, %v939
      %v941 = vrot.slane %v936, 4
      %v943 = vshrl.u32 %v713, 16
      %v945 = vrot.slane %v943, 7
      %v946 = vshll.u32 %v713, 16
      %v948 = vor.u32 %v945, %v946
      %v949 = vrot.slane %v945, 4
      %v951 = vshrl.u32 %v714, 16
      %v953 = vrot.slane %v951, 7
      %v954 = vshll.u32 %v714, 16
      %v956 = vor.u32 %v953, %v954
      %v957 = vsel %vm720, %v949, %v956
      %v958 = vrot.slane %v953, 4
      %v960 = vshrl.u32 %v715, 16
      %v962 = vrot.slane %v960, 7
      %v963 = vshll.u32 %v715, 16
      %v965 = vor.u32 %v962, %v963
      %v966 = vrot.slane %v962, 4
      %v968 = vshrl.u32 %v716, 16
      %v970 = vrot.slane %v968, 7
      %v971 = vshll.u32 %v716, 16
      %v973 = vor.u32 %v970, %v971
      %v974 = vsel %vm720, %v966, %v973
      %v975 = vrot.slane %v970, 4
      %v977 = vshrl.u32 %v717, 16
      %v979 = vrot.slane %v977, 7
      %v980 = vshll.u32 %v717, 16
      %v982 = vor.u32 %v979, %v980
      %v983 = vrot.slane %v979, 4
      %v985 = vshrl.u32 %v718, 16
      %v987 = vrot.slane %v985, 7
      %v988 = vshll.u32 %v718, 16
      %v990 = vor.u32 %v987, %v988
      %v991 = vsel %vm720, %v983, %v990
      %v992 = vrot.slane %v987, 4
      %s1041 = scalar_lea.vmem [#allocation2], 12
      %vm1042 = vcmask 27648
      %vm1043 = vmand %vm1042, %vm631
      %v1044 = vld [vmem:[%s1041] sm:$0xf]
      %v1045 = vsel %vm1043, %v727, %v1044
      %1046 = vst [vmem:[%s1041] sm:$0xf] %v1045
      %1047 = vst.msk [vmem:[%s1041 + $0x4] sm:$0xf] %vm565, %v736
      %v1048 = vld [vmem:[%s1041 + $0x8] sm:$0x1]
      %v1049 = vsel %vm576, %v737, %v1048
      %1050 = vst [vmem:[%s1041 + $0x8] sm:$0x1] %v1049
      %v1051 = vld [vmem:[%s1041 + $0xc] sm:$0xf]
      %v1052 = vsel %vm1043, %v744, %v1051
      %1053 = vst [vmem:[%s1041 + $0xc] sm:$0xf] %v1052
      %1054 = vst.msk [vmem:[%s1041 + $0x10] sm:$0xf] %vm565, %v753
      %v1055 = vld [vmem:[%s1041 + $0x14] sm:$0x1]
      %v1056 = vsel %vm576, %v754, %v1055
      %1057 = vst [vmem:[%s1041 + $0x14] sm:$0x1] %v1056
      %v1058 = vld [vmem:[%s1041 + $0x18] sm:$0xf]
      %v1059 = vsel %vm1043, %v761, %v1058
      %1060 = vst [vmem:[%s1041 + $0x18] sm:$0xf] %v1059
      %1061 = vst.msk [vmem:[%s1041 + $0x1c] sm:$0xf] %vm565, %v770
      %v1062 = vld [vmem:[%s1041 + $0x20] sm:$0x1]
      %v1063 = vsel %vm576, %v771, %v1062
      %1064 = vst [vmem:[%s1041 + $0x20] sm:$0x1] %v1063
      %v1065 = vld [vmem:[%s1041 + $0x24] sm:$0xf]
      %v1066 = vsel %vm1043, %v778, %v1065
      %1067 = vst [vmem:[%s1041 + $0x24] sm:$0xf] %v1066
      %1068 = vst.msk [vmem:[%s1041 + $0x28] sm:$0xf] %vm565, %v787
      %v1069 = vld [vmem:[%s1041 + $0x2c] sm:$0x1]
      %v1070 = vsel %vm576, %v788, %v1069
      %1071 = vst [vmem:[%s1041 + $0x2c] sm:$0x1] %v1070
      %v1072 = vld [vmem:[%s1041 + $0x30] sm:$0xf]
      %v1073 = vsel %vm1043, %v795, %v1072
      %1074 = vst [vmem:[%s1041 + $0x30] sm:$0xf] %v1073
      %1075 = vst.msk [vmem:[%s1041 + $0x34] sm:$0xf] %vm565, %v804
      %v1076 = vld [vmem:[%s1041 + $0x38] sm:$0x1]
      %v1077 = vsel %vm576, %v805, %v1076
      %1078 = vst [vmem:[%s1041 + $0x38] sm:$0x1] %v1077
      %v1079 = vld [vmem:[%s1041 + $0x3c] sm:$0xf]
      %v1080 = vsel %vm1043, %v812, %v1079
      %1081 = vst [vmem:[%s1041 + $0x3c] sm:$0xf] %v1080
      %1082 = vst.msk [vmem:[%s1041 + $0x40] sm:$0xf] %vm565, %v821
      %v1083 = vld [vmem:[%s1041 + $0x44] sm:$0x1]
      %v1084 = vsel %vm576, %v822, %v1083
      %1085 = vst [vmem:[%s1041 + $0x44] sm:$0x1] %v1084
      %v1086 = vld [vmem:[%s1041 + $0x48] sm:$0xf]
      %v1087 = vsel %vm1043, %v829, %v1086
      %1088 = vst [vmem:[%s1041 + $0x48] sm:$0xf] %v1087
      %1089 = vst.msk [vmem:[%s1041 + $0x4c] sm:$0xf] %vm565, %v838
      %v1090 = vld [vmem:[%s1041 + $0x50] sm:$0x1]
      %v1091 = vsel %vm576, %v839, %v1090
      %1092 = vst [vmem:[%s1041 + $0x50] sm:$0x1] %v1091
      %v1093 = vld [vmem:[%s1041 + $0x54] sm:$0xf]
      %v1094 = vsel %vm1043, %v846, %v1093
      %1095 = vst [vmem:[%s1041 + $0x54] sm:$0xf] %v1094
      %1096 = vst.msk [vmem:[%s1041 + $0x58] sm:$0xf] %vm565, %v855
      %v1097 = vld [vmem:[%s1041 + $0x5c] sm:$0x1]
      %v1098 = vsel %vm576, %v856, %v1097
      %1099 = vst [vmem:[%s1041 + $0x5c] sm:$0x1] %v1098
      %v1100 = vld [vmem:[%s1041 + $0x60] sm:$0xf]
      %v1101 = vsel %vm1043, %v863, %v1100
      %1102 = vst [vmem:[%s1041 + $0x60] sm:$0xf] %v1101
      %1103 = vst.msk [vmem:[%s1041 + $0x64] sm:$0xf] %vm565, %v872
      %v1104 = vld [vmem:[%s1041 + $0x68] sm:$0x1]
      %v1105 = vsel %vm576, %v873, %v1104
      %1106 = vst [vmem:[%s1041 + $0x68] sm:$0x1] %v1105
      %v1107 = vld [vmem:[%s1041 + $0x6c] sm:$0xf]
      %v1108 = vsel %vm1043, %v880, %v1107
      %1109 = vst [vmem:[%s1041 + $0x6c] sm:$0xf] %v1108
      %1110 = vst.msk [vmem:[%s1041 + $0x70] sm:$0xf] %vm565, %v889
      %v1111 = vld [vmem:[%s1041 + $0x74] sm:$0x1]
      %v1112 = vsel %vm576, %v890, %v1111
      %1113 = vst [vmem:[%s1041 + $0x74] sm:$0x1] %v1112
      %v1114 = vld [vmem:[%s1041 + $0x78] sm:$0xf]
      %v1115 = vsel %vm1043, %v897, %v1114
      %1116 = vst [vmem:[%s1041 + $0x78] sm:$0xf] %v1115
      %1117 = vst.msk [vmem:[%s1041 + $0x7c] sm:$0xf] %vm565, %v906
      %v1118 = vld [vmem:[%s1041 + $0x80] sm:$0x1]
      %v1119 = vsel %vm576, %v907, %v1118
      %1120 = vst [vmem:[%s1041 + $0x80] sm:$0x1] %v1119
      %v1121 = vld [vmem:[%s1041 + $0x84] sm:$0xf]
      %v1122 = vsel %vm1043, %v914, %v1121
      %1123 = vst [vmem:[%s1041 + $0x84] sm:$0xf] %v1122
      %1124 = vst.msk [vmem:[%s1041 + $0x88] sm:$0xf] %vm565, %v923
      %v1125 = vld [vmem:[%s1041 + $0x8c] sm:$0x1]
      %v1126 = vsel %vm576, %v924, %v1125
      %1127 = vst [vmem:[%s1041 + $0x8c] sm:$0x1] %v1126
      %v1128 = vld [vmem:[%s1041 + $0x90] sm:$0xf]
      %v1129 = vsel %vm1043, %v931, %v1128
      %1130 = vst [vmem:[%s1041 + $0x90] sm:$0xf] %v1129
      %1131 = vst.msk [vmem:[%s1041 + $0x94] sm:$0xf] %vm565, %v940
      %v1132 = vld [vmem:[%s1041 + $0x98] sm:$0x1]
      %v1133 = vsel %vm576, %v941, %v1132
      %1134 = vst [vmem:[%s1041 + $0x98] sm:$0x1] %v1133
      %v1135 = vld [vmem:[%s1041 + $0x9c] sm:$0xf]
      %v1136 = vsel %vm1043, %v948, %v1135
      %1137 = vst [vmem:[%s1041 + $0x9c] sm:$0xf] %v1136
      %1138 = vst.msk [vmem:[%s1041 + $0xa0] sm:$0xf] %vm565, %v957
      %v1139 = vld [vmem:[%s1041 + $0xa4] sm:$0x1]
      %v1140 = vsel %vm576, %v958, %v1139
      %1141 = vst [vmem:[%s1041 + $0xa4] sm:$0x1] %v1140
      %v1142 = vld [vmem:[%s1041 + $0xa8] sm:$0xf]
      %v1143 = vsel %vm1043, %v965, %v1142
      %1144 = vst [vmem:[%s1041 + $0xa8] sm:$0xf] %v1143
      %1145 = vst.msk [vmem:[%s1041 + $0xac] sm:$0xf] %vm565, %v974
      %v1146 = vld [vmem:[%s1041 + $0xb0] sm:$0x1]
      %v1147 = vsel %vm576, %v975, %v1146
      %1148 = vst [vmem:[%s1041 + $0xb0] sm:$0x1] %v1147
      %v1149 = vld [vmem:[%s1041 + $0xb4] sm:$0xf]
      %v1150 = vsel %vm1043, %v982, %v1149
      %1151 = vst [vmem:[%s1041 + $0xb4] sm:$0xf] %v1150
      %1152 = vst.msk [vmem:[%s1041 + $0xb8] sm:$0xf] %vm565, %v991
      %v1153 = vld [vmem:[%s1041 + $0xbc] sm:$0x1]
      %v1154 = vsel %vm576, %v992, %v1153
      %1155 = vst [vmem:[%s1041 + $0xbc] sm:$0x1] %v1154
      %v1156 = vld [vmem:[#allocation2] sm:$0xf]
      %v1157 = vld [vmem:[#allocation2 + $0x4] sm:$0xf]
      %v1158 = vld [vmem:[#allocation2 + $0xc] sm:$0xf]
      %v1159 = vld [vmem:[#allocation2 + $0x10] sm:$0xf]
      %v1160 = vld [vmem:[#allocation2 + $0x18] sm:$0xf]
      %v1161 = vld [vmem:[#allocation2 + $0x1c] sm:$0xf]
      %v1162 = vld [vmem:[#allocation2 + $0x24] sm:$0xf]
      %v1163 = vld [vmem:[#allocation2 + $0x28] sm:$0xf]
      %v1164 = vld [vmem:[#allocation2 + $0x30] sm:$0xf]
      %v1165 = vld [vmem:[#allocation2 + $0x34] sm:$0xf]
      %v1166 = vld [vmem:[#allocation2 + $0x3c] sm:$0xf]
      %v1167 = vld [vmem:[#allocation2 + $0x40] sm:$0xf]
      %v1168 = vld [vmem:[#allocation2 + $0x48] sm:$0xf]
      %v1169 = vld [vmem:[#allocation2 + $0x4c] sm:$0xf]
      %v1170 = vld [vmem:[#allocation2 + $0x54] sm:$0xf]
      %v1171 = vld [vmem:[#allocation2 + $0x58] sm:$0xf]
      %v1172 = vld [vmem:[#allocation2 + $0x60] sm:$0xf]
      %v1173 = vld [vmem:[#allocation2 + $0x64] sm:$0xf]
      %v1174 = vld [vmem:[#allocation2 + $0x6c] sm:$0xf]
      %v1175 = vld [vmem:[#allocation2 + $0x70] sm:$0xf]
      %v1176 = vld [vmem:[#allocation2 + $0x78] sm:$0xf]
      %v1177 = vld [vmem:[#allocation2 + $0x7c] sm:$0xf]
      %v1178 = vld [vmem:[#allocation2 + $0x84] sm:$0xf]
      %v1179 = vld [vmem:[#allocation2 + $0x88] sm:$0xf]
      %v1180 = vld [vmem:[#allocation2 + $0x90] sm:$0xf]
      %v1181 = vld [vmem:[#allocation2 + $0x94] sm:$0xf]
      %v1182 = vld [vmem:[#allocation2 + $0x9c] sm:$0xf]
      %v1183 = vld [vmem:[#allocation2 + $0xa0] sm:$0xf]
      %v1184 = vld [vmem:[#allocation2 + $0xa8] sm:$0xf]
      %v1185 = vld [vmem:[#allocation2 + $0xac] sm:$0xf]
      %v1186 = vld [vmem:[#allocation2 + $0xb4] sm:$0xf]
      %v1187 = vld [vmem:[#allocation2 + $0xb8] sm:$0xf]
      %v1188 = vld [vmem:[%s3] sm:$0x3]
      %v1189 = vld [vmem:[#allocation2 + $0x8] sm:$0x1]
      %v1190 = vld [vmem:[#allocation2 + $0x14] sm:$0x1]
      %v1191 = vld [vmem:[#allocation2 + $0x20] sm:$0x1]
      %v1192 = vld [vmem:[#allocation2 + $0x2c] sm:$0x1]
      %v1193 = vld [vmem:[#allocation2 + $0x38] sm:$0x1]
      %v1194 = vld [vmem:[#allocation2 + $0x44] sm:$0x1]
      %v1195 = vld [vmem:[#allocation2 + $0x50] sm:$0x1]
      %v1196 = vld [vmem:[#allocation2 + $0x5c] sm:$0x1]
      %v1197 = vld [vmem:[#allocation2 + $0x68] sm:$0x1]
      %v1198 = vld [vmem:[#allocation2 + $0x74] sm:$0x1]
      %v1199 = vld [vmem:[#allocation2 + $0x80] sm:$0x1]
      %v1200 = vld [vmem:[#allocation2 + $0x8c] sm:$0x1]
      %v1201 = vld [vmem:[#allocation2 + $0x98] sm:$0x1]
      %v1202 = vld [vmem:[#allocation2 + $0xa4] sm:$0x1]
      %v1203 = vld [vmem:[#allocation2 + $0xb0] sm:$0x1]
      %v1204 = vld [vmem:[#allocation2 + $0xbc] sm:$0x1]
      %vm1205 = vsmask.f32 3328
      %vm1206 = vsmask.f32 7440
      %vm1207 = vmor %vm1205, %vm1206
      %v1209 = vshrl.u32 %v1156, 16
      %v1211 = vrot.slane %v1209, 4
      %v1212 = vshll.u32 %v1156, 16
      %v1214 = vrot.slane %v1212, 5
      %v1215 = vor.u32 %v1211, %v1214
      %v1216 = vrot.slane %v1215, 4
      %v1218 = vshll.u32 %v1157, 16
      %v1220 = vrot.slane %v1218, 5
      %v1221 = vsel %vm1207, %v1216, %v1220
      %v1222 = vshrl.u32 %v1157, 16
      %v1224 = vrot.slane %v1222, 4
      %v1225 = vor.u32 %v1224, %v1220
      %v1226 = vrot.slane %v1225, 4
      %v1228 = vshll.u32 %v1189, 16
      %v1230 = vrot.slane %v1228, 5
      %v1231 = vsel %vm1207, %v1226, %v1230
      %v1233 = vshrl.u32 %v1158, 16
      %v1235 = vrot.slane %v1233, 4
      %v1236 = vshll.u32 %v1158, 16
      %v1238 = vrot.slane %v1236, 5
      %v1239 = vor.u32 %v1235, %v1238
      %v1240 = vrot.slane %v1239, 4
      %v1242 = vshll.u32 %v1159, 16
      %v1244 = vrot.slane %v1242, 5
      %v1245 = vsel %vm1207, %v1240, %v1244
      %v1246 = vshrl.u32 %v1159, 16
      %v1248 = vrot.slane %v1246, 4
      %v1249 = vor.u32 %v1248, %v1244
      %v1250 = vrot.slane %v1249, 4
      %v1252 = vshll.u32 %v1190, 16
      %v1254 = vrot.slane %v1252, 5
      %v1255 = vsel %vm1207, %v1250, %v1254
      %v1257 = vshrl.u32 %v1160, 16
      %v1259 = vrot.slane %v1257, 4
      %v1260 = vshll.u32 %v1160, 16
      %v1262 = vrot.slane %v1260, 5
      %v1263 = vor.u32 %v1259, %v1262
      %v1264 = vrot.slane %v1263, 4
      %v1266 = vshll.u32 %v1161, 16
      %v1268 = vrot.slane %v1266, 5
      %v1269 = vsel %vm1207, %v1264, %v1268
      %v1270 = vshrl.u32 %v1161, 16
      %v1272 = vrot.slane %v1270, 4
      %v1273 = vor.u32 %v1272, %v1268
      %v1274 = vrot.slane %v1273, 4
      %v1276 = vshll.u32 %v1191, 16
      %v1278 = vrot.slane %v1276, 5
      %v1279 = vsel %vm1207, %v1274, %v1278
      %v1281 = vshrl.u32 %v1162, 16
      %v1283 = vrot.slane %v1281, 4
      %v1284 = vshll.u32 %v1162, 16
      %v1286 = vrot.slane %v1284, 5
      %v1287 = vor.u32 %v1283, %v1286
      %v1288 = vrot.slane %v1287, 4
      %v1290 = vshll.u32 %v1163, 16
      %v1292 = vrot.slane %v1290, 5
      %v1293 = vsel %vm1207, %v1288, %v1292
      %v1294 = vshrl.u32 %v1163, 16
      %v1296 = vrot.slane %v1294, 4
      %v1297 = vor.u32 %v1296, %v1292
      %v1298 = vrot.slane %v1297, 4
      %v1300 = vshll.u32 %v1192, 16
      %v1302 = vrot.slane %v1300, 5
      %v1303 = vsel %vm1207, %v1298, %v1302
      %v1305 = vshrl.u32 %v1164, 16
      %v1307 = vrot.slane %v1305, 4
      %v1308 = vshll.u32 %v1164, 16
      %v1310 = vrot.slane %v1308, 5
      %v1311 = vor.u32 %v1307, %v1310
      %v1312 = vrot.slane %v1311, 4
      %v1314 = vshll.u32 %v1165, 16
      %v1316 = vrot.slane %v1314, 5
      %v1317 = vsel %vm1207, %v1312, %v1316
      %v1318 = vshrl.u32 %v1165, 16
      %v1320 = vrot.slane %v1318, 4
      %v1321 = vor.u32 %v1320, %v1316
      %v1322 = vrot.slane %v1321, 4
      %v1324 = vshll.u32 %v1193, 16
      %v1326 = vrot.slane %v1324, 5
      %v1327 = vsel %vm1207, %v1322, %v1326
      %v1329 = vshrl.u32 %v1166, 16
      %v1331 = vrot.slane %v1329, 4
      %v1332 = vshll.u32 %v1166, 16
      %v1334 = vrot.slane %v1332, 5
      %v1335 = vor.u32 %v1331, %v1334
      %v1336 = vrot.slane %v1335, 4
      %v1338 = vshll.u32 %v1167, 16
      %v1340 = vrot.slane %v1338, 5
      %v1341 = vsel %vm1207, %v1336, %v1340
      %v1342 = vshrl.u32 %v1167, 16
      %v1344 = vrot.slane %v1342, 4
      %v1345 = vor.u32 %v1344, %v1340
      %v1346 = vrot.slane %v1345, 4
      %v1348 = vshll.u32 %v1194, 16
      %v1350 = vrot.slane %v1348, 5
      %v1351 = vsel %vm1207, %v1346, %v1350
      %v1353 = vshrl.u32 %v1168, 16
      %v1355 = vrot.slane %v1353, 4
      %v1356 = vshll.u32 %v1168, 16
      %v1358 = vrot.slane %v1356, 5
      %v1359 = vor.u32 %v1355, %v1358
      %v1360 = vrot.slane %v1359, 4
      %v1362 = vshll.u32 %v1169, 16
      %v1364 = vrot.slane %v1362, 5
      %v1365 = vsel %vm1207, %v1360, %v1364
      %v1366 = vshrl.u32 %v1169, 16
      %v1368 = vrot.slane %v1366, 4
      %v1369 = vor.u32 %v1368, %v1364
      %v1370 = vrot.slane %v1369, 4
      %v1372 = vshll.u32 %v1195, 16
      %v1374 = vrot.slane %v1372, 5
      %v1375 = vsel %vm1207, %v1370, %v1374
      %v1377 = vshrl.u32 %v1170, 16
      %v1379 = vrot.slane %v1377, 4
      %v1380 = vshll.u32 %v1170, 16
      %v1382 = vrot.slane %v1380, 5
      %v1383 = vor.u32 %v1379, %v1382
      %v1384 = vrot.slane %v1383, 4
      %v1386 = vshll.u32 %v1171, 16
      %v1388 = vrot.slane %v1386, 5
      %v1389 = vsel %vm1207, %v1384, %v1388
      %v1390 = vshrl.u32 %v1171, 16
      %v1392 = vrot.slane %v1390, 4
      %v1393 = vor.u32 %v1392, %v1388
      %v1394 = vrot.slane %v1393, 4
      %v1396 = vshll.u32 %v1196, 16
      %v1398 = vrot.slane %v1396, 5
      %v1399 = vsel %vm1207, %v1394, %v1398
      %v1401 = vshrl.u32 %v1172, 16
      %v1403 = vrot.slane %v1401, 4
      %v1404 = vshll.u32 %v1172, 16
      %v1406 = vrot.slane %v1404, 5
      %v1407 = vor.u32 %v1403, %v1406
      %v1408 = vrot.slane %v1407, 4
      %v1410 = vshll.u32 %v1173, 16
      %v1412 = vrot.slane %v1410, 5
      %v1413 = vsel %vm1207, %v1408, %v1412
      %v1414 = vshrl.u32 %v1173, 16
      %v1416 = vrot.slane %v1414, 4
      %v1417 = vor.u32 %v1416, %v1412
      %v1418 = vrot.slane %v1417, 4
      %v1420 = vshll.u32 %v1197, 16
      %v1422 = vrot.slane %v1420, 5
      %v1423 = vsel %vm1207, %v1418, %v1422
      %v1425 = vshrl.u32 %v1174, 16
      %v1427 = vrot.slane %v1425, 4
      %v1428 = vshll.u32 %v1174, 16
      %v1430 = vrot.slane %v1428, 5
      %v1431 = vor.u32 %v1427, %v1430
      %v1432 = vrot.slane %v1431, 4
      %v1434 = vshll.u32 %v1175, 16
      %v1436 = vrot.slane %v1434, 5
      %v1437 = vsel %vm1207, %v1432, %v1436
      %v1438 = vshrl.u32 %v1175, 16
      %v1440 = vrot.slane %v1438, 4
      %v1441 = vor.u32 %v1440, %v1436
      %v1442 = vrot.slane %v1441, 4
      %v1444 = vshll.u32 %v1198, 16
      %v1446 = vrot.slane %v1444, 5
      %v1447 = vsel %vm1207, %v1442, %v1446
      %v1449 = vshrl.u32 %v1176, 16
      %v1451 = vrot.slane %v1449, 4
      %v1452 = vshll.u32 %v1176, 16
      %v1454 = vrot.slane %v1452, 5
      %v1455 = vor.u32 %v1451, %v1454
      %v1456 = vrot.slane %v1455, 4
      %v1458 = vshll.u32 %v1177, 16
      %v1460 = vrot.slane %v1458, 5
      %v1461 = vsel %vm1207, %v1456, %v1460
      %v1462 = vshrl.u32 %v1177, 16
      %v1464 = vrot.slane %v1462, 4
      %v1465 = vor.u32 %v1464, %v1460
      %v1466 = vrot.slane %v1465, 4
      %v1468 = vshll.u32 %v1199, 16
      %v1470 = vrot.slane %v1468, 5
      %v1471 = vsel %vm1207, %v1466, %v1470
      %v1473 = vshrl.u32 %v1178, 16
      %v1475 = vrot.slane %v1473, 4
      %v1476 = vshll.u32 %v1178, 16
      %v1478 = vrot.slane %v1476, 5
      %v1479 = vor.u32 %v1475, %v1478
      %v1480 = vrot.slane %v1479, 4
      %v1482 = vshll.u32 %v1179, 16
      %v1484 = vrot.slane %v1482, 5
      %v1485 = vsel %vm1207, %v1480, %v1484
      %v1486 = vshrl.u32 %v1179, 16
      %v1488 = vrot.slane %v1486, 4
      %v1489 = vor.u32 %v1488, %v1484
      %v1490 = vrot.slane %v1489, 4
      %v1492 = vshll.u32 %v1200, 16
      %v1494 = vrot.slane %v1492, 5
      %v1495 = vsel %vm1207, %v1490, %v1494
      %v1497 = vshrl.u32 %v1180, 16
      %v1499 = vrot.slane %v1497, 4
      %v1500 = vshll.u32 %v1180, 16
      %v1502 = vrot.slane %v1500, 5
      %v1503 = vor.u32 %v1499, %v1502
      %v1504 = vrot.slane %v1503, 4
      %v1506 = vshll.u32 %v1181, 16
      %v1508 = vrot.slane %v1506, 5
      %v1509 = vsel %vm1207, %v1504, %v1508
      %v1510 = vshrl.u32 %v1181, 16
      %v1512 = vrot.slane %v1510, 4
      %v1513 = vor.u32 %v1512, %v1508
      %v1514 = vrot.slane %v1513, 4
      %v1516 = vshll.u32 %v1201, 16
      %v1518 = vrot.slane %v1516, 5
      %v1519 = vsel %vm1207, %v1514, %v1518
      %v1521 = vshrl.u32 %v1182, 16
      %v1523 = vrot.slane %v1521, 4
      %v1524 = vshll.u32 %v1182, 16
      %v1526 = vrot.slane %v1524, 5
      %v1527 = vor.u32 %v1523, %v1526
      %v1528 = vrot.slane %v1527, 4
      %v1530 = vshll.u32 %v1183, 16
      %v1532 = vrot.slane %v1530, 5
      %v1533 = vsel %vm1207, %v1528, %v1532
      %v1534 = vshrl.u32 %v1183, 16
      %v1536 = vrot.slane %v1534, 4
      %v1537 = vor.u32 %v1536, %v1532
      %v1538 = vrot.slane %v1537, 4
      %v1540 = vshll.u32 %v1202, 16
      %v1542 = vrot.slane %v1540, 5
      %v1543 = vsel %vm1207, %v1538, %v1542
      %v1545 = vshrl.u32 %v1184, 16
      %v1547 = vrot.slane %v1545, 4
      %v1548 = vshll.u32 %v1184, 16
      %v1550 = vrot.slane %v1548, 5
      %v1551 = vor.u32 %v1547, %v1550
      %v1552 = vrot.slane %v1551, 4
      %v1554 = vshll.u32 %v1185, 16
      %v1556 = vrot.slane %v1554, 5
      %v1557 = vsel %vm1207, %v1552, %v1556
      %v1558 = vshrl.u32 %v1185, 16
      %v1560 = vrot.slane %v1558, 4
      %v1561 = vor.u32 %v1560, %v1556
      %v1562 = vrot.slane %v1561, 4
      %v1564 = vshll.u32 %v1203, 16
      %v1566 = vrot.slane %v1564, 5
      %v1567 = vsel %vm1207, %v1562, %v1566
      %v1569 = vshrl.u32 %v1186, 16
      %v1571 = vrot.slane %v1569, 4
      %v1572 = vshll.u32 %v1186, 16
      %v1574 = vrot.slane %v1572, 5
      %v1575 = vor.u32 %v1571, %v1574
      %v1576 = vrot.slane %v1575, 4
      %v1578 = vshll.u32 %v1187, 16
      %v1580 = vrot.slane %v1578, 5
      %v1581 = vsel %vm1207, %v1576, %v1580
      %v1582 = vshrl.u32 %v1187, 16
      %v1584 = vrot.slane %v1582, 4
      %v1585 = vor.u32 %v1584, %v1580
      %v1586 = vrot.slane %v1585, 4
      %v1588 = vshll.u32 %v1204, 16
      %v1590 = vrot.slane %v1588, 5
      %v1591 = vsel %vm1207, %v1586, %v1590
      %s1592 = scalar_lea.vmem %s3, 2
      %v1593 = vld [vmem:[%s1592] sm:$0x3]
      %v1594 = vunpack.c.l.b16 %v1221
      %v1595 = vunpack.c.l.b16 %v1231
      %v1596 = vunpack.c.l.b16 %v1245
      %v1597 = vunpack.c.l.b16 %v1255
      %v1598 = vunpack.c.l.b16 %v1269
      %v1599 = vunpack.c.l.b16 %v1279
      %v1600 = vunpack.c.l.b16 %v1293
      %v1601 = vunpack.c.l.b16 %v1303
      %v1602 = vunpack.c.l.b16 %v1317
      %v1603 = vunpack.c.l.b16 %v1327
      %v1604 = vunpack.c.l.b16 %v1341
      %v1605 = vunpack.c.l.b16 %v1351
      %v1606 = vunpack.c.l.b16 %v1365
      %v1607 = vunpack.c.l.b16 %v1375
      %v1608 = vunpack.c.l.b16 %v1389
      %v1609 = vunpack.c.l.b16 %v1399
      %v1610 = vunpack.c.l.b16 %v1413
      %v1611 = vunpack.c.l.b16 %v1423
      %v1612 = vunpack.c.l.b16 %v1437
      %v1613 = vunpack.c.l.b16 %v1447
      %v1614 = vunpack.c.l.b16 %v1461
      %v1615 = vunpack.c.l.b16 %v1471
      %v1616 = vunpack.c.l.b16 %v1485
      %v1617 = vunpack.c.l.b16 %v1495
      %v1618 = vunpack.c.l.b16 %v1509
      %v1619 = vunpack.c.l.b16 %v1519
      %v1620 = vunpack.c.l.b16 %v1533
      %v1621 = vunpack.c.l.b16 %v1543
      %v1622 = vunpack.c.l.b16 %v1557
      %v1623 = vunpack.c.l.b16 %v1567
      %v1624 = vunpack.c.l.b16 %v1581
      %v1625 = vunpack.c.l.b16 %v1591
      %v1626 = vpack.c.b16 %v1595, %v1594
      %v1627 = vpack.c.b16 %v1597, %v1596
      %v1628 = vpack.c.b16 %v1599, %v1598
      %v1629 = vpack.c.b16 %v1601, %v1600
      %v1630 = vpack.c.b16 %v1603, %v1602
      %v1631 = vpack.c.b16 %v1605, %v1604
      %v1632 = vpack.c.b16 %v1607, %v1606
      %v1633 = vpack.c.b16 %v1609, %v1608
      %v1634 = vpack.c.b16 %v1611, %v1610
      %v1635 = vpack.c.b16 %v1613, %v1612
      %v1636 = vpack.c.b16 %v1615, %v1614
      %v1637 = vpack.c.b16 %v1617, %v1616
      %v1638 = vpack.c.b16 %v1619, %v1618
      %v1639 = vpack.c.b16 %v1621, %v1620
      %v1640 = vpack.c.b16 %v1623, %v1622
      %v1641 = vpack.c.b16 %v1625, %v1624
      %vm1642 = vcmask 31744
      %v1644 = vsel %vm1642, %v1626, 0
      %v1647 = vsel %vm1642, %v1627, 0
      %v1650 = vsel %vm1642, %v1628, 0
      %v1653 = vsel %vm1642, %v1629, 0
      %v1656 = vsel %vm1642, %v1630, 0
      %v1659 = vsel %vm1642, %v1631, 0
      %v1662 = vsel %vm1642, %v1632, 0
      %v1665 = vsel %vm1642, %v1633, 0
      %v1668 = vsel %vm1642, %v1634, 0
      %v1671 = vsel %vm1642, %v1635, 0
      %v1674 = vsel %vm1642, %v1636, 0
      %v1677 = vsel %vm1642, %v1637, 0
      %v1680 = vsel %vm1642, %v1638, 0
      %v1683 = vsel %vm1642, %v1639, 0
      %v1686 = vsel %vm1642, %v1640, 0
      %v1689 = vsel %vm1642, %v1641, 0
      %vm1691 = vcmask 1041408
      %v1693 = vsel %vm1691, %v1593, 0
      %1695 = vmatpush.bf16.msra.mxu0 0
      %1696 = vmatpush.bf16.msra.mxu0 0
      %1697 = vmatpush.bf16.msra.mxu0 0
      %1698 = vmatpush.bf16.msra.mxu0 0
      %1699 = vmatpush.bf16.msra.mxu0 0
      %1700 = vmatpush.bf16.msra.mxu0 0
      %1701 = vmatpush.bf16.msra.mxu0 0
      %1702 = vmatpush.bf16.msra.mxu0 %v1693
      %1703 = vmatmul.bf16.gmra.mxu0 %v1644
      %v1704 = vpop.f32.mrf.mxu0
      %v1705 = vadd.f32 0.0, %v1704
      %v1706 = vpop.f32.mrf.mxu0
      %v1707 = vadd.f32 0.0, %v1706
      %1708 = vmatmul.bf16.gmra.mxu0 %v1647
      %v1709 = vpop.f32.mrf.mxu0
      %v1710 = vadd.f32 0.0, %v1709
      %v1711 = vpop.f32.mrf.mxu0
      %v1712 = vadd.f32 0.0, %v1711
      %1713 = vmatmul.bf16.gmra.mxu0 %v1650
      %v1714 = vpop.f32.mrf.mxu0
      %v1715 = vadd.f32 0.0, %v1714
      %v1716 = vpop.f32.mrf.mxu0
      %v1717 = vadd.f32 0.0, %v1716
      %1718 = vmatmul.bf16.gmra.mxu0 %v1653
      %v1719 = vpop.f32.mrf.mxu0
      %v1720 = vadd.f32 0.0, %v1719
      %v1721 = vpop.f32.mrf.mxu0
      %v1722 = vadd.f32 0.0, %v1721
      %1723 = vmatmul.bf16.gmra.mxu0 %v1656
      %v1724 = vpop.f32.mrf.mxu0
      %v1725 = vadd.f32 0.0, %v1724
      %v1726 = vpop.f32.mrf.mxu0
      %v1727 = vadd.f32 0.0, %v1726
      %1728 = vmatmul.bf16.gmra.mxu0 %v1659
      %v1729 = vpop.f32.mrf.mxu0
      %v1730 = vadd.f32 0.0, %v1729
      %v1731 = vpop.f32.mrf.mxu0
      %v1732 = vadd.f32 0.0, %v1731
      %1733 = vmatmul.bf16.gmra.mxu0 %v1662
      %v1734 = vpop.f32.mrf.mxu0
      %v1735 = vadd.f32 0.0, %v1734
      %v1736 = vpop.f32.mrf.mxu0
      %v1737 = vadd.f32 0.0, %v1736
      %1738 = vmatmul.bf16.gmra.mxu0 %v1665
      %v1739 = vpop.f32.mrf.mxu0
      %v1740 = vadd.f32 0.0, %v1739
      %v1741 = vpop.f32.mrf.mxu0
      %v1742 = vadd.f32 0.0, %v1741
      %1743 = vmatmul.bf16.gmra.mxu0 %v1668
      %v1744 = vpop.f32.mrf.mxu0
      %v1745 = vadd.f32 0.0, %v1744
      %v1746 = vpop.f32.mrf.mxu0
      %v1747 = vadd.f32 0.0, %v1746
      %1748 = vmatmul.bf16.gmra.mxu0 %v1671
      %v1749 = vpop.f32.mrf.mxu0
      %v1750 = vadd.f32 0.0, %v1749
      %v1751 = vpop.f32.mrf.mxu0
      %v1752 = vadd.f32 0.0, %v1751
      %1753 = vmatmul.bf16.gmra.mxu0 %v1674
      %v1754 = vpop.f32.mrf.mxu0
      %v1755 = vadd.f32 0.0, %v1754
      %v1756 = vpop.f32.mrf.mxu0
      %v1757 = vadd.f32 0.0, %v1756
      %1758 = vmatmul.bf16.gmra.mxu0 %v1677
      %v1759 = vpop.f32.mrf.mxu0
      %v1760 = vadd.f32 0.0, %v1759
      %v1761 = vpop.f32.mrf.mxu0
      %v1762 = vadd.f32 0.0, %v1761
      %1763 = vmatmul.bf16.gmra.mxu0 %v1680
      %v1764 = vpop.f32.mrf.mxu0
      %v1765 = vadd.f32 0.0, %v1764
      %v1766 = vpop.f32.mrf.mxu0
      %v1767 = vadd.f32 0.0, %v1766
      %1768 = vmatmul.bf16.gmra.mxu0 %v1683
      %v1769 = vpop.f32.mrf.mxu0
      %v1770 = vadd.f32 0.0, %v1769
      %v1771 = vpop.f32.mrf.mxu0
      %v1772 = vadd.f32 0.0, %v1771
      %1773 = vmatmul.bf16.gmra.mxu0 %v1686
      %v1774 = vpop.f32.mrf.mxu0
      %v1775 = vadd.f32 0.0, %v1774
      %v1776 = vpop.f32.mrf.mxu0
      %v1777 = vadd.f32 0.0, %v1776
      %1778 = vmatmul.bf16.gmra.mxu0 %v1689
      %v1779 = vpop.f32.mrf.mxu0
      %v1780 = vadd.f32 0.0, %v1779
      %v1781 = vpop.f32.mrf.mxu0
      %v1782 = vadd.f32 0.0, %v1781
      %1783 = vdwg.mxu0
      %v1816 = vunpack.c.l.b16 %v1156
      %v1817 = vunpack.c.l.b16 %v1157
      %v1818 = vunpack.c.l.b16 %v1158
      %v1819 = vunpack.c.l.b16 %v1159
      %v1820 = vunpack.c.l.b16 %v1160
      %v1821 = vunpack.c.l.b16 %v1161
      %v1822 = vunpack.c.l.b16 %v1162
      %v1823 = vunpack.c.l.b16 %v1163
      %v1824 = vunpack.c.l.b16 %v1164
      %v1825 = vunpack.c.l.b16 %v1165
      %v1826 = vunpack.c.l.b16 %v1166
      %v1827 = vunpack.c.l.b16 %v1167
      %v1828 = vunpack.c.l.b16 %v1168
      %v1829 = vunpack.c.l.b16 %v1169
      %v1830 = vunpack.c.l.b16 %v1170
      %v1831 = vunpack.c.l.b16 %v1171
      %v1832 = vunpack.c.l.b16 %v1172
      %v1833 = vunpack.c.l.b16 %v1173
      %v1834 = vunpack.c.l.b16 %v1174
      %v1835 = vunpack.c.l.b16 %v1175
      %v1836 = vunpack.c.l.b16 %v1176
      %v1837 = vunpack.c.l.b16 %v1177
      %v1838 = vunpack.c.l.b16 %v1178
      %v1839 = vunpack.c.l.b16 %v1179
      %v1840 = vunpack.c.l.b16 %v1180
      %v1841 = vunpack.c.l.b16 %v1181
      %v1842 = vunpack.c.l.b16 %v1182
      %v1843 = vunpack.c.l.b16 %v1183
      %v1844 = vunpack.c.l.b16 %v1184
      %v1845 = vunpack.c.l.b16 %v1185
      %v1846 = vunpack.c.l.b16 %v1186
      %v1847 = vunpack.c.l.b16 %v1187
      %v1848 = vpack.c.b16 %v1817, %v1816
      %v1849 = vpack.c.b16 %v1819, %v1818
      %v1850 = vpack.c.b16 %v1821, %v1820
      %v1851 = vpack.c.b16 %v1823, %v1822
      %v1852 = vpack.c.b16 %v1825, %v1824
      %v1853 = vpack.c.b16 %v1827, %v1826
      %v1854 = vpack.c.b16 %v1829, %v1828
      %v1855 = vpack.c.b16 %v1831, %v1830
      %v1856 = vpack.c.b16 %v1833, %v1832
      %v1857 = vpack.c.b16 %v1835, %v1834
      %v1858 = vpack.c.b16 %v1837, %v1836
      %v1859 = vpack.c.b16 %v1839, %v1838
      %v1860 = vpack.c.b16 %v1841, %v1840
      %v1861 = vpack.c.b16 %v1843, %v1842
      %v1862 = vpack.c.b16 %v1845, %v1844
      %v1863 = vpack.c.b16 %v1847, %v1846
      %v1865 = vsel %vm1642, %v1848, 0
      %v1868 = vsel %vm1642, %v1849, 0
      %v1871 = vsel %vm1642, %v1850, 0
      %v1874 = vsel %vm1642, %v1851, 0
      %v1877 = vsel %vm1642, %v1852, 0
      %v1880 = vsel %vm1642, %v1853, 0
      %v1883 = vsel %vm1642, %v1854, 0
      %v1886 = vsel %vm1642, %v1855, 0
      %v1889 = vsel %vm1642, %v1856, 0
      %v1892 = vsel %vm1642, %v1857, 0
      %v1895 = vsel %vm1642, %v1858, 0
      %v1898 = vsel %vm1642, %v1859, 0
      %v1901 = vsel %vm1642, %v1860, 0
      %v1904 = vsel %vm1642, %v1861, 0
      %v1907 = vsel %vm1642, %v1862, 0
      %v1910 = vsel %vm1642, %v1863, 0
      %v1913 = vsel %vm1691, %v1188, 0
      %1915 = vmatpush.bf16.msra.mxu0 0
      %1916 = vmatpush.bf16.msra.mxu0 0
      %1917 = vmatpush.bf16.msra.mxu0 0
      %1918 = vmatpush.bf16.msra.mxu0 0
      %1919 = vmatpush.bf16.msra.mxu0 0
      %1920 = vmatpush.bf16.msra.mxu0 0
      %1921 = vmatpush.bf16.msra.mxu0 0
      %1922 = vmatpush.bf16.msra.mxu0 %v1913
      %1923 = vmatmul.bf16.gmra.mxu0 %v1865
      %v1924 = vpop.f32.mrf.mxu0
      %v1925 = vadd.f32 %v1705, %v1924
      %v1926 = vpop.f32.mrf.mxu0
      %v1927 = vadd.f32 %v1707, %v1926
      %1928 = vmatmul.bf16.gmra.mxu0 %v1868
      %v1929 = vpop.f32.mrf.mxu0
      %v1930 = vadd.f32 %v1710, %v1929
      %v1931 = vpop.f32.mrf.mxu0
      %v1932 = vadd.f32 %v1712, %v1931
      %1933 = vmatmul.bf16.gmra.mxu0 %v1871
      %v1934 = vpop.f32.mrf.mxu0
      %v1935 = vadd.f32 %v1715, %v1934
      %v1936 = vpop.f32.mrf.mxu0
      %v1937 = vadd.f32 %v1717, %v1936
      %1938 = vmatmul.bf16.gmra.mxu0 %v1874
      %v1939 = vpop.f32.mrf.mxu0
      %v1940 = vadd.f32 %v1720, %v1939
      %v1941 = vpop.f32.mrf.mxu0
      %v1942 = vadd.f32 %v1722, %v1941
      %1943 = vmatmul.bf16.gmra.mxu0 %v1877
      %v1944 = vpop.f32.mrf.mxu0
      %v1945 = vadd.f32 %v1725, %v1944
      %v1946 = vpop.f32.mrf.mxu0
      %v1947 = vadd.f32 %v1727, %v1946
      %1948 = vmatmul.bf16.gmra.mxu0 %v1880
      %v1949 = vpop.f32.mrf.mxu0
      %v1950 = vadd.f32 %v1730, %v1949
      %v1951 = vpop.f32.mrf.mxu0
      %v1952 = vadd.f32 %v1732, %v1951
      %1953 = vmatmul.bf16.gmra.mxu0 %v1883
      %v1954 = vpop.f32.mrf.mxu0
      %v1955 = vadd.f32 %v1735, %v1954
      %v1956 = vpop.f32.mrf.mxu0
      %v1957 = vadd.f32 %v1737, %v1956
      %1958 = vmatmul.bf16.gmra.mxu0 %v1886
      %v1959 = vpop.f32.mrf.mxu0
      %v1960 = vadd.f32 %v1740, %v1959
      %v1961 = vpop.f32.mrf.mxu0
      %v1962 = vadd.f32 %v1742, %v1961
      %1963 = vmatmul.bf16.gmra.mxu0 %v1889
      %v1964 = vpop.f32.mrf.mxu0
      %v1965 = vadd.f32 %v1745, %v1964
      %v1966 = vpop.f32.mrf.mxu0
      %v1967 = vadd.f32 %v1747, %v1966
      %1968 = vmatmul.bf16.gmra.mxu0 %v1892
      %v1969 = vpop.f32.mrf.mxu0
      %v1970 = vadd.f32 %v1750, %v1969
      %v1971 = vpop.f32.mrf.mxu0
      %v1972 = vadd.f32 %v1752, %v1971
      %1973 = vmatmul.bf16.gmra.mxu0 %v1895
      %v1974 = vpop.f32.mrf.mxu0
      %v1975 = vadd.f32 %v1755, %v1974
      %v1976 = vpop.f32.mrf.mxu0
      %v1977 = vadd.f32 %v1757, %v1976
      %1978 = vmatmul.bf16.gmra.mxu0 %v1898
      %v1979 = vpop.f32.mrf.mxu0
      %v1980 = vadd.f32 %v1760, %v1979
      %v1981 = vpop.f32.mrf.mxu0
      %v1982 = vadd.f32 %v1762, %v1981
      %1983 = vmatmul.bf16.gmra.mxu0 %v1901
      %v1984 = vpop.f32.mrf.mxu0
      %v1985 = vadd.f32 %v1765, %v1984
      %v1986 = vpop.f32.mrf.mxu0
      %v1987 = vadd.f32 %v1767, %v1986
      %1988 = vmatmul.bf16.gmra.mxu0 %v1904
      %v1989 = vpop.f32.mrf.mxu0
      %v1990 = vadd.f32 %v1770, %v1989
      %v1991 = vpop.f32.mrf.mxu0
      %v1992 = vadd.f32 %v1772, %v1991
      %1993 = vmatmul.bf16.gmra.mxu0 %v1907
      %v1994 = vpop.f32.mrf.mxu0
      %v1995 = vadd.f32 %v1775, %v1994
      %v1996 = vpop.f32.mrf.mxu0
      %v1997 = vadd.f32 %v1777, %v1996
      %1998 = vmatmul.bf16.gmra.mxu0 %v1910
      %v1999 = vpop.f32.mrf.mxu0
      %v2000 = vadd.f32 %v1780, %v1999
      %v2001 = vpop.f32.mrf.mxu0
      %v2002 = vadd.f32 %v1782, %v2001
      %2003 = vdwg.mxu0
      %v2004 = vld [vmem:[#allocation2] sm:$0xe]
      %v2005 = vld [vmem:[#allocation2 + $0xc] sm:$0xe]
      %v2006 = vld [vmem:[#allocation2 + $0x18] sm:$0xe]
      %v2007 = vld [vmem:[#allocation2 + $0x24] sm:$0xe]
      %v2008 = vld [vmem:[#allocation2 + $0x30] sm:$0xe]
      %v2009 = vld [vmem:[#allocation2 + $0x3c] sm:$0xe]
      %v2010 = vld [vmem:[#allocation2 + $0x48] sm:$0xe]
      %v2011 = vld [vmem:[#allocation2 + $0x54] sm:$0xe]
      %v2012 = vld [vmem:[#allocation2 + $0x60] sm:$0xe]
      %v2013 = vld [vmem:[#allocation2 + $0x6c] sm:$0xe]
      %v2014 = vld [vmem:[#allocation2 + $0x78] sm:$0xe]
      %v2015 = vld [vmem:[#allocation2 + $0x84] sm:$0xe]
      %v2016 = vld [vmem:[#allocation2 + $0x90] sm:$0xe]
      %v2017 = vld [vmem:[#allocation2 + $0x9c] sm:$0xe]
      %v2018 = vld [vmem:[#allocation2 + $0xa8] sm:$0xe]
      %v2019 = vld [vmem:[#allocation2 + $0xb4] sm:$0xe]
      %vm2052 = vcmask 1042432
      %vm2053 = vcmask 1046532
      %vm2054 = vmor %vm2052, %vm2053
      %v2055 = vrot.slane %v2004, 5
      %v2056 = vrot.slane %v2055, 4
      %v2057 = vrot.slane %v1157, 5
      %v2058 = vsel %vm2054, %v2056, %v2057
      %v2059 = vrot.slane %v2057, 4
      %v2060 = vrot.slane %v1189, 5
      %v2061 = vsel %vm2054, %v2059, %v2060
      %v2062 = vrot.slane %v2005, 5
      %v2063 = vrot.slane %v2062, 4
      %v2064 = vrot.slane %v1159, 5
      %v2065 = vsel %vm2054, %v2063, %v2064
      %v2066 = vrot.slane %v2064, 4
      %v2067 = vrot.slane %v1190, 5
      %v2068 = vsel %vm2054, %v2066, %v2067
      %v2069 = vrot.slane %v2006, 5
      %v2070 = vrot.slane %v2069, 4
      %v2071 = vrot.slane %v1161, 5
      %v2072 = vsel %vm2054, %v2070, %v2071
      %v2073 = vrot.slane %v2071, 4
      %v2074 = vrot.slane %v1191, 5
      %v2075 = vsel %vm2054, %v2073, %v2074
      %v2076 = vrot.slane %v2007, 5
      %v2077 = vrot.slane %v2076, 4
      %v2078 = vrot.slane %v1163, 5
      %v2079 = vsel %vm2054, %v2077, %v2078
      %v2080 = vrot.slane %v2078, 4
      %v2081 = vrot.slane %v1192, 5
      %v2082 = vsel %vm2054, %v2080, %v2081
      %v2083 = vrot.slane %v2008, 5
      %v2084 = vrot.slane %v2083, 4
      %v2085 = vrot.slane %v1165, 5
      %v2086 = vsel %vm2054, %v2084, %v2085
      %v2087 = vrot.slane %v2085, 4
      %v2088 = vrot.slane %v1193, 5
      %v2089 = vsel %vm2054, %v2087, %v2088
      %v2090 = vrot.slane %v2009, 5
      %v2091 = vrot.slane %v2090, 4
      %v2092 = vrot.slane %v1167, 5
      %v2093 = vsel %vm2054, %v2091, %v2092
      %v2094 = vrot.slane %v2092, 4
      %v2095 = vrot.slane %v1194, 5
      %v2096 = vsel %vm2054, %v2094, %v2095
      %v2097 = vrot.slane %v2010, 5
      %v2098 = vrot.slane %v2097, 4
      %v2099 = vrot.slane %v1169, 5
      %v2100 = vsel %vm2054, %v2098, %v2099
      %v2101 = vrot.slane %v2099, 4
      %v2102 = vrot.slane %v1195, 5
      %v2103 = vsel %vm2054, %v2101, %v2102
      %v2104 = vrot.slane %v2011, 5
      %v2105 = vrot.slane %v2104, 4
      %v2106 = vrot.slane %v1171, 5
      %v2107 = vsel %vm2054, %v2105, %v2106
      %v2108 = vrot.slane %v2106, 4
      %v2109 = vrot.slane %v1196, 5
      %v2110 = vsel %vm2054, %v2108, %v2109
      %v2111 = vrot.slane %v2012, 5
      %v2112 = vrot.slane %v2111, 4
      %v2113 = vrot.slane %v1173, 5
      %v2114 = vsel %vm2054, %v2112, %v2113
      %v2115 = vrot.slane %v2113, 4
      %v2116 = vrot.slane %v1197, 5
      %v2117 = vsel %vm2054, %v2115, %v2116
      %v2118 = vrot.slane %v2013, 5
      %v2119 = vrot.slane %v2118, 4
      %v2120 = vrot.slane %v1175, 5
      %v2121 = vsel %vm2054, %v2119, %v2120
      %v2122 = vrot.slane %v2120, 4
      %v2123 = vrot.slane %v1198, 5
      %v2124 = vsel %vm2054, %v2122, %v2123
      %v2125 = vrot.slane %v2014, 5
      %v2126 = vrot.slane %v2125, 4
      %v2127 = vrot.slane %v1177, 5
      %v2128 = vsel %vm2054, %v2126, %v2127
      %v2129 = vrot.slane %v2127, 4
      %v2130 = vrot.slane %v1199, 5
      %v2131 = vsel %vm2054, %v2129, %v2130
      %v2132 = vrot.slane %v2015, 5
      %v2133 = vrot.slane %v2132, 4
      %v2134 = vrot.slane %v1179, 5
      %v2135 = vsel %vm2054, %v2133, %v2134
      %v2136 = vrot.slane %v2134, 4
      %v2137 = vrot.slane %v1200, 5
      %v2138 = vsel %vm2054, %v2136, %v2137
      %v2139 = vrot.slane %v2016, 5
      %v2140 = vrot.slane %v2139, 4
      %v2141 = vrot.slane %v1181, 5
      %v2142 = vsel %vm2054, %v2140, %v2141
      %v2143 = vrot.slane %v2141, 4
      %v2144 = vrot.slane %v1201, 5
      %v2145 = vsel %vm2054, %v2143, %v2144
      %v2146 = vrot.slane %v2017, 5
      %v2147 = vrot.slane %v2146, 4
      %v2148 = vrot.slane %v1183, 5
      %v2149 = vsel %vm2054, %v2147, %v2148
      %v2150 = vrot.slane %v2148, 4
      %v2151 = vrot.slane %v1202, 5
      %v2152 = vsel %vm2054, %v2150, %v2151
      %v2153 = vrot.slane %v2018, 5
      %v2154 = vrot.slane %v2153, 4
      %v2155 = vrot.slane %v1185, 5
      %v2156 = vsel %vm2054, %v2154, %v2155
      %v2157 = vrot.slane %v2155, 4
      %v2158 = vrot.slane %v1203, 5
      %v2159 = vsel %vm2054, %v2157, %v2158
      %v2160 = vrot.slane %v2019, 5
      %v2161 = vrot.slane %v2160, 4
      %v2162 = vrot.slane %v1187, 5
      %v2163 = vsel %vm2054, %v2161, %v2162
      %v2164 = vrot.slane %v2162, 4
      %v2165 = vrot.slane %v1204, 5
      %v2166 = vsel %vm2054, %v2164, %v2165
      %s2167 = scalar_lea.vmem %s3, 4
      %v2168 = vld [vmem:[%s2167] sm:$0x3]
      %v2169 = vunpack.c.l.b16 %v2058
      %v2170 = vunpack.c.l.b16 %v2061
      %v2171 = vunpack.c.l.b16 %v2065
      %v2172 = vunpack.c.l.b16 %v2068
      %v2173 = vunpack.c.l.b16 %v2072
      %v2174 = vunpack.c.l.b16 %v2075
      %v2175 = vunpack.c.l.b16 %v2079
      %v2176 = vunpack.c.l.b16 %v2082
      %v2177 = vunpack.c.l.b16 %v2086
      %v2178 = vunpack.c.l.b16 %v2089
      %v2179 = vunpack.c.l.b16 %v2093
      %v2180 = vunpack.c.l.b16 %v2096
      %v2181 = vunpack.c.l.b16 %v2100
      %v2182 = vunpack.c.l.b16 %v2103
      %v2183 = vunpack.c.l.b16 %v2107
      %v2184 = vunpack.c.l.b16 %v2110
      %v2185 = vunpack.c.l.b16 %v2114
      %v2186 = vunpack.c.l.b16 %v2117
      %v2187 = vunpack.c.l.b16 %v2121
      %v2188 = vunpack.c.l.b16 %v2124
      %v2189 = vunpack.c.l.b16 %v2128
      %v2190 = vunpack.c.l.b16 %v2131
      %v2191 = vunpack.c.l.b16 %v2135
      %v2192 = vunpack.c.l.b16 %v2138
      %v2193 = vunpack.c.l.b16 %v2142
      %v2194 = vunpack.c.l.b16 %v2145
      %v2195 = vunpack.c.l.b16 %v2149
      %v2196 = vunpack.c.l.b16 %v2152
      %v2197 = vunpack.c.l.b16 %v2156
      %v2198 = vunpack.c.l.b16 %v2159
      %v2199 = vunpack.c.l.b16 %v2163
      %v2200 = vunpack.c.l.b16 %v2166
      %v2201 = vpack.c.b16 %v2170, %v2169
      %v2202 = vpack.c.b16 %v2172, %v2171
      %v2203 = vpack.c.b16 %v2174, %v2173
      %v2204 = vpack.c.b16 %v2176, %v2175
      %v2205 = vpack.c.b16 %v2178, %v2177
      %v2206 = vpack.c.b16 %v2180, %v2179
      %v2207 = vpack.c.b16 %v2182, %v2181
      %v2208 = vpack.c.b16 %v2184, %v2183
      %v2209 = vpack.c.b16 %v2186, %v2185
      %v2210 = vpack.c.b16 %v2188, %v2187
      %v2211 = vpack.c.b16 %v2190, %v2189
      %v2212 = vpack.c.b16 %v2192, %v2191
      %v2213 = vpack.c.b16 %v2194, %v2193
      %v2214 = vpack.c.b16 %v2196, %v2195
      %v2215 = vpack.c.b16 %v2198, %v2197
      %v2216 = vpack.c.b16 %v2200, %v2199
      %v2218 = vsel %vm1642, %v2201, 0
      %v2221 = vsel %vm1642, %v2202, 0
      %v2224 = vsel %vm1642, %v2203, 0
      %v2227 = vsel %vm1642, %v2204, 0
      %v2230 = vsel %vm1642, %v2205, 0
      %v2233 = vsel %vm1642, %v2206, 0
      %v2236 = vsel %vm1642, %v2207, 0
      %v2239 = vsel %vm1642, %v2208, 0
      %v2242 = vsel %vm1642, %v2209, 0
      %v2245 = vsel %vm1642, %v2210, 0
      %v2248 = vsel %vm1642, %v2211, 0
      %v2251 = vsel %vm1642, %v2212, 0
      %v2254 = vsel %vm1642, %v2213, 0
      %v2257 = vsel %vm1642, %v2214, 0
      %v2260 = vsel %vm1642, %v2215, 0
      %v2263 = vsel %vm1642, %v2216, 0
      %v2266 = vsel %vm1691, %v2168, 0
      %2268 = vmatpush.bf16.msra.mxu0 0
      %2269 = vmatpush.bf16.msra.mxu0 0
      %2270 = vmatpush.bf16.msra.mxu0 0
      %2271 = vmatpush.bf16.msra.mxu0 0
      %2272 = vmatpush.bf16.msra.mxu0 0
      %2273 = vmatpush.bf16.msra.mxu0 0
      %2274 = vmatpush.bf16.msra.mxu0 0
      %2275 = vmatpush.bf16.msra.mxu0 %v2266
      %2276 = vmatmul.bf16.gmra.mxu0 %v2218
      %v2277 = vpop.f32.mrf.mxu0
      %v2278 = vadd.f32 0.0, %v2277
      %v2279 = vpop.f32.mrf.mxu0
      %v2280 = vadd.f32 0.0, %v2279
      %2281 = vmatmul.bf16.gmra.mxu0 %v2221
      %v2282 = vpop.f32.mrf.mxu0
      %v2283 = vadd.f32 0.0, %v2282
      %v2284 = vpop.f32.mrf.mxu0
      %v2285 = vadd.f32 0.0, %v2284
      %2286 = vmatmul.bf16.gmra.mxu0 %v2224
      %v2287 = vpop.f32.mrf.mxu0
      %v2288 = vadd.f32 0.0, %v2287
      %v2289 = vpop.f32.mrf.mxu0
      %v2290 = vadd.f32 0.0, %v2289
      %2291 = vmatmul.bf16.gmra.mxu0 %v2227
      %v2292 = vpop.f32.mrf.mxu0
      %v2293 = vadd.f32 0.0, %v2292
      %v2294 = vpop.f32.mrf.mxu0
      %v2295 = vadd.f32 0.0, %v2294
      %2296 = vmatmul.bf16.gmra.mxu0 %v2230
      %v2297 = vpop.f32.mrf.mxu0
      %v2298 = vadd.f32 0.0, %v2297
      %v2299 = vpop.f32.mrf.mxu0
      %v2300 = vadd.f32 0.0, %v2299
      %2301 = vmatmul.bf16.gmra.mxu0 %v2233
      %v2302 = vpop.f32.mrf.mxu0
      %v2303 = vadd.f32 0.0, %v2302
      %v2304 = vpop.f32.mrf.mxu0
      %v2305 = vadd.f32 0.0, %v2304
      %2306 = vmatmul.bf16.gmra.mxu0 %v2236
      %v2307 = vpop.f32.mrf.mxu0
      %v2308 = vadd.f32 0.0, %v2307
      %v2309 = vpop.f32.mrf.mxu0
      %v2310 = vadd.f32 0.0, %v2309
      %2311 = vmatmul.bf16.gmra.mxu0 %v2239
      %v2312 = vpop.f32.mrf.mxu0
      %v2313 = vadd.f32 0.0, %v2312
      %v2314 = vpop.f32.mrf.mxu0
      %v2315 = vadd.f32 0.0, %v2314
      %2316 = vmatmul.bf16.gmra.mxu0 %v2242
      %v2317 = vpop.f32.mrf.mxu0
      %v2318 = vadd.f32 0.0, %v2317
      %v2319 = vpop.f32.mrf.mxu0
      %v2320 = vadd.f32 0.0, %v2319
      %2321 = vmatmul.bf16.gmra.mxu0 %v2245
      %v2322 = vpop.f32.mrf.mxu0
      %v2323 = vadd.f32 0.0, %v2322
      %v2324 = vpop.f32.mrf.mxu0
      %v2325 = vadd.f32 0.0, %v2324
      %2326 = vmatmul.bf16.gmra.mxu0 %v2248
      %v2327 = vpop.f32.mrf.mxu0
      %v2328 = vadd.f32 0.0, %v2327
      %v2329 = vpop.f32.mrf.mxu0
      %v2330 = vadd.f32 0.0, %v2329
      %2331 = vmatmul.bf16.gmra.mxu0 %v2251
      %v2332 = vpop.f32.mrf.mxu0
      %v2333 = vadd.f32 0.0, %v2332
      %v2334 = vpop.f32.mrf.mxu0
      %v2335 = vadd.f32 0.0, %v2334
      %2336 = vmatmul.bf16.gmra.mxu0 %v2254
      %v2337 = vpop.f32.mrf.mxu0
      %v2338 = vadd.f32 0.0, %v2337
      %v2339 = vpop.f32.mrf.mxu0
      %v2340 = vadd.f32 0.0, %v2339
      %2341 = vmatmul.bf16.gmra.mxu0 %v2257
      %v2342 = vpop.f32.mrf.mxu0
      %v2343 = vadd.f32 0.0, %v2342
      %v2344 = vpop.f32.mrf.mxu0
      %v2345 = vadd.f32 0.0, %v2344
      %2346 = vmatmul.bf16.gmra.mxu0 %v2260
      %v2347 = vpop.f32.mrf.mxu0
      %v2348 = vadd.f32 0.0, %v2347
      %v2349 = vpop.f32.mrf.mxu0
      %v2350 = vadd.f32 0.0, %v2349
      %2351 = vmatmul.bf16.gmra.mxu0 %v2263
      %v2352 = vpop.f32.mrf.mxu0
      %v2353 = vadd.f32 0.0, %v2352
      %v2354 = vpop.f32.mrf.mxu0
      %v2355 = vadd.f32 0.0, %v2354
      %2356 = vdwg.mxu0
      %v2357 = vadd.f32 %v1925, %v2278
      %v2358 = vadd.f32 %v1927, %v2280
      %v2359 = vadd.f32 %v1930, %v2283
      %v2360 = vadd.f32 %v1932, %v2285
      %v2361 = vadd.f32 %v1935, %v2288
      %v2362 = vadd.f32 %v1937, %v2290
      %v2363 = vadd.f32 %v1940, %v2293
      %v2364 = vadd.f32 %v1942, %v2295
      %v2365 = vadd.f32 %v1945, %v2298
      %v2366 = vadd.f32 %v1947, %v2300
      %v2367 = vadd.f32 %v1950, %v2303
      %v2368 = vadd.f32 %v1952, %v2305
      %v2369 = vadd.f32 %v1955, %v2308
      %v2370 = vadd.f32 %v1957, %v2310
      %v2371 = vadd.f32 %v1960, %v2313
      %v2372 = vadd.f32 %v1962, %v2315
      %v2373 = vadd.f32 %v1965, %v2318
      %v2374 = vadd.f32 %v1967, %v2320
      %v2375 = vadd.f32 %v1970, %v2323
      %v2376 = vadd.f32 %v1972, %v2325
      %v2377 = vadd.f32 %v1975, %v2328
      %v2378 = vadd.f32 %v1977, %v2330
      %v2379 = vadd.f32 %v1980, %v2333
      %v2380 = vadd.f32 %v1982, %v2335
      %v2381 = vadd.f32 %v1985, %v2338
      %v2382 = vadd.f32 %v1987, %v2340
      %v2383 = vadd.f32 %v1990, %v2343
      %v2384 = vadd.f32 %v1992, %v2345
      %v2385 = vadd.f32 %v1995, %v2348
      %v2386 = vadd.f32 %v1997, %v2350
      %v2387 = vadd.f32 %v2000, %v2353
      %v2388 = vadd.f32 %v2002, %v2355
      %v2389 = vld [vmem:[%s1041] sm:$0xf]
      %v2390 = vld [vmem:[%s1041 + $0x4] sm:$0xf]
      %v2391 = vld [vmem:[%s1041 + $0xc] sm:$0xf]
      %v2392 = vld [vmem:[%s1041 + $0x10] sm:$0xf]
      %v2393 = vld [vmem:[%s1041 + $0x18] sm:$0xf]
      %v2394 = vld [vmem:[%s1041 + $0x1c] sm:$0xf]
      %v2395 = vld [vmem:[%s1041 + $0x24] sm:$0xf]
      %v2396 = vld [vmem:[%s1041 + $0x28] sm:$0xf]
      %v2397 = vld [vmem:[%s1041 + $0x30] sm:$0xf]
      %v2398 = vld [vmem:[%s1041 + $0x34] sm:$0xf]
      %v2399 = vld [vmem:[%s1041 + $0x3c] sm:$0xf]
      %v2400 = vld [vmem:[%s1041 + $0x40] sm:$0xf]
      %v2401 = vld [vmem:[%s1041 + $0x48] sm:$0xf]
      %v2402 = vld [vmem:[%s1041 + $0x4c] sm:$0xf]
      %v2403 = vld [vmem:[%s1041 + $0x54] sm:$0xf]
      %v2404 = vld [vmem:[%s1041 + $0x58] sm:$0xf]
      %v2405 = vld [vmem:[%s1041 + $0x60] sm:$0xf]
      %v2406 = vld [vmem:[%s1041 + $0x64] sm:$0xf]
      %v2407 = vld [vmem:[%s1041 + $0x6c] sm:$0xf]
      %v2408 = vld [vmem:[%s1041 + $0x70] sm:$0xf]
      %v2409 = vld [vmem:[%s1041 + $0x78] sm:$0xf]
      %v2410 = vld [vmem:[%s1041 + $0x7c] sm:$0xf]
      %v2411 = vld [vmem:[%s1041 + $0x84] sm:$0xf]
      %v2412 = vld [vmem:[%s1041 + $0x88] sm:$0xf]
      %v2413 = vld [vmem:[%s1041 + $0x90] sm:$0xf]
      %v2414 = vld [vmem:[%s1041 + $0x94] sm:$0xf]
      %v2415 = vld [vmem:[%s1041 + $0x9c] sm:$0xf]
      %v2416 = vld [vmem:[%s1041 + $0xa0] sm:$0xf]
      %v2417 = vld [vmem:[%s1041 + $0xa8] sm:$0xf]
      %v2418 = vld [vmem:[%s1041 + $0xac] sm:$0xf]
      %v2419 = vld [vmem:[%s1041 + $0xb4] sm:$0xf]
      %v2420 = vld [vmem:[%s1041 + $0xb8] sm:$0xf]
      %s2421 = scalar_lea.vmem %s3, 6
      %v2422 = vld [vmem:[%s2421] sm:$0x3]
      %v2455 = vunpack.c.l.b16 %v2389
      %v2456 = vunpack.c.l.b16 %v2390
      %v2457 = vunpack.c.l.b16 %v2391
      %v2458 = vunpack.c.l.b16 %v2392
      %v2459 = vunpack.c.l.b16 %v2393
      %v2460 = vunpack.c.l.b16 %v2394
      %v2461 = vunpack.c.l.b16 %v2395
      %v2462 = vunpack.c.l.b16 %v2396
      %v2463 = vunpack.c.l.b16 %v2397
      %v2464 = vunpack.c.l.b16 %v2398
      %v2465 = vunpack.c.l.b16 %v2399
      %v2466 = vunpack.c.l.b16 %v2400
      %v2467 = vunpack.c.l.b16 %v2401
      %v2468 = vunpack.c.l.b16 %v2402
      %v2469 = vunpack.c.l.b16 %v2403
      %v2470 = vunpack.c.l.b16 %v2404
      %v2471 = vunpack.c.l.b16 %v2405
      %v2472 = vunpack.c.l.b16 %v2406
      %v2473 = vunpack.c.l.b16 %v2407
      %v2474 = vunpack.c.l.b16 %v2408
      %v2475 = vunpack.c.l.b16 %v2409
      %v2476 = vunpack.c.l.b16 %v2410
      %v2477 = vunpack.c.l.b16 %v2411
      %v2478 = vunpack.c.l.b16 %v2412
      %v2479 = vunpack.c.l.b16 %v2413
      %v2480 = vunpack.c.l.b16 %v2414
      %v2481 = vunpack.c.l.b16 %v2415
      %v2482 = vunpack.c.l.b16 %v2416
      %v2483 = vunpack.c.l.b16 %v2417
      %v2484 = vunpack.c.l.b16 %v2418
      %v2485 = vunpack.c.l.b16 %v2419
      %v2486 = vunpack.c.l.b16 %v2420
      %v2487 = vpack.c.b16 %v2456, %v2455
      %v2488 = vpack.c.b16 %v2458, %v2457
      %v2489 = vpack.c.b16 %v2460, %v2459
      %v2490 = vpack.c.b16 %v2462, %v2461
      %v2491 = vpack.c.b16 %v2464, %v2463
      %v2492 = vpack.c.b16 %v2466, %v2465
      %v2493 = vpack.c.b16 %v2468, %v2467
      %v2494 = vpack.c.b16 %v2470, %v2469
      %v2495 = vpack.c.b16 %v2472, %v2471
      %v2496 = vpack.c.b16 %v2474, %v2473
      %v2497 = vpack.c.b16 %v2476, %v2475
      %v2498 = vpack.c.b16 %v2478, %v2477
      %v2499 = vpack.c.b16 %v2480, %v2479
      %v2500 = vpack.c.b16 %v2482, %v2481
      %v2501 = vpack.c.b16 %v2484, %v2483
      %v2502 = vpack.c.b16 %v2486, %v2485
      %v2504 = vsel %vm1642, %v2487, 0
      %v2507 = vsel %vm1642, %v2488, 0
      %v2510 = vsel %vm1642, %v2489, 0
      %v2513 = vsel %vm1642, %v2490, 0
      %v2516 = vsel %vm1642, %v2491, 0
      %v2519 = vsel %vm1642, %v2492, 0
      %v2522 = vsel %vm1642, %v2493, 0
      %v2525 = vsel %vm1642, %v2494, 0
      %v2528 = vsel %vm1642, %v2495, 0
      %v2531 = vsel %vm1642, %v2496, 0
      %v2534 = vsel %vm1642, %v2497, 0
      %v2537 = vsel %vm1642, %v2498, 0
      %v2540 = vsel %vm1642, %v2499, 0
      %v2543 = vsel %vm1642, %v2500, 0
      %v2546 = vsel %vm1642, %v2501, 0
      %v2549 = vsel %vm1642, %v2502, 0
      %v2552 = vsel %vm1691, %v2422, 0
      %2554 = vmatpush.bf16.msra.mxu0 0
      %2555 = vmatpush.bf16.msra.mxu0 0
      %2556 = vmatpush.bf16.msra.mxu0 0
      %2557 = vmatpush.bf16.msra.mxu0 0
      %2558 = vmatpush.bf16.msra.mxu0 0
      %2559 = vmatpush.bf16.msra.mxu0 0
      %2560 = vmatpush.bf16.msra.mxu0 0
      %2561 = vmatpush.bf16.msra.mxu0 %v2552
      %2562 = vmatmul.bf16.gmra.mxu0 %v2504
      %v2563 = vpop.f32.mrf.mxu0
      %v2564 = vadd.f32 0.0, %v2563
      %v2565 = vpop.f32.mrf.mxu0
      %v2566 = vadd.f32 0.0, %v2565
      %2567 = vmatmul.bf16.gmra.mxu0 %v2507
      %v2568 = vpop.f32.mrf.mxu0
      %v2569 = vadd.f32 0.0, %v2568
      %v2570 = vpop.f32.mrf.mxu0
      %v2571 = vadd.f32 0.0, %v2570
      %2572 = vmatmul.bf16.gmra.mxu0 %v2510
      %v2573 = vpop.f32.mrf.mxu0
      %v2574 = vadd.f32 0.0, %v2573
      %v2575 = vpop.f32.mrf.mxu0
      %v2576 = vadd.f32 0.0, %v2575
      %2577 = vmatmul.bf16.gmra.mxu0 %v2513
      %v2578 = vpop.f32.mrf.mxu0
      %v2579 = vadd.f32 0.0, %v2578
      %v2580 = vpop.f32.mrf.mxu0
      %v2581 = vadd.f32 0.0, %v2580
      %2582 = vmatmul.bf16.gmra.mxu0 %v2516
      %v2583 = vpop.f32.mrf.mxu0
      %v2584 = vadd.f32 0.0, %v2583
      %v2585 = vpop.f32.mrf.mxu0
      %v2586 = vadd.f32 0.0, %v2585
      %2587 = vmatmul.bf16.gmra.mxu0 %v2519
      %v2588 = vpop.f32.mrf.mxu0
      %v2589 = vadd.f32 0.0, %v2588
      %v2590 = vpop.f32.mrf.mxu0
      %v2591 = vadd.f32 0.0, %v2590
      %2592 = vmatmul.bf16.gmra.mxu0 %v2522
      %v2593 = vpop.f32.mrf.mxu0
      %v2594 = vadd.f32 0.0, %v2593
      %v2595 = vpop.f32.mrf.mxu0
      %v2596 = vadd.f32 0.0, %v2595
      %2597 = vmatmul.bf16.gmra.mxu0 %v2525
      %v2598 = vpop.f32.mrf.mxu0
      %v2599 = vadd.f32 0.0, %v2598
      %v2600 = vpop.f32.mrf.mxu0
      %v2601 = vadd.f32 0.0, %v2600
      %2602 = vmatmul.bf16.gmra.mxu0 %v2528
      %v2603 = vpop.f32.mrf.mxu0
      %v2604 = vadd.f32 0.0, %v2603
      %v2605 = vpop.f32.mrf.mxu0
      %v2606 = vadd.f32 0.0, %v2605
      %2607 = vmatmul.bf16.gmra.mxu0 %v2531
      %v2608 = vpop.f32.mrf.mxu0
      %v2609 = vadd.f32 0.0, %v2608
      %v2610 = vpop.f32.mrf.mxu0
      %v2611 = vadd.f32 0.0, %v2610
      %2612 = vmatmul.bf16.gmra.mxu0 %v2534
      %v2613 = vpop.f32.mrf.mxu0
      %v2614 = vadd.f32 0.0, %v2613
      %v2615 = vpop.f32.mrf.mxu0
      %v2616 = vadd.f32 0.0, %v2615
      %2617 = vmatmul.bf16.gmra.mxu0 %v2537
      %v2618 = vpop.f32.mrf.mxu0
      %v2619 = vadd.f32 0.0, %v2618
      %v2620 = vpop.f32.mrf.mxu0
      %v2621 = vadd.f32 0.0, %v2620
      %2622 = vmatmul.bf16.gmra.mxu0 %v2540
      %v2623 = vpop.f32.mrf.mxu0
      %v2624 = vadd.f32 0.0, %v2623
      %v2625 = vpop.f32.mrf.mxu0
      %v2626 = vadd.f32 0.0, %v2625
      %2627 = vmatmul.bf16.gmra.mxu0 %v2543
      %v2628 = vpop.f32.mrf.mxu0
      %v2629 = vadd.f32 0.0, %v2628
      %v2630 = vpop.f32.mrf.mxu0
      %v2631 = vadd.f32 0.0, %v2630
      %2632 = vmatmul.bf16.gmra.mxu0 %v2546
      %v2633 = vpop.f32.mrf.mxu0
      %v2634 = vadd.f32 0.0, %v2633
      %v2635 = vpop.f32.mrf.mxu0
      %v2636 = vadd.f32 0.0, %v2635
      %2637 = vmatmul.bf16.gmra.mxu0 %v2549
      %v2638 = vpop.f32.mrf.mxu0
      %v2639 = vadd.f32 0.0, %v2638
      %v2640 = vpop.f32.mrf.mxu0
      %v2641 = vadd.f32 0.0, %v2640
      %2642 = vdwg.mxu0
      %v2643 = vadd.f32 %v2357, %v2564
      %v2644 = vadd.f32 %v2358, %v2566
      %v2645 = vadd.f32 %v2359, %v2569
      %v2646 = vadd.f32 %v2360, %v2571
      %v2647 = vadd.f32 %v2361, %v2574
      %v2648 = vadd.f32 %v2362, %v2576
      %v2649 = vadd.f32 %v2363, %v2579
      %v2650 = vadd.f32 %v2364, %v2581
      %v2651 = vadd.f32 %v2365, %v2584
      %v2652 = vadd.f32 %v2366, %v2586
      %v2653 = vadd.f32 %v2367, %v2589
      %v2654 = vadd.f32 %v2368, %v2591
      %v2655 = vadd.f32 %v2369, %v2594
      %v2656 = vadd.f32 %v2370, %v2596
      %v2657 = vadd.f32 %v2371, %v2599
      %v2658 = vadd.f32 %v2372, %v2601
      %v2659 = vadd.f32 %v2373, %v2604
      %v2660 = vadd.f32 %v2374, %v2606
      %v2661 = vadd.f32 %v2375, %v2609
      %v2662 = vadd.f32 %v2376, %v2611
      %v2663 = vadd.f32 %v2377, %v2614
      %v2664 = vadd.f32 %v2378, %v2616
      %v2665 = vadd.f32 %v2379, %v2619
      %v2666 = vadd.f32 %v2380, %v2621
      %v2667 = vadd.f32 %v2381, %v2624
      %v2668 = vadd.f32 %v2382, %v2626
      %v2669 = vadd.f32 %v2383, %v2629
      %v2670 = vadd.f32 %v2384, %v2631
      %v2671 = vadd.f32 %v2385, %v2634
      %v2672 = vadd.f32 %v2386, %v2636
      %v2673 = vadd.f32 %v2387, %v2639
      %v2674 = vadd.f32 %v2388, %v2641
      %v2675 = vld [vmem:[%s1041] sm:$0xf]
      %v2676 = vld [vmem:[%s1041 + $0x4] sm:$0xf]
      %v2677 = vld [vmem:[%s1041 + $0x8] sm:$0x1]
      %v2678 = vld [vmem:[%s1041 + $0xc] sm:$0xf]
      %v2679 = vld [vmem:[%s1041 + $0x10] sm:$0xf]
      %v2680 = vld [vmem:[%s1041 + $0x14] sm:$0x1]
      %v2681 = vld [vmem:[%s1041 + $0x18] sm:$0xf]
      %v2682 = vld [vmem:[%s1041 + $0x1c] sm:$0xf]
      %v2683 = vld [vmem:[%s1041 + $0x20] sm:$0x1]
      %v2684 = vld [vmem:[%s1041 + $0x24] sm:$0xf]
      %v2685 = vld [vmem:[%s1041 + $0x28] sm:$0xf]
      %v2686 = vld [vmem:[%s1041 + $0x2c] sm:$0x1]
      %v2687 = vld [vmem:[%s1041 + $0x30] sm:$0xf]
      %v2688 = vld [vmem:[%s1041 + $0x34] sm:$0xf]
      %v2689 = vld [vmem:[%s1041 + $0x38] sm:$0x1]
      %v2690 = vld [vmem:[%s1041 + $0x3c] sm:$0xf]
      %v2691 = vld [vmem:[%s1041 + $0x40] sm:$0xf]
      %v2692 = vld [vmem:[%s1041 + $0x44] sm:$0x1]
      %v2693 = vld [vmem:[%s1041 + $0x48] sm:$0xf]
      %v2694 = vld [vmem:[%s1041 + $0x4c] sm:$0xf]
      %v2695 = vld [vmem:[%s1041 + $0x50] sm:$0x1]
      %v2696 = vld [vmem:[%s1041 + $0x54] sm:$0xf]
      %v2697 = vld [vmem:[%s1041 + $0x58] sm:$0xf]
      %v2698 = vld [vmem:[%s1041 + $0x5c] sm:$0x1]
      %v2699 = vld [vmem:[%s1041 + $0x60] sm:$0xf]
      %v2700 = vld [vmem:[%s1041 + $0x64] sm:$0xf]
      %v2701 = vld [vmem:[%s1041 + $0x68] sm:$0x1]
      %v2702 = vld [vmem:[%s1041 + $0x6c] sm:$0xf]
      %v2703 = vld [vmem:[%s1041 + $0x70] sm:$0xf]
      %v2704 = vld [vmem:[%s1041 + $0x74] sm:$0x1]
      %v2705 = vld [vmem:[%s1041 + $0x78] sm:$0xf]
      %v2706 = vld [vmem:[%s1041 + $0x7c] sm:$0xf]
      %v2707 = vld [vmem:[%s1041 + $0x80] sm:$0x1]
      %v2708 = vld [vmem:[%s1041 + $0x84] sm:$0xf]
      %v2709 = vld [vmem:[%s1041 + $0x88] sm:$0xf]
      %v2710 = vld [vmem:[%s1041 + $0x8c] sm:$0x1]
      %v2711 = vld [vmem:[%s1041 + $0x90] sm:$0xf]
      %v2712 = vld [vmem:[%s1041 + $0x94] sm:$0xf]
      %v2713 = vld [vmem:[%s1041 + $0x98] sm:$0x1]
      %v2714 = vld [vmem:[%s1041 + $0x9c] sm:$0xf]
      %v2715 = vld [vmem:[%s1041 + $0xa0] sm:$0xf]
      %v2716 = vld [vmem:[%s1041 + $0xa4] sm:$0x1]
      %v2717 = vld [vmem:[%s1041 + $0xa8] sm:$0xf]
      %v2718 = vld [vmem:[%s1041 + $0xac] sm:$0xf]
      %v2719 = vld [vmem:[%s1041 + $0xb0] sm:$0x1]
      %v2720 = vld [vmem:[%s1041 + $0xb4] sm:$0xf]
      %v2721 = vld [vmem:[%s1041 + $0xb8] sm:$0xf]
      %v2722 = vld [vmem:[%s1041 + $0xbc] sm:$0x1]
      %v2724 = vshrl.u32 %v2675, 16
      %v2726 = vrot.slane %v2724, 4
      %v2727 = vshll.u32 %v2675, 16
      %v2729 = vrot.slane %v2727, 5
      %v2730 = vor.u32 %v2726, %v2729
      %v2731 = vrot.slane %v2730, 4
      %v2733 = vshll.u32 %v2676, 16
      %v2735 = vrot.slane %v2733, 5
      %v2736 = vsel %vm1207, %v2731, %v2735
      %v2737 = vshrl.u32 %v2676, 16
      %v2739 = vrot.slane %v2737, 4
      %v2740 = vor.u32 %v2739, %v2735
      %v2741 = vrot.slane %v2740, 4
      %v2743 = vshll.u32 %v2677, 16
      %v2745 = vrot.slane %v2743, 5
      %v2746 = vsel %vm1207, %v2741, %v2745
      %v2748 = vshrl.u32 %v2678, 16
      %v2750 = vrot.slane %v2748, 4
      %v2751 = vshll.u32 %v2678, 16
      %v2753 = vrot.slane %v2751, 5
      %v2754 = vor.u32 %v2750, %v2753
      %v2755 = vrot.slane %v2754, 4
      %v2757 = vshll.u32 %v2679, 16
      %v2759 = vrot.slane %v2757, 5
      %v2760 = vsel %vm1207, %v2755, %v2759
      %v2761 = vshrl.u32 %v2679, 16
      %v2763 = vrot.slane %v2761, 4
      %v2764 = vor.u32 %v2763, %v2759
      %v2765 = vrot.slane %v2764, 4
      %v2767 = vshll.u32 %v2680, 16
      %v2769 = vrot.slane %v2767, 5
      %v2770 = vsel %vm1207, %v2765, %v2769
      %v2772 = vshrl.u32 %v2681, 16
      %v2774 = vrot.slane %v2772, 4
      %v2775 = vshll.u32 %v2681, 16
      %v2777 = vrot.slane %v2775, 5
      %v2778 = vor.u32 %v2774, %v2777
      %v2779 = vrot.slane %v2778, 4
      %v2781 = vshll.u32 %v2682, 16
      %v2783 = vrot.slane %v2781, 5
      %v2784 = vsel %vm1207, %v2779, %v2783
      %v2785 = vshrl.u32 %v2682, 16
      %v2787 = vrot.slane %v2785, 4
      %v2788 = vor.u32 %v2787, %v2783
      %v2789 = vrot.slane %v2788, 4
      %v2791 = vshll.u32 %v2683, 16
      %v2793 = vrot.slane %v2791, 5
      %v2794 = vsel %vm1207, %v2789, %v2793
      %v2796 = vshrl.u32 %v2684, 16
      %v2798 = vrot.slane %v2796, 4
      %v2799 = vshll.u32 %v2684, 16
      %v2801 = vrot.slane %v2799, 5
      %v2802 = vor.u32 %v2798, %v2801
      %v2803 = vrot.slane %v2802, 4
      %v2805 = vshll.u32 %v2685, 16
      %v2807 = vrot.slane %v2805, 5
      %v2808 = vsel %vm1207, %v2803, %v2807
      %v2809 = vshrl.u32 %v2685, 16
      %v2811 = vrot.slane %v2809, 4
      %v2812 = vor.u32 %v2811, %v2807
      %v2813 = vrot.slane %v2812, 4
      %v2815 = vshll.u32 %v2686, 16
      %v2817 = vrot.slane %v2815, 5
      %v2818 = vsel %vm1207, %v2813, %v2817
      %v2820 = vshrl.u32 %v2687, 16
      %v2822 = vrot.slane %v2820, 4
      %v2823 = vshll.u32 %v2687, 16
      %v2825 = vrot.slane %v2823, 5
      %v2826 = vor.u32 %v2822, %v2825
      %v2827 = vrot.slane %v2826, 4
      %v2829 = vshll.u32 %v2688, 16
      %v2831 = vrot.slane %v2829, 5
      %v2832 = vsel %vm1207, %v2827, %v2831
      %v2833 = vshrl.u32 %v2688, 16
      %v2835 = vrot.slane %v2833, 4
      %v2836 = vor.u32 %v2835, %v2831
      %v2837 = vrot.slane %v2836, 4
      %v2839 = vshll.u32 %v2689, 16
      %v2841 = vrot.slane %v2839, 5
      %v2842 = vsel %vm1207, %v2837, %v2841
      %v2844 = vshrl.u32 %v2690, 16
      %v2846 = vrot.slane %v2844, 4
      %v2847 = vshll.u32 %v2690, 16
      %v2849 = vrot.slane %v2847, 5
      %v2850 = vor.u32 %v2846, %v2849
      %v2851 = vrot.slane %v2850, 4
      %v2853 = vshll.u32 %v2691, 16
      %v2855 = vrot.slane %v2853, 5
      %v2856 = vsel %vm1207, %v2851, %v2855
      %v2857 = vshrl.u32 %v2691, 16
      %v2859 = vrot.slane %v2857, 4
      %v2860 = vor.u32 %v2859, %v2855
      %v2861 = vrot.slane %v2860, 4
      %v2863 = vshll.u32 %v2692, 16
      %v2865 = vrot.slane %v2863, 5
      %v2866 = vsel %vm1207, %v2861, %v2865
      %v2868 = vshrl.u32 %v2693, 16
      %v2870 = vrot.slane %v2868, 4
      %v2871 = vshll.u32 %v2693, 16
      %v2873 = vrot.slane %v2871, 5
      %v2874 = vor.u32 %v2870, %v2873
      %v2875 = vrot.slane %v2874, 4
      %v2877 = vshll.u32 %v2694, 16
      %v2879 = vrot.slane %v2877, 5
      %v2880 = vsel %vm1207, %v2875, %v2879
      %v2881 = vshrl.u32 %v2694, 16
      %v2883 = vrot.slane %v2881, 4
      %v2884 = vor.u32 %v2883, %v2879
      %v2885 = vrot.slane %v2884, 4
      %v2887 = vshll.u32 %v2695, 16
      %v2889 = vrot.slane %v2887, 5
      %v2890 = vsel %vm1207, %v2885, %v2889
      %v2892 = vshrl.u32 %v2696, 16
      %v2894 = vrot.slane %v2892, 4
      %v2895 = vshll.u32 %v2696, 16
      %v2897 = vrot.slane %v2895, 5
      %v2898 = vor.u32 %v2894, %v2897
      %v2899 = vrot.slane %v2898, 4
      %v2901 = vshll.u32 %v2697, 16
      %v2903 = vrot.slane %v2901, 5
      %v2904 = vsel %vm1207, %v2899, %v2903
      %v2905 = vshrl.u32 %v2697, 16
      %v2907 = vrot.slane %v2905, 4
      %v2908 = vor.u32 %v2907, %v2903
      %v2909 = vrot.slane %v2908, 4
      %v2911 = vshll.u32 %v2698, 16
      %v2913 = vrot.slane %v2911, 5
      %v2914 = vsel %vm1207, %v2909, %v2913
      %v2916 = vshrl.u32 %v2699, 16
      %v2918 = vrot.slane %v2916, 4
      %v2919 = vshll.u32 %v2699, 16
      %v2921 = vrot.slane %v2919, 5
      %v2922 = vor.u32 %v2918, %v2921
      %v2923 = vrot.slane %v2922, 4
      %v2925 = vshll.u32 %v2700, 16
      %v2927 = vrot.slane %v2925, 5
      %v2928 = vsel %vm1207, %v2923, %v2927
      %v2929 = vshrl.u32 %v2700, 16
      %v2931 = vrot.slane %v2929, 4
      %v2932 = vor.u32 %v2931, %v2927
      %v2933 = vrot.slane %v2932, 4
      %v2935 = vshll.u32 %v2701, 16
      %v2937 = vrot.slane %v2935, 5
      %v2938 = vsel %vm1207, %v2933, %v2937
      %v2940 = vshrl.u32 %v2702, 16
      %v2942 = vrot.slane %v2940, 4
      %v2943 = vshll.u32 %v2702, 16
      %v2945 = vrot.slane %v2943, 5
      %v2946 = vor.u32 %v2942, %v2945
      %v2947 = vrot.slane %v2946, 4
      %v2949 = vshll.u32 %v2703, 16
      %v2951 = vrot.slane %v2949, 5
      %v2952 = vsel %vm1207, %v2947, %v2951
      %v2953 = vshrl.u32 %v2703, 16
      %v2955 = vrot.slane %v2953, 4
      %v2956 = vor.u32 %v2955, %v2951
      %v2957 = vrot.slane %v2956, 4
      %v2959 = vshll.u32 %v2704, 16
      %v2961 = vrot.slane %v2959, 5
      %v2962 = vsel %vm1207, %v2957, %v2961
      %v2964 = vshrl.u32 %v2705, 16
      %v2966 = vrot.slane %v2964, 4
      %v2967 = vshll.u32 %v2705, 16
      %v2969 = vrot.slane %v2967, 5
      %v2970 = vor.u32 %v2966, %v2969
      %v2971 = vrot.slane %v2970, 4
      %v2973 = vshll.u32 %v2706, 16
      %v2975 = vrot.slane %v2973, 5
      %v2976 = vsel %vm1207, %v2971, %v2975
      %v2977 = vshrl.u32 %v2706, 16
      %v2979 = vrot.slane %v2977, 4
      %v2980 = vor.u32 %v2979, %v2975
      %v2981 = vrot.slane %v2980, 4
      %v2983 = vshll.u32 %v2707, 16
      %v2985 = vrot.slane %v2983, 5
      %v2986 = vsel %vm1207, %v2981, %v2985
      %v2988 = vshrl.u32 %v2708, 16
      %v2990 = vrot.slane %v2988, 4
      %v2991 = vshll.u32 %v2708, 16
      %v2993 = vrot.slane %v2991, 5
      %v2994 = vor.u32 %v2990, %v2993
      %v2995 = vrot.slane %v2994, 4
      %v2997 = vshll.u32 %v2709, 16
      %v2999 = vrot.slane %v2997, 5
      %v3000 = vsel %vm1207, %v2995, %v2999
      %v3001 = vshrl.u32 %v2709, 16
      %v3003 = vrot.slane %v3001, 4
      %v3004 = vor.u32 %v3003, %v2999
      %v3005 = vrot.slane %v3004, 4
      %v3007 = vshll.u32 %v2710, 16
      %v3009 = vrot.slane %v3007, 5
      %v3010 = vsel %vm1207, %v3005, %v3009
      %v3012 = vshrl.u32 %v2711, 16
      %v3014 = vrot.slane %v3012, 4
      %v3015 = vshll.u32 %v2711, 16
      %v3017 = vrot.slane %v3015, 5
      %v3018 = vor.u32 %v3014, %v3017
      %v3019 = vrot.slane %v3018, 4
      %v3021 = vshll.u32 %v2712, 16
      %v3023 = vrot.slane %v3021, 5
      %v3024 = vsel %vm1207, %v3019, %v3023
      %v3025 = vshrl.u32 %v2712, 16
      %v3027 = vrot.slane %v3025, 4
      %v3028 = vor.u32 %v3027, %v3023
      %v3029 = vrot.slane %v3028, 4
      %v3031 = vshll.u32 %v2713, 16
      %v3033 = vrot.slane %v3031, 5
      %v3034 = vsel %vm1207, %v3029, %v3033
      %v3036 = vshrl.u32 %v2714, 16
      %v3038 = vrot.slane %v3036, 4
      %v3039 = vshll.u32 %v2714, 16
      %v3041 = vrot.slane %v3039, 5
      %v3042 = vor.u32 %v3038, %v3041
      %v3043 = vrot.slane %v3042, 4
      %v3045 = vshll.u32 %v2715, 16
      %v3047 = vrot.slane %v3045, 5
      %v3048 = vsel %vm1207, %v3043, %v3047
      %v3049 = vshrl.u32 %v2715, 16
      %v3051 = vrot.slane %v3049, 4
      %v3052 = vor.u32 %v3051, %v3047
      %v3053 = vrot.slane %v3052, 4
      %v3055 = vshll.u32 %v2716, 16
      %v3057 = vrot.slane %v3055, 5
      %v3058 = vsel %vm1207, %v3053, %v3057
      %v3060 = vshrl.u32 %v2717, 16
      %v3062 = vrot.slane %v3060, 4
      %v3063 = vshll.u32 %v2717, 16
      %v3065 = vrot.slane %v3063, 5
      %v3066 = vor.u32 %v3062, %v3065
      %v3067 = vrot.slane %v3066, 4
      %v3069 = vshll.u32 %v2718, 16
      %v3071 = vrot.slane %v3069, 5
      %v3072 = vsel %vm1207, %v3067, %v3071
      %v3073 = vshrl.u32 %v2718, 16
      %v3075 = vrot.slane %v3073, 4
      %v3076 = vor.u32 %v3075, %v3071
      %v3077 = vrot.slane %v3076, 4
      %v3079 = vshll.u32 %v2719, 16
      %v3081 = vrot.slane %v3079, 5
      %v3082 = vsel %vm1207, %v3077, %v3081
      %v3084 = vshrl.u32 %v2720, 16
      %v3086 = vrot.slane %v3084, 4
      %v3087 = vshll.u32 %v2720, 16
      %v3089 = vrot.slane %v3087, 5
      %v3090 = vor.u32 %v3086, %v3089
      %v3091 = vrot.slane %v3090, 4
      %v3093 = vshll.u32 %v2721, 16
      %v3095 = vrot.slane %v3093, 5
      %v3096 = vsel %vm1207, %v3091, %v3095
      %v3097 = vshrl.u32 %v2721, 16
      %v3099 = vrot.slane %v3097, 4
      %v3100 = vor.u32 %v3099, %v3095
      %v3101 = vrot.slane %v3100, 4
      %v3103 = vshll.u32 %v2722, 16
      %v3105 = vrot.slane %v3103, 5
      %v3106 = vsel %vm1207, %v3101, %v3105
      %s3107 = scalar_lea.vmem %s3, 8
      %v3108 = vld [vmem:[%s3107] sm:$0x3]
      %v3109 = vunpack.c.l.b16 %v2736
      %v3110 = vunpack.c.l.b16 %v2746
      %v3111 = vunpack.c.l.b16 %v2760
      %v3112 = vunpack.c.l.b16 %v2770
      %v3113 = vunpack.c.l.b16 %v2784
      %v3114 = vunpack.c.l.b16 %v2794
      %v3115 = vunpack.c.l.b16 %v2808
      %v3116 = vunpack.c.l.b16 %v2818
      %v3117 = vunpack.c.l.b16 %v2832
      %v3118 = vunpack.c.l.b16 %v2842
      %v3119 = vunpack.c.l.b16 %v2856
      %v3120 = vunpack.c.l.b16 %v2866
      %v3121 = vunpack.c.l.b16 %v2880
      %v3122 = vunpack.c.l.b16 %v2890
      %v3123 = vunpack.c.l.b16 %v2904
      %v3124 = vunpack.c.l.b16 %v2914
      %v3125 = vunpack.c.l.b16 %v2928
      %v3126 = vunpack.c.l.b16 %v2938
      %v3127 = vunpack.c.l.b16 %v2952
      %v3128 = vunpack.c.l.b16 %v2962
      %v3129 = vunpack.c.l.b16 %v2976
      %v3130 = vunpack.c.l.b16 %v2986
      %v3131 = vunpack.c.l.b16 %v3000
      %v3132 = vunpack.c.l.b16 %v3010
      %v3133 = vunpack.c.l.b16 %v3024
      %v3134 = vunpack.c.l.b16 %v3034
      %v3135 = vunpack.c.l.b16 %v3048
      %v3136 = vunpack.c.l.b16 %v3058
      %v3137 = vunpack.c.l.b16 %v3072
      %v3138 = vunpack.c.l.b16 %v3082
      %v3139 = vunpack.c.l.b16 %v3096
      %v3140 = vunpack.c.l.b16 %v3106
      %v3141 = vpack.c.b16 %v3110, %v3109
      %v3142 = vpack.c.b16 %v3112, %v3111
      %v3143 = vpack.c.b16 %v3114, %v3113
      %v3144 = vpack.c.b16 %v3116, %v3115
      %v3145 = vpack.c.b16 %v3118, %v3117
      %v3146 = vpack.c.b16 %v3120, %v3119
      %v3147 = vpack.c.b16 %v3122, %v3121
      %v3148 = vpack.c.b16 %v3124, %v3123
      %v3149 = vpack.c.b16 %v3126, %v3125
      %v3150 = vpack.c.b16 %v3128, %v3127
      %v3151 = vpack.c.b16 %v3130, %v3129
      %v3152 = vpack.c.b16 %v3132, %v3131
      %v3153 = vpack.c.b16 %v3134, %v3133
      %v3154 = vpack.c.b16 %v3136, %v3135
      %v3155 = vpack.c.b16 %v3138, %v3137
      %v3156 = vpack.c.b16 %v3140, %v3139
      %v3158 = vsel %vm1642, %v3141, 0
      %v3161 = vsel %vm1642, %v3142, 0
      %v3164 = vsel %vm1642, %v3143, 0
      %v3167 = vsel %vm1642, %v3144, 0
      %v3170 = vsel %vm1642, %v3145, 0
      %v3173 = vsel %vm1642, %v3146, 0
      %v3176 = vsel %vm1642, %v3147, 0
      %v3179 = vsel %vm1642, %v3148, 0
      %v3182 = vsel %vm1642, %v3149, 0
      %v3185 = vsel %vm1642, %v3150, 0
      %v3188 = vsel %vm1642, %v3151, 0
      %v3191 = vsel %vm1642, %v3152, 0
      %v3194 = vsel %vm1642, %v3153, 0
      %v3197 = vsel %vm1642, %v3154, 0
      %v3200 = vsel %vm1642, %v3155, 0
      %v3203 = vsel %vm1642, %v3156, 0
      %v3206 = vsel %vm1691, %v3108, 0
      %3208 = vmatpush.bf16.msra.mxu0 0
      %3209 = vmatpush.bf16.msra.mxu0 0
      %3210 = vmatpush.bf16.msra.mxu0 0
      %3211 = vmatpush.bf16.msra.mxu0 0
      %3212 = vmatpush.bf16.msra.mxu0 0
      %3213 = vmatpush.bf16.msra.mxu0 0
      %3214 = vmatpush.bf16.msra.mxu0 0
      %3215 = vmatpush.bf16.msra.mxu0 %v3206
      %3216 = vmatmul.bf16.gmra.mxu0 %v3158
      %v3217 = vpop.f32.mrf.mxu0
      %v3218 = vadd.f32 0.0, %v3217
      %v3219 = vpop.f32.mrf.mxu0
      %v3220 = vadd.f32 0.0, %v3219
      %3221 = vmatmul.bf16.gmra.mxu0 %v3161
      %v3222 = vpop.f32.mrf.mxu0
      %v3223 = vadd.f32 0.0, %v3222
      %v3224 = vpop.f32.mrf.mxu0
      %v3225 = vadd.f32 0.0, %v3224
      %3226 = vmatmul.bf16.gmra.mxu0 %v3164
      %v3227 = vpop.f32.mrf.mxu0
      %v3228 = vadd.f32 0.0, %v3227
      %v3229 = vpop.f32.mrf.mxu0
      %v3230 = vadd.f32 0.0, %v3229
      %3231 = vmatmul.bf16.gmra.mxu0 %v3167
      %v3232 = vpop.f32.mrf.mxu0
      %v3233 = vadd.f32 0.0, %v3232
      %v3234 = vpop.f32.mrf.mxu0
      %v3235 = vadd.f32 0.0, %v3234
      %3236 = vmatmul.bf16.gmra.mxu0 %v3170
      %v3237 = vpop.f32.mrf.mxu0
      %v3238 = vadd.f32 0.0, %v3237
      %v3239 = vpop.f32.mrf.mxu0
      %v3240 = vadd.f32 0.0, %v3239
      %3241 = vmatmul.bf16.gmra.mxu0 %v3173
      %v3242 = vpop.f32.mrf.mxu0
      %v3243 = vadd.f32 0.0, %v3242
      %v3244 = vpop.f32.mrf.mxu0
      %v3245 = vadd.f32 0.0, %v3244
      %3246 = vmatmul.bf16.gmra.mxu0 %v3176
      %v3247 = vpop.f32.mrf.mxu0
      %v3248 = vadd.f32 0.0, %v3247
      %v3249 = vpop.f32.mrf.mxu0
      %v3250 = vadd.f32 0.0, %v3249
      %3251 = vmatmul.bf16.gmra.mxu0 %v3179
      %v3252 = vpop.f32.mrf.mxu0
      %v3253 = vadd.f32 0.0, %v3252
      %v3254 = vpop.f32.mrf.mxu0
      %v3255 = vadd.f32 0.0, %v3254
      %3256 = vmatmul.bf16.gmra.mxu0 %v3182
      %v3257 = vpop.f32.mrf.mxu0
      %v3258 = vadd.f32 0.0, %v3257
      %v3259 = vpop.f32.mrf.mxu0
      %v3260 = vadd.f32 0.0, %v3259
      %3261 = vmatmul.bf16.gmra.mxu0 %v3185
      %v3262 = vpop.f32.mrf.mxu0
      %v3263 = vadd.f32 0.0, %v3262
      %v3264 = vpop.f32.mrf.mxu0
      %v3265 = vadd.f32 0.0, %v3264
      %3266 = vmatmul.bf16.gmra.mxu0 %v3188
      %v3267 = vpop.f32.mrf.mxu0
      %v3268 = vadd.f32 0.0, %v3267
      %v3269 = vpop.f32.mrf.mxu0
      %v3270 = vadd.f32 0.0, %v3269
      %3271 = vmatmul.bf16.gmra.mxu0 %v3191
      %v3272 = vpop.f32.mrf.mxu0
      %v3273 = vadd.f32 0.0, %v3272
      %v3274 = vpop.f32.mrf.mxu0
      %v3275 = vadd.f32 0.0, %v3274
      %3276 = vmatmul.bf16.gmra.mxu0 %v3194
      %v3277 = vpop.f32.mrf.mxu0
      %v3278 = vadd.f32 0.0, %v3277
      %v3279 = vpop.f32.mrf.mxu0
      %v3280 = vadd.f32 0.0, %v3279
      %3281 = vmatmul.bf16.gmra.mxu0 %v3197
      %v3282 = vpop.f32.mrf.mxu0
      %v3283 = vadd.f32 0.0, %v3282
      %v3284 = vpop.f32.mrf.mxu0
      %v3285 = vadd.f32 0.0, %v3284
      %3286 = vmatmul.bf16.gmra.mxu0 %v3200
      %v3287 = vpop.f32.mrf.mxu0
      %v3288 = vadd.f32 0.0, %v3287
      %v3289 = vpop.f32.mrf.mxu0
      %v3290 = vadd.f32 0.0, %v3289
      %3291 = vmatmul.bf16.gmra.mxu0 %v3203
      %v3292 = vpop.f32.mrf.mxu0
      %v3293 = vadd.f32 0.0, %v3292
      %v3294 = vpop.f32.mrf.mxu0
      %v3295 = vadd.f32 0.0, %v3294
      %3296 = vdwg.mxu0
      %v3297 = vadd.f32 %v2643, %v3218
      %v3298 = vadd.f32 %v2644, %v3220
      %v3299 = vadd.f32 %v2645, %v3223
      %v3300 = vadd.f32 %v2646, %v3225
      %v3301 = vadd.f32 %v2647, %v3228
      %v3302 = vadd.f32 %v2648, %v3230
      %v3303 = vadd.f32 %v2649, %v3233
      %v3304 = vadd.f32 %v2650, %v3235
      %v3305 = vadd.f32 %v2651, %v3238
      %v3306 = vadd.f32 %v2652, %v3240
      %v3307 = vadd.f32 %v2653, %v3243
      %v3308 = vadd.f32 %v2654, %v3245
      %v3309 = vadd.f32 %v2655, %v3248
      %v3310 = vadd.f32 %v2656, %v3250
      %v3311 = vadd.f32 %v2657, %v3253
      %v3312 = vadd.f32 %v2658, %v3255
      %v3313 = vadd.f32 %v2659, %v3258
      %v3314 = vadd.f32 %v2660, %v3260
      %v3315 = vadd.f32 %v2661, %v3263
      %v3316 = vadd.f32 %v2662, %v3265
      %v3317 = vadd.f32 %v2663, %v3268
      %v3318 = vadd.f32 %v2664, %v3270
      %v3319 = vadd.f32 %v2665, %v3273
      %v3320 = vadd.f32 %v2666, %v3275
      %v3321 = vadd.f32 %v2667, %v3278
      %v3322 = vadd.f32 %v2668, %v3280
      %v3323 = vadd.f32 %v2669, %v3283
      %v3324 = vadd.f32 %v2670, %v3285
      %v3325 = vadd.f32 %v2671, %v3288
      %v3326 = vadd.f32 %v2672, %v3290
      %v3327 = vadd.f32 %v2673, %v3293
      %v3328 = vadd.f32 %v2674, %v3295
      %v3329 = vld [vmem:[%s1041] sm:$0xe]
      %v3330 = vld [vmem:[%s1041 + $0xc] sm:$0xe]
      %v3331 = vld [vmem:[%s1041 + $0x18] sm:$0xe]
      %v3332 = vld [vmem:[%s1041 + $0x24] sm:$0xe]
      %v3333 = vld [vmem:[%s1041 + $0x30] sm:$0xe]
      %v3334 = vld [vmem:[%s1041 + $0x3c] sm:$0xe]
      %v3335 = vld [vmem:[%s1041 + $0x48] sm:$0xe]
      %v3336 = vld [vmem:[%s1041 + $0x54] sm:$0xe]
      %v3337 = vld [vmem:[%s1041 + $0x60] sm:$0xe]
      %v3338 = vld [vmem:[%s1041 + $0x6c] sm:$0xe]
      %v3339 = vld [vmem:[%s1041 + $0x78] sm:$0xe]
      %v3340 = vld [vmem:[%s1041 + $0x84] sm:$0xe]
      %v3341 = vld [vmem:[%s1041 + $0x90] sm:$0xe]
      %v3342 = vld [vmem:[%s1041 + $0x9c] sm:$0xe]
      %v3343 = vld [vmem:[%s1041 + $0xa8] sm:$0xe]
      %v3344 = vld [vmem:[%s1041 + $0xb4] sm:$0xe]
      %v3393 = vrot.slane %v3329, 5
      %v3394 = vrot.slane %v3393, 4
      %v3395 = vrot.slane %v2676, 5
      %v3396 = vsel %vm2054, %v3394, %v3395
      %v3397 = vrot.slane %v3395, 4
      %v3398 = vrot.slane %v2677, 5
      %v3399 = vsel %vm2054, %v3397, %v3398
      %v3400 = vrot.slane %v3330, 5
      %v3401 = vrot.slane %v3400, 4
      %v3402 = vrot.slane %v2679, 5
      %v3403 = vsel %vm2054, %v3401, %v3402
      %v3404 = vrot.slane %v3402, 4
      %v3405 = vrot.slane %v2680, 5
      %v3406 = vsel %vm2054, %v3404, %v3405
      %v3407 = vrot.slane %v3331, 5
      %v3408 = vrot.slane %v3407, 4
      %v3409 = vrot.slane %v2682, 5
      %v3410 = vsel %vm2054, %v3408, %v3409
      %v3411 = vrot.slane %v3409, 4
      %v3412 = vrot.slane %v2683, 5
      %v3413 = vsel %vm2054, %v3411, %v3412
      %v3414 = vrot.slane %v3332, 5
      %v3415 = vrot.slane %v3414, 4
      %v3416 = vrot.slane %v2685, 5
      %v3417 = vsel %vm2054, %v3415, %v3416
      %v3418 = vrot.slane %v3416, 4
      %v3419 = vrot.slane %v2686, 5
      %v3420 = vsel %vm2054, %v3418, %v3419
      %v3421 = vrot.slane %v3333, 5
      %v3422 = vrot.slane %v3421, 4
      %v3423 = vrot.slane %v2688, 5
      %v3424 = vsel %vm2054, %v3422, %v3423
      %v3425 = vrot.slane %v3423, 4
      %v3426 = vrot.slane %v2689, 5
      %v3427 = vsel %vm2054, %v3425, %v3426
      %v3428 = vrot.slane %v3334, 5
      %v3429 = vrot.slane %v3428, 4
      %v3430 = vrot.slane %v2691, 5
      %v3431 = vsel %vm2054, %v3429, %v3430
      %v3432 = vrot.slane %v3430, 4
      %v3433 = vrot.slane %v2692, 5
      %v3434 = vsel %vm2054, %v3432, %v3433
      %v3435 = vrot.slane %v3335, 5
      %v3436 = vrot.slane %v3435, 4
      %v3437 = vrot.slane %v2694, 5
      %v3438 = vsel %vm2054, %v3436, %v3437
      %v3439 = vrot.slane %v3437, 4
      %v3440 = vrot.slane %v2695, 5
      %v3441 = vsel %vm2054, %v3439, %v3440
      %v3442 = vrot.slane %v3336, 5
      %v3443 = vrot.slane %v3442, 4
      %v3444 = vrot.slane %v2697, 5
      %v3445 = vsel %vm2054, %v3443, %v3444
      %v3446 = vrot.slane %v3444, 4
      %v3447 = vrot.slane %v2698, 5
      %v3448 = vsel %vm2054, %v3446, %v3447
      %v3449 = vrot.slane %v3337, 5
      %v3450 = vrot.slane %v3449, 4
      %v3451 = vrot.slane %v2700, 5
      %v3452 = vsel %vm2054, %v3450, %v3451
      %v3453 = vrot.slane %v3451, 4
      %v3454 = vrot.slane %v2701, 5
      %v3455 = vsel %vm2054, %v3453, %v3454
      %v3456 = vrot.slane %v3338, 5
      %v3457 = vrot.slane %v3456, 4
      %v3458 = vrot.slane %v2703, 5
      %v3459 = vsel %vm2054, %v3457, %v3458
      %v3460 = vrot.slane %v3458, 4
      %v3461 = vrot.slane %v2704, 5
      %v3462 = vsel %vm2054, %v3460, %v3461
      %v3463 = vrot.slane %v3339, 5
      %v3464 = vrot.slane %v3463, 4
      %v3465 = vrot.slane %v2706, 5
      %v3466 = vsel %vm2054, %v3464, %v3465
      %v3467 = vrot.slane %v3465, 4
      %v3468 = vrot.slane %v2707, 5
      %v3469 = vsel %vm2054, %v3467, %v3468
      %v3470 = vrot.slane %v3340, 5
      %v3471 = vrot.slane %v3470, 4
      %v3472 = vrot.slane %v2709, 5
      %v3473 = vsel %vm2054, %v3471, %v3472
      %v3474 = vrot.slane %v3472, 4
      %v3475 = vrot.slane %v2710, 5
      %v3476 = vsel %vm2054, %v3474, %v3475
      %v3477 = vrot.slane %v3341, 5
      %v3478 = vrot.slane %v3477, 4
      %v3479 = vrot.slane %v2712, 5
      %v3480 = vsel %vm2054, %v3478, %v3479
      %v3481 = vrot.slane %v3479, 4
      %v3482 = vrot.slane %v2713, 5
      %v3483 = vsel %vm2054, %v3481, %v3482
      %v3484 = vrot.slane %v3342, 5
      %v3485 = vrot.slane %v3484, 4
      %v3486 = vrot.slane %v2715, 5
      %v3487 = vsel %vm2054, %v3485, %v3486
      %v3488 = vrot.slane %v3486, 4
      %v3489 = vrot.slane %v2716, 5
      %v3490 = vsel %vm2054, %v3488, %v3489
      %v3491 = vrot.slane %v3343, 5
      %v3492 = vrot.slane %v3491, 4
      %v3493 = vrot.slane %v2718, 5
      %v3494 = vsel %vm2054, %v3492, %v3493
      %v3495 = vrot.slane %v3493, 4
      %v3496 = vrot.slane %v2719, 5
      %v3497 = vsel %vm2054, %v3495, %v3496
      %v3498 = vrot.slane %v3344, 5
      %v3499 = vrot.slane %v3498, 4
      %v3500 = vrot.slane %v2721, 5
      %v3501 = vsel %vm2054, %v3499, %v3500
      %v3502 = vrot.slane %v3500, 4
      %v3503 = vrot.slane %v2722, 5
      %v3504 = vsel %vm2054, %v3502, %v3503
      %s3505 = scalar_lea.vmem %s3, 10
      %v3506 = vld [vmem:[%s3505] sm:$0x3]
      %v3507 = vunpack.c.l.b16 %v3396
      %v3508 = vunpack.c.l.b16 %v3399
      %v3509 = vunpack.c.l.b16 %v3403
      %v3510 = vunpack.c.l.b16 %v3406
      %v3511 = vunpack.c.l.b16 %v3410
      %v3512 = vunpack.c.l.b16 %v3413
      %v3513 = vunpack.c.l.b16 %v3417
      %v3514 = vunpack.c.l.b16 %v3420
      %v3515 = vunpack.c.l.b16 %v3424
      %v3516 = vunpack.c.l.b16 %v3427
      %v3517 = vunpack.c.l.b16 %v3431
      %v3518 = vunpack.c.l.b16 %v3434
      %v3519 = vunpack.c.l.b16 %v3438
      %v3520 = vunpack.c.l.b16 %v3441
      %v3521 = vunpack.c.l.b16 %v3445
      %v3522 = vunpack.c.l.b16 %v3448
      %v3523 = vunpack.c.l.b16 %v3452
      %v3524 = vunpack.c.l.b16 %v3455
      %v3525 = vunpack.c.l.b16 %v3459
      %v3526 = vunpack.c.l.b16 %v3462
      %v3527 = vunpack.c.l.b16 %v3466
      %v3528 = vunpack.c.l.b16 %v3469
      %v3529 = vunpack.c.l.b16 %v3473
      %v3530 = vunpack.c.l.b16 %v3476
      %v3531 = vunpack.c.l.b16 %v3480
      %v3532 = vunpack.c.l.b16 %v3483
      %v3533 = vunpack.c.l.b16 %v3487
      %v3534 = vunpack.c.l.b16 %v3490
      %v3535 = vunpack.c.l.b16 %v3494
      %v3536 = vunpack.c.l.b16 %v3497
      %v3537 = vunpack.c.l.b16 %v3501
      %v3538 = vunpack.c.l.b16 %v3504
      %v3539 = vpack.c.b16 %v3508, %v3507
      %v3540 = vpack.c.b16 %v3510, %v3509
      %v3541 = vpack.c.b16 %v3512, %v3511
      %v3542 = vpack.c.b16 %v3514, %v3513
      %v3543 = vpack.c.b16 %v3516, %v3515
      %v3544 = vpack.c.b16 %v3518, %v3517
      %v3545 = vpack.c.b16 %v3520, %v3519
      %v3546 = vpack.c.b16 %v3522, %v3521
      %v3547 = vpack.c.b16 %v3524, %v3523
      %v3548 = vpack.c.b16 %v3526, %v3525
      %v3549 = vpack.c.b16 %v3528, %v3527
      %v3550 = vpack.c.b16 %v3530, %v3529
      %v3551 = vpack.c.b16 %v3532, %v3531
      %v3552 = vpack.c.b16 %v3534, %v3533
      %v3553 = vpack.c.b16 %v3536, %v3535
      %v3554 = vpack.c.b16 %v3538, %v3537
      %v3556 = vsel %vm1642, %v3539, 0
      %v3559 = vsel %vm1642, %v3540, 0
      %v3562 = vsel %vm1642, %v3541, 0
      %v3565 = vsel %vm1642, %v3542, 0
      %v3568 = vsel %vm1642, %v3543, 0
      %v3571 = vsel %vm1642, %v3544, 0
      %v3574 = vsel %vm1642, %v3545, 0
      %v3577 = vsel %vm1642, %v3546, 0
      %v3580 = vsel %vm1642, %v3547, 0
      %v3583 = vsel %vm1642, %v3548, 0
      %v3586 = vsel %vm1642, %v3549, 0
      %v3589 = vsel %vm1642, %v3550, 0
      %v3592 = vsel %vm1642, %v3551, 0
      %v3595 = vsel %vm1642, %v3552, 0
      %v3598 = vsel %vm1642, %v3553, 0
      %v3601 = vsel %vm1642, %v3554, 0
      %v3604 = vsel %vm1691, %v3506, 0
      %3606 = vmatpush.bf16.msra.mxu0 0
      %3607 = vmatpush.bf16.msra.mxu0 0
      %3608 = vmatpush.bf16.msra.mxu0 0
      %3609 = vmatpush.bf16.msra.mxu0 0
      %3610 = vmatpush.bf16.msra.mxu0 0
      %3611 = vmatpush.bf16.msra.mxu0 0
      %3612 = vmatpush.bf16.msra.mxu0 0
      %3613 = vmatpush.bf16.msra.mxu0 %v3604
      %3614 = vmatmul.bf16.gmra.mxu0 %v3556
      %v3615 = vpop.f32.mrf.mxu0
      %v3616 = vadd.f32 0.0, %v3615
      %v3617 = vpop.f32.mrf.mxu0
      %v3618 = vadd.f32 0.0, %v3617
      %3619 = vmatmul.bf16.gmra.mxu0 %v3559
      %v3620 = vpop.f32.mrf.mxu0
      %v3621 = vadd.f32 0.0, %v3620
      %v3622 = vpop.f32.mrf.mxu0
      %v3623 = vadd.f32 0.0, %v3622
      %3624 = vmatmul.bf16.gmra.mxu0 %v3562
      %v3625 = vpop.f32.mrf.mxu0
      %v3626 = vadd.f32 0.0, %v3625
      %v3627 = vpop.f32.mrf.mxu0
      %v3628 = vadd.f32 0.0, %v3627
      %3629 = vmatmul.bf16.gmra.mxu0 %v3565
      %v3630 = vpop.f32.mrf.mxu0
      %v3631 = vadd.f32 0.0, %v3630
      %v3632 = vpop.f32.mrf.mxu0
      %v3633 = vadd.f32 0.0, %v3632
      %3634 = vmatmul.bf16.gmra.mxu0 %v3568
      %v3635 = vpop.f32.mrf.mxu0
      %v3636 = vadd.f32 0.0, %v3635
      %v3637 = vpop.f32.mrf.mxu0
      %v3638 = vadd.f32 0.0, %v3637
      %3639 = vmatmul.bf16.gmra.mxu0 %v3571
      %v3640 = vpop.f32.mrf.mxu0
      %v3641 = vadd.f32 0.0, %v3640
      %v3642 = vpop.f32.mrf.mxu0
      %v3643 = vadd.f32 0.0, %v3642
      %3644 = vmatmul.bf16.gmra.mxu0 %v3574
      %v3645 = vpop.f32.mrf.mxu0
      %v3646 = vadd.f32 0.0, %v3645
      %v3647 = vpop.f32.mrf.mxu0
      %v3648 = vadd.f32 0.0, %v3647
      %3649 = vmatmul.bf16.gmra.mxu0 %v3577
      %v3650 = vpop.f32.mrf.mxu0
      %v3651 = vadd.f32 0.0, %v3650
      %v3652 = vpop.f32.mrf.mxu0
      %v3653 = vadd.f32 0.0, %v3652
      %3654 = vmatmul.bf16.gmra.mxu0 %v3580
      %v3655 = vpop.f32.mrf.mxu0
      %v3656 = vadd.f32 0.0, %v3655
      %v3657 = vpop.f32.mrf.mxu0
      %v3658 = vadd.f32 0.0, %v3657
      %3659 = vmatmul.bf16.gmra.mxu0 %v3583
      %v3660 = vpop.f32.mrf.mxu0
      %v3661 = vadd.f32 0.0, %v3660
      %v3662 = vpop.f32.mrf.mxu0
      %v3663 = vadd.f32 0.0, %v3662
      %3664 = vmatmul.bf16.gmra.mxu0 %v3586
      %v3665 = vpop.f32.mrf.mxu0
      %v3666 = vadd.f32 0.0, %v3665
      %v3667 = vpop.f32.mrf.mxu0
      %v3668 = vadd.f32 0.0, %v3667
      %3669 = vmatmul.bf16.gmra.mxu0 %v3589
      %v3670 = vpop.f32.mrf.mxu0
      %v3671 = vadd.f32 0.0, %v3670
      %v3672 = vpop.f32.mrf.mxu0
      %v3673 = vadd.f32 0.0, %v3672
      %3674 = vmatmul.bf16.gmra.mxu0 %v3592
      %v3675 = vpop.f32.mrf.mxu0
      %v3676 = vadd.f32 0.0, %v3675
      %v3677 = vpop.f32.mrf.mxu0
      %v3678 = vadd.f32 0.0, %v3677
      %3679 = vmatmul.bf16.gmra.mxu0 %v3595
      %v3680 = vpop.f32.mrf.mxu0
      %v3681 = vadd.f32 0.0, %v3680
      %v3682 = vpop.f32.mrf.mxu0
      %v3683 = vadd.f32 0.0, %v3682
      %3684 = vmatmul.bf16.gmra.mxu0 %v3598
      %v3685 = vpop.f32.mrf.mxu0
      %v3686 = vadd.f32 0.0, %v3685
      %v3687 = vpop.f32.mrf.mxu0
      %v3688 = vadd.f32 0.0, %v3687
      %3689 = vmatmul.bf16.gmra.mxu0 %v3601
      %v3690 = vpop.f32.mrf.mxu0
      %v3691 = vadd.f32 0.0, %v3690
      %v3692 = vpop.f32.mrf.mxu0
      %v3693 = vadd.f32 0.0, %v3692
      %3694 = vdwg.mxu0
      %v3695 = vadd.f32 %v3297, %v3616
      %v3696 = vadd.f32 %v3298, %v3618
      %v3697 = vadd.f32 %v3299, %v3621
      %v3698 = vadd.f32 %v3300, %v3623
      %v3699 = vadd.f32 %v3301, %v3626
      %v3700 = vadd.f32 %v3302, %v3628
      %v3701 = vadd.f32 %v3303, %v3631
      %v3702 = vadd.f32 %v3304, %v3633
      %v3703 = vadd.f32 %v3305, %v3636
      %v3704 = vadd.f32 %v3306, %v3638
      %v3705 = vadd.f32 %v3307, %v3641
      %v3706 = vadd.f32 %v3308, %v3643
      %v3707 = vadd.f32 %v3309, %v3646
      %v3708 = vadd.f32 %v3310, %v3648
      %v3709 = vadd.f32 %v3311, %v3651
      %v3710 = vadd.f32 %v3312, %v3653
      %v3711 = vadd.f32 %v3313, %v3656
      %v3712 = vadd.f32 %v3314, %v3658
      %v3713 = vadd.f32 %v3315, %v3661
      %v3714 = vadd.f32 %v3316, %v3663
      %v3715 = vadd.f32 %v3317, %v3666
      %v3716 = vadd.f32 %v3318, %v3668
      %v3717 = vadd.f32 %v3319, %v3671
      %v3718 = vadd.f32 %v3320, %v3673
      %v3719 = vadd.f32 %v3321, %v3676
      %v3720 = vadd.f32 %v3322, %v3678
      %v3721 = vadd.f32 %v3323, %v3681
      %v3722 = vadd.f32 %v3324, %v3683
      %v3723 = vadd.f32 %v3325, %v3686
      %v3724 = vadd.f32 %v3326, %v3688
      %v3725 = vadd.f32 %v3327, %v3691
      %v3726 = vadd.f32 %v3328, %v3693
      %s3727 = scalar_lea.vmem [#allocation2], 24
      %v3728 = vld [vmem:[%s3727] sm:$0xf]
      %v3729 = vld [vmem:[%s3727 + $0x4] sm:$0xf]
      %v3730 = vld [vmem:[%s3727 + $0xc] sm:$0xf]
      %v3731 = vld [vmem:[%s3727 + $0x10] sm:$0xf]
      %v3732 = vld [vmem:[%s3727 + $0x18] sm:$0xf]
      %v3733 = vld [vmem:[%s3727 + $0x1c] sm:$0xf]
      %v3734 = vld [vmem:[%s3727 + $0x24] sm:$0xf]
      %v3735 = vld [vmem:[%s3727 + $0x28] sm:$0xf]
      %v3736 = vld [vmem:[%s3727 + $0x30] sm:$0xf]
      %v3737 = vld [vmem:[%s3727 + $0x34] sm:$0xf]
      %v3738 = vld [vmem:[%s3727 + $0x3c] sm:$0xf]
      %v3739 = vld [vmem:[%s3727 + $0x40] sm:$0xf]
      %v3740 = vld [vmem:[%s3727 + $0x48] sm:$0xf]
      %v3741 = vld [vmem:[%s3727 + $0x4c] sm:$0xf]
      %v3742 = vld [vmem:[%s3727 + $0x54] sm:$0xf]
      %v3743 = vld [vmem:[%s3727 + $0x58] sm:$0xf]
      %v3744 = vld [vmem:[%s3727 + $0x60] sm:$0xf]
      %v3745 = vld [vmem:[%s3727 + $0x64] sm:$0xf]
      %v3746 = vld [vmem:[%s3727 + $0x6c] sm:$0xf]
      %v3747 = vld [vmem:[%s3727 + $0x70] sm:$0xf]
      %v3748 = vld [vmem:[%s3727 + $0x78] sm:$0xf]
      %v3749 = vld [vmem:[%s3727 + $0x7c] sm:$0xf]
      %v3750 = vld [vmem:[%s3727 + $0x84] sm:$0xf]
      %v3751 = vld [vmem:[%s3727 + $0x88] sm:$0xf]
      %v3752 = vld [vmem:[%s3727 + $0x90] sm:$0xf]
      %v3753 = vld [vmem:[%s3727 + $0x94] sm:$0xf]
      %v3754 = vld [vmem:[%s3727 + $0x9c] sm:$0xf]
      %v3755 = vld [vmem:[%s3727 + $0xa0] sm:$0xf]
      %v3756 = vld [vmem:[%s3727 + $0xa8] sm:$0xf]
      %v3757 = vld [vmem:[%s3727 + $0xac] sm:$0xf]
      %v3758 = vld [vmem:[%s3727 + $0xb4] sm:$0xf]
      %v3759 = vld [vmem:[%s3727 + $0xb8] sm:$0xf]
      %s3760 = scalar_lea.vmem %s3, 12
      %v3761 = vld [vmem:[%s3760] sm:$0x3]
      %v3794 = vunpack.c.l.b16 %v3728
      %v3795 = vunpack.c.l.b16 %v3729
      %v3796 = vunpack.c.l.b16 %v3730
      %v3797 = vunpack.c.l.b16 %v3731
      %v3798 = vunpack.c.l.b16 %v3732
      %v3799 = vunpack.c.l.b16 %v3733
      %v3800 = vunpack.c.l.b16 %v3734
      %v3801 = vunpack.c.l.b16 %v3735
      %v3802 = vunpack.c.l.b16 %v3736
      %v3803 = vunpack.c.l.b16 %v3737
      %v3804 = vunpack.c.l.b16 %v3738
      %v3805 = vunpack.c.l.b16 %v3739
      %v3806 = vunpack.c.l.b16 %v3740
      %v3807 = vunpack.c.l.b16 %v3741
      %v3808 = vunpack.c.l.b16 %v3742
      %v3809 = vunpack.c.l.b16 %v3743
      %v3810 = vunpack.c.l.b16 %v3744
      %v3811 = vunpack.c.l.b16 %v3745
      %v3812 = vunpack.c.l.b16 %v3746
      %v3813 = vunpack.c.l.b16 %v3747
      %v3814 = vunpack.c.l.b16 %v3748
      %v3815 = vunpack.c.l.b16 %v3749
      %v3816 = vunpack.c.l.b16 %v3750
      %v3817 = vunpack.c.l.b16 %v3751
      %v3818 = vunpack.c.l.b16 %v3752
      %v3819 = vunpack.c.l.b16 %v3753
      %v3820 = vunpack.c.l.b16 %v3754
      %v3821 = vunpack.c.l.b16 %v3755
      %v3822 = vunpack.c.l.b16 %v3756
      %v3823 = vunpack.c.l.b16 %v3757
      %v3824 = vunpack.c.l.b16 %v3758
      %v3825 = vunpack.c.l.b16 %v3759
      %v3826 = vpack.c.b16 %v3795, %v3794
      %v3827 = vpack.c.b16 %v3797, %v3796
      %v3828 = vpack.c.b16 %v3799, %v3798
      %v3829 = vpack.c.b16 %v3801, %v3800
      %v3830 = vpack.c.b16 %v3803, %v3802
      %v3831 = vpack.c.b16 %v3805, %v3804
      %v3832 = vpack.c.b16 %v3807, %v3806
      %v3833 = vpack.c.b16 %v3809, %v3808
      %v3834 = vpack.c.b16 %v3811, %v3810
      %v3835 = vpack.c.b16 %v3813, %v3812
      %v3836 = vpack.c.b16 %v3815, %v3814
      %v3837 = vpack.c.b16 %v3817, %v3816
      %v3838 = vpack.c.b16 %v3819, %v3818
      %v3839 = vpack.c.b16 %v3821, %v3820
      %v3840 = vpack.c.b16 %v3823, %v3822
      %v3841 = vpack.c.b16 %v3825, %v3824
      %v3843 = vsel %vm1642, %v3826, 0
      %v3846 = vsel %vm1642, %v3827, 0
      %v3849 = vsel %vm1642, %v3828, 0
      %v3852 = vsel %vm1642, %v3829, 0
      %v3855 = vsel %vm1642, %v3830, 0
      %v3858 = vsel %vm1642, %v3831, 0
      %v3861 = vsel %vm1642, %v3832, 0
      %v3864 = vsel %vm1642, %v3833, 0
      %v3867 = vsel %vm1642, %v3834, 0
      %v3870 = vsel %vm1642, %v3835, 0
      %v3873 = vsel %vm1642, %v3836, 0
      %v3876 = vsel %vm1642, %v3837, 0
      %v3879 = vsel %vm1642, %v3838, 0
      %v3882 = vsel %vm1642, %v3839, 0
      %v3885 = vsel %vm1642, %v3840, 0
      %v3888 = vsel %vm1642, %v3841, 0
      %v3891 = vsel %vm1691, %v3761, 0
      %3893 = vmatpush.bf16.msra.mxu0 0
      %3894 = vmatpush.bf16.msra.mxu0 0
      %3895 = vmatpush.bf16.msra.mxu0 0
      %3896 = vmatpush.bf16.msra.mxu0 0
      %3897 = vmatpush.bf16.msra.mxu0 0
      %3898 = vmatpush.bf16.msra.mxu0 0
      %3899 = vmatpush.bf16.msra.mxu0 0
      %3900 = vmatpush.bf16.msra.mxu0 %v3891
      %3901 = vmatmul.bf16.gmra.mxu0 %v3843
      %v3902 = vpop.f32.mrf.mxu0
      %v3903 = vadd.f32 0.0, %v3902
      %v3904 = vpop.f32.mrf.mxu0
      %v3905 = vadd.f32 0.0, %v3904
      %3906 = vmatmul.bf16.gmra.mxu0 %v3846
      %v3907 = vpop.f32.mrf.mxu0
      %v3908 = vadd.f32 0.0, %v3907
      %v3909 = vpop.f32.mrf.mxu0
      %v3910 = vadd.f32 0.0, %v3909
      %3911 = vmatmul.bf16.gmra.mxu0 %v3849
      %v3912 = vpop.f32.mrf.mxu0
      %v3913 = vadd.f32 0.0, %v3912
      %v3914 = vpop.f32.mrf.mxu0
      %v3915 = vadd.f32 0.0, %v3914
      %3916 = vmatmul.bf16.gmra.mxu0 %v3852
      %v3917 = vpop.f32.mrf.mxu0
      %v3918 = vadd.f32 0.0, %v3917
      %v3919 = vpop.f32.mrf.mxu0
      %v3920 = vadd.f32 0.0, %v3919
      %3921 = vmatmul.bf16.gmra.mxu0 %v3855
      %v3922 = vpop.f32.mrf.mxu0
      %v3923 = vadd.f32 0.0, %v3922
      %v3924 = vpop.f32.mrf.mxu0
      %v3925 = vadd.f32 0.0, %v3924
      %3926 = vmatmul.bf16.gmra.mxu0 %v3858
      %v3927 = vpop.f32.mrf.mxu0
      %v3928 = vadd.f32 0.0, %v3927
      %v3929 = vpop.f32.mrf.mxu0
      %v3930 = vadd.f32 0.0, %v3929
      %3931 = vmatmul.bf16.gmra.mxu0 %v3861
      %v3932 = vpop.f32.mrf.mxu0
      %v3933 = vadd.f32 0.0, %v3932
      %v3934 = vpop.f32.mrf.mxu0
      %v3935 = vadd.f32 0.0, %v3934
      %3936 = vmatmul.bf16.gmra.mxu0 %v3864
      %v3937 = vpop.f32.mrf.mxu0
      %v3938 = vadd.f32 0.0, %v3937
      %v3939 = vpop.f32.mrf.mxu0
      %v3940 = vadd.f32 0.0, %v3939
      %3941 = vmatmul.bf16.gmra.mxu0 %v3867
      %v3942 = vpop.f32.mrf.mxu0
      %v3943 = vadd.f32 0.0, %v3942
      %v3944 = vpop.f32.mrf.mxu0
      %v3945 = vadd.f32 0.0, %v3944
      %3946 = vmatmul.bf16.gmra.mxu0 %v3870
      %v3947 = vpop.f32.mrf.mxu0
      %v3948 = vadd.f32 0.0, %v3947
      %v3949 = vpop.f32.mrf.mxu0
      %v3950 = vadd.f32 0.0, %v3949
      %3951 = vmatmul.bf16.gmra.mxu0 %v3873
      %v3952 = vpop.f32.mrf.mxu0
      %v3953 = vadd.f32 0.0, %v3952
      %v3954 = vpop.f32.mrf.mxu0
      %v3955 = vadd.f32 0.0, %v3954
      %3956 = vmatmul.bf16.gmra.mxu0 %v3876
      %v3957 = vpop.f32.mrf.mxu0
      %v3958 = vadd.f32 0.0, %v3957
      %v3959 = vpop.f32.mrf.mxu0
      %v3960 = vadd.f32 0.0, %v3959
      %3961 = vmatmul.bf16.gmra.mxu0 %v3879
      %v3962 = vpop.f32.mrf.mxu0
      %v3963 = vadd.f32 0.0, %v3962
      %v3964 = vpop.f32.mrf.mxu0
      %v3965 = vadd.f32 0.0, %v3964
      %3966 = vmatmul.bf16.gmra.mxu0 %v3882
      %v3967 = vpop.f32.mrf.mxu0
      %v3968 = vadd.f32 0.0, %v3967
      %v3969 = vpop.f32.mrf.mxu0
      %v3970 = vadd.f32 0.0, %v3969
      %3971 = vmatmul.bf16.gmra.mxu0 %v3885
      %v3972 = vpop.f32.mrf.mxu0
      %v3973 = vadd.f32 0.0, %v3972
      %v3974 = vpop.f32.mrf.mxu0
      %v3975 = vadd.f32 0.0, %v3974
      %3976 = vmatmul.bf16.gmra.mxu0 %v3888
      %v3977 = vpop.f32.mrf.mxu0
      %v3978 = vadd.f32 0.0, %v3977
      %v3979 = vpop.f32.mrf.mxu0
      %v3980 = vadd.f32 0.0, %v3979
      %3981 = vdwg.mxu0
      %v3982 = vadd.f32 %v3695, %v3903
      %v3983 = vadd.f32 %v3696, %v3905
      %v3984 = vadd.f32 %v3697, %v3908
      %v3985 = vadd.f32 %v3698, %v3910
      %v3986 = vadd.f32 %v3699, %v3913
      %v3987 = vadd.f32 %v3700, %v3915
      %v3988 = vadd.f32 %v3701, %v3918
      %v3989 = vadd.f32 %v3702, %v3920
      %v3990 = vadd.f32 %v3703, %v3923
      %v3991 = vadd.f32 %v3704, %v3925
      %v3992 = vadd.f32 %v3705, %v3928
      %v3993 = vadd.f32 %v3706, %v3930
      %v3994 = vadd.f32 %v3707, %v3933
      %v3995 = vadd.f32 %v3708, %v3935
      %v3996 = vadd.f32 %v3709, %v3938
      %v3997 = vadd.f32 %v3710, %v3940
      %v3998 = vadd.f32 %v3711, %v3943
      %v3999 = vadd.f32 %v3712, %v3945
      %v4000 = vadd.f32 %v3713, %v3948
      %v4001 = vadd.f32 %v3714, %v3950
      %v4002 = vadd.f32 %v3715, %v3953
      %v4003 = vadd.f32 %v3716, %v3955
      %v4004 = vadd.f32 %v3717, %v3958
      %v4005 = vadd.f32 %v3718, %v3960
      %v4006 = vadd.f32 %v3719, %v3963
      %v4007 = vadd.f32 %v3720, %v3965
      %v4008 = vadd.f32 %v3721, %v3968
      %v4009 = vadd.f32 %v3722, %v3970
      %v4010 = vadd.f32 %v3723, %v3973
      %v4011 = vadd.f32 %v3724, %v3975
      %v4012 = vadd.f32 %v3725, %v3978
      %v4013 = vadd.f32 %v3726, %v3980
      %v4014 = vld [vmem:[%s3727] sm:$0xf]
      %v4015 = vld [vmem:[%s3727 + $0x4] sm:$0xf]
      %v4016 = vld [vmem:[%s3727 + $0x8] sm:$0x1]
      %v4017 = vld [vmem:[%s3727 + $0xc] sm:$0xf]
      %v4018 = vld [vmem:[%s3727 + $0x10] sm:$0xf]
      %v4019 = vld [vmem:[%s3727 + $0x14] sm:$0x1]
      %v4020 = vld [vmem:[%s3727 + $0x18] sm:$0xf]
      %v4021 = vld [vmem:[%s3727 + $0x1c] sm:$0xf]
      %v4022 = vld [vmem:[%s3727 + $0x20] sm:$0x1]
      %v4023 = vld [vmem:[%s3727 + $0x24] sm:$0xf]
      %v4024 = vld [vmem:[%s3727 + $0x28] sm:$0xf]
      %v4025 = vld [vmem:[%s3727 + $0x2c] sm:$0x1]
      %v4026 = vld [vmem:[%s3727 + $0x30] sm:$0xf]
      %v4027 = vld [vmem:[%s3727 + $0x34] sm:$0xf]
      %v4028 = vld [vmem:[%s3727 + $0x38] sm:$0x1]
      %v4029 = vld [vmem:[%s3727 + $0x3c] sm:$0xf]
      %v4030 = vld [vmem:[%s3727 + $0x40] sm:$0xf]
      %v4031 = vld [vmem:[%s3727 + $0x44] sm:$0x1]
      %v4032 = vld [vmem:[%s3727 + $0x48] sm:$0xf]
      %v4033 = vld [vmem:[%s3727 + $0x4c] sm:$0xf]
      %v4034 = vld [vmem:[%s3727 + $0x50] sm:$0x1]
      %v4035 = vld [vmem:[%s3727 + $0x54] sm:$0xf]
      %v4036 = vld [vmem:[%s3727 + $0x58] sm:$0xf]
      %v4037 = vld [vmem:[%s3727 + $0x5c] sm:$0x1]
      %v4038 = vld [vmem:[%s3727 + $0x60] sm:$0xf]
      %v4039 = vld [vmem:[%s3727 + $0x64] sm:$0xf]
      %v4040 = vld [vmem:[%s3727 + $0x68] sm:$0x1]
      %v4041 = vld [vmem:[%s3727 + $0x6c] sm:$0xf]
      %v4042 = vld [vmem:[%s3727 + $0x70] sm:$0xf]
      %v4043 = vld [vmem:[%s3727 + $0x74] sm:$0x1]
      %v4044 = vld [vmem:[%s3727 + $0x78] sm:$0xf]
      %v4045 = vld [vmem:[%s3727 + $0x7c] sm:$0xf]
      %v4046 = vld [vmem:[%s3727 + $0x80] sm:$0x1]
      %v4047 = vld [vmem:[%s3727 + $0x84] sm:$0xf]
      %v4048 = vld [vmem:[%s3727 + $0x88] sm:$0xf]
      %v4049 = vld [vmem:[%s3727 + $0x8c] sm:$0x1]
      %v4050 = vld [vmem:[%s3727 + $0x90] sm:$0xf]
      %v4051 = vld [vmem:[%s3727 + $0x94] sm:$0xf]
      %v4052 = vld [vmem:[%s3727 + $0x98] sm:$0x1]
      %v4053 = vld [vmem:[%s3727 + $0x9c] sm:$0xf]
      %v4054 = vld [vmem:[%s3727 + $0xa0] sm:$0xf]
      %v4055 = vld [vmem:[%s3727 + $0xa4] sm:$0x1]
      %v4056 = vld [vmem:[%s3727 + $0xa8] sm:$0xf]
      %v4057 = vld [vmem:[%s3727 + $0xac] sm:$0xf]
      %v4058 = vld [vmem:[%s3727 + $0xb0] sm:$0x1]
      %v4059 = vld [vmem:[%s3727 + $0xb4] sm:$0xf]
      %v4060 = vld [vmem:[%s3727 + $0xb8] sm:$0xf]
      %v4061 = vld [vmem:[%s3727 + $0xbc] sm:$0x1]
      %v4063 = vshrl.u32 %v4014, 16
      %v4065 = vrot.slane %v4063, 4
      %v4066 = vshll.u32 %v4014, 16
      %v4068 = vrot.slane %v4066, 5
      %v4069 = vor.u32 %v4065, %v4068
      %v4070 = vrot.slane %v4069, 4
      %v4072 = vshll.u32 %v4015, 16
      %v4074 = vrot.slane %v4072, 5
      %v4075 = vsel %vm1207, %v4070, %v4074
      %v4076 = vshrl.u32 %v4015, 16
      %v4078 = vrot.slane %v4076, 4
      %v4079 = vor.u32 %v4078, %v4074
      %v4080 = vrot.slane %v4079, 4
      %v4082 = vshll.u32 %v4016, 16
      %v4084 = vrot.slane %v4082, 5
      %v4085 = vsel %vm1207, %v4080, %v4084
      %v4087 = vshrl.u32 %v4017, 16
      %v4089 = vrot.slane %v4087, 4
      %v4090 = vshll.u32 %v4017, 16
      %v4092 = vrot.slane %v4090, 5
      %v4093 = vor.u32 %v4089, %v4092
      %v4094 = vrot.slane %v4093, 4
      %v4096 = vshll.u32 %v4018, 16
      %v4098 = vrot.slane %v4096, 5
      %v4099 = vsel %vm1207, %v4094, %v4098
      %v4100 = vshrl.u32 %v4018, 16
      %v4102 = vrot.slane %v4100, 4
      %v4103 = vor.u32 %v4102, %v4098
      %v4104 = vrot.slane %v4103, 4
      %v4106 = vshll.u32 %v4019, 16
      %v4108 = vrot.slane %v4106, 5
      %v4109 = vsel %vm1207, %v4104, %v4108
      %v4111 = vshrl.u32 %v4020, 16
      %v4113 = vrot.slane %v4111, 4
      %v4114 = vshll.u32 %v4020, 16
      %v4116 = vrot.slane %v4114, 5
      %v4117 = vor.u32 %v4113, %v4116
      %v4118 = vrot.slane %v4117, 4
      %v4120 = vshll.u32 %v4021, 16
      %v4122 = vrot.slane %v4120, 5
      %v4123 = vsel %vm1207, %v4118, %v4122
      %v4124 = vshrl.u32 %v4021, 16
      %v4126 = vrot.slane %v4124, 4
      %v4127 = vor.u32 %v4126, %v4122
      %v4128 = vrot.slane %v4127, 4
      %v4130 = vshll.u32 %v4022, 16
      %v4132 = vrot.slane %v4130, 5
      %v4133 = vsel %vm1207, %v4128, %v4132
      %v4135 = vshrl.u32 %v4023, 16
      %v4137 = vrot.slane %v4135, 4
      %v4138 = vshll.u32 %v4023, 16
      %v4140 = vrot.slane %v4138, 5
      %v4141 = vor.u32 %v4137, %v4140
      %v4142 = vrot.slane %v4141, 4
      %v4144 = vshll.u32 %v4024, 16
      %v4146 = vrot.slane %v4144, 5
      %v4147 = vsel %vm1207, %v4142, %v4146
      %v4148 = vshrl.u32 %v4024, 16
      %v4150 = vrot.slane %v4148, 4
      %v4151 = vor.u32 %v4150, %v4146
      %v4152 = vrot.slane %v4151, 4
      %v4154 = vshll.u32 %v4025, 16
      %v4156 = vrot.slane %v4154, 5
      %v4157 = vsel %vm1207, %v4152, %v4156
      %v4159 = vshrl.u32 %v4026, 16
      %v4161 = vrot.slane %v4159, 4
      %v4162 = vshll.u32 %v4026, 16
      %v4164 = vrot.slane %v4162, 5
      %v4165 = vor.u32 %v4161, %v4164
      %v4166 = vrot.slane %v4165, 4
      %v4168 = vshll.u32 %v4027, 16
      %v4170 = vrot.slane %v4168, 5
      %v4171 = vsel %vm1207, %v4166, %v4170
      %v4172 = vshrl.u32 %v4027, 16
      %v4174 = vrot.slane %v4172, 4
      %v4175 = vor.u32 %v4174, %v4170
      %v4176 = vrot.slane %v4175, 4
      %v4178 = vshll.u32 %v4028, 16
      %v4180 = vrot.slane %v4178, 5
      %v4181 = vsel %vm1207, %v4176, %v4180
      %v4183 = vshrl.u32 %v4029, 16
      %v4185 = vrot.slane %v4183, 4
      %v4186 = vshll.u32 %v4029, 16
      %v4188 = vrot.slane %v4186, 5
      %v4189 = vor.u32 %v4185, %v4188
      %v4190 = vrot.slane %v4189, 4
      %v4192 = vshll.u32 %v4030, 16
      %v4194 = vrot.slane %v4192, 5
      %v4195 = vsel %vm1207, %v4190, %v4194
      %v4196 = vshrl.u32 %v4030, 16
      %v4198 = vrot.slane %v4196, 4
      %v4199 = vor.u32 %v4198, %v4194
      %v4200 = vrot.slane %v4199, 4
      %v4202 = vshll.u32 %v4031, 16
      %v4204 = vrot.slane %v4202, 5
      %v4205 = vsel %vm1207, %v4200, %v4204
      %v4207 = vshrl.u32 %v4032, 16
      %v4209 = vrot.slane %v4207, 4
      %v4210 = vshll.u32 %v4032, 16
      %v4212 = vrot.slane %v4210, 5
      %v4213 = vor.u32 %v4209, %v4212
      %v4214 = vrot.slane %v4213, 4
      %v4216 = vshll.u32 %v4033, 16
      %v4218 = vrot.slane %v4216, 5
      %v4219 = vsel %vm1207, %v4214, %v4218
      %v4220 = vshrl.u32 %v4033, 16
      %v4222 = vrot.slane %v4220, 4
      %v4223 = vor.u32 %v4222, %v4218
      %v4224 = vrot.slane %v4223, 4
      %v4226 = vshll.u32 %v4034, 16
      %v4228 = vrot.slane %v4226, 5
      %v4229 = vsel %vm1207, %v4224, %v4228
      %v4231 = vshrl.u32 %v4035, 16
      %v4233 = vrot.slane %v4231, 4
      %v4234 = vshll.u32 %v4035, 16
      %v4236 = vrot.slane %v4234, 5
      %v4237 = vor.u32 %v4233, %v4236
      %v4238 = vrot.slane %v4237, 4
      %v4240 = vshll.u32 %v4036, 16
      %v4242 = vrot.slane %v4240, 5
      %v4243 = vsel %vm1207, %v4238, %v4242
      %v4244 = vshrl.u32 %v4036, 16
      %v4246 = vrot.slane %v4244, 4
      %v4247 = vor.u32 %v4246, %v4242
      %v4248 = vrot.slane %v4247, 4
      %v4250 = vshll.u32 %v4037, 16
      %v4252 = vrot.slane %v4250, 5
      %v4253 = vsel %vm1207, %v4248, %v4252
      %v4255 = vshrl.u32 %v4038, 16
      %v4257 = vrot.slane %v4255, 4
      %v4258 = vshll.u32 %v4038, 16
      %v4260 = vrot.slane %v4258, 5
      %v4261 = vor.u32 %v4257, %v4260
      %v4262 = vrot.slane %v4261, 4
      %v4264 = vshll.u32 %v4039, 16
      %v4266 = vrot.slane %v4264, 5
      %v4267 = vsel %vm1207, %v4262, %v4266
      %v4268 = vshrl.u32 %v4039, 16
      %v4270 = vrot.slane %v4268, 4
      %v4271 = vor.u32 %v4270, %v4266
      %v4272 = vrot.slane %v4271, 4
      %v4274 = vshll.u32 %v4040, 16
      %v4276 = vrot.slane %v4274, 5
      %v4277 = vsel %vm1207, %v4272, %v4276
      %v4279 = vshrl.u32 %v4041, 16
      %v4281 = vrot.slane %v4279, 4
      %v4282 = vshll.u32 %v4041, 16
      %v4284 = vrot.slane %v4282, 5
      %v4285 = vor.u32 %v4281, %v4284
      %v4286 = vrot.slane %v4285, 4
      %v4288 = vshll.u32 %v4042, 16
      %v4290 = vrot.slane %v4288, 5
      %v4291 = vsel %vm1207, %v4286, %v4290
      %v4292 = vshrl.u32 %v4042, 16
      %v4294 = vrot.slane %v4292, 4
      %v4295 = vor.u32 %v4294, %v4290
      %v4296 = vrot.slane %v4295, 4
      %v4298 = vshll.u32 %v4043, 16
      %v4300 = vrot.slane %v4298, 5
      %v4301 = vsel %vm1207, %v4296, %v4300
      %v4303 = vshrl.u32 %v4044, 16
      %v4305 = vrot.slane %v4303, 4
      %v4306 = vshll.u32 %v4044, 16
      %v4308 = vrot.slane %v4306, 5
      %v4309 = vor.u32 %v4305, %v4308
      %v4310 = vrot.slane %v4309, 4
      %v4312 = vshll.u32 %v4045, 16
      %v4314 = vrot.slane %v4312, 5
      %v4315 = vsel %vm1207, %v4310, %v4314
      %v4316 = vshrl.u32 %v4045, 16
      %v4318 = vrot.slane %v4316, 4
      %v4319 = vor.u32 %v4318, %v4314
      %v4320 = vrot.slane %v4319, 4
      %v4322 = vshll.u32 %v4046, 16
      %v4324 = vrot.slane %v4322, 5
      %v4325 = vsel %vm1207, %v4320, %v4324
      %v4327 = vshrl.u32 %v4047, 16
      %v4329 = vrot.slane %v4327, 4
      %v4330 = vshll.u32 %v4047, 16
      %v4332 = vrot.slane %v4330, 5
      %v4333 = vor.u32 %v4329, %v4332
      %v4334 = vrot.slane %v4333, 4
      %v4336 = vshll.u32 %v4048, 16
      %v4338 = vrot.slane %v4336, 5
      %v4339 = vsel %vm1207, %v4334, %v4338
      %v4340 = vshrl.u32 %v4048, 16
      %v4342 = vrot.slane %v4340, 4
      %v4343 = vor.u32 %v4342, %v4338
      %v4344 = vrot.slane %v4343, 4
      %v4346 = vshll.u32 %v4049, 16
      %v4348 = vrot.slane %v4346, 5
      %v4349 = vsel %vm1207, %v4344, %v4348
      %v4351 = vshrl.u32 %v4050, 16
      %v4353 = vrot.slane %v4351, 4
      %v4354 = vshll.u32 %v4050, 16
      %v4356 = vrot.slane %v4354, 5
      %v4357 = vor.u32 %v4353, %v4356
      %v4358 = vrot.slane %v4357, 4
      %v4360 = vshll.u32 %v4051, 16
      %v4362 = vrot.slane %v4360, 5
      %v4363 = vsel %vm1207, %v4358, %v4362
      %v4364 = vshrl.u32 %v4051, 16
      %v4366 = vrot.slane %v4364, 4
      %v4367 = vor.u32 %v4366, %v4362
      %v4368 = vrot.slane %v4367, 4
      %v4370 = vshll.u32 %v4052, 16
      %v4372 = vrot.slane %v4370, 5
      %v4373 = vsel %vm1207, %v4368, %v4372
      %v4375 = vshrl.u32 %v4053, 16
      %v4377 = vrot.slane %v4375, 4
      %v4378 = vshll.u32 %v4053, 16
      %v4380 = vrot.slane %v4378, 5
      %v4381 = vor.u32 %v4377, %v4380
      %v4382 = vrot.slane %v4381, 4
      %v4384 = vshll.u32 %v4054, 16
      %v4386 = vrot.slane %v4384, 5
      %v4387 = vsel %vm1207, %v4382, %v4386
      %v4388 = vshrl.u32 %v4054, 16
      %v4390 = vrot.slane %v4388, 4
      %v4391 = vor.u32 %v4390, %v4386
      %v4392 = vrot.slane %v4391, 4
      %v4394 = vshll.u32 %v4055, 16
      %v4396 = vrot.slane %v4394, 5
      %v4397 = vsel %vm1207, %v4392, %v4396
      %v4399 = vshrl.u32 %v4056, 16
      %v4401 = vrot.slane %v4399, 4
      %v4402 = vshll.u32 %v4056, 16
      %v4404 = vrot.slane %v4402, 5
      %v4405 = vor.u32 %v4401, %v4404
      %v4406 = vrot.slane %v4405, 4
      %v4408 = vshll.u32 %v4057, 16
      %v4410 = vrot.slane %v4408, 5
      %v4411 = vsel %vm1207, %v4406, %v4410
      %v4412 = vshrl.u32 %v4057, 16
      %v4414 = vrot.slane %v4412, 4
      %v4415 = vor.u32 %v4414, %v4410
      %v4416 = vrot.slane %v4415, 4
      %v4418 = vshll.u32 %v4058, 16
      %v4420 = vrot.slane %v4418, 5
      %v4421 = vsel %vm1207, %v4416, %v4420
      %v4423 = vshrl.u32 %v4059, 16
      %v4425 = vrot.slane %v4423, 4
      %v4426 = vshll.u32 %v4059, 16
      %v4428 = vrot.slane %v4426, 5
      %v4429 = vor.u32 %v4425, %v4428
      %v4430 = vrot.slane %v4429, 4
      %v4432 = vshll.u32 %v4060, 16
      %v4434 = vrot.slane %v4432, 5
      %v4435 = vsel %vm1207, %v4430, %v4434
      %v4436 = vshrl.u32 %v4060, 16
      %v4438 = vrot.slane %v4436, 4
      %v4439 = vor.u32 %v4438, %v4434
      %v4440 = vrot.slane %v4439, 4
      %v4442 = vshll.u32 %v4061, 16
      %v4444 = vrot.slane %v4442, 5
      %v4445 = vsel %vm1207, %v4440, %v4444
      %s4446 = scalar_lea.vmem %s3, 14
      %v4447 = vld [vmem:[%s4446] sm:$0x3]
      %v4448 = vunpack.c.l.b16 %v4075
      %v4449 = vunpack.c.l.b16 %v4085
      %v4450 = vunpack.c.l.b16 %v4099
      %v4451 = vunpack.c.l.b16 %v4109
      %v4452 = vunpack.c.l.b16 %v4123
      %v4453 = vunpack.c.l.b16 %v4133
      %v4454 = vunpack.c.l.b16 %v4147
      %v4455 = vunpack.c.l.b16 %v4157
      %v4456 = vunpack.c.l.b16 %v4171
      %v4457 = vunpack.c.l.b16 %v4181
      %v4458 = vunpack.c.l.b16 %v4195
      %v4459 = vunpack.c.l.b16 %v4205
      %v4460 = vunpack.c.l.b16 %v4219
      %v4461 = vunpack.c.l.b16 %v4229
      %v4462 = vunpack.c.l.b16 %v4243
      %v4463 = vunpack.c.l.b16 %v4253
      %v4464 = vunpack.c.l.b16 %v4267
      %v4465 = vunpack.c.l.b16 %v4277
      %v4466 = vunpack.c.l.b16 %v4291
      %v4467 = vunpack.c.l.b16 %v4301
      %v4468 = vunpack.c.l.b16 %v4315
      %v4469 = vunpack.c.l.b16 %v4325
      %v4470 = vunpack.c.l.b16 %v4339
      %v4471 = vunpack.c.l.b16 %v4349
      %v4472 = vunpack.c.l.b16 %v4363
      %v4473 = vunpack.c.l.b16 %v4373
      %v4474 = vunpack.c.l.b16 %v4387
      %v4475 = vunpack.c.l.b16 %v4397
      %v4476 = vunpack.c.l.b16 %v4411
      %v4477 = vunpack.c.l.b16 %v4421
      %v4478 = vunpack.c.l.b16 %v4435
      %v4479 = vunpack.c.l.b16 %v4445
      %v4480 = vpack.c.b16 %v4449, %v4448
      %v4481 = vpack.c.b16 %v4451, %v4450
      %v4482 = vpack.c.b16 %v4453, %v4452
      %v4483 = vpack.c.b16 %v4455, %v4454
      %v4484 = vpack.c.b16 %v4457, %v4456
      %v4485 = vpack.c.b16 %v4459, %v4458
      %v4486 = vpack.c.b16 %v4461, %v4460
      %v4487 = vpack.c.b16 %v4463, %v4462
      %v4488 = vpack.c.b16 %v4465, %v4464
      %v4489 = vpack.c.b16 %v4467, %v4466
      %v4490 = vpack.c.b16 %v4469, %v4468
      %v4491 = vpack.c.b16 %v4471, %v4470
      %v4492 = vpack.c.b16 %v4473, %v4472
      %v4493 = vpack.c.b16 %v4475, %v4474
      %v4494 = vpack.c.b16 %v4477, %v4476
      %v4495 = vpack.c.b16 %v4479, %v4478
      %v4497 = vsel %vm1642, %v4480, 0
      %v4500 = vsel %vm1642, %v4481, 0
      %v4503 = vsel %vm1642, %v4482, 0
      %v4506 = vsel %vm1642, %v4483, 0
      %v4509 = vsel %vm1642, %v4484, 0
      %v4512 = vsel %vm1642, %v4485, 0
      %v4515 = vsel %vm1642, %v4486, 0
      %v4518 = vsel %vm1642, %v4487, 0
      %v4521 = vsel %vm1642, %v4488, 0
      %v4524 = vsel %vm1642, %v4489, 0
      %v4527 = vsel %vm1642, %v4490, 0
      %v4530 = vsel %vm1642, %v4491, 0
      %v4533 = vsel %vm1642, %v4492, 0
      %v4536 = vsel %vm1642, %v4493, 0
      %v4539 = vsel %vm1642, %v4494, 0
      %v4542 = vsel %vm1642, %v4495, 0
      %v4545 = vsel %vm1691, %v4447, 0
      %4547 = vmatpush.bf16.msra.mxu0 0
      %4548 = vmatpush.bf16.msra.mxu0 0
      %4549 = vmatpush.bf16.msra.mxu0 0
      %4550 = vmatpush.bf16.msra.mxu0 0
      %4551 = vmatpush.bf16.msra.mxu0 0
      %4552 = vmatpush.bf16.msra.mxu0 0
      %4553 = vmatpush.bf16.msra.mxu0 0
      %4554 = vmatpush.bf16.msra.mxu0 %v4545
      %4555 = vmatmul.bf16.gmra.mxu0 %v4497
      %v4556 = vpop.f32.mrf.mxu0
      %v4557 = vadd.f32 0.0, %v4556
      %v4558 = vpop.f32.mrf.mxu0
      %v4559 = vadd.f32 0.0, %v4558
      %4560 = vmatmul.bf16.gmra.mxu0 %v4500
      %v4561 = vpop.f32.mrf.mxu0
      %v4562 = vadd.f32 0.0, %v4561
      %v4563 = vpop.f32.mrf.mxu0
      %v4564 = vadd.f32 0.0, %v4563
      %4565 = vmatmul.bf16.gmra.mxu0 %v4503
      %v4566 = vpop.f32.mrf.mxu0
      %v4567 = vadd.f32 0.0, %v4566
      %v4568 = vpop.f32.mrf.mxu0
      %v4569 = vadd.f32 0.0, %v4568
      %4570 = vmatmul.bf16.gmra.mxu0 %v4506
      %v4571 = vpop.f32.mrf.mxu0
      %v4572 = vadd.f32 0.0, %v4571
      %v4573 = vpop.f32.mrf.mxu0
      %v4574 = vadd.f32 0.0, %v4573
      %4575 = vmatmul.bf16.gmra.mxu0 %v4509
      %v4576 = vpop.f32.mrf.mxu0
      %v4577 = vadd.f32 0.0, %v4576
      %v4578 = vpop.f32.mrf.mxu0
      %v4579 = vadd.f32 0.0, %v4578
      %4580 = vmatmul.bf16.gmra.mxu0 %v4512
      %v4581 = vpop.f32.mrf.mxu0
      %v4582 = vadd.f32 0.0, %v4581
      %v4583 = vpop.f32.mrf.mxu0
      %v4584 = vadd.f32 0.0, %v4583
      %4585 = vmatmul.bf16.gmra.mxu0 %v4515
      %v4586 = vpop.f32.mrf.mxu0
      %v4587 = vadd.f32 0.0, %v4586
      %v4588 = vpop.f32.mrf.mxu0
      %v4589 = vadd.f32 0.0, %v4588
      %4590 = vmatmul.bf16.gmra.mxu0 %v4518
      %v4591 = vpop.f32.mrf.mxu0
      %v4592 = vadd.f32 0.0, %v4591
      %v4593 = vpop.f32.mrf.mxu0
      %v4594 = vadd.f32 0.0, %v4593
      %4595 = vmatmul.bf16.gmra.mxu0 %v4521
      %v4596 = vpop.f32.mrf.mxu0
      %v4597 = vadd.f32 0.0, %v4596
      %v4598 = vpop.f32.mrf.mxu0
      %v4599 = vadd.f32 0.0, %v4598
      %4600 = vmatmul.bf16.gmra.mxu0 %v4524
      %v4601 = vpop.f32.mrf.mxu0
      %v4602 = vadd.f32 0.0, %v4601
      %v4603 = vpop.f32.mrf.mxu0
      %v4604 = vadd.f32 0.0, %v4603
      %4605 = vmatmul.bf16.gmra.mxu0 %v4527
      %v4606 = vpop.f32.mrf.mxu0
      %v4607 = vadd.f32 0.0, %v4606
      %v4608 = vpop.f32.mrf.mxu0
      %v4609 = vadd.f32 0.0, %v4608
      %4610 = vmatmul.bf16.gmra.mxu0 %v4530
      %v4611 = vpop.f32.mrf.mxu0
      %v4612 = vadd.f32 0.0, %v4611
      %v4613 = vpop.f32.mrf.mxu0
      %v4614 = vadd.f32 0.0, %v4613
      %4615 = vmatmul.bf16.gmra.mxu0 %v4533
      %v4616 = vpop.f32.mrf.mxu0
      %v4617 = vadd.f32 0.0, %v4616
      %v4618 = vpop.f32.mrf.mxu0
      %v4619 = vadd.f32 0.0, %v4618
      %4620 = vmatmul.bf16.gmra.mxu0 %v4536
      %v4621 = vpop.f32.mrf.mxu0
      %v4622 = vadd.f32 0.0, %v4621
      %v4623 = vpop.f32.mrf.mxu0
      %v4624 = vadd.f32 0.0, %v4623
      %4625 = vmatmul.bf16.gmra.mxu0 %v4539
      %v4626 = vpop.f32.mrf.mxu0
      %v4627 = vadd.f32 0.0, %v4626
      %v4628 = vpop.f32.mrf.mxu0
      %v4629 = vadd.f32 0.0, %v4628
      %4630 = vmatmul.bf16.gmra.mxu0 %v4542
      %v4631 = vpop.f32.mrf.mxu0
      %v4632 = vadd.f32 0.0, %v4631
      %v4633 = vpop.f32.mrf.mxu0
      %v4634 = vadd.f32 0.0, %v4633
      %4635 = vdwg.mxu0
      %v4636 = vadd.f32 %v3982, %v4557
      %v4637 = vadd.f32 %v3983, %v4559
      %v4638 = vadd.f32 %v3984, %v4562
      %v4639 = vadd.f32 %v3985, %v4564
      %v4640 = vadd.f32 %v3986, %v4567
      %v4641 = vadd.f32 %v3987, %v4569
      %v4642 = vadd.f32 %v3988, %v4572
      %v4643 = vadd.f32 %v3989, %v4574
      %v4644 = vadd.f32 %v3990, %v4577
      %v4645 = vadd.f32 %v3991, %v4579
      %v4646 = vadd.f32 %v3992, %v4582
      %v4647 = vadd.f32 %v3993, %v4584
      %v4648 = vadd.f32 %v3994, %v4587
      %v4649 = vadd.f32 %v3995, %v4589
      %v4650 = vadd.f32 %v3996, %v4592
      %v4651 = vadd.f32 %v3997, %v4594
      %v4652 = vadd.f32 %v3998, %v4597
      %v4653 = vadd.f32 %v3999, %v4599
      %v4654 = vadd.f32 %v4000, %v4602
      %v4655 = vadd.f32 %v4001, %v4604
      %v4656 = vadd.f32 %v4002, %v4607
      %v4657 = vadd.f32 %v4003, %v4609
      %v4658 = vadd.f32 %v4004, %v4612
      %v4659 = vadd.f32 %v4005, %v4614
      %v4660 = vadd.f32 %v4006, %v4617
      %v4661 = vadd.f32 %v4007, %v4619
      %v4662 = vadd.f32 %v4008, %v4622
      %v4663 = vadd.f32 %v4009, %v4624
      %v4664 = vadd.f32 %v4010, %v4627
      %v4665 = vadd.f32 %v4011, %v4629
      %v4666 = vadd.f32 %v4012, %v4632
      %v4667 = vadd.f32 %v4013, %v4634
      %v4668 = vld [vmem:[%s3727] sm:$0xe]
      %v4669 = vld [vmem:[%s3727 + $0xc] sm:$0xe]
      %v4670 = vld [vmem:[%s3727 + $0x18] sm:$0xe]
      %v4671 = vld [vmem:[%s3727 + $0x24] sm:$0xe]
      %v4672 = vld [vmem:[%s3727 + $0x30] sm:$0xe]
      %v4673 = vld [vmem:[%s3727 + $0x3c] sm:$0xe]
      %v4674 = vld [vmem:[%s3727 + $0x48] sm:$0xe]
      %v4675 = vld [vmem:[%s3727 + $0x54] sm:$0xe]
      %v4676 = vld [vmem:[%s3727 + $0x60] sm:$0xe]
      %v4677 = vld [vmem:[%s3727 + $0x6c] sm:$0xe]
      %v4678 = vld [vmem:[%s3727 + $0x78] sm:$0xe]
      %v4679 = vld [vmem:[%s3727 + $0x84] sm:$0xe]
      %v4680 = vld [vmem:[%s3727 + $0x90] sm:$0xe]
      %v4681 = vld [vmem:[%s3727 + $0x9c] sm:$0xe]
      %v4682 = vld [vmem:[%s3727 + $0xa8] sm:$0xe]
      %v4683 = vld [vmem:[%s3727 + $0xb4] sm:$0xe]
      %v4732 = vrot.slane %v4668, 5
      %v4733 = vrot.slane %v4732, 4
      %v4734 = vrot.slane %v4015, 5
      %v4735 = vsel %vm2054, %v4733, %v4734
      %v4736 = vrot.slane %v4734, 4
      %v4737 = vrot.slane %v4016, 5
      %v4738 = vsel %vm2054, %v4736, %v4737
      %v4739 = vrot.slane %v4669, 5
      %v4740 = vrot.slane %v4739, 4
      %v4741 = vrot.slane %v4018, 5
      %v4742 = vsel %vm2054, %v4740, %v4741
      %v4743 = vrot.slane %v4741, 4
      %v4744 = vrot.slane %v4019, 5
      %v4745 = vsel %vm2054, %v4743, %v4744
      %v4746 = vrot.slane %v4670, 5
      %v4747 = vrot.slane %v4746, 4
      %v4748 = vrot.slane %v4021, 5
      %v4749 = vsel %vm2054, %v4747, %v4748
      %v4750 = vrot.slane %v4748, 4
      %v4751 = vrot.slane %v4022, 5
      %v4752 = vsel %vm2054, %v4750, %v4751
      %v4753 = vrot.slane %v4671, 5
      %v4754 = vrot.slane %v4753, 4
      %v4755 = vrot.slane %v4024, 5
      %v4756 = vsel %vm2054, %v4754, %v4755
      %v4757 = vrot.slane %v4755, 4
      %v4758 = vrot.slane %v4025, 5
      %v4759 = vsel %vm2054, %v4757, %v4758
      %v4760 = vrot.slane %v4672, 5
      %v4761 = vrot.slane %v4760, 4
      %v4762 = vrot.slane %v4027, 5
      %v4763 = vsel %vm2054, %v4761, %v4762
      %v4764 = vrot.slane %v4762, 4
      %v4765 = vrot.slane %v4028, 5
      %v4766 = vsel %vm2054, %v4764, %v4765
      %v4767 = vrot.slane %v4673, 5
      %v4768 = vrot.slane %v4767, 4
      %v4769 = vrot.slane %v4030, 5
      %v4770 = vsel %vm2054, %v4768, %v4769
      %v4771 = vrot.slane %v4769, 4
      %v4772 = vrot.slane %v4031, 5
      %v4773 = vsel %vm2054, %v4771, %v4772
      %v4774 = vrot.slane %v4674, 5
      %v4775 = vrot.slane %v4774, 4
      %v4776 = vrot.slane %v4033, 5
      %v4777 = vsel %vm2054, %v4775, %v4776
      %v4778 = vrot.slane %v4776, 4
      %v4779 = vrot.slane %v4034, 5
      %v4780 = vsel %vm2054, %v4778, %v4779
      %v4781 = vrot.slane %v4675, 5
      %v4782 = vrot.slane %v4781, 4
      %v4783 = vrot.slane %v4036, 5
      %v4784 = vsel %vm2054, %v4782, %v4783
      %v4785 = vrot.slane %v4783, 4
      %v4786 = vrot.slane %v4037, 5
      %v4787 = vsel %vm2054, %v4785, %v4786
      %v4788 = vrot.slane %v4676, 5
      %v4789 = vrot.slane %v4788, 4
      %v4790 = vrot.slane %v4039, 5
      %v4791 = vsel %vm2054, %v4789, %v4790
      %v4792 = vrot.slane %v4790, 4
      %v4793 = vrot.slane %v4040, 5
      %v4794 = vsel %vm2054, %v4792, %v4793
      %v4795 = vrot.slane %v4677, 5
      %v4796 = vrot.slane %v4795, 4
      %v4797 = vrot.slane %v4042, 5
      %v4798 = vsel %vm2054, %v4796, %v4797
      %v4799 = vrot.slane %v4797, 4
      %v4800 = vrot.slane %v4043, 5
      %v4801 = vsel %vm2054, %v4799, %v4800
      %v4802 = vrot.slane %v4678, 5
      %v4803 = vrot.slane %v4802, 4
      %v4804 = vrot.slane %v4045, 5
      %v4805 = vsel %vm2054, %v4803, %v4804
      %v4806 = vrot.slane %v4804, 4
      %v4807 = vrot.slane %v4046, 5
      %v4808 = vsel %vm2054, %v4806, %v4807
      %v4809 = vrot.slane %v4679, 5
      %v4810 = vrot.slane %v4809, 4
      %v4811 = vrot.slane %v4048, 5
      %v4812 = vsel %vm2054, %v4810, %v4811
      %v4813 = vrot.slane %v4811, 4
      %v4814 = vrot.slane %v4049, 5
      %v4815 = vsel %vm2054, %v4813, %v4814
      %v4816 = vrot.slane %v4680, 5
      %v4817 = vrot.slane %v4816, 4
      %v4818 = vrot.slane %v4051, 5
      %v4819 = vsel %vm2054, %v4817, %v4818
      %v4820 = vrot.slane %v4818, 4
      %v4821 = vrot.slane %v4052, 5
      %v4822 = vsel %vm2054, %v4820, %v4821
      %v4823 = vrot.slane %v4681, 5
      %v4824 = vrot.slane %v4823, 4
      %v4825 = vrot.slane %v4054, 5
      %v4826 = vsel %vm2054, %v4824, %v4825
      %v4827 = vrot.slane %v4825, 4
      %v4828 = vrot.slane %v4055, 5
      %v4829 = vsel %vm2054, %v4827, %v4828
      %v4830 = vrot.slane %v4682, 5
      %v4831 = vrot.slane %v4830, 4
      %v4832 = vrot.slane %v4057, 5
      %v4833 = vsel %vm2054, %v4831, %v4832
      %v4834 = vrot.slane %v4832, 4
      %v4835 = vrot.slane %v4058, 5
      %v4836 = vsel %vm2054, %v4834, %v4835
      %v4837 = vrot.slane %v4683, 5
      %v4838 = vrot.slane %v4837, 4
      %v4839 = vrot.slane %v4060, 5
      %v4840 = vsel %vm2054, %v4838, %v4839
      %v4841 = vrot.slane %v4839, 4
      %v4842 = vrot.slane %v4061, 5
      %v4843 = vsel %vm2054, %v4841, %v4842
      %s4844 = scalar_lea.vmem %s3, 16
      %v4845 = vld [vmem:[%s4844] sm:$0x3]
      %v4846 = vunpack.c.l.b16 %v4735
      %v4847 = vunpack.c.l.b16 %v4738
      %v4848 = vunpack.c.l.b16 %v4742
      %v4849 = vunpack.c.l.b16 %v4745
      %v4850 = vunpack.c.l.b16 %v4749
      %v4851 = vunpack.c.l.b16 %v4752
      %v4852 = vunpack.c.l.b16 %v4756
      %v4853 = vunpack.c.l.b16 %v4759
      %v4854 = vunpack.c.l.b16 %v4763
      %v4855 = vunpack.c.l.b16 %v4766
      %v4856 = vunpack.c.l.b16 %v4770
      %v4857 = vunpack.c.l.b16 %v4773
      %v4858 = vunpack.c.l.b16 %v4777
      %v4859 = vunpack.c.l.b16 %v4780
      %v4860 = vunpack.c.l.b16 %v4784
      %v4861 = vunpack.c.l.b16 %v4787
      %v4862 = vunpack.c.l.b16 %v4791
      %v4863 = vunpack.c.l.b16 %v4794
      %v4864 = vunpack.c.l.b16 %v4798
      %v4865 = vunpack.c.l.b16 %v4801
      %v4866 = vunpack.c.l.b16 %v4805
      %v4867 = vunpack.c.l.b16 %v4808
      %v4868 = vunpack.c.l.b16 %v4812
      %v4869 = vunpack.c.l.b16 %v4815
      %v4870 = vunpack.c.l.b16 %v4819
      %v4871 = vunpack.c.l.b16 %v4822
      %v4872 = vunpack.c.l.b16 %v4826
      %v4873 = vunpack.c.l.b16 %v4829
      %v4874 = vunpack.c.l.b16 %v4833
      %v4875 = vunpack.c.l.b16 %v4836
      %v4876 = vunpack.c.l.b16 %v4840
      %v4877 = vunpack.c.l.b16 %v4843
      %v4878 = vpack.c.b16 %v4847, %v4846
      %v4879 = vpack.c.b16 %v4849, %v4848
      %v4880 = vpack.c.b16 %v4851, %v4850
      %v4881 = vpack.c.b16 %v4853, %v4852
      %v4882 = vpack.c.b16 %v4855, %v4854
      %v4883 = vpack.c.b16 %v4857, %v4856
      %v4884 = vpack.c.b16 %v4859, %v4858
      %v4885 = vpack.c.b16 %v4861, %v4860
      %v4886 = vpack.c.b16 %v4863, %v4862
      %v4887 = vpack.c.b16 %v4865, %v4864
      %v4888 = vpack.c.b16 %v4867, %v4866
      %v4889 = vpack.c.b16 %v4869, %v4868
      %v4890 = vpack.c.b16 %v4871, %v4870
      %v4891 = vpack.c.b16 %v4873, %v4872
      %v4892 = vpack.c.b16 %v4875, %v4874
      %v4893 = vpack.c.b16 %v4877, %v4876
      %v4895 = vsel %vm1642, %v4878, 0
      %v4898 = vsel %vm1642, %v4879, 0
      %v4901 = vsel %vm1642, %v4880, 0
      %v4904 = vsel %vm1642, %v4881, 0
      %v4907 = vsel %vm1642, %v4882, 0
      %v4910 = vsel %vm1642, %v4883, 0
      %v4913 = vsel %vm1642, %v4884, 0
      %v4916 = vsel %vm1642, %v4885, 0
      %v4919 = vsel %vm1642, %v4886, 0
      %v4922 = vsel %vm1642, %v4887, 0
      %v4925 = vsel %vm1642, %v4888, 0
      %v4928 = vsel %vm1642, %v4889, 0
      %v4931 = vsel %vm1642, %v4890, 0
      %v4934 = vsel %vm1642, %v4891, 0
      %v4937 = vsel %vm1642, %v4892, 0
      %v4940 = vsel %vm1642, %v4893, 0
      %v4943 = vsel %vm1691, %v4845, 0
      %4945 = vmatpush.bf16.msra.mxu0 0
      %4946 = vmatpush.bf16.msra.mxu0 0
      %4947 = vmatpush.bf16.msra.mxu0 0
      %4948 = vmatpush.bf16.msra.mxu0 0
      %4949 = vmatpush.bf16.msra.mxu0 0
      %4950 = vmatpush.bf16.msra.mxu0 0
      %4951 = vmatpush.bf16.msra.mxu0 0
      %4952 = vmatpush.bf16.msra.mxu0 %v4943
      %4953 = vmatmul.bf16.gmra.mxu0 %v4895
      %v4954 = vpop.f32.mrf.mxu0
      %v4955 = vadd.f32 0.0, %v4954
      %v4956 = vpop.f32.mrf.mxu0
      %v4957 = vadd.f32 0.0, %v4956
      %4958 = vmatmul.bf16.gmra.mxu0 %v4898
      %v4959 = vpop.f32.mrf.mxu0
      %v4960 = vadd.f32 0.0, %v4959
      %v4961 = vpop.f32.mrf.mxu0
      %v4962 = vadd.f32 0.0, %v4961
      %4963 = vmatmul.bf16.gmra.mxu0 %v4901
      %v4964 = vpop.f32.mrf.mxu0
      %v4965 = vadd.f32 0.0, %v4964
      %v4966 = vpop.f32.mrf.mxu0
      %v4967 = vadd.f32 0.0, %v4966
      %4968 = vmatmul.bf16.gmra.mxu0 %v4904
      %v4969 = vpop.f32.mrf.mxu0
      %v4970 = vadd.f32 0.0, %v4969
      %v4971 = vpop.f32.mrf.mxu0
      %v4972 = vadd.f32 0.0, %v4971
      %4973 = vmatmul.bf16.gmra.mxu0 %v4907
      %v4974 = vpop.f32.mrf.mxu0
      %v4975 = vadd.f32 0.0, %v4974
      %v4976 = vpop.f32.mrf.mxu0
      %v4977 = vadd.f32 0.0, %v4976
      %4978 = vmatmul.bf16.gmra.mxu0 %v4910
      %v4979 = vpop.f32.mrf.mxu0
      %v4980 = vadd.f32 0.0, %v4979
      %v4981 = vpop.f32.mrf.mxu0
      %v4982 = vadd.f32 0.0, %v4981
      %4983 = vmatmul.bf16.gmra.mxu0 %v4913
      %v4984 = vpop.f32.mrf.mxu0
      %v4985 = vadd.f32 0.0, %v4984
      %v4986 = vpop.f32.mrf.mxu0
      %v4987 = vadd.f32 0.0, %v4986
      %4988 = vmatmul.bf16.gmra.mxu0 %v4916
      %v4989 = vpop.f32.mrf.mxu0
      %v4990 = vadd.f32 0.0, %v4989
      %v4991 = vpop.f32.mrf.mxu0
      %v4992 = vadd.f32 0.0, %v4991
      %4993 = vmatmul.bf16.gmra.mxu0 %v4919
      %v4994 = vpop.f32.mrf.mxu0
      %v4995 = vadd.f32 0.0, %v4994
      %v4996 = vpop.f32.mrf.mxu0
      %v4997 = vadd.f32 0.0, %v4996
      %4998 = vmatmul.bf16.gmra.mxu0 %v4922
      %v4999 = vpop.f32.mrf.mxu0
      %v5000 = vadd.f32 0.0, %v4999
      %v5001 = vpop.f32.mrf.mxu0
      %v5002 = vadd.f32 0.0, %v5001
      %5003 = vmatmul.bf16.gmra.mxu0 %v4925
      %v5004 = vpop.f32.mrf.mxu0
      %v5005 = vadd.f32 0.0, %v5004
      %v5006 = vpop.f32.mrf.mxu0
      %v5007 = vadd.f32 0.0, %v5006
      %5008 = vmatmul.bf16.gmra.mxu0 %v4928
      %v5009 = vpop.f32.mrf.mxu0
      %v5010 = vadd.f32 0.0, %v5009
      %v5011 = vpop.f32.mrf.mxu0
      %v5012 = vadd.f32 0.0, %v5011
      %5013 = vmatmul.bf16.gmra.mxu0 %v4931
      %v5014 = vpop.f32.mrf.mxu0
      %v5015 = vadd.f32 0.0, %v5014
      %v5016 = vpop.f32.mrf.mxu0
      %v5017 = vadd.f32 0.0, %v5016
      %5018 = vmatmul.bf16.gmra.mxu0 %v4934
      %v5019 = vpop.f32.mrf.mxu0
      %v5020 = vadd.f32 0.0, %v5019
      %v5021 = vpop.f32.mrf.mxu0
      %v5022 = vadd.f32 0.0, %v5021
      %5023 = vmatmul.bf16.gmra.mxu0 %v4937
      %v5024 = vpop.f32.mrf.mxu0
      %v5025 = vadd.f32 0.0, %v5024
      %v5026 = vpop.f32.mrf.mxu0
      %v5027 = vadd.f32 0.0, %v5026
      %5028 = vmatmul.bf16.gmra.mxu0 %v4940
      %v5029 = vpop.f32.mrf.mxu0
      %v5030 = vadd.f32 0.0, %v5029
      %v5031 = vpop.f32.mrf.mxu0
      %v5032 = vadd.f32 0.0, %v5031
      %5033 = vdwg.mxu0
      %v5034 = vadd.f32 %v4636, %v4955
      %v5035 = vadd.f32 %v4637, %v4957
      %v5036 = vadd.f32 %v4638, %v4960
      %v5037 = vadd.f32 %v4639, %v4962
      %v5038 = vadd.f32 %v4640, %v4965
      %v5039 = vadd.f32 %v4641, %v4967
      %v5040 = vadd.f32 %v4642, %v4970
      %v5041 = vadd.f32 %v4643, %v4972
      %v5042 = vadd.f32 %v4644, %v4975
      %v5043 = vadd.f32 %v4645, %v4977
      %v5044 = vadd.f32 %v4646, %v4980
      %v5045 = vadd.f32 %v4647, %v4982
      %v5046 = vadd.f32 %v4648, %v4985
      %v5047 = vadd.f32 %v4649, %v4987
      %v5048 = vadd.f32 %v4650, %v4990
      %v5049 = vadd.f32 %v4651, %v4992
      %v5050 = vadd.f32 %v4652, %v4995
      %v5051 = vadd.f32 %v4653, %v4997
      %v5052 = vadd.f32 %v4654, %v5000
      %v5053 = vadd.f32 %v4655, %v5002
      %v5054 = vadd.f32 %v4656, %v5005
      %v5055 = vadd.f32 %v4657, %v5007
      %v5056 = vadd.f32 %v4658, %v5010
      %v5057 = vadd.f32 %v4659, %v5012
      %v5058 = vadd.f32 %v4660, %v5015
      %v5059 = vadd.f32 %v4661, %v5017
      %v5060 = vadd.f32 %v4662, %v5020
      %v5061 = vadd.f32 %v4663, %v5022
      %v5062 = vadd.f32 %v4664, %v5025
      %v5063 = vadd.f32 %v4665, %v5027
      %v5064 = vadd.f32 %v4666, %v5030
      %v5065 = vadd.f32 %v4667, %v5032
      %v5066 = vsel %vm1642, %v5034, 0.0
      %v5067 = vsel %vm1642, %v5035, 0.0
      %v5068 = vadd.f32 %v5066, %v5067
      %v5069 = vsel %vm1642, %v5036, 0.0
      %v5070 = vadd.f32 %v5068, %v5069
      %v5071 = vsel %vm1642, %v5037, 0.0
      %v5072 = vadd.f32 %v5070, %v5071
      %v5073 = vsel %vm1642, %v5038, 0.0
      %v5074 = vadd.f32 %v5072, %v5073
      %v5075 = vsel %vm1642, %v5039, 0.0
      %v5076 = vadd.f32 %v5074, %v5075
      %v5077 = vsel %vm1642, %v5040, 0.0
      %v5078 = vadd.f32 %v5076, %v5077
      %v5079 = vsel %vm1642, %v5041, 0.0
      %v5080 = vadd.f32 %v5078, %v5079
      %v5081 = vsel %vm1642, %v5042, 0.0
      %v5082 = vadd.f32 %v5080, %v5081
      %v5083 = vsel %vm1642, %v5043, 0.0
      %v5084 = vadd.f32 %v5082, %v5083
      %v5085 = vsel %vm1642, %v5044, 0.0
      %v5086 = vadd.f32 %v5084, %v5085
      %v5087 = vsel %vm1642, %v5045, 0.0
      %v5088 = vadd.f32 %v5086, %v5087
      %v5089 = vsel %vm1642, %v5046, 0.0
      %v5090 = vadd.f32 %v5088, %v5089
      %v5091 = vsel %vm1642, %v5047, 0.0
      %v5092 = vadd.f32 %v5090, %v5091
      %v5093 = vsel %vm1642, %v5048, 0.0
      %v5094 = vadd.f32 %v5092, %v5093
      %v5095 = vsel %vm1642, %v5049, 0.0
      %v5096 = vadd.f32 %v5094, %v5095
      %v5097 = vsel %vm1642, %v5050, 0.0
      %v5098 = vadd.f32 %v5096, %v5097
      %v5099 = vsel %vm1642, %v5051, 0.0
      %v5100 = vadd.f32 %v5098, %v5099
      %v5101 = vsel %vm1642, %v5052, 0.0
      %v5102 = vadd.f32 %v5100, %v5101
      %v5103 = vsel %vm1642, %v5053, 0.0
      %v5104 = vadd.f32 %v5102, %v5103
      %v5105 = vsel %vm1642, %v5054, 0.0
      %v5106 = vadd.f32 %v5104, %v5105
      %v5107 = vsel %vm1642, %v5055, 0.0
      %v5108 = vadd.f32 %v5106, %v5107
      %v5109 = vsel %vm1642, %v5056, 0.0
      %v5110 = vadd.f32 %v5108, %v5109
      %v5111 = vsel %vm1642, %v5057, 0.0
      %v5112 = vadd.f32 %v5110, %v5111
      %v5113 = vsel %vm1642, %v5058, 0.0
      %v5114 = vadd.f32 %v5112, %v5113
      %v5115 = vsel %vm1642, %v5059, 0.0
      %v5116 = vadd.f32 %v5114, %v5115
      %v5117 = vsel %vm1642, %v5060, 0.0
      %v5118 = vadd.f32 %v5116, %v5117
      %v5119 = vsel %vm1642, %v5061, 0.0
      %v5120 = vadd.f32 %v5118, %v5119
      %v5121 = vsel %vm1642, %v5062, 0.0
      %v5122 = vadd.f32 %v5120, %v5121
      %v5123 = vsel %vm1642, %v5063, 0.0
      %v5124 = vadd.f32 %v5122, %v5123
      %v5125 = vsel %vm1642, %v5064, 0.0
      %v5126 = vadd.f32 %v5124, %v5125
      %v5127 = vsel %vm1642, %v5065, 0.0
      %v5128 = vadd.f32 %v5126, %v5127
      %v5129 = vrot.slane %v5128, 4
      %v5130 = vadd.f32 %v5128, %v5129
      %v5131 = vrot.slane %v5130, 2
      %v5132 = vadd.f32 %v5130, %v5131
      %v5133 = vrot.slane %v5132, 1
      %v5134 = vadd.f32 %v5132, %v5133
      %5135 = vst.msk [vmem:[%s235] sm:$0x1] %vm568, %v5134
      %v5136 = vmul.f32 %v5034, %v5034
      %v5137 = vmul.f32 %v5035, %v5035
      %v5138 = vmul.f32 %v5036, %v5036
      %v5139 = vmul.f32 %v5037, %v5037
      %v5140 = vmul.f32 %v5038, %v5038
      %v5141 = vmul.f32 %v5039, %v5039
      %v5142 = vmul.f32 %v5040, %v5040
      %v5143 = vmul.f32 %v5041, %v5041
      %v5144 = vmul.f32 %v5042, %v5042
      %v5145 = vmul.f32 %v5043, %v5043
      %v5146 = vmul.f32 %v5044, %v5044
      %v5147 = vmul.f32 %v5045, %v5045
      %v5148 = vmul.f32 %v5046, %v5046
      %v5149 = vmul.f32 %v5047, %v5047
      %v5150 = vmul.f32 %v5048, %v5048
      %v5151 = vmul.f32 %v5049, %v5049
      %v5152 = vmul.f32 %v5050, %v5050
      %v5153 = vmul.f32 %v5051, %v5051
      %v5154 = vmul.f32 %v5052, %v5052
      %v5155 = vmul.f32 %v5053, %v5053
      %v5156 = vmul.f32 %v5054, %v5054
      %v5157 = vmul.f32 %v5055, %v5055
      %v5158 = vmul.f32 %v5056, %v5056
      %v5159 = vmul.f32 %v5057, %v5057
      %v5160 = vmul.f32 %v5058, %v5058
      %v5161 = vmul.f32 %v5059, %v5059
      %v5162 = vmul.f32 %v5060, %v5060
      %v5163 = vmul.f32 %v5061, %v5061
      %v5164 = vmul.f32 %v5062, %v5062
      %v5165 = vmul.f32 %v5063, %v5063
      %v5166 = vmul.f32 %v5064, %v5064
      %v5167 = vmul.f32 %v5065, %v5065
      %v5168 = vsel %vm1642, %v5136, 0.0
      %v5169 = vsel %vm1642, %v5137, 0.0
      %v5170 = vadd.f32 %v5168, %v5169
      %v5171 = vsel %vm1642, %v5138, 0.0
      %v5172 = vadd.f32 %v5170, %v5171
      %v5173 = vsel %vm1642, %v5139, 0.0
      %v5174 = vadd.f32 %v5172, %v5173
      %v5175 = vsel %vm1642, %v5140, 0.0
      %v5176 = vadd.f32 %v5174, %v5175
      %v5177 = vsel %vm1642, %v5141, 0.0
      %v5178 = vadd.f32 %v5176, %v5177
      %v5179 = vsel %vm1642, %v5142, 0.0
      %v5180 = vadd.f32 %v5178, %v5179
      %v5181 = vsel %vm1642, %v5143, 0.0
      %v5182 = vadd.f32 %v5180, %v5181
      %v5183 = vsel %vm1642, %v5144, 0.0
      %v5184 = vadd.f32 %v5182, %v5183
      %v5185 = vsel %vm1642, %v5145, 0.0
      %v5186 = vadd.f32 %v5184, %v5185
      %v5187 = vsel %vm1642, %v5146, 0.0
      %v5188 = vadd.f32 %v5186, %v5187
      %v5189 = vsel %vm1642, %v5147, 0.0
      %v5190 = vadd.f32 %v5188, %v5189
      %v5191 = vsel %vm1642, %v5148, 0.0
      %v5192 = vadd.f32 %v5190, %v5191
      %v5193 = vsel %vm1642, %v5149, 0.0
      %v5194 = vadd.f32 %v5192, %v5193
      %v5195 = vsel %vm1642, %v5150, 0.0
      %v5196 = vadd.f32 %v5194, %v5195
      %v5197 = vsel %vm1642, %v5151, 0.0
      %v5198 = vadd.f32 %v5196, %v5197
      %v5199 = vsel %vm1642, %v5152, 0.0
      %v5200 = vadd.f32 %v5198, %v5199
      %v5201 = vsel %vm1642, %v5153, 0.0
      %v5202 = vadd.f32 %v5200, %v5201
      %v5203 = vsel %vm1642, %v5154, 0.0
      %v5204 = vadd.f32 %v5202, %v5203
      %v5205 = vsel %vm1642, %v5155, 0.0
      %v5206 = vadd.f32 %v5204, %v5205
      %v5207 = vsel %vm1642, %v5156, 0.0
      %v5208 = vadd.f32 %v5206, %v5207
      %v5209 = vsel %vm1642, %v5157, 0.0
      %v5210 = vadd.f32 %v5208, %v5209
      %v5211 = vsel %vm1642, %v5158, 0.0
      %v5212 = vadd.f32 %v5210, %v5211
      %v5213 = vsel %vm1642, %v5159, 0.0
      %v5214 = vadd.f32 %v5212, %v5213
      %v5215 = vsel %vm1642, %v5160, 0.0
      %v5216 = vadd.f32 %v5214, %v5215
      %v5217 = vsel %vm1642, %v5161, 0.0
      %v5218 = vadd.f32 %v5216, %v5217
      %v5219 = vsel %vm1642, %v5162, 0.0
      %v5220 = vadd.f32 %v5218, %v5219
      %v5221 = vsel %vm1642, %v5163, 0.0
      %v5222 = vadd.f32 %v5220, %v5221
      %v5223 = vsel %vm1642, %v5164, 0.0
      %v5224 = vadd.f32 %v5222, %v5223
      %v5225 = vsel %vm1642, %v5165, 0.0
      %v5226 = vadd.f32 %v5224, %v5225
      %v5227 = vsel %vm1642, %v5166, 0.0
      %v5228 = vadd.f32 %v5226, %v5227
      %v5229 = vsel %vm1642, %v5167, 0.0
      %v5230 = vadd.f32 %v5228, %v5229
      %v5231 = vrot.slane %v5230, 4
      %v5232 = vadd.f32 %v5230, %v5231
      %v5233 = vrot.slane %v5232, 2
      %v5234 = vadd.f32 %v5232, %v5233
      %v5235 = vrot.slane %v5234, 1
      %v5236 = vadd.f32 %v5234, %v5235
      %5237 = vst.msk [vmem:[%s235 + $0x1] sm:$0x1] %vm568, %v5236
      %v5238 = vpack.c.bf16 %v5034, %v5034
      %v5239 = vpack.c.bf16 %v5035, %v5035
      %v5240 = vpack.c.bf16 %v5036, %v5036
      %v5241 = vpack.c.bf16 %v5037, %v5037
      %v5242 = vpack.c.bf16 %v5038, %v5038
      %v5243 = vpack.c.bf16 %v5039, %v5039
      %v5244 = vpack.c.bf16 %v5040, %v5040
      %v5245 = vpack.c.bf16 %v5041, %v5041
      %v5246 = vpack.c.bf16 %v5042, %v5042
      %v5247 = vpack.c.bf16 %v5043, %v5043
      %v5248 = vpack.c.bf16 %v5044, %v5044
      %v5249 = vpack.c.bf16 %v5045, %v5045
      %v5250 = vpack.c.bf16 %v5046, %v5046
      %v5251 = vpack.c.bf16 %v5047, %v5047
      %v5252 = vpack.c.bf16 %v5048, %v5048
      %v5253 = vpack.c.bf16 %v5049, %v5049
      %v5254 = vpack.c.bf16 %v5050, %v5050
      %v5255 = vpack.c.bf16 %v5051, %v5051
      %v5256 = vpack.c.bf16 %v5052, %v5052
      %v5257 = vpack.c.bf16 %v5053, %v5053
      %v5258 = vpack.c.bf16 %v5054, %v5054
      %v5259 = vpack.c.bf16 %v5055, %v5055
      %v5260 = vpack.c.bf16 %v5056, %v5056
      %v5261 = vpack.c.bf16 %v5057, %v5057
      %v5262 = vpack.c.bf16 %v5058, %v5058
      %v5263 = vpack.c.bf16 %v5059, %v5059
      %v5264 = vpack.c.bf16 %v5060, %v5060
      %v5265 = vpack.c.bf16 %v5061, %v5061
      %v5266 = vpack.c.bf16 %v5062, %v5062
      %v5267 = vpack.c.bf16 %v5063, %v5063
      %v5268 = vpack.c.bf16 %v5064, %v5064
      %v5269 = vpack.c.bf16 %v5065, %v5065
      %5270 = vst.msk [vmem:[%s231] sm:$0xf] %vm565, %v5238
      %5271 = vst.msk [vmem:[%s231 + $0x4] sm:$0xf] %vm565, %v5239
      %5272 = vst.msk [vmem:[%s231 + $0x8] sm:$0xf] %vm565, %v5240
      %5273 = vst.msk [vmem:[%s231 + $0xc] sm:$0xf] %vm565, %v5241
      %5274 = vst.msk [vmem:[%s231 + $0x10] sm:$0xf] %vm565, %v5242
      %5275 = vst.msk [vmem:[%s231 + $0x14] sm:$0xf] %vm565, %v5243
      %5276 = vst.msk [vmem:[%s231 + $0x18] sm:$0xf] %vm565, %v5244
      %5277 = vst.msk [vmem:[%s231 + $0x1c] sm:$0xf] %vm565, %v5245
      %5278 = vst.msk [vmem:[%s231 + $0x20] sm:$0xf] %vm565, %v5246
      %5279 = vst.msk [vmem:[%s231 + $0x24] sm:$0xf] %vm565, %v5247
      %5280 = vst.msk [vmem:[%s231 + $0x28] sm:$0xf] %vm565, %v5248
      %5281 = vst.msk [vmem:[%s231 + $0x2c] sm:$0xf] %vm565, %v5249
      %5282 = vst.msk [vmem:[%s231 + $0x30] sm:$0xf] %vm565, %v5250
      %5283 = vst.msk [vmem:[%s231 + $0x34] sm:$0xf] %vm565, %v5251
      %5284 = vst.msk [vmem:[%s231 + $0x38] sm:$0xf] %vm565, %v5252
      %5285 = vst.msk [vmem:[%s231 + $0x3c] sm:$0xf] %vm565, %v5253
      %5286 = vst.msk [vmem:[%s231 + $0x40] sm:$0xf] %vm565, %v5254
      %5287 = vst.msk [vmem:[%s231 + $0x44] sm:$0xf] %vm565, %v5255
      %5288 = vst.msk [vmem:[%s231 + $0x48] sm:$0xf] %vm565, %v5256
      %5289 = vst.msk [vmem:[%s231 + $0x4c] sm:$0xf] %vm565, %v5257
      %5290 = vst.msk [vmem:[%s231 + $0x50] sm:$0xf] %vm565, %v5258
      %5291 = vst.msk [vmem:[%s231 + $0x54] sm:$0xf] %vm565, %v5259
      %5292 = vst.msk [vmem:[%s231 + $0x58] sm:$0xf] %vm565, %v5260
      %5293 = vst.msk [vmem:[%s231 + $0x5c] sm:$0xf] %vm565, %v5261
      %5294 = vst.msk [vmem:[%s231 + $0x60] sm:$0xf] %vm565, %v5262
      %5295 = vst.msk [vmem:[%s231 + $0x64] sm:$0xf] %vm565, %v5263
      %5296 = vst.msk [vmem:[%s231 + $0x68] sm:$0xf] %vm565, %v5264
      %5297 = vst.msk [vmem:[%s231 + $0x6c] sm:$0xf] %vm565, %v5265
      %5298 = vst.msk [vmem:[%s231 + $0x70] sm:$0xf] %vm565, %v5266
      %5299 = vst.msk [vmem:[%s231 + $0x74] sm:$0xf] %vm565, %v5267
      %5300 = vst.msk [vmem:[%s231 + $0x78] sm:$0xf] %vm565, %v5268
      %5301 = vst.msk [vmem:[%s231 + $0x7c] sm:$0xf] %vm565, %v5269
      %p5302 = scmp.lt.s32.totalorder %s17, 1
      %s5303 = scalar_select %p5302, %s17, 1
      %s5304 = smul.addr %s5303, 32
      %s5305 = smul.addr %s5304, 4
      %s5306 = scalar_lea.vmem %s4, %s5305
      %p5307 = scmp.lt.s32.totalorder %s17, 1
      %s5308 = scalar_select %p5307, %s17, 1
      %s5309 = smul.addr %s5308, 2
      %s5310 = scalar_lea.vmem %s5, %s5309
      // Predicated region
      $region37: #{resnet_basic_block.4} parent=35 // pred_check
        %p5311 = pneg %p124
      $region38: #{resnet_basic_block.4} parent=35 // pred_check_branch
        %5313 = sbr.rel (%p5311) target = $region40
      $region39: #{resnet_basic_block.4} parent=35 // pred_region
        _
      $region40: #{resnet_basic_block.4} parent=35 // pred_fallthru
        _
      // Predicated region
      $region41: #{resnet_basic_block.4} parent=35 // pred_check
        %p5314 = pneg %p150
      $region42: #{resnet_basic_block.4} parent=35 // pred_check_branch
        %5316 = sbr.rel (%p5314) target = $region44
      $region43: #{resnet_basic_block.4} parent=35 // pred_region
        _
      $region44: #{resnet_basic_block.4} parent=35 // pred_fallthru
        _
    $region36: #{resnet_basic_block.4} parent=5 // pred_fallthru
      _
    %p5317 = scmp.le.s32.totalorder 2, %s12
    // Predicated region
    $region45: #{resnet_basic_block.4} parent=5 // pred_check
      %p5318 = pneg %p5317
    $region46: #{resnet_basic_block.4} parent=5 // pred_check_branch
      %5320 = sbr.rel (%p5318) target = $region48
    $region47: #{resnet_basic_block.4} parent=5 // pred_region
      %s5321 = ssub.s32 %s12, 2
      // Predicated region
      $region49: #{resnet_basic_block.4} parent=47 // pred_check
        %p5322 = pneg %p130
      $region50: #{resnet_basic_block.4} parent=47 // pred_check_branch
        %5324 = sbr.rel (%p5322) target = $region52
      $region51: #{resnet_basic_block.4} parent=47 // pred_region
        %p5325 = scmp.lt.s32.totalorder %s18, 1
        %s5326 = scalar_select %p5325, %s18, 1
        %s5327 = smul.addr %s5326, 32
        %s5328 = smul.addr %s5327, 4
        %s5329 = scalar_lea.vmem %s4, %s5328
      $region52: #{resnet_basic_block.4} parent=47 // pred_fallthru
        _
      // Predicated region
      $region53: #{resnet_basic_block.4} parent=47 // pred_check
        %p5330 = pneg %p156
      $region54: #{resnet_basic_block.4} parent=47 // pred_check_branch
        %5332 = sbr.rel (%p5330) target = $region56
      $region55: #{resnet_basic_block.4} parent=47 // pred_region
        %p5333 = scmp.lt.s32.totalorder %s18, 1
        %s5334 = scalar_select %p5333, %s18, 1
        %s5335 = smul.addr %s5334, 2
        %s5336 = scalar_lea.vmem %s5, %s5335
      $region56: #{resnet_basic_block.4} parent=47 // pred_fallthru
        _
    $region48: #{resnet_basic_block.4} parent=5 // pred_fallthru
      _
  $region6: #{resnet_basic_block.4} parent=0 // loop_footer
    %s16 = sadd.s32 1, %s12
  $region7: #{resnet_basic_block.4} parent=0 // loop_footer_branch
    %11 = sbr.rel target = $region3
  $region8: #{resnet_basic_block.4} parent=0 // loop_exit
    _

</llo_original>
